<compile_context>
chip_gen: v5e
topology: v5e:2x2
jax: 0.10.0
libtpu: 0.0.40
codegen_flags: <defaults>
</compile_context>

<pallas_src>
import jax
import jax.numpy as jnp
from jax.experimental import pallas as pl
from jax.experimental.pallas import tpu as pltpu

ACTION_DIM = 3 + 3 + 4 + 6 + 6 + 8   # 30
HEAD_PAD = 128                       # pad (action || value) head to lane-dense 128 cols


# --------------------------- Pallas kernels (hot path) ---------------------------

def _conv_gemm_kernel(p_ref, w_ref, b_ref, o_ref):
    """One M-block of relu(patches @ w + b). bf16 operands, f32 accumulate, bf16 store."""
    acc = jnp.dot(p_ref[...], w_ref[...], preferred_element_type=jnp.float32)
    acc = jnp.maximum(acc + b_ref[...], 0.0)
    o_ref[...] = acc.astype(o_ref.dtype)


def pallas_conv_gemm(patches, w, b2d, *, block_m=None):
    """relu(patches @ w + b) -> bf16.  patches:(M,K) bf16, w:(K,N) bf16, b2d:(1,N) f32.

    Optionally tiles M into `block_m`-row blocks on a "parallel" grid axis (lets
    v7x's second TensorCore take half the rows); M is zero-padded to a multiple of
    block_m and the padded rows are sliced off afterwards.
    """
    M, K = patches.shape
    N = w.shape[1]
    if block_m is None or block_m >= M:
        block_m, Mp = M, M
    else:
        Mp = pl.cdiv(M, block_m) * block_m
        if Mp != M:
            patches = jnp.pad(patches, ((0, Mp - M), (0, 0)))
    out = pl.pallas_call(
        _conv_gemm_kernel,
        out_shape=jax.ShapeDtypeStruct((Mp, N), jnp.bfloat16),
        grid_spec=pltpu.PrefetchScalarGridSpec(
            num_scalar_prefetch=0,
            grid=(Mp // block_m,),
            in_specs=[
                pl.BlockSpec((block_m, K), lambda i: (i, 0)),
                pl.BlockSpec((K, N), lambda i: (0, 0)),
                pl.BlockSpec((1, N), lambda i: (0, 0)),
            ],
            out_specs=pl.BlockSpec((block_m, N), lambda i: (i, 0)),
        ),
        compiler_params=pltpu.CompilerParams(dimension_semantics=("parallel",)),
    )(patches, w, b2d)
    return out if Mp == M else out[:M]


def _mlp_head_kernel(x_ref, w1_ref, b1_ref, w2_ref, b2_ref, wh_ref, bh_ref, o_ref):
    """Fused fc1 -> relu -> fc2 -> relu -> dueling head.

    The value column is folded into the advantage matmul (column ACTION_DIM of a
    128-wide, lane-dense head weight); mean/subtract/add run on the VPU in f32.
    """
    x = x_ref[...]                                                            # (M,1024) bf16
    h = jnp.dot(x, w1_ref[...], preferred_element_type=jnp.float32) + b1_ref[...]
    h = jnp.maximum(h, 0.0).astype(jnp.bfloat16)                              # (M,256)
    h = jnp.dot(h, w2_ref[...], preferred_element_type=jnp.float32) + b2_ref[...]
    h = jnp.maximum(h, 0.0).astype(jnp.bfloat16)                              # (M,128)
    av = jnp.dot(h, wh_ref[...], preferred_element_type=jnp.float32) + bh_ref[...]  # (M,128) f32
    action = av[:, :ACTION_DIM]                                               # (M,30)
    value = av[:, ACTION_DIM:ACTION_DIM + 1]                                  # (M,1)
    out = action - jnp.mean(action, axis=1, keepdims=True) + value
    o_ref[...] = out.astype(o_ref.dtype)


def pallas_mlp_head(x, w1, b1, w2, b2, wh, bh):
    """Single pallas_call for the whole MLP tail; every operand fits in VMEM."""
    M, K = x.shape
    H1 = w1.shape[1]
    H2 = w2.shape[1]
    HP = wh.shape[1]
    return pl.pallas_call(
        _mlp_head_kernel,
        out_shape=jax.ShapeDtypeStruct((M, ACTION_DIM), jnp.float32),
        grid_spec=pltpu.PrefetchScalarGridSpec(
            num_scalar_prefetch=0,
            grid=(1,),
            in_specs=[
                pl.BlockSpec((M, K), lambda i: (0, 0)),
                pl.BlockSpec((K, H1), lambda i: (0, 0)),
                pl.BlockSpec((1, H1), lambda i: (0, 0)),
                pl.BlockSpec((H1, H2), lambda i: (0, 0)),
                pl.BlockSpec((1, H2), lambda i: (0, 0)),
                pl.BlockSpec((H2, HP), lambda i: (0, 0)),
                pl.BlockSpec((1, HP), lambda i: (0, 0)),
            ],
            out_specs=pl.BlockSpec((M, ACTION_DIM), lambda i: (0, 0)),
        ),
        compiler_params=pltpu.CompilerParams(dimension_semantics=("arbitrary",)),
    )(x, w1, b1, w2, b2, wh, bh)


# ------------------------------ plain-JAX glue ------------------------------------

def _im2col_3d(x, ksize, stride, pad):
    """x: (N, D, H, W, C) channels-last. Replicate padding + patch extraction.

    Column order of the returned (M, kD*kH*kW*C) matrix is (kd, kh, kw, c) with c
    fastest, matching the channels-last weight packing in pack_params().
    """
    kD, kH, kW = ksize
    sD, sH, sW = stride
    pD, pH, pW = pad
    xp = jnp.pad(x, ((0, 0), (pD, pD), (pH, pH), (pW, pW), (0, 0)), mode="edge")
    N, Dp, Hp, Wp, C = xp.shape
    oD = (Dp - kD) // sD + 1
    oH = (Hp - kH) // sH + 1
    oW = (Wp - kW) // sW + 1
    d_idx = (jnp.arange(oD) * sD)[:, None] + jnp.arange(kD)[None, :]
    h_idx = (jnp.arange(oH) * sH)[:, None] + jnp.arange(kH)[None, :]
    w_idx = (jnp.arange(oW) * sW)[:, None] + jnp.arange(kW)[None, :]
    p = xp[:, d_idx, :, :, :]                    # (N, oD, kD, Hp, Wp, C)
    p = p[:, :, :, h_idx, :, :]                  # (N, oD, kD, oH, kH, Wp, C)
    p = p[:, :, :, :, :, w_idx, :]               # (N, oD, kD, oH, kH, oW, kW, C)
    p = jnp.transpose(p, (0, 1, 3, 5, 2, 4, 6, 7))   # (N, oD, oH, oW, kD, kH, kW, C)
    return p.reshape(N * oD * oH * oW, kD * kH * kW * C), (N, oD, oH, oW)


def conv3d_relu(x, w_mat, b2d, ksize, stride, pad, *, block_m=None, flatten=False):
    """Conv3d (replicate pad, matching padding_mode='replicate') + ReLU, channels-last.

    x: (N, D, H, W, C) bf16.  w_mat: (kD*kH*kW*Cin, Cout) bf16.
    Returns (N, oD, oH, oW, Cout) bf16, or (N, oD*oH*oW*Cout) bf16 if flatten=True.
    """
    # TODO(synk): move the replicate-pad + patch extraction into VMEM inside the conv
    # kernel (tap-loop accumulation over (kD,kH,kW)) so the patch matrix is never
    # materialized in HBM; kept as bf16 plain-JAX glue here for lowering robustness.
    patches, (N, oD, oH, oW) = _im2col_3d(x, ksize, stride, pad)
    cout = w_mat.shape[1]
    y = pallas_conv_gemm(patches, w_mat, b2d, block_m=block_m)   # (M, Cout) bf16
    if flatten:
        return y.reshape(N, oD * oH * oW * cout)
    return y.reshape(N, oD, oH, oW, cout)


def init_params(key):
    """Deterministic PyTorch-like uniform(-1/sqrt(fan_in), 1/sqrt(fan_in)) init (f32)."""
    def u(k, shape, fan_in):
        bound = 1.0 / (fan_in ** 0.5)
        return jax.random.uniform(k, shape, jnp.float32, -bound, bound)

    ks = jax.random.split(key, 16)
    p = {}
    p["conv1_w"] = u(ks[0], (16, 4, 8, 8, 8), 4 * 8 * 8 * 8)
    p["conv1_b"] = u(ks[1], (16,), 4 * 8 * 8 * 8)
    p["conv2_w"] = u(ks[2], (32, 16, 4, 4, 4), 16 * 4 * 4 * 4)
    p["conv2_b"] = u(ks[3], (32,), 16 * 4 * 4 * 4)
    p["conv3_w"] = u(ks[4], (64, 32, 3, 3, 3), 32 * 27)
    p["conv3_b"] = u(ks[5], (64,), 32 * 27)
    p["conv4_w"] = u(ks[6], (128, 64, 3, 3, 3), 64 * 27)
    p["conv4_b"] = u(ks[7], (128,), 64 * 27)
    p["fc1_w"] = u(ks[8], (256, 1024), 1024)   # (out, in) like torch Linear
    p["fc1_b"] = u(ks[9], (256,), 1024)
    p["fc2_w"] = u(ks[10], (128, 256), 256)
    p["fc2_b"] = u(ks[11], (128,), 256)
    p["da_w"] = u(ks[12], (ACTION_DIM, 128), 128)
    p["da_b"] = u(ks[13], (ACTION_DIM,), 128)
    p["dv_w"] = u(ks[14], (1, 128), 128)
    p["dv_b"] = u(ks[15], (1,), 128)
    return p


def pack_params(p):
    """One-time weight repacking (channels-last conv mats, bf16 casts, fc1 flatten
    permutation, dueling-head fold) off the hot path."""
    def conv_mat(w):
        # (Cout,Cin,kD,kH,kW) -> (kD*kH*kW*Cin, Cout) bf16, channels-last column order
        return jnp.transpose(w, (2, 3, 4, 1, 0)).reshape(-1, w.shape[0]).astype(jnp.bfloat16)

    f = {}
    for i in (1, 2, 3, 4):
        f[f"conv{i}_w"] = conv_mat(p[f"conv{i}_w"])
        f[f"conv{i}_b"] = p[f"conv{i}_b"].reshape(1, -1)          # f32 (1, Cout)

    # fc1: torch flatten is (c,d,h,w)-ordered; our channels-last flatten is
    # (d,h,w,c)-ordered.  Permute fc1's input rows once so the two agree.
    S, C = 1 * 2 * 4, 128                                          # conv4 output spatial / chans
    idx = (jnp.arange(S)[:, None] + jnp.arange(C)[None, :] * S).reshape(-1)
    f["fc1_w"] = jnp.transpose(p["fc1_w"])[idx].astype(jnp.bfloat16)   # (1024, 256)
    f["fc1_b"] = p["fc1_b"].reshape(1, -1)
    f["fc2_w"] = jnp.transpose(p["fc2_w"]).astype(jnp.bfloat16)        # (256, 128)
    f["fc2_b"] = p["fc2_b"].reshape(1, -1)

    # Dueling head: fold the value column into the advantage matmul, pad to 128 lanes.
    wh = jnp.concatenate([jnp.transpose(p["da_w"]), jnp.transpose(p["dv_w"])], axis=1)  # (128,31)
    bh = jnp.concatenate([p["da_b"], p["dv_b"]])                                        # (31,)
    f["head_w"] = jnp.pad(wh, ((0, 0), (0, HEAD_PAD - wh.shape[1]))).astype(jnp.bfloat16)
    f["head_b"] = jnp.pad(bh, (0, HEAD_PAD - bh.shape[0])).reshape(1, -1)               # f32
    return f


def forward(pp, x):
    # Single layout change on the raw input: NCDHW -> NDHWC (channels-last), bf16.
    x = jnp.transpose(x, (0, 2, 3, 4, 1)).astype(jnp.bfloat16)
    # conv1: M = 2*1*10*18 = 360 rows -> padded to 384, two parallel (192, K) blocks.
    x = conv3d_relu(x, pp["conv1_w"], pp["conv1_b"], (8, 8, 8), (3, 3, 3), (3, 0, 0),
                    block_m=192)
    x = conv3d_relu(x, pp["conv2_w"], pp["conv2_b"], (4, 4, 4), (2, 2, 2), (2, 0, 0))
    x = conv3d_relu(x, pp["conv3_w"], pp["conv3_b"], (3, 3, 3), (1, 1, 1), (1, 0, 0))
    # conv4 GEMM output flattens directly (d,h,w,c)-ordered; fc1 rows were permuted
    # in pack_params, so no NCDHW transpose is needed anywhere after the input.
    feats = conv3d_relu(x, pp["conv4_w"], pp["conv4_b"], (3, 3, 3), (1, 1, 1), (1, 1, 0),
                        flatten=True)                              # (N, 1024) bf16
    return pallas_mlp_head(feats, pp["fc1_w"], pp["fc1_b"], pp["fc2_w"], pp["fc2_b"],
                           pp["head_w"], pp["head_b"])


def ref_forward(params, x):
    """Pure-JAX f32 reference mirroring the PyTorch forward (independent sanity check)."""
    def conv(x, w, b, stride, pad):
        xp = jnp.pad(x, ((0, 0), (0, 0), (pad[0],) * 2, (pad[1],) * 2, (pad[2],) * 2),
                     mode="edge")
        y = jax.lax.conv_general_dilated(
            xp, w, window_strides=stride, padding="VALID",
            dimension_numbers=("NCDHW", "OIDHW", "NCDHW"))
        return jax.nn.relu(y + b[None, :, None, None, None])

    x = conv(x, params["conv1_w"], params["conv1_b"], (3, 3, 3), (3, 0, 0))
    x = conv(x, params["conv2_w"], params["conv2_b"], (2, 2, 2), (2, 0, 0))
    x = conv(x, params["conv3_w"], params["conv3_b"], (1, 1, 1), (1, 0, 0))
    x = conv(x, params["conv4_w"], params["conv4_b"], (1, 1, 1), (1, 1, 0))
    x = x.reshape(x.shape[0], -1)
    x = jax.nn.relu(x @ params["fc1_w"].T + params["fc1_b"])
    x = jax.nn.relu(x @ params["fc2_w"].T + params["fc2_b"])
    action = x @ params["da_w"].T + params["da_b"]
    value = x @ params["dv_w"].T + params["dv_b"]
    return action - jnp.mean(action, axis=1, keepdims=True) + value


if __name__ == "__main__":
    key = jax.random.PRNGKey(0)
    pkey, xkey = jax.random.split(key)
    params = init_params(pkey)
    packed = pack_params(params)   # one-time repack, outside the per-step hot path

    # Smallest input consistent with fc1's 1*2*4*128 flatten:
    # (batch=2, channels=4, D=4, H=35, W=59)
    x = jax.random.normal(xkey, (2, 4, 4, 35, 59), dtype=jnp.float32)

    out = jax.block_until_ready(jax.jit(forward)(packed, x))
    assert out.shape == (2, ACTION_DIM), out.shape

    ref = jax.block_until_ready(ref_forward(params, x))
    assert jnp.allclose(out, ref, rtol=5e-2, atol=5e-2), float(jnp.max(jnp.abs(out - ref)))

    print("KERNEL_OK")
</pallas_src>

<mosaic_0001>
module attributes {stable_mosaic.version = 11 : i64} {
  func.func @_conv_gemm_kernel(%arg0: i32, %arg1: memref<192x2048xbf16, #tpu.memory_space<vmem>>, %arg2: memref<2048x16xbf16, #tpu.memory_space<vmem>>, %arg3: memref<1x16xf32, #tpu.memory_space<vmem>>, %arg4: memref<192x16xbf16, #tpu.memory_space<vmem>>) attributes {dimension_semantics = [#tpu.dimension_semantics<parallel>], iteration_bounds = array<i64: 2>, scalar_prefetch = 0 : i64, scratch_operands = 0 : i64, tpu.core_type = #tpu.core_type<tc>, window_params = [{transform_indices = @transform_0, window_bounds = array<i64: 192, 2048>}, {pipeline_mode = #tpu.pipeline_mode<synchronous>, transform_indices = @transform_1, window_bounds = array<i64: 2048, 16>}, {pipeline_mode = #tpu.pipeline_mode<synchronous>, transform_indices = @transform_2, window_bounds = array<i64: 1, 16>}, {transform_indices = @transform_3, window_bounds = array<i64: 192, 16>}]} {
    %c0 = arith.constant 0 : index
    %c0_0 = arith.constant 0 : index
    %0 = vector.load %arg1[%c0, %c0_0] : memref<192x2048xbf16, #tpu.memory_space<vmem>>, vector<192x2048xbf16>
    %c0_1 = arith.constant 0 : index
    %c0_2 = arith.constant 0 : index
    %1 = vector.load %arg2[%c0_1, %c0_2] : memref<2048x16xbf16, #tpu.memory_space<vmem>>, vector<2048x16xbf16>
    %cst = arith.constant dense<0.000000e+00> : vector<192x16xf32>
    %2 = tpu.matmul %0, %1, %cst {dimension_numbers = #tpu.dot_dimension_numbers<[1], [0], [0], [1], [0, 0, 1, 1], [], []>} : vector<192x2048xbf16>, vector<2048x16xbf16>, vector<192x16xf32> -> vector<192x16xf32>
    %c0_3 = arith.constant 0 : index
    %c0_4 = arith.constant 0 : index
    %3 = vector.load %arg3[%c0_3, %c0_4] : memref<1x16xf32, #tpu.memory_space<vmem>>, vector<1x16xf32>
    %4 = vector.broadcast %3 : vector<1x16xf32> to vector<192x16xf32>
    %5 = arith.addf %2, %4 : vector<192x16xf32>
    %cst_5 = arith.constant 0.000000e+00 : f32
    %6 = vector.broadcast %cst_5 : f32 to vector<192x16xf32>
    %7 = arith.maximumf %5, %6 : vector<192x16xf32>
    %8 = arith.truncf %7 : vector<192x16xf32> to vector<192x16xbf16>
    %c0_6 = arith.constant 0 : index
    %c0_7 = arith.constant 0 : index
    %9 = vector.load %arg4[%c0_6, %c0_7] : memref<192x16xbf16, #tpu.memory_space<vmem>>, vector<192x16xbf16>
    tpu.vector_store %arg4[%c0_6, %c0_7], %8 {strides = array<i32>} : memref<192x16xbf16, #tpu.memory_space<vmem>>, vector<192x16xbf16>,
    return
  }
  func.func @transform_0(%arg0: i32) -> (i32, i32) {
    %c0_i32 = arith.constant 0 : i32
    %c0_i32_0 = arith.constant 0 : i32
    return %arg0, %c0_i32 : i32, i32
  }
  func.func @transform_1(%arg0: i32) -> (i32, i32) {
    %c0_i32 = arith.constant 0 : i32
    %c0_i32_0 = arith.constant 0 : i32
    %c0_i32_1 = arith.constant 0 : i32
    return %c0_i32, %c0_i32_0 : i32, i32
  }
  func.func @transform_2(%arg0: i32) -> (i32, i32) {
    %c0_i32 = arith.constant 0 : i32
    %c0_i32_0 = arith.constant 0 : i32
    %c0_i32_1 = arith.constant 0 : i32
    return %c0_i32, %c0_i32_0 : i32, i32
  }
  func.func @transform_3(%arg0: i32) -> (i32, i32) {
    %c0_i32 = arith.constant 0 : i32
    %c0_i32_0 = arith.constant 0 : i32
    return %arg0, %c0_i32 : i32, i32
  }
}

module attributes {stable_mosaic.version = 11 : i64} {
  func.func @_conv_gemm_kernel(%arg0: i32, %arg1: memref<64x1024xbf16, #tpu.memory_space<vmem>>, %arg2: memref<1024x32xbf16, #tpu.memory_space<vmem>>, %arg3: memref<1x32xf32, #tpu.memory_space<vmem>>, %arg4: memref<64x32xbf16, #tpu.memory_space<vmem>>) attributes {dimension_semantics = [#tpu.dimension_semantics<parallel>], iteration_bounds = array<i64: 1>, scalar_prefetch = 0 : i64, scratch_operands = 0 : i64, tpu.core_type = #tpu.core_type<tc>, window_params = [{transform_indices = @transform_0, window_bounds = array<i64: 64, 1024>}, {pipeline_mode = #tpu.pipeline_mode<synchronous>, transform_indices = @transform_1, window_bounds = array<i64: 1024, 32>}, {pipeline_mode = #tpu.pipeline_mode<synchronous>, transform_indices = @transform_2, window_bounds = array<i64: 1, 32>}, {transform_indices = @transform_3, window_bounds = array<i64: 64, 32>}]} {
    %c0 = arith.constant 0 : index
    %c0_0 = arith.constant 0 : index
    %0 = vector.load %arg1[%c0, %c0_0] : memref<64x1024xbf16, #tpu.memory_space<vmem>>, vector<64x1024xbf16>
    %c0_1 = arith.constant 0 : index
    %c0_2 = arith.constant 0 : index
    %1 = vector.load %arg2[%c0_1, %c0_2] : memref<1024x32xbf16, #tpu.memory_space<vmem>>, vector<1024x32xbf16>
    %cst = arith.constant dense<0.000000e+00> : vector<64x32xf32>
    %2 = tpu.matmul %0, %1, %cst {dimension_numbers = #tpu.dot_dimension_numbers<[1], [0], [0], [1], [0, 0, 1, 1], [], []>} : vector<64x1024xbf16>, vector<1024x32xbf16>, vector<64x32xf32> -> vector<64x32xf32>
    %c0_3 = arith.constant 0 : index
    %c0_4 = arith.constant 0 : index
    %3 = vector.load %arg3[%c0_3, %c0_4] : memref<1x32xf32, #tpu.memory_space<vmem>>, vector<1x32xf32>
    %4 = vector.broadcast %3 : vector<1x32xf32> to vector<64x32xf32>
    %5 = arith.addf %2, %4 : vector<64x32xf32>
    %cst_5 = arith.constant 0.000000e+00 : f32
    %6 = vector.broadcast %cst_5 : f32 to vector<64x32xf32>
    %7 = arith.maximumf %5, %6 : vector<64x32xf32>
    %8 = arith.truncf %7 : vector<64x32xf32> to vector<64x32xbf16>
    %c0_6 = arith.constant 0 : index
    %c0_7 = arith.constant 0 : index
    %9 = vector.load %arg4[%c0_6, %c0_7] : memref<64x32xbf16, #tpu.memory_space<vmem>>, vector<64x32xbf16>
    tpu.vector_store %arg4[%c0_6, %c0_7], %8 {strides = array<i32>} : memref<64x32xbf16, #tpu.memory_space<vmem>>, vector<64x32xbf16>,
    return
  }
  func.func @transform_0(%arg0: i32) -> (i32, i32) {
    %c0_i32 = arith.constant 0 : i32
    %c0_i32_0 = arith.constant 0 : i32
    return %arg0, %c0_i32 : i32, i32
  }
  func.func @transform_1(%arg0: i32) -> (i32, i32) {
    %c0_i32 = arith.constant 0 : i32
    %c0_i32_0 = arith.constant 0 : i32
    %c0_i32_1 = arith.constant 0 : i32
    return %c0_i32, %c0_i32_0 : i32, i32
  }
  func.func @transform_2(%arg0: i32) -> (i32, i32) {
    %c0_i32 = arith.constant 0 : i32
    %c0_i32_0 = arith.constant 0 : i32
    %c0_i32_1 = arith.constant 0 : i32
    return %c0_i32, %c0_i32_0 : i32, i32
  }
  func.func @transform_3(%arg0: i32) -> (i32, i32) {
    %c0_i32 = arith.constant 0 : i32
    %c0_i32_0 = arith.constant 0 : i32
    return %arg0, %c0_i32 : i32, i32
  }
}

module attributes {stable_mosaic.version = 11 : i64} {
  func.func @_conv_gemm_kernel(%arg0: i32, %arg1: memref<24x864xbf16, #tpu.memory_space<vmem>>, %arg2: memref<864x64xbf16, #tpu.memory_space<vmem>>, %arg3: memref<1x64xf32, #tpu.memory_space<vmem>>, %arg4: memref<24x64xbf16, #tpu.memory_space<vmem>>) attributes {dimension_semantics = [#tpu.dimension_semantics<parallel>], iteration_bounds = array<i64: 1>, scalar_prefetch = 0 : i64, scratch_operands = 0 : i64, tpu.core_type = #tpu.core_type<tc>, window_params = [{transform_indices = @transform_0, window_bounds = array<i64: 24, 864>}, {pipeline_mode = #tpu.pipeline_mode<synchronous>, transform_indices = @transform_1, window_bounds = array<i64: 864, 64>}, {pipeline_mode = #tpu.pipeline_mode<synchronous>, transform_indices = @transform_2, window_bounds = array<i64: 1, 64>}, {transform_indices = @transform_3, window_bounds = array<i64: 24, 64>}]} {
    %c0 = arith.constant 0 : index
    %c0_0 = arith.constant 0 : index
    %0 = vector.load %arg1[%c0, %c0_0] : memref<24x864xbf16, #tpu.memory_space<vmem>>, vector<24x864xbf16>
    %c0_1 = arith.constant 0 : index
    %c0_2 = arith.constant 0 : index
    %1 = vector.load %arg2[%c0_1, %c0_2] : memref<864x64xbf16, #tpu.memory_space<vmem>>, vector<864x64xbf16>
    %cst = arith.constant dense<0.000000e+00> : vector<24x64xf32>
    %2 = tpu.matmul %0, %1, %cst {dimension_numbers = #tpu.dot_dimension_numbers<[1], [0], [0], [1], [0, 0, 1, 1], [], []>} : vector<24x864xbf16>, vector<864x64xbf16>, vector<24x64xf32> -> vector<24x64xf32>
    %c0_3 = arith.constant 0 : index
    %c0_4 = arith.constant 0 : index
    %3 = vector.load %arg3[%c0_3, %c0_4] : memref<1x64xf32, #tpu.memory_space<vmem>>, vector<1x64xf32>
    %4 = vector.broadcast %3 : vector<1x64xf32> to vector<24x64xf32>
    %5 = arith.addf %2, %4 : vector<24x64xf32>
    %cst_5 = arith.constant 0.000000e+00 : f32
    %6 = vector.broadcast %cst_5 : f32 to vector<24x64xf32>
    %7 = arith.maximumf %5, %6 : vector<24x64xf32>
    %8 = arith.truncf %7 : vector<24x64xf32> to vector<24x64xbf16>
    %c0_6 = arith.constant 0 : index
    %c0_7 = arith.constant 0 : index
    %9 = vector.load %arg4[%c0_6, %c0_7] : memref<24x64xbf16, #tpu.memory_space<vmem>>, vector<24x64xbf16>
    tpu.vector_store %arg4[%c0_6, %c0_7], %8 {strides = array<i32>} : memref<24x64xbf16, #tpu.memory_space<vmem>>, vector<24x64xbf16>,
    return
  }
  func.func @transform_0(%arg0: i32) -> (i32, i32) {
    %c0_i32 = arith.constant 0 : i32
    %c0_i32_0 = arith.constant 0 : i32
    return %arg0, %c0_i32 : i32, i32
  }
  func.func @transform_1(%arg0: i32) -> (i32, i32) {
    %c0_i32 = arith.constant 0 : i32
    %c0_i32_0 = arith.constant 0 : i32
    %c0_i32_1 = arith.constant 0 : i32
    return %c0_i32, %c0_i32_0 : i32, i32
  }
  func.func @transform_2(%arg0: i32) -> (i32, i32) {
    %c0_i32 = arith.constant 0 : i32
    %c0_i32_0 = arith.constant 0 : i32
    %c0_i32_1 = arith.constant 0 : i32
    return %c0_i32, %c0_i32_0 : i32, i32
  }
  func.func @transform_3(%arg0: i32) -> (i32, i32) {
    %c0_i32 = arith.constant 0 : i32
    %c0_i32_0 = arith.constant 0 : i32
    return %arg0, %c0_i32 : i32, i32
  }
}

module attributes {stable_mosaic.version = 11 : i64} {
  func.func @_conv_gemm_kernel(%arg0: i32, %arg1: memref<16x1728xbf16, #tpu.memory_space<vmem>>, %arg2: memref<1728x128xbf16, #tpu.memory_space<vmem>>, %arg3: memref<1x128xf32, #tpu.memory_space<vmem>>, %arg4: memref<16x128xbf16, #tpu.memory_space<vmem>>) attributes {dimension_semantics = [#tpu.dimension_semantics<parallel>], iteration_bounds = array<i64: 1>, scalar_prefetch = 0 : i64, scratch_operands = 0 : i64, tpu.core_type = #tpu.core_type<tc>, window_params = [{transform_indices = @transform_0, window_bounds = array<i64: 16, 1728>}, {pipeline_mode = #tpu.pipeline_mode<synchronous>, transform_indices = @transform_1, window_bounds = array<i64: 1728, 128>}, {pipeline_mode = #tpu.pipeline_mode<synchronous>, transform_indices = @transform_2, window_bounds = array<i64: 1, 128>}, {transform_indices = @transform_3, window_bounds = array<i64: 16, 128>}]} {
    %c0 = arith.constant 0 : index
    %c0_0 = arith.constant 0 : index
    %0 = vector.load %arg1[%c0, %c0_0] : memref<16x1728xbf16, #tpu.memory_space<vmem>>, vector<16x1728xbf16>
    %c0_1 = arith.constant 0 : index
    %c0_2 = arith.constant 0 : index
    %1 = vector.load %arg2[%c0_1, %c0_2] : memref<1728x128xbf16, #tpu.memory_space<vmem>>, vector<1728x128xbf16>
    %cst = arith.constant dense<0.000000e+00> : vector<16x128xf32>
    %2 = tpu.matmul %0, %1, %cst {dimension_numbers = #tpu.dot_dimension_numbers<[1], [0], [0], [1], [0, 0, 1, 1], [], []>} : vector<16x1728xbf16>, vector<1728x128xbf16>, vector<16x128xf32> -> vector<16x128xf32>
    %c0_3 = arith.constant 0 : index
    %c0_4 = arith.constant 0 : index
    %3 = vector.load %arg3[%c0_3, %c0_4] : memref<1x128xf32, #tpu.memory_space<vmem>>, vector<1x128xf32>
    %4 = vector.broadcast %3 : vector<1x128xf32> to vector<16x128xf32>
    %5 = arith.addf %2, %4 : vector<16x128xf32>
    %cst_5 = arith.constant 0.000000e+00 : f32
    %6 = vector.broadcast %cst_5 : f32 to vector<16x128xf32>
    %7 = arith.maximumf %5, %6 : vector<16x128xf32>
    %8 = arith.truncf %7 : vector<16x128xf32> to vector<16x128xbf16>
    %c0_6 = arith.constant 0 : index
    %c0_7 = arith.constant 0 : index
    %9 = vector.load %arg4[%c0_6, %c0_7] : memref<16x128xbf16, #tpu.memory_space<vmem>>, vector<16x128xbf16>
    tpu.vector_store %arg4[%c0_6, %c0_7], %8 {strides = array<i32>} : memref<16x128xbf16, #tpu.memory_space<vmem>>, vector<16x128xbf16>,
    return
  }
  func.func @transform_0(%arg0: i32) -> (i32, i32) {
    %c0_i32 = arith.constant 0 : i32
    %c0_i32_0 = arith.constant 0 : i32
    return %arg0, %c0_i32 : i32, i32
  }
  func.func @transform_1(%arg0: i32) -> (i32, i32) {
    %c0_i32 = arith.constant 0 : i32
    %c0_i32_0 = arith.constant 0 : i32
    %c0_i32_1 = arith.constant 0 : i32
    return %c0_i32, %c0_i32_0 : i32, i32
  }
  func.func @transform_2(%arg0: i32) -> (i32, i32) {
    %c0_i32 = arith.constant 0 : i32
    %c0_i32_0 = arith.constant 0 : i32
    %c0_i32_1 = arith.constant 0 : i32
    return %c0_i32, %c0_i32_0 : i32, i32
  }
  func.func @transform_3(%arg0: i32) -> (i32, i32) {
    %c0_i32 = arith.constant 0 : i32
    %c0_i32_0 = arith.constant 0 : i32
    return %arg0, %c0_i32 : i32, i32
  }
}

module attributes {stable_mosaic.version = 11 : i64} {
  func.func @_mlp_head_kernel(%arg0: i32, %arg1: memref<2x1024xbf16, #tpu.memory_space<vmem>>, %arg2: memref<1024x256xbf16, #tpu.memory_space<vmem>>, %arg3: memref<1x256xf32, #tpu.memory_space<vmem>>, %arg4: memref<256x128xbf16, #tpu.memory_space<vmem>>, %arg5: memref<1x128xf32, #tpu.memory_space<vmem>>, %arg6: memref<128x128xbf16, #tpu.memory_space<vmem>>, %arg7: memref<1x128xf32, #tpu.memory_space<vmem>>, %arg8: memref<2x30xf32, #tpu.memory_space<vmem>>) attributes {dimension_semantics = [#tpu.dimension_semantics<arbitrary>], iteration_bounds = array<i64: 1>, scalar_prefetch = 0 : i64, scratch_operands = 0 : i64, tpu.core_type = #tpu.core_type<tc>, window_params = [{pipeline_mode = #tpu.pipeline_mode<synchronous>, transform_indices = @transform_0, window_bounds = array<i64: 2, 1024>}, {pipeline_mode = #tpu.pipeline_mode<synchronous>, transform_indices = @transform_1, window_bounds = array<i64: 1024, 256>}, {pipeline_mode = #tpu.pipeline_mode<synchronous>, transform_indices = @transform_2, window_bounds = array<i64: 1, 256>}, {pipeline_mode = #tpu.pipeline_mode<synchronous>, transform_indices = @transform_3, window_bounds = array<i64: 256, 128>}, {pipeline_mode = #tpu.pipeline_mode<synchronous>, transform_indices = @transform_4, window_bounds = array<i64: 1, 128>}, {pipeline_mode = #tpu.pipeline_mode<synchronous>, transform_indices = @transform_5, window_bounds = array<i64: 128, 128>}, {pipeline_mode = #tpu.pipeline_mode<synchronous>, transform_indices = @transform_6, window_bounds = array<i64: 1, 128>}, {pipeline_mode = #tpu.pipeline_mode<synchronous>, transform_indices = @transform_7, window_bounds = array<i64: 2, 30>}]} {
    %c0 = arith.constant 0 : index
    %c0_0 = arith.constant 0 : index
    %0 = vector.load %arg1[%c0, %c0_0] : memref<2x1024xbf16, #tpu.memory_space<vmem>>, vector<2x1024xbf16>
    %c0_1 = arith.constant 0 : index
    %c0_2 = arith.constant 0 : index
    %1 = vector.load %arg2[%c0_1, %c0_2] : memref<1024x256xbf16, #tpu.memory_space<vmem>>, vector<1024x256xbf16>
    %cst = arith.constant dense<0.000000e+00> : vector<2x256xf32>
    %2 = tpu.matmul %0, %1, %cst {dimension_numbers = #tpu.dot_dimension_numbers<[1], [0], [0], [1], [0, 0, 1, 1], [], []>} : vector<2x1024xbf16>, vector<1024x256xbf16>, vector<2x256xf32> -> vector<2x256xf32>
    %c0_3 = arith.constant 0 : index
    %c0_4 = arith.constant 0 : index
    %3 = vector.load %arg3[%c0_3, %c0_4] : memref<1x256xf32, #tpu.memory_space<vmem>>, vector<1x256xf32>
    %4 = vector.broadcast %3 : vector<1x256xf32> to vector<2x256xf32>
    %5 = arith.addf %2, %4 : vector<2x256xf32>
    %cst_5 = arith.constant 0.000000e+00 : f32
    %6 = vector.broadcast %cst_5 : f32 to vector<2x256xf32>
    %7 = arith.maximumf %5, %6 : vector<2x256xf32>
    %8 = arith.truncf %7 : vector<2x256xf32> to vector<2x256xbf16>
    %c0_6 = arith.constant 0 : index
    %c0_7 = arith.constant 0 : index
    %9 = vector.load %arg4[%c0_6, %c0_7] : memref<256x128xbf16, #tpu.memory_space<vmem>>, vector<256x128xbf16>
    %cst_8 = arith.constant dense<0.000000e+00> : vector<2x128xf32>
    %10 = tpu.matmul %8, %9, %cst_8 {dimension_numbers = #tpu.dot_dimension_numbers<[1], [0], [0], [1], [0, 0, 1, 1], [], []>} : vector<2x256xbf16>, vector<256x128xbf16>, vector<2x128xf32> -> vector<2x128xf32>
    %c0_9 = arith.constant 0 : index
    %c0_10 = arith.constant 0 : index
    %11 = vector.load %arg5[%c0_9, %c0_10] : memref<1x128xf32, #tpu.memory_space<vmem>>, vector<1x128xf32>
    %12 = vector.broadcast %11 : vector<1x128xf32> to vector<2x128xf32>
    %13 = arith.addf %10, %12 : vector<2x128xf32>
    %cst_11 = arith.constant 0.000000e+00 : f32
    %14 = vector.broadcast %cst_11 : f32 to vector<2x128xf32>
    %15 = arith.maximumf %13, %14 : vector<2x128xf32>
    %16 = arith.truncf %15 : vector<2x128xf32> to vector<2x128xbf16>
    %c0_12 = arith.constant 0 : index
    %c0_13 = arith.constant 0 : index
    %17 = vector.load %arg6[%c0_12, %c0_13] : memref<128x128xbf16, #tpu.memory_space<vmem>>, vector<128x128xbf16>
    %cst_14 = arith.constant dense<0.000000e+00> : vector<2x128xf32>
    %18 = tpu.matmul %16, %17, %cst_14 {dimension_numbers = #tpu.dot_dimension_numbers<[1], [0], [0], [1], [0, 0, 1, 1], [], []>} : vector<2x128xbf16>, vector<128x128xbf16>, vector<2x128xf32> -> vector<2x128xf32>
    %c0_15 = arith.constant 0 : index
    %c0_16 = arith.constant 0 : index
    %19 = vector.load %arg7[%c0_15, %c0_16] : memref<1x128xf32, #tpu.memory_space<vmem>>, vector<1x128xf32>
    %20 = vector.broadcast %19 : vector<1x128xf32> to vector<2x128xf32>
    %21 = arith.addf %18, %20 : vector<2x128xf32>
    %22 = vector.extract_strided_slice %21 {offsets = [0, 0], sizes = [2, 30], strides = [1, 1]} : vector<2x128xf32> to vector<2x30xf32>
    %23 = vector.extract_strided_slice %21 {offsets = [0, 30], sizes = [2, 1], strides = [1, 1]} : vector<2x128xf32> to vector<2x1xf32>
    %cst_17 = arith.constant dense<0.000000e+00> : vector<2xf32>
    %24 = vector.multi_reduction <add>, %22, %cst_17 [1] : vector<2x30xf32> to vector<2xf32>
    %25 = vector.shape_cast %24 : vector<2xf32> to vector<2x1xf32>
    %cst_18 = arith.constant 3.000000e+01 : f32
    %26 = vector.broadcast %cst_18 : f32 to vector<2x1xf32>
    %27 = arith.divf %25, %26 : vector<2x1xf32>
    %28 = vector.broadcast %27 : vector<2x1xf32> to vector<2x30xf32>
    %29 = arith.subf %22, %28 : vector<2x30xf32>
    %30 = vector.broadcast %23 : vector<2x1xf32> to vector<2x30xf32>
    %31 = arith.addf %29, %30 : vector<2x30xf32>
    %c0_19 = arith.constant 0 : index
    %c0_20 = arith.constant 0 : index
    %32 = vector.load %arg8[%c0_19, %c0_20] : memref<2x30xf32, #tpu.memory_space<vmem>>, vector<2x30xf32>
    tpu.vector_store %arg8[%c0_19, %c0_20], %31 {strides = array<i32>} : memref<2x30xf32, #tpu.memory_space<vmem>>, vector<2x30xf32>,
    return
  }
  func.func @transform_0(%arg0: i32) -> (i32, i32) {
    %c0_i32 = arith.constant 0 : i32
    %c0_i32_0 = arith.constant 0 : i32
    %c0_i32_1 = arith.constant 0 : i32
    return %c0_i32, %c0_i32_0 : i32, i32
  }
  func.func @transform_1(%arg0: i32) -> (i32, i32) {
    %c0_i32 = arith.constant 0 : i32
    %c0_i32_0 = arith.constant 0 : i32
    %c0_i32_1 = arith.constant 0 : i32
    return %c0_i32, %c0_i32_0 : i32, i32
  }
  func.func @transform_2(%arg0: i32) -> (i32, i32) {
    %c0_i32 = arith.constant 0 : i32
    %c0_i32_0 = arith.constant 0 : i32
    %c0_i32_1 = arith.constant 0 : i32
    return %c0_i32, %c0_i32_0 : i32, i32
  }
  func.func @transform_3(%arg0: i32) -> (i32, i32) {
    %c0_i32 = arith.constant 0 : i32
    %c0_i32_0 = arith.constant 0 : i32
    %c0_i32_1 = arith.constant 0 : i32
    return %c0_i32, %c0_i32_0 : i32, i32
  }
  func.func @transform_4(%arg0: i32) -> (i32, i32) {
    %c0_i32 = arith.constant 0 : i32
    %c0_i32_0 = arith.constant 0 : i32
    %c0_i32_1 = arith.constant 0 : i32
    return %c0_i32, %c0_i32_0 : i32, i32
  }
  func.func @transform_5(%arg0: i32) -> (i32, i32) {
    %c0_i32 = arith.constant 0 : i32
    %c0_i32_0 = arith.constant 0 : i32
    %c0_i32_1 = arith.constant 0 : i32
    return %c0_i32, %c0_i32_0 : i32, i32
  }
  func.func @transform_6(%arg0: i32) -> (i32, i32) {
    %c0_i32 = arith.constant 0 : i32
    %c0_i32_0 = arith.constant 0 : i32
    %c0_i32_1 = arith.constant 0 : i32
    return %c0_i32, %c0_i32_0 : i32, i32
  }
  func.func @transform_7(%arg0: i32) -> (i32, i32) {
    %c0_i32 = arith.constant 0 : i32
    %c0_i32_0 = arith.constant 0 : i32
    %c0_i32_1 = arith.constant 0 : i32
    return %c0_i32, %c0_i32_0 : i32, i32
  }
}

</mosaic_0001>

<llo_original>
// kernel: forward.5
$region0: #{forward.5}
  #allocation0 [shape = 'u32[]', space=smem, size = 0x4, offset = 0x4, fixed_abs, tag = 'smem constant byte address 0x4 - core index']
  #allocation1 [shape = 'u32[72,128]{1,0:T(1,128)}', space=vmem, size = 0x9000, scoped, tag = 'internal scratch']
  %s0 = inlined_call_operand.vmem [shape: bf16[384,2048], index: 0, kind: input, shape index: {}]
  %s1 = inlined_call_operand.vmem [shape: bf16[2048,16], index: 1, kind: input, shape index: {}]
  %s2 = inlined_call_operand.vmem [shape: f32[1,16], index: 2, kind: input, shape index: {}]
  %s3 = inlined_call_operand.vmem [shape: bf16[384,16], index: 3, kind: output, shape index: {}]
  %s4 = sld [smem:[#allocation0]]
  $region45: #{forward.5} parent=0
    _
  %s6 = ssub.s32 1, %s4
  %s7 = scalar_select 0, %s6, %s4
  loop: start=0, step=1, limit=4
  $region2: #{forward.5} parent=0 // loop_pre_header
    _
  $region3: #{forward.5} parent=0 // loop_header
    %s9 = sphi 0, %s13
    %p10 = scmp.ge.s32.totalorder %s9, 4
    %s19 = sphi 0, %s21
    %s22 = sphi 0, %s19
    %s23 = sphi 0, %s22
    %s39 = sphi 0, %s23
    %s43 = sphi 0, %s43
    %s45 = sphi 0, %s43
    %s46 = sphi 0, %s45
    %s60 = sphi 0, %s46
    %s64 = sphi 0, %s64
    %s66 = sphi 0, %s64
    %s67 = sphi 0, %s66
    %s81 = sphi 0, %s67
    %s87 = sphi 0, %s89
    %s90 = sphi 0, %s87
    %s91 = sphi 0, %s90
    %s107 = sphi 0, %s91
  $region4: #{forward.5} parent=0 // loop_header_branch
    %12 = sbr.rel (%p10) target = $region8
  $region5: #{forward.5} parent=0 // loop_body
    %s14 = ssub.s32 %s9, 1
    %s15 = ssub.s32 %s9, 2
    %s16 = sadd.s32 %s9, 1
    %s17 = ssub.s32 %s9, %s16
    %p18 = scmp.eq.s32.totalorder %s17, 0
    %s20 = sadd.s32 %s19, 1
    %s21 = scalar_select %p18, %s19, %s20
    %p24 = pneg %p18
    %p25 = scmp.eq.s32.totalorder %s9, 1
    %p26 = por %p24, %p25
    %p27 = scmp.ne.s32.totalorder %s19, %s22
    %p28 = scmp.eq.s32.totalorder %s9, 0
    %p29 = por %p27, %p28
    %p30 = scmp.ne.s32.totalorder %s19, %s22
    %p31 = scmp.eq.s32.totalorder %s14, 1
    %p32 = por %p30, %p31
    %p33 = scmp.ne.s32.totalorder %s22, %s23
    %p34 = scmp.eq.s32.totalorder %s14, 0
    %p35 = por %p33, %p34
    %p36 = scmp.ne.s32.totalorder %s22, %s23
    %p37 = scmp.eq.s32.totalorder %s15, 1
    %p38 = por %p36, %p37
    %p40 = scmp.ne.s32.totalorder %s23, %s39
    %p41 = scmp.eq.s32.totalorder %s15, 0
    %p42 = por %p40, %p41
    %s44 = sadd.s32 %s43, 1
    %p47 = scmp.eq.s32.totalorder %s9, 1
    %p48 = scmp.ne.s32.totalorder %s43, %s45
    %p49 = scmp.eq.s32.totalorder %s9, 0
    %p50 = por %p48, %p49
    %p51 = scmp.ne.s32.totalorder %s43, %s45
    %p52 = scmp.eq.s32.totalorder %s14, 1
    %p53 = por %p51, %p52
    %p54 = scmp.ne.s32.totalorder %s45, %s46
    %p55 = scmp.eq.s32.totalorder %s14, 0
    %p56 = por %p54, %p55
    %p57 = scmp.ne.s32.totalorder %s45, %s46
    %p58 = scmp.eq.s32.totalorder %s15, 1
    %p59 = por %p57, %p58
    %p61 = scmp.ne.s32.totalorder %s46, %s60
    %p62 = scmp.eq.s32.totalorder %s15, 0
    %p63 = por %p61, %p62
    %s65 = sadd.s32 %s64, 1
    %p68 = scmp.eq.s32.totalorder %s9, 1
    %p69 = scmp.ne.s32.totalorder %s64, %s66
    %p70 = scmp.eq.s32.totalorder %s9, 0
    %p71 = por %p69, %p70
    %p72 = scmp.ne.s32.totalorder %s64, %s66
    %p73 = scmp.eq.s32.totalorder %s14, 1
    %p74 = por %p72, %p73
    %p75 = scmp.ne.s32.totalorder %s66, %s67
    %p76 = scmp.eq.s32.totalorder %s14, 0
    %p77 = por %p75, %p76
    %p78 = scmp.ne.s32.totalorder %s66, %s67
    %p79 = scmp.eq.s32.totalorder %s15, 1
    %p80 = por %p78, %p79
    %p82 = scmp.ne.s32.totalorder %s67, %s81
    %p83 = scmp.eq.s32.totalorder %s15, 0
    %p84 = por %p82, %p83
    %s85 = ssub.s32 %s9, %s16
    %p86 = scmp.eq.s32.totalorder %s85, 0
    %s88 = sadd.s32 %s87, 1
    %s89 = scalar_select %p86, %s87, %s88
    %p92 = pneg %p86
    %p93 = scmp.eq.s32.totalorder %s9, 1
    %p94 = por %p92, %p93
    %p95 = scmp.ne.s32.totalorder %s87, %s90
    %p96 = scmp.eq.s32.totalorder %s9, 0
    %p97 = por %p95, %p96
    %p98 = scmp.ne.s32.totalorder %s87, %s90
    %p99 = scmp.eq.s32.totalorder %s14, 1
    %p100 = por %p98, %p99
    %p101 = scmp.ne.s32.totalorder %s90, %s91
    %p102 = scmp.eq.s32.totalorder %s14, 0
    %p103 = por %p101, %p102
    %p104 = scmp.ne.s32.totalorder %s90, %s91
    %p105 = scmp.eq.s32.totalorder %s15, 1
    %p106 = por %p104, %p105
    %p108 = scmp.ne.s32.totalorder %s91, %s107
    %p109 = scmp.eq.s32.totalorder %s15, 0
    %p110 = por %p108, %p109
    %p111 = scmp.le.s32.totalorder 1, %s9
    %p112 = scmp.lt.s32.totalorder %s9, 3
    %p113 = pnand %p111, %p112
    %p114 = pneg %p113
    // Predicated region
    $region9: #{forward.5} parent=5 // pred_check
      _
    $region10: #{forward.5} parent=5 // pred_check_branch
      %116 = sbr.rel (%p113) target = $region12
    $region11: #{forward.5} parent=5 // pred_region
      %s117 = ssub.s32 %s9, 1
      // Predicated region
      $region13: #{forward.5} parent=11 // pred_check
        %p118 = pneg %p56
      $region14: #{forward.5} parent=11 // pred_check_branch
        %120 = sbr.rel (%p118) target = $region16
      $region15: #{forward.5} parent=11 // pred_region
        _
      $region16: #{forward.5} parent=11 // pred_fallthru
        _
      // Predicated region
      $region17: #{forward.5} parent=11 // pred_check
        %p121 = pneg %p77
      $region18: #{forward.5} parent=11 // pred_check_branch
        %123 = sbr.rel (%p121) target = $region20
      $region19: #{forward.5} parent=11 // pred_region
        _
      $region20: #{forward.5} parent=11 // pred_fallthru
        _
    $region12: #{forward.5} parent=5 // pred_fallthru
      _
    %p124 = scmp.lt.s32.totalorder %s9, 2
    // Predicated region
    $region21: #{forward.5} parent=5 // pred_check
      %p125 = pneg %p124
    $region22: #{forward.5} parent=5 // pred_check_branch
      %127 = sbr.rel (%p125) target = $region24
    $region23: #{forward.5} parent=5 // pred_region
      // Predicated region
      $region25: #{forward.5} parent=23 // pred_check
        %p128 = pneg %p29
      $region26: #{forward.5} parent=23 // pred_check_branch
        %130 = sbr.rel (%p128) target = $region28
      $region27: #{forward.5} parent=23 // pred_region
        %s131 = smul.u32 24, %s9
        %p132 = scmp.lt.s32.totalorder %s131, 47
        %s133 = scalar_select %p132, %s131, 47
        %s134 = smul.addr %s133, 16
        %s135 = smul.addr %s134, 4
        %s136 = scalar_lea.vmem %s0, %s135
        %s137 = smul.u32 24, %s9
      $region28: #{forward.5} parent=23 // pred_fallthru
        _
    $region24: #{forward.5} parent=5 // pred_fallthru
      _
    %p138 = scmp.le.s32.totalorder 1, %s9
    %p139 = scmp.lt.s32.totalorder %s9, 3
    %p140 = pnand %p138, %p139
    %p141 = pneg %p140
    // Predicated region
    $region29: #{forward.5} parent=5 // pred_check
      _
    $region30: #{forward.5} parent=5 // pred_check_branch
      %143 = sbr.rel (%p140) target = $region32
    $region31: #{forward.5} parent=5 // pred_region
      %s144 = ssub.s32 %s9, 1
      %s145 = smul.u32 24, %s14
      %p146 = scmp.lt.s32.totalorder %s145, 47
      %s147 = scalar_select %p146, %s145, 47
      %s148 = smul.addr %s147, 16
      %s149 = smul.addr %s148, 4
      %s150 = scalar_lea.vmem %s0, %s149
      %p151 = pneg %p35
      %p152 = pneg %p32
      %p153 = pneg %p56
      %p154 = pneg %p53
      %p155 = pneg %p77
      %p156 = pneg %p74
      %p157 = pneg %p103
      %p158 = pneg %p100
      %s159 = smul.u32 24, %s14
      %p160 = scmp.lt.s32.totalorder %s159, 47
      %s161 = scalar_select %p160, %s159, 47
      %s162 = smul.addr %s161, 4
      %s163 = scalar_lea.vmem %s3, %s162
      %s164 = smul.u32 24, %s14
      %p165 = scmp.lt.s32.totalorder %s164, 47
      %s166 = scalar_select %p165, %s164, 47
      %s167 = smul.addr %s166, 16
      %s168 = smul.addr %s167, 4
      %s169 = scalar_lea.vmem %s0, %s168
      %s170 = smul.u32 24, %s14
      %s171 = smul.u32 24, %s14
      %p172 = scmp.lt.s32.totalorder %s171, 47
      %s173 = scalar_select %p172, %s171, 47
      %s174 = smul.addr %s173, 4
      %s175 = scalar_lea.vmem %s3, %s174
      %s176 = smul.u32 24, %s14
      %v177 = vld [vmem:[%s169] sm:$0xff]
      %v178 = vld [vmem:[%s169 + $0x8] sm:$0xff]
      %v179 = vld [vmem:[%s169 + $0x10] sm:$0xff]
      %v180 = vld [vmem:[%s169 + $0x18] sm:$0xff]
      %v181 = vld [vmem:[%s169 + $0x20] sm:$0xff]
      %v182 = vld [vmem:[%s169 + $0x28] sm:$0xff]
      %v183 = vld [vmem:[%s169 + $0x30] sm:$0xff]
      %v184 = vld [vmem:[%s169 + $0x38] sm:$0xff]
      %v185 = vld [vmem:[%s169 + $0x40] sm:$0xff]
      %v186 = vld [vmem:[%s169 + $0x48] sm:$0xff]
      %v187 = vld [vmem:[%s169 + $0x50] sm:$0xff]
      %v188 = vld [vmem:[%s169 + $0x58] sm:$0xff]
      %v189 = vld [vmem:[%s169 + $0x60] sm:$0xff]
      %v190 = vld [vmem:[%s169 + $0x68] sm:$0xff]
      %v191 = vld [vmem:[%s169 + $0x70] sm:$0xff]
      %v192 = vld [vmem:[%s169 + $0x78] sm:$0xff]
      %v193 = vld [vmem:[%s169 + $0x80] sm:$0xff]
      %v194 = vld [vmem:[%s169 + $0x88] sm:$0xff]
      %v195 = vld [vmem:[%s169 + $0x90] sm:$0xff]
      %v196 = vld [vmem:[%s169 + $0x98] sm:$0xff]
      %v197 = vld [vmem:[%s169 + $0xa0] sm:$0xff]
      %v198 = vld [vmem:[%s169 + $0xa8] sm:$0xff]
      %v199 = vld [vmem:[%s169 + $0xb0] sm:$0xff]
      %v200 = vld [vmem:[%s169 + $0xb8] sm:$0xff]
      %v201 = vld [vmem:[%s169 + $0xc0] sm:$0xff]
      %v202 = vld [vmem:[%s169 + $0xc8] sm:$0xff]
      %v203 = vld [vmem:[%s169 + $0xd0] sm:$0xff]
      %v204 = vld [vmem:[%s169 + $0xd8] sm:$0xff]
      %v205 = vld [vmem:[%s169 + $0xe0] sm:$0xff]
      %v206 = vld [vmem:[%s169 + $0xe8] sm:$0xff]
      %v207 = vld [vmem:[%s169 + $0xf0] sm:$0xff]
      %v208 = vld [vmem:[%s169 + $0xf8] sm:$0xff]
      %v209 = vld [vmem:[%s169 + $0x100] sm:$0xff]
      %v210 = vld [vmem:[%s169 + $0x108] sm:$0xff]
      %v211 = vld [vmem:[%s169 + $0x110] sm:$0xff]
      %v212 = vld [vmem:[%s169 + $0x118] sm:$0xff]
      %v213 = vld [vmem:[%s169 + $0x120] sm:$0xff]
      %v214 = vld [vmem:[%s169 + $0x128] sm:$0xff]
      %v215 = vld [vmem:[%s169 + $0x130] sm:$0xff]
      %v216 = vld [vmem:[%s169 + $0x138] sm:$0xff]
      %v217 = vld [vmem:[%s169 + $0x140] sm:$0xff]
      %v218 = vld [vmem:[%s169 + $0x148] sm:$0xff]
      %v219 = vld [vmem:[%s169 + $0x150] sm:$0xff]
      %v220 = vld [vmem:[%s169 + $0x158] sm:$0xff]
      %v221 = vld [vmem:[%s169 + $0x160] sm:$0xff]
      %v222 = vld [vmem:[%s169 + $0x168] sm:$0xff]
      %v223 = vld [vmem:[%s169 + $0x170] sm:$0xff]
      %v224 = vld [vmem:[%s169 + $0x178] sm:$0xff]
      %v225 = vld [vmem:[%s169 + $0x180] sm:$0xff]
      %v226 = vld [vmem:[%s169 + $0x188] sm:$0xff]
      %v227 = vld [vmem:[%s169 + $0x190] sm:$0xff]
      %v228 = vld [vmem:[%s169 + $0x198] sm:$0xff]
      %v229 = vld [vmem:[%s169 + $0x1a0] sm:$0xff]
      %v230 = vld [vmem:[%s169 + $0x1a8] sm:$0xff]
      %v231 = vld [vmem:[%s169 + $0x1b0] sm:$0xff]
      %v232 = vld [vmem:[%s169 + $0x1b8] sm:$0xff]
      %v233 = vld [vmem:[%s169 + $0x1c0] sm:$0xff]
      %v234 = vld [vmem:[%s169 + $0x1c8] sm:$0xff]
      %v235 = vld [vmem:[%s169 + $0x1d0] sm:$0xff]
      %v236 = vld [vmem:[%s169 + $0x1d8] sm:$0xff]
      %v237 = vld [vmem:[%s169 + $0x1e0] sm:$0xff]
      %v238 = vld [vmem:[%s169 + $0x1e8] sm:$0xff]
      %v239 = vld [vmem:[%s169 + $0x1f0] sm:$0xff]
      %v240 = vld [vmem:[%s169 + $0x1f8] sm:$0xff]
      %v241 = vld [vmem:[%s169 + $0x200] sm:$0xff]
      %v242 = vld [vmem:[%s169 + $0x208] sm:$0xff]
      %v243 = vld [vmem:[%s169 + $0x210] sm:$0xff]
      %v244 = vld [vmem:[%s169 + $0x218] sm:$0xff]
      %v245 = vld [vmem:[%s169 + $0x220] sm:$0xff]
      %v246 = vld [vmem:[%s169 + $0x228] sm:$0xff]
      %v247 = vld [vmem:[%s169 + $0x230] sm:$0xff]
      %v248 = vld [vmem:[%s169 + $0x238] sm:$0xff]
      %v249 = vld [vmem:[%s169 + $0x240] sm:$0xff]
      %v250 = vld [vmem:[%s169 + $0x248] sm:$0xff]
      %v251 = vld [vmem:[%s169 + $0x250] sm:$0xff]
      %v252 = vld [vmem:[%s169 + $0x258] sm:$0xff]
      %v253 = vld [vmem:[%s169 + $0x260] sm:$0xff]
      %v254 = vld [vmem:[%s169 + $0x268] sm:$0xff]
      %v255 = vld [vmem:[%s169 + $0x270] sm:$0xff]
      %v256 = vld [vmem:[%s169 + $0x278] sm:$0xff]
      %v257 = vld [vmem:[%s169 + $0x280] sm:$0xff]
      %v258 = vld [vmem:[%s169 + $0x288] sm:$0xff]
      %v259 = vld [vmem:[%s169 + $0x290] sm:$0xff]
      %v260 = vld [vmem:[%s169 + $0x298] sm:$0xff]
      %v261 = vld [vmem:[%s169 + $0x2a0] sm:$0xff]
      %v262 = vld [vmem:[%s169 + $0x2a8] sm:$0xff]
      %v263 = vld [vmem:[%s169 + $0x2b0] sm:$0xff]
      %v264 = vld [vmem:[%s169 + $0x2b8] sm:$0xff]
      %v265 = vld [vmem:[%s169 + $0x2c0] sm:$0xff]
      %v266 = vld [vmem:[%s169 + $0x2c8] sm:$0xff]
      %v267 = vld [vmem:[%s169 + $0x2d0] sm:$0xff]
      %v268 = vld [vmem:[%s169 + $0x2d8] sm:$0xff]
      %v269 = vld [vmem:[%s169 + $0x2e0] sm:$0xff]
      %v270 = vld [vmem:[%s169 + $0x2e8] sm:$0xff]
      %v271 = vld [vmem:[%s169 + $0x2f0] sm:$0xff]
      %v272 = vld [vmem:[%s169 + $0x2f8] sm:$0xff]
      %v273 = vld [vmem:[%s169 + $0x300] sm:$0xff]
      %v274 = vld [vmem:[%s169 + $0x308] sm:$0xff]
      %v275 = vld [vmem:[%s169 + $0x310] sm:$0xff]
      %v276 = vld [vmem:[%s169 + $0x318] sm:$0xff]
      %v277 = vld [vmem:[%s169 + $0x320] sm:$0xff]
      %v278 = vld [vmem:[%s169 + $0x328] sm:$0xff]
      %v279 = vld [vmem:[%s169 + $0x330] sm:$0xff]
      %v280 = vld [vmem:[%s169 + $0x338] sm:$0xff]
      %v281 = vld [vmem:[%s169 + $0x340] sm:$0xff]
      %v282 = vld [vmem:[%s169 + $0x348] sm:$0xff]
      %v283 = vld [vmem:[%s169 + $0x350] sm:$0xff]
      %v284 = vld [vmem:[%s169 + $0x358] sm:$0xff]
      %v285 = vld [vmem:[%s169 + $0x360] sm:$0xff]
      %v286 = vld [vmem:[%s169 + $0x368] sm:$0xff]
      %v287 = vld [vmem:[%s169 + $0x370] sm:$0xff]
      %v288 = vld [vmem:[%s169 + $0x378] sm:$0xff]
      %v289 = vld [vmem:[%s169 + $0x380] sm:$0xff]
      %v290 = vld [vmem:[%s169 + $0x388] sm:$0xff]
      %v291 = vld [vmem:[%s169 + $0x390] sm:$0xff]
      %v292 = vld [vmem:[%s169 + $0x398] sm:$0xff]
      %v293 = vld [vmem:[%s169 + $0x3a0] sm:$0xff]
      %v294 = vld [vmem:[%s169 + $0x3a8] sm:$0xff]
      %v295 = vld [vmem:[%s169 + $0x3b0] sm:$0xff]
      %v296 = vld [vmem:[%s169 + $0x3b8] sm:$0xff]
      %v297 = vld [vmem:[%s169 + $0x3c0] sm:$0xff]
      %v298 = vld [vmem:[%s169 + $0x3c8] sm:$0xff]
      %v299 = vld [vmem:[%s169 + $0x3d0] sm:$0xff]
      %v300 = vld [vmem:[%s169 + $0x3d8] sm:$0xff]
      %v301 = vld [vmem:[%s169 + $0x3e0] sm:$0xff]
      %v302 = vld [vmem:[%s169 + $0x3e8] sm:$0xff]
      %v303 = vld [vmem:[%s169 + $0x3f0] sm:$0xff]
      %v304 = vld [vmem:[%s169 + $0x3f8] sm:$0xff]
      %v305 = vld [vmem:[%s169 + $0x400] sm:$0xff]
      %v306 = vld [vmem:[%s169 + $0x408] sm:$0xff]
      %v307 = vld [vmem:[%s169 + $0x410] sm:$0xff]
      %v308 = vld [vmem:[%s169 + $0x418] sm:$0xff]
      %v309 = vld [vmem:[%s169 + $0x420] sm:$0xff]
      %v310 = vld [vmem:[%s169 + $0x428] sm:$0xff]
      %v311 = vld [vmem:[%s169 + $0x430] sm:$0xff]
      %v312 = vld [vmem:[%s169 + $0x438] sm:$0xff]
      %v313 = vld [vmem:[%s169 + $0x440] sm:$0xff]
      %v314 = vld [vmem:[%s169 + $0x448] sm:$0xff]
      %v315 = vld [vmem:[%s169 + $0x450] sm:$0xff]
      %v316 = vld [vmem:[%s169 + $0x458] sm:$0xff]
      %v317 = vld [vmem:[%s169 + $0x460] sm:$0xff]
      %v318 = vld [vmem:[%s169 + $0x468] sm:$0xff]
      %v319 = vld [vmem:[%s169 + $0x470] sm:$0xff]
      %v320 = vld [vmem:[%s169 + $0x478] sm:$0xff]
      %v321 = vld [vmem:[%s169 + $0x480] sm:$0xff]
      %v322 = vld [vmem:[%s169 + $0x488] sm:$0xff]
      %v323 = vld [vmem:[%s169 + $0x490] sm:$0xff]
      %v324 = vld [vmem:[%s169 + $0x498] sm:$0xff]
      %v325 = vld [vmem:[%s169 + $0x4a0] sm:$0xff]
      %v326 = vld [vmem:[%s169 + $0x4a8] sm:$0xff]
      %v327 = vld [vmem:[%s169 + $0x4b0] sm:$0xff]
      %v328 = vld [vmem:[%s169 + $0x4b8] sm:$0xff]
      %v329 = vld [vmem:[%s169 + $0x4c0] sm:$0xff]
      %v330 = vld [vmem:[%s169 + $0x4c8] sm:$0xff]
      %v331 = vld [vmem:[%s169 + $0x4d0] sm:$0xff]
      %v332 = vld [vmem:[%s169 + $0x4d8] sm:$0xff]
      %v333 = vld [vmem:[%s169 + $0x4e0] sm:$0xff]
      %v334 = vld [vmem:[%s169 + $0x4e8] sm:$0xff]
      %v335 = vld [vmem:[%s169 + $0x4f0] sm:$0xff]
      %v336 = vld [vmem:[%s169 + $0x4f8] sm:$0xff]
      %v337 = vld [vmem:[%s169 + $0x500] sm:$0xff]
      %v338 = vld [vmem:[%s169 + $0x508] sm:$0xff]
      %v339 = vld [vmem:[%s169 + $0x510] sm:$0xff]
      %v340 = vld [vmem:[%s169 + $0x518] sm:$0xff]
      %v341 = vld [vmem:[%s169 + $0x520] sm:$0xff]
      %v342 = vld [vmem:[%s169 + $0x528] sm:$0xff]
      %v343 = vld [vmem:[%s169 + $0x530] sm:$0xff]
      %v344 = vld [vmem:[%s169 + $0x538] sm:$0xff]
      %v345 = vld [vmem:[%s169 + $0x540] sm:$0xff]
      %v346 = vld [vmem:[%s169 + $0x548] sm:$0xff]
      %v347 = vld [vmem:[%s169 + $0x550] sm:$0xff]
      %v348 = vld [vmem:[%s169 + $0x558] sm:$0xff]
      %v349 = vld [vmem:[%s169 + $0x560] sm:$0xff]
      %v350 = vld [vmem:[%s169 + $0x568] sm:$0xff]
      %v351 = vld [vmem:[%s169 + $0x570] sm:$0xff]
      %v352 = vld [vmem:[%s169 + $0x578] sm:$0xff]
      %v353 = vld [vmem:[%s169 + $0x580] sm:$0xff]
      %v354 = vld [vmem:[%s169 + $0x588] sm:$0xff]
      %v355 = vld [vmem:[%s169 + $0x590] sm:$0xff]
      %v356 = vld [vmem:[%s169 + $0x598] sm:$0xff]
      %v357 = vld [vmem:[%s169 + $0x5a0] sm:$0xff]
      %v358 = vld [vmem:[%s169 + $0x5a8] sm:$0xff]
      %v359 = vld [vmem:[%s169 + $0x5b0] sm:$0xff]
      %v360 = vld [vmem:[%s169 + $0x5b8] sm:$0xff]
      %v361 = vld [vmem:[%s169 + $0x5c0] sm:$0xff]
      %v362 = vld [vmem:[%s169 + $0x5c8] sm:$0xff]
      %v363 = vld [vmem:[%s169 + $0x5d0] sm:$0xff]
      %v364 = vld [vmem:[%s169 + $0x5d8] sm:$0xff]
      %v365 = vld [vmem:[%s169 + $0x5e0] sm:$0xff]
      %v366 = vld [vmem:[%s169 + $0x5e8] sm:$0xff]
      %v367 = vld [vmem:[%s169 + $0x5f0] sm:$0xff]
      %v368 = vld [vmem:[%s169 + $0x5f8] sm:$0xff]
      %v369 = vld [vmem:[%s1] sm:$0xf]
      %v370 = vld [vmem:[%s1 + $0x4] sm:$0xf]
      %v371 = vld [vmem:[%s1 + $0x8] sm:$0xf]
      %v372 = vld [vmem:[%s1 + $0xc] sm:$0xf]
      %v373 = vld [vmem:[%s1 + $0x10] sm:$0xf]
      %v374 = vld [vmem:[%s1 + $0x14] sm:$0xf]
      %v375 = vld [vmem:[%s1 + $0x18] sm:$0xf]
      %v376 = vld [vmem:[%s1 + $0x1c] sm:$0xf]
      %v377 = vld [vmem:[%s1 + $0x20] sm:$0xf]
      %v378 = vld [vmem:[%s1 + $0x24] sm:$0xf]
      %v379 = vld [vmem:[%s1 + $0x28] sm:$0xf]
      %v380 = vld [vmem:[%s1 + $0x2c] sm:$0xf]
      %v381 = vld [vmem:[%s1 + $0x30] sm:$0xf]
      %v382 = vld [vmem:[%s1 + $0x34] sm:$0xf]
      %v383 = vld [vmem:[%s1 + $0x38] sm:$0xf]
      %v384 = vld [vmem:[%s1 + $0x3c] sm:$0xf]
      %v385 = vld [vmem:[%s1 + $0x40] sm:$0xf]
      %v386 = vld [vmem:[%s1 + $0x44] sm:$0xf]
      %v387 = vld [vmem:[%s1 + $0x48] sm:$0xf]
      %v388 = vld [vmem:[%s1 + $0x4c] sm:$0xf]
      %v389 = vld [vmem:[%s1 + $0x50] sm:$0xf]
      %v390 = vld [vmem:[%s1 + $0x54] sm:$0xf]
      %v391 = vld [vmem:[%s1 + $0x58] sm:$0xf]
      %v392 = vld [vmem:[%s1 + $0x5c] sm:$0xf]
      %v393 = vld [vmem:[%s1 + $0x60] sm:$0xf]
      %v394 = vld [vmem:[%s1 + $0x64] sm:$0xf]
      %v395 = vld [vmem:[%s1 + $0x68] sm:$0xf]
      %v396 = vld [vmem:[%s1 + $0x6c] sm:$0xf]
      %v397 = vld [vmem:[%s1 + $0x70] sm:$0xf]
      %v398 = vld [vmem:[%s1 + $0x74] sm:$0xf]
      %v399 = vld [vmem:[%s1 + $0x78] sm:$0xf]
      %v400 = vld [vmem:[%s1 + $0x7c] sm:$0xf]
      %v401 = vld [vmem:[%s1 + $0x80] sm:$0xf]
      %v402 = vld [vmem:[%s1 + $0x84] sm:$0xf]
      %v403 = vld [vmem:[%s1 + $0x88] sm:$0xf]
      %v404 = vld [vmem:[%s1 + $0x8c] sm:$0xf]
      %v405 = vld [vmem:[%s1 + $0x90] sm:$0xf]
      %v406 = vld [vmem:[%s1 + $0x94] sm:$0xf]
      %v407 = vld [vmem:[%s1 + $0x98] sm:$0xf]
      %v408 = vld [vmem:[%s1 + $0x9c] sm:$0xf]
      %v409 = vld [vmem:[%s1 + $0xa0] sm:$0xf]
      %v410 = vld [vmem:[%s1 + $0xa4] sm:$0xf]
      %v411 = vld [vmem:[%s1 + $0xa8] sm:$0xf]
      %v412 = vld [vmem:[%s1 + $0xac] sm:$0xf]
      %v413 = vld [vmem:[%s1 + $0xb0] sm:$0xf]
      %v414 = vld [vmem:[%s1 + $0xb4] sm:$0xf]
      %v415 = vld [vmem:[%s1 + $0xb8] sm:$0xf]
      %v416 = vld [vmem:[%s1 + $0xbc] sm:$0xf]
      %v417 = vld [vmem:[%s1 + $0xc0] sm:$0xf]
      %v418 = vld [vmem:[%s1 + $0xc4] sm:$0xf]
      %v419 = vld [vmem:[%s1 + $0xc8] sm:$0xf]
      %v420 = vld [vmem:[%s1 + $0xcc] sm:$0xf]
      %v421 = vld [vmem:[%s1 + $0xd0] sm:$0xf]
      %v422 = vld [vmem:[%s1 + $0xd4] sm:$0xf]
      %v423 = vld [vmem:[%s1 + $0xd8] sm:$0xf]
      %v424 = vld [vmem:[%s1 + $0xdc] sm:$0xf]
      %v425 = vld [vmem:[%s1 + $0xe0] sm:$0xf]
      %v426 = vld [vmem:[%s1 + $0xe4] sm:$0xf]
      %v427 = vld [vmem:[%s1 + $0xe8] sm:$0xf]
      %v428 = vld [vmem:[%s1 + $0xec] sm:$0xf]
      %v429 = vld [vmem:[%s1 + $0xf0] sm:$0xf]
      %v430 = vld [vmem:[%s1 + $0xf4] sm:$0xf]
      %v431 = vld [vmem:[%s1 + $0xf8] sm:$0xf]
      %v432 = vld [vmem:[%s1 + $0xfc] sm:$0xf]
      %v433 = vld [vmem:[%s1 + $0x100] sm:$0xf]
      %v434 = vld [vmem:[%s1 + $0x104] sm:$0xf]
      %v435 = vld [vmem:[%s1 + $0x108] sm:$0xf]
      %v436 = vld [vmem:[%s1 + $0x10c] sm:$0xf]
      %v437 = vld [vmem:[%s1 + $0x110] sm:$0xf]
      %v438 = vld [vmem:[%s1 + $0x114] sm:$0xf]
      %v439 = vld [vmem:[%s1 + $0x118] sm:$0xf]
      %v440 = vld [vmem:[%s1 + $0x11c] sm:$0xf]
      %v441 = vld [vmem:[%s1 + $0x120] sm:$0xf]
      %v442 = vld [vmem:[%s1 + $0x124] sm:$0xf]
      %v443 = vld [vmem:[%s1 + $0x128] sm:$0xf]
      %v444 = vld [vmem:[%s1 + $0x12c] sm:$0xf]
      %v445 = vld [vmem:[%s1 + $0x130] sm:$0xf]
      %v446 = vld [vmem:[%s1 + $0x134] sm:$0xf]
      %v447 = vld [vmem:[%s1 + $0x138] sm:$0xf]
      %v448 = vld [vmem:[%s1 + $0x13c] sm:$0xf]
      %v449 = vld [vmem:[%s1 + $0x140] sm:$0xf]
      %v450 = vld [vmem:[%s1 + $0x144] sm:$0xf]
      %v451 = vld [vmem:[%s1 + $0x148] sm:$0xf]
      %v452 = vld [vmem:[%s1 + $0x14c] sm:$0xf]
      %v453 = vld [vmem:[%s1 + $0x150] sm:$0xf]
      %v454 = vld [vmem:[%s1 + $0x154] sm:$0xf]
      %v455 = vld [vmem:[%s1 + $0x158] sm:$0xf]
      %v456 = vld [vmem:[%s1 + $0x15c] sm:$0xf]
      %v457 = vld [vmem:[%s1 + $0x160] sm:$0xf]
      %v458 = vld [vmem:[%s1 + $0x164] sm:$0xf]
      %v459 = vld [vmem:[%s1 + $0x168] sm:$0xf]
      %v460 = vld [vmem:[%s1 + $0x16c] sm:$0xf]
      %v461 = vld [vmem:[%s1 + $0x170] sm:$0xf]
      %v462 = vld [vmem:[%s1 + $0x174] sm:$0xf]
      %v463 = vld [vmem:[%s1 + $0x178] sm:$0xf]
      %v464 = vld [vmem:[%s1 + $0x17c] sm:$0xf]
      %v465 = vld [vmem:[%s1 + $0x180] sm:$0xf]
      %v466 = vld [vmem:[%s1 + $0x184] sm:$0xf]
      %v467 = vld [vmem:[%s1 + $0x188] sm:$0xf]
      %v468 = vld [vmem:[%s1 + $0x18c] sm:$0xf]
      %v469 = vld [vmem:[%s1 + $0x190] sm:$0xf]
      %v470 = vld [vmem:[%s1 + $0x194] sm:$0xf]
      %v471 = vld [vmem:[%s1 + $0x198] sm:$0xf]
      %v472 = vld [vmem:[%s1 + $0x19c] sm:$0xf]
      %v473 = vld [vmem:[%s1 + $0x1a0] sm:$0xf]
      %v474 = vld [vmem:[%s1 + $0x1a4] sm:$0xf]
      %v475 = vld [vmem:[%s1 + $0x1a8] sm:$0xf]
      %v476 = vld [vmem:[%s1 + $0x1ac] sm:$0xf]
      %v477 = vld [vmem:[%s1 + $0x1b0] sm:$0xf]
      %v478 = vld [vmem:[%s1 + $0x1b4] sm:$0xf]
      %v479 = vld [vmem:[%s1 + $0x1b8] sm:$0xf]
      %v480 = vld [vmem:[%s1 + $0x1bc] sm:$0xf]
      %v481 = vld [vmem:[%s1 + $0x1c0] sm:$0xf]
      %v482 = vld [vmem:[%s1 + $0x1c4] sm:$0xf]
      %v483 = vld [vmem:[%s1 + $0x1c8] sm:$0xf]
      %v484 = vld [vmem:[%s1 + $0x1cc] sm:$0xf]
      %v485 = vld [vmem:[%s1 + $0x1d0] sm:$0xf]
      %v486 = vld [vmem:[%s1 + $0x1d4] sm:$0xf]
      %v487 = vld [vmem:[%s1 + $0x1d8] sm:$0xf]
      %v488 = vld [vmem:[%s1 + $0x1dc] sm:$0xf]
      %v489 = vld [vmem:[%s1 + $0x1e0] sm:$0xf]
      %v490 = vld [vmem:[%s1 + $0x1e4] sm:$0xf]
      %v491 = vld [vmem:[%s1 + $0x1e8] sm:$0xf]
      %v492 = vld [vmem:[%s1 + $0x1ec] sm:$0xf]
      %v493 = vld [vmem:[%s1 + $0x1f0] sm:$0xf]
      %v494 = vld [vmem:[%s1 + $0x1f4] sm:$0xf]
      %v495 = vld [vmem:[%s1 + $0x1f8] sm:$0xf]
      %v496 = vld [vmem:[%s1 + $0x1fc] sm:$0xf]
      %v497 = vld [vmem:[%s1 + $0x200] sm:$0xf]
      %v498 = vld [vmem:[%s1 + $0x204] sm:$0xf]
      %v499 = vld [vmem:[%s1 + $0x208] sm:$0xf]
      %v500 = vld [vmem:[%s1 + $0x20c] sm:$0xf]
      %v501 = vld [vmem:[%s1 + $0x210] sm:$0xf]
      %v502 = vld [vmem:[%s1 + $0x214] sm:$0xf]
      %v503 = vld [vmem:[%s1 + $0x218] sm:$0xf]
      %v504 = vld [vmem:[%s1 + $0x21c] sm:$0xf]
      %v505 = vld [vmem:[%s1 + $0x220] sm:$0xf]
      %v506 = vld [vmem:[%s1 + $0x224] sm:$0xf]
      %v507 = vld [vmem:[%s1 + $0x228] sm:$0xf]
      %v508 = vld [vmem:[%s1 + $0x22c] sm:$0xf]
      %v509 = vld [vmem:[%s1 + $0x230] sm:$0xf]
      %v510 = vld [vmem:[%s1 + $0x234] sm:$0xf]
      %v511 = vld [vmem:[%s1 + $0x238] sm:$0xf]
      %v512 = vld [vmem:[%s1 + $0x23c] sm:$0xf]
      %v513 = vld [vmem:[%s1 + $0x240] sm:$0xf]
      %v514 = vld [vmem:[%s1 + $0x244] sm:$0xf]
      %v515 = vld [vmem:[%s1 + $0x248] sm:$0xf]
      %v516 = vld [vmem:[%s1 + $0x24c] sm:$0xf]
      %v517 = vld [vmem:[%s1 + $0x250] sm:$0xf]
      %v518 = vld [vmem:[%s1 + $0x254] sm:$0xf]
      %v519 = vld [vmem:[%s1 + $0x258] sm:$0xf]
      %v520 = vld [vmem:[%s1 + $0x25c] sm:$0xf]
      %v521 = vld [vmem:[%s1 + $0x260] sm:$0xf]
      %v522 = vld [vmem:[%s1 + $0x264] sm:$0xf]
      %v523 = vld [vmem:[%s1 + $0x268] sm:$0xf]
      %v524 = vld [vmem:[%s1 + $0x26c] sm:$0xf]
      %v525 = vld [vmem:[%s1 + $0x270] sm:$0xf]
      %v526 = vld [vmem:[%s1 + $0x274] sm:$0xf]
      %v527 = vld [vmem:[%s1 + $0x278] sm:$0xf]
      %v528 = vld [vmem:[%s1 + $0x27c] sm:$0xf]
      %v529 = vld [vmem:[%s1 + $0x280] sm:$0xf]
      %v530 = vld [vmem:[%s1 + $0x284] sm:$0xf]
      %v531 = vld [vmem:[%s1 + $0x288] sm:$0xf]
      %v532 = vld [vmem:[%s1 + $0x28c] sm:$0xf]
      %v533 = vld [vmem:[%s1 + $0x290] sm:$0xf]
      %v534 = vld [vmem:[%s1 + $0x294] sm:$0xf]
      %v535 = vld [vmem:[%s1 + $0x298] sm:$0xf]
      %v536 = vld [vmem:[%s1 + $0x29c] sm:$0xf]
      %v537 = vld [vmem:[%s1 + $0x2a0] sm:$0xf]
      %v538 = vld [vmem:[%s1 + $0x2a4] sm:$0xf]
      %v539 = vld [vmem:[%s1 + $0x2a8] sm:$0xf]
      %v540 = vld [vmem:[%s1 + $0x2ac] sm:$0xf]
      %v541 = vld [vmem:[%s1 + $0x2b0] sm:$0xf]
      %v542 = vld [vmem:[%s1 + $0x2b4] sm:$0xf]
      %v543 = vld [vmem:[%s1 + $0x2b8] sm:$0xf]
      %v544 = vld [vmem:[%s1 + $0x2bc] sm:$0xf]
      %v545 = vld [vmem:[%s1 + $0x2c0] sm:$0xf]
      %v546 = vld [vmem:[%s1 + $0x2c4] sm:$0xf]
      %v547 = vld [vmem:[%s1 + $0x2c8] sm:$0xf]
      %v548 = vld [vmem:[%s1 + $0x2cc] sm:$0xf]
      %v549 = vld [vmem:[%s1 + $0x2d0] sm:$0xf]
      %v550 = vld [vmem:[%s1 + $0x2d4] sm:$0xf]
      %v551 = vld [vmem:[%s1 + $0x2d8] sm:$0xf]
      %v552 = vld [vmem:[%s1 + $0x2dc] sm:$0xf]
      %v553 = vld [vmem:[%s1 + $0x2e0] sm:$0xf]
      %v554 = vld [vmem:[%s1 + $0x2e4] sm:$0xf]
      %v555 = vld [vmem:[%s1 + $0x2e8] sm:$0xf]
      %v556 = vld [vmem:[%s1 + $0x2ec] sm:$0xf]
      %v557 = vld [vmem:[%s1 + $0x2f0] sm:$0xf]
      %v558 = vld [vmem:[%s1 + $0x2f4] sm:$0xf]
      %v559 = vld [vmem:[%s1 + $0x2f8] sm:$0xf]
      %v560 = vld [vmem:[%s1 + $0x2fc] sm:$0xf]
      %v561 = vld [vmem:[%s1 + $0x300] sm:$0xf]
      %v562 = vld [vmem:[%s1 + $0x304] sm:$0xf]
      %v563 = vld [vmem:[%s1 + $0x308] sm:$0xf]
      %v564 = vld [vmem:[%s1 + $0x30c] sm:$0xf]
      %v565 = vld [vmem:[%s1 + $0x310] sm:$0xf]
      %v566 = vld [vmem:[%s1 + $0x314] sm:$0xf]
      %v567 = vld [vmem:[%s1 + $0x318] sm:$0xf]
      %v568 = vld [vmem:[%s1 + $0x31c] sm:$0xf]
      %v569 = vld [vmem:[%s1 + $0x320] sm:$0xf]
      %v570 = vld [vmem:[%s1 + $0x324] sm:$0xf]
      %v571 = vld [vmem:[%s1 + $0x328] sm:$0xf]
      %v572 = vld [vmem:[%s1 + $0x32c] sm:$0xf]
      %v573 = vld [vmem:[%s1 + $0x330] sm:$0xf]
      %v574 = vld [vmem:[%s1 + $0x334] sm:$0xf]
      %v575 = vld [vmem:[%s1 + $0x338] sm:$0xf]
      %v576 = vld [vmem:[%s1 + $0x33c] sm:$0xf]
      %v577 = vld [vmem:[%s1 + $0x340] sm:$0xf]
      %v578 = vld [vmem:[%s1 + $0x344] sm:$0xf]
      %v579 = vld [vmem:[%s1 + $0x348] sm:$0xf]
      %v580 = vld [vmem:[%s1 + $0x34c] sm:$0xf]
      %v581 = vld [vmem:[%s1 + $0x350] sm:$0xf]
      %v582 = vld [vmem:[%s1 + $0x354] sm:$0xf]
      %v583 = vld [vmem:[%s1 + $0x358] sm:$0xf]
      %v584 = vld [vmem:[%s1 + $0x35c] sm:$0xf]
      %v585 = vld [vmem:[%s1 + $0x360] sm:$0xf]
      %v586 = vld [vmem:[%s1 + $0x364] sm:$0xf]
      %v587 = vld [vmem:[%s1 + $0x368] sm:$0xf]
      %v588 = vld [vmem:[%s1 + $0x36c] sm:$0xf]
      %v589 = vld [vmem:[%s1 + $0x370] sm:$0xf]
      %v590 = vld [vmem:[%s1 + $0x374] sm:$0xf]
      %v591 = vld [vmem:[%s1 + $0x378] sm:$0xf]
      %v592 = vld [vmem:[%s1 + $0x37c] sm:$0xf]
      %v593 = vld [vmem:[%s1 + $0x380] sm:$0xf]
      %v594 = vld [vmem:[%s1 + $0x384] sm:$0xf]
      %v595 = vld [vmem:[%s1 + $0x388] sm:$0xf]
      %v596 = vld [vmem:[%s1 + $0x38c] sm:$0xf]
      %v597 = vld [vmem:[%s1 + $0x390] sm:$0xf]
      %v598 = vld [vmem:[%s1 + $0x394] sm:$0xf]
      %v599 = vld [vmem:[%s1 + $0x398] sm:$0xf]
      %v600 = vld [vmem:[%s1 + $0x39c] sm:$0xf]
      %v601 = vld [vmem:[%s1 + $0x3a0] sm:$0xf]
      %v602 = vld [vmem:[%s1 + $0x3a4] sm:$0xf]
      %v603 = vld [vmem:[%s1 + $0x3a8] sm:$0xf]
      %v604 = vld [vmem:[%s1 + $0x3ac] sm:$0xf]
      %v605 = vld [vmem:[%s1 + $0x3b0] sm:$0xf]
      %v606 = vld [vmem:[%s1 + $0x3b4] sm:$0xf]
      %v607 = vld [vmem:[%s1 + $0x3b8] sm:$0xf]
      %v608 = vld [vmem:[%s1 + $0x3bc] sm:$0xf]
      %v609 = vld [vmem:[%s1 + $0x3c0] sm:$0xf]
      %v610 = vld [vmem:[%s1 + $0x3c4] sm:$0xf]
      %v611 = vld [vmem:[%s1 + $0x3c8] sm:$0xf]
      %v612 = vld [vmem:[%s1 + $0x3cc] sm:$0xf]
      %v613 = vld [vmem:[%s1 + $0x3d0] sm:$0xf]
      %v614 = vld [vmem:[%s1 + $0x3d4] sm:$0xf]
      %v615 = vld [vmem:[%s1 + $0x3d8] sm:$0xf]
      %v616 = vld [vmem:[%s1 + $0x3dc] sm:$0xf]
      %v617 = vld [vmem:[%s1 + $0x3e0] sm:$0xf]
      %v618 = vld [vmem:[%s1 + $0x3e4] sm:$0xf]
      %v619 = vld [vmem:[%s1 + $0x3e8] sm:$0xf]
      %v620 = vld [vmem:[%s1 + $0x3ec] sm:$0xf]
      %v621 = vld [vmem:[%s1 + $0x3f0] sm:$0xf]
      %v622 = vld [vmem:[%s1 + $0x3f4] sm:$0xf]
      %v623 = vld [vmem:[%s1 + $0x3f8] sm:$0xf]
      %v624 = vld [vmem:[%s1 + $0x3fc] sm:$0xf]
      %v625 = vld [vmem:[%s2] sm:$0x1]
      %v627 = vperm.slane %v625, 0
      %v821 = vunpack.c.l.b16 %v177
      %v822 = vunpack.c.h.b16 %v177
      %v823 = vunpack.c.l.b16 %v178
      %v824 = vunpack.c.h.b16 %v178
      %v825 = vunpack.c.l.b16 %v179
      %v826 = vunpack.c.h.b16 %v179
      %v827 = vunpack.c.l.b16 %v180
      %v828 = vunpack.c.h.b16 %v180
      %v829 = vunpack.c.l.b16 %v181
      %v830 = vunpack.c.h.b16 %v181
      %v831 = vunpack.c.l.b16 %v182
      %v832 = vunpack.c.h.b16 %v182
      %v833 = vunpack.c.l.b16 %v183
      %v834 = vunpack.c.h.b16 %v183
      %v835 = vunpack.c.l.b16 %v184
      %v836 = vunpack.c.h.b16 %v184
      %v837 = vunpack.c.l.b16 %v185
      %v838 = vunpack.c.h.b16 %v185
      %v839 = vunpack.c.l.b16 %v186
      %v840 = vunpack.c.h.b16 %v186
      %v841 = vunpack.c.l.b16 %v187
      %v842 = vunpack.c.h.b16 %v187
      %v843 = vunpack.c.l.b16 %v188
      %v844 = vunpack.c.h.b16 %v188
      %v845 = vunpack.c.l.b16 %v189
      %v846 = vunpack.c.h.b16 %v189
      %v847 = vunpack.c.l.b16 %v190
      %v848 = vunpack.c.h.b16 %v190
      %v849 = vunpack.c.l.b16 %v191
      %v850 = vunpack.c.h.b16 %v191
      %v851 = vunpack.c.l.b16 %v192
      %v852 = vunpack.c.h.b16 %v192
      %v853 = vunpack.c.l.b16 %v193
      %v854 = vunpack.c.h.b16 %v193
      %v855 = vunpack.c.l.b16 %v194
      %v856 = vunpack.c.h.b16 %v194
      %v857 = vunpack.c.l.b16 %v195
      %v858 = vunpack.c.h.b16 %v195
      %v859 = vunpack.c.l.b16 %v196
      %v860 = vunpack.c.h.b16 %v196
      %v861 = vunpack.c.l.b16 %v197
      %v862 = vunpack.c.h.b16 %v197
      %v863 = vunpack.c.l.b16 %v198
      %v864 = vunpack.c.h.b16 %v198
      %v865 = vunpack.c.l.b16 %v199
      %v866 = vunpack.c.h.b16 %v199
      %v867 = vunpack.c.l.b16 %v200
      %v868 = vunpack.c.h.b16 %v200
      %v869 = vunpack.c.l.b16 %v201
      %v870 = vunpack.c.h.b16 %v201
      %v871 = vunpack.c.l.b16 %v202
      %v872 = vunpack.c.h.b16 %v202
      %v873 = vunpack.c.l.b16 %v203
      %v874 = vunpack.c.h.b16 %v203
      %v875 = vunpack.c.l.b16 %v204
      %v876 = vunpack.c.h.b16 %v204
      %v877 = vunpack.c.l.b16 %v205
      %v878 = vunpack.c.h.b16 %v205
      %v879 = vunpack.c.l.b16 %v206
      %v880 = vunpack.c.h.b16 %v206
      %v881 = vunpack.c.l.b16 %v207
      %v882 = vunpack.c.h.b16 %v207
      %v883 = vunpack.c.l.b16 %v208
      %v884 = vunpack.c.h.b16 %v208
      %v885 = vunpack.c.l.b16 %v209
      %v886 = vunpack.c.h.b16 %v209
      %v887 = vunpack.c.l.b16 %v210
      %v888 = vunpack.c.h.b16 %v210
      %v889 = vunpack.c.l.b16 %v211
      %v890 = vunpack.c.h.b16 %v211
      %v891 = vunpack.c.l.b16 %v212
      %v892 = vunpack.c.h.b16 %v212
      %v893 = vunpack.c.l.b16 %v213
      %v894 = vunpack.c.h.b16 %v213
      %v895 = vunpack.c.l.b16 %v214
      %v896 = vunpack.c.h.b16 %v214
      %v897 = vunpack.c.l.b16 %v215
      %v898 = vunpack.c.h.b16 %v215
      %v899 = vunpack.c.l.b16 %v216
      %v900 = vunpack.c.h.b16 %v216
      %v901 = vunpack.c.l.b16 %v217
      %v902 = vunpack.c.h.b16 %v217
      %v903 = vunpack.c.l.b16 %v218
      %v904 = vunpack.c.h.b16 %v218
      %v905 = vunpack.c.l.b16 %v219
      %v906 = vunpack.c.h.b16 %v219
      %v907 = vunpack.c.l.b16 %v220
      %v908 = vunpack.c.h.b16 %v220
      %v909 = vunpack.c.l.b16 %v221
      %v910 = vunpack.c.h.b16 %v221
      %v911 = vunpack.c.l.b16 %v222
      %v912 = vunpack.c.h.b16 %v222
      %v913 = vunpack.c.l.b16 %v223
      %v914 = vunpack.c.h.b16 %v223
      %v915 = vunpack.c.l.b16 %v224
      %v916 = vunpack.c.h.b16 %v224
      %v917 = vunpack.c.l.b16 %v225
      %v918 = vunpack.c.h.b16 %v225
      %v919 = vunpack.c.l.b16 %v226
      %v920 = vunpack.c.h.b16 %v226
      %v921 = vunpack.c.l.b16 %v227
      %v922 = vunpack.c.h.b16 %v227
      %v923 = vunpack.c.l.b16 %v228
      %v924 = vunpack.c.h.b16 %v228
      %v925 = vunpack.c.l.b16 %v229
      %v926 = vunpack.c.h.b16 %v229
      %v927 = vunpack.c.l.b16 %v230
      %v928 = vunpack.c.h.b16 %v230
      %v929 = vunpack.c.l.b16 %v231
      %v930 = vunpack.c.h.b16 %v231
      %v931 = vunpack.c.l.b16 %v232
      %v932 = vunpack.c.h.b16 %v232
      %v933 = vunpack.c.l.b16 %v233
      %v934 = vunpack.c.h.b16 %v233
      %v935 = vunpack.c.l.b16 %v234
      %v936 = vunpack.c.h.b16 %v234
      %v937 = vunpack.c.l.b16 %v235
      %v938 = vunpack.c.h.b16 %v235
      %v939 = vunpack.c.l.b16 %v236
      %v940 = vunpack.c.h.b16 %v236
      %v941 = vunpack.c.l.b16 %v237
      %v942 = vunpack.c.h.b16 %v237
      %v943 = vunpack.c.l.b16 %v238
      %v944 = vunpack.c.h.b16 %v238
      %v945 = vunpack.c.l.b16 %v239
      %v946 = vunpack.c.h.b16 %v239
      %v947 = vunpack.c.l.b16 %v240
      %v948 = vunpack.c.h.b16 %v240
      %v949 = vunpack.c.l.b16 %v241
      %v950 = vunpack.c.h.b16 %v241
      %v951 = vunpack.c.l.b16 %v242
      %v952 = vunpack.c.h.b16 %v242
      %v953 = vunpack.c.l.b16 %v243
      %v954 = vunpack.c.h.b16 %v243
      %v955 = vunpack.c.l.b16 %v244
      %v956 = vunpack.c.h.b16 %v244
      %v957 = vunpack.c.l.b16 %v245
      %v958 = vunpack.c.h.b16 %v245
      %v959 = vunpack.c.l.b16 %v246
      %v960 = vunpack.c.h.b16 %v246
      %v961 = vunpack.c.l.b16 %v247
      %v962 = vunpack.c.h.b16 %v247
      %v963 = vunpack.c.l.b16 %v248
      %v964 = vunpack.c.h.b16 %v248
      %v965 = vunpack.c.l.b16 %v249
      %v966 = vunpack.c.h.b16 %v249
      %v967 = vunpack.c.l.b16 %v250
      %v968 = vunpack.c.h.b16 %v250
      %v969 = vunpack.c.l.b16 %v251
      %v970 = vunpack.c.h.b16 %v251
      %v971 = vunpack.c.l.b16 %v252
      %v972 = vunpack.c.h.b16 %v252
      %v973 = vunpack.c.l.b16 %v253
      %v974 = vunpack.c.h.b16 %v253
      %v975 = vunpack.c.l.b16 %v254
      %v976 = vunpack.c.h.b16 %v254
      %v977 = vunpack.c.l.b16 %v255
      %v978 = vunpack.c.h.b16 %v255
      %v979 = vunpack.c.l.b16 %v256
      %v980 = vunpack.c.h.b16 %v256
      %v981 = vunpack.c.l.b16 %v257
      %v982 = vunpack.c.h.b16 %v257
      %v983 = vunpack.c.l.b16 %v258
      %v984 = vunpack.c.h.b16 %v258
      %v985 = vunpack.c.l.b16 %v259
      %v986 = vunpack.c.h.b16 %v259
      %v987 = vunpack.c.l.b16 %v260
      %v988 = vunpack.c.h.b16 %v260
      %v989 = vunpack.c.l.b16 %v261
      %v990 = vunpack.c.h.b16 %v261
      %v991 = vunpack.c.l.b16 %v262
      %v992 = vunpack.c.h.b16 %v262
      %v993 = vunpack.c.l.b16 %v263
      %v994 = vunpack.c.h.b16 %v263
      %v995 = vunpack.c.l.b16 %v264
      %v996 = vunpack.c.h.b16 %v264
      %v997 = vunpack.c.l.b16 %v265
      %v998 = vunpack.c.h.b16 %v265
      %v999 = vunpack.c.l.b16 %v266
      %v1000 = vunpack.c.h.b16 %v266
      %v1001 = vunpack.c.l.b16 %v267
      %v1002 = vunpack.c.h.b16 %v267
      %v1003 = vunpack.c.l.b16 %v268
      %v1004 = vunpack.c.h.b16 %v268
      %v1005 = vunpack.c.l.b16 %v269
      %v1006 = vunpack.c.h.b16 %v269
      %v1007 = vunpack.c.l.b16 %v270
      %v1008 = vunpack.c.h.b16 %v270
      %v1009 = vunpack.c.l.b16 %v271
      %v1010 = vunpack.c.h.b16 %v271
      %v1011 = vunpack.c.l.b16 %v272
      %v1012 = vunpack.c.h.b16 %v272
      %v1013 = vunpack.c.l.b16 %v273
      %v1014 = vunpack.c.h.b16 %v273
      %v1015 = vunpack.c.l.b16 %v274
      %v1016 = vunpack.c.h.b16 %v274
      %v1017 = vunpack.c.l.b16 %v275
      %v1018 = vunpack.c.h.b16 %v275
      %v1019 = vunpack.c.l.b16 %v276
      %v1020 = vunpack.c.h.b16 %v276
      %v1021 = vunpack.c.l.b16 %v277
      %v1022 = vunpack.c.h.b16 %v277
      %v1023 = vunpack.c.l.b16 %v278
      %v1024 = vunpack.c.h.b16 %v278
      %v1025 = vunpack.c.l.b16 %v279
      %v1026 = vunpack.c.h.b16 %v279
      %v1027 = vunpack.c.l.b16 %v280
      %v1028 = vunpack.c.h.b16 %v280
      %v1029 = vunpack.c.l.b16 %v281
      %v1030 = vunpack.c.h.b16 %v281
      %v1031 = vunpack.c.l.b16 %v282
      %v1032 = vunpack.c.h.b16 %v282
      %v1033 = vunpack.c.l.b16 %v283
      %v1034 = vunpack.c.h.b16 %v283
      %v1035 = vunpack.c.l.b16 %v284
      %v1036 = vunpack.c.h.b16 %v284
      %v1037 = vunpack.c.l.b16 %v285
      %v1038 = vunpack.c.h.b16 %v285
      %v1039 = vunpack.c.l.b16 %v286
      %v1040 = vunpack.c.h.b16 %v286
      %v1041 = vunpack.c.l.b16 %v287
      %v1042 = vunpack.c.h.b16 %v287
      %v1043 = vunpack.c.l.b16 %v288
      %v1044 = vunpack.c.h.b16 %v288
      %v1045 = vunpack.c.l.b16 %v289
      %v1046 = vunpack.c.h.b16 %v289
      %v1047 = vunpack.c.l.b16 %v290
      %v1048 = vunpack.c.h.b16 %v290
      %v1049 = vunpack.c.l.b16 %v291
      %v1050 = vunpack.c.h.b16 %v291
      %v1051 = vunpack.c.l.b16 %v292
      %v1052 = vunpack.c.h.b16 %v292
      %v1053 = vunpack.c.l.b16 %v293
      %v1054 = vunpack.c.h.b16 %v293
      %v1055 = vunpack.c.l.b16 %v294
      %v1056 = vunpack.c.h.b16 %v294
      %v1057 = vunpack.c.l.b16 %v295
      %v1058 = vunpack.c.h.b16 %v295
      %v1059 = vunpack.c.l.b16 %v296
      %v1060 = vunpack.c.h.b16 %v296
      %v1061 = vunpack.c.l.b16 %v297
      %v1062 = vunpack.c.h.b16 %v297
      %v1063 = vunpack.c.l.b16 %v298
      %v1064 = vunpack.c.h.b16 %v298
      %v1065 = vunpack.c.l.b16 %v299
      %v1066 = vunpack.c.h.b16 %v299
      %v1067 = vunpack.c.l.b16 %v300
      %v1068 = vunpack.c.h.b16 %v300
      %v1069 = vunpack.c.l.b16 %v301
      %v1070 = vunpack.c.h.b16 %v301
      %v1071 = vunpack.c.l.b16 %v302
      %v1072 = vunpack.c.h.b16 %v302
      %v1073 = vunpack.c.l.b16 %v303
      %v1074 = vunpack.c.h.b16 %v303
      %v1075 = vunpack.c.l.b16 %v304
      %v1076 = vunpack.c.h.b16 %v304
      %v1077 = vunpack.c.l.b16 %v305
      %v1078 = vunpack.c.h.b16 %v305
      %v1079 = vunpack.c.l.b16 %v306
      %v1080 = vunpack.c.h.b16 %v306
      %v1081 = vunpack.c.l.b16 %v307
      %v1082 = vunpack.c.h.b16 %v307
      %v1083 = vunpack.c.l.b16 %v308
      %v1084 = vunpack.c.h.b16 %v308
      %v1085 = vunpack.c.l.b16 %v309
      %v1086 = vunpack.c.h.b16 %v309
      %v1087 = vunpack.c.l.b16 %v310
      %v1088 = vunpack.c.h.b16 %v310
      %v1089 = vunpack.c.l.b16 %v311
      %v1090 = vunpack.c.h.b16 %v311
      %v1091 = vunpack.c.l.b16 %v312
      %v1092 = vunpack.c.h.b16 %v312
      %v1093 = vunpack.c.l.b16 %v313
      %v1094 = vunpack.c.h.b16 %v313
      %v1095 = vunpack.c.l.b16 %v314
      %v1096 = vunpack.c.h.b16 %v314
      %v1097 = vunpack.c.l.b16 %v315
      %v1098 = vunpack.c.h.b16 %v315
      %v1099 = vunpack.c.l.b16 %v316
      %v1100 = vunpack.c.h.b16 %v316
      %v1101 = vunpack.c.l.b16 %v317
      %v1102 = vunpack.c.h.b16 %v317
      %v1103 = vunpack.c.l.b16 %v318
      %v1104 = vunpack.c.h.b16 %v318
      %v1105 = vunpack.c.l.b16 %v319
      %v1106 = vunpack.c.h.b16 %v319
      %v1107 = vunpack.c.l.b16 %v320
      %v1108 = vunpack.c.h.b16 %v320
      %v1109 = vunpack.c.l.b16 %v321
      %v1110 = vunpack.c.h.b16 %v321
      %v1111 = vunpack.c.l.b16 %v322
      %v1112 = vunpack.c.h.b16 %v322
      %v1113 = vunpack.c.l.b16 %v323
      %v1114 = vunpack.c.h.b16 %v323
      %v1115 = vunpack.c.l.b16 %v324
      %v1116 = vunpack.c.h.b16 %v324
      %v1117 = vunpack.c.l.b16 %v325
      %v1118 = vunpack.c.h.b16 %v325
      %v1119 = vunpack.c.l.b16 %v326
      %v1120 = vunpack.c.h.b16 %v326
      %v1121 = vunpack.c.l.b16 %v327
      %v1122 = vunpack.c.h.b16 %v327
      %v1123 = vunpack.c.l.b16 %v328
      %v1124 = vunpack.c.h.b16 %v328
      %v1125 = vunpack.c.l.b16 %v329
      %v1126 = vunpack.c.h.b16 %v329
      %v1127 = vunpack.c.l.b16 %v330
      %v1128 = vunpack.c.h.b16 %v330
      %v1129 = vunpack.c.l.b16 %v331
      %v1130 = vunpack.c.h.b16 %v331
      %v1131 = vunpack.c.l.b16 %v332
      %v1132 = vunpack.c.h.b16 %v332
      %v1133 = vunpack.c.l.b16 %v333
      %v1134 = vunpack.c.h.b16 %v333
      %v1135 = vunpack.c.l.b16 %v334
      %v1136 = vunpack.c.h.b16 %v334
      %v1137 = vunpack.c.l.b16 %v335
      %v1138 = vunpack.c.h.b16 %v335
      %v1139 = vunpack.c.l.b16 %v336
      %v1140 = vunpack.c.h.b16 %v336
      %v1141 = vunpack.c.l.b16 %v337
      %v1142 = vunpack.c.h.b16 %v337
      %v1143 = vunpack.c.l.b16 %v338
      %v1144 = vunpack.c.h.b16 %v338
      %v1145 = vunpack.c.l.b16 %v339
      %v1146 = vunpack.c.h.b16 %v339
      %v1147 = vunpack.c.l.b16 %v340
      %v1148 = vunpack.c.h.b16 %v340
      %v1149 = vunpack.c.l.b16 %v341
      %v1150 = vunpack.c.h.b16 %v341
      %v1151 = vunpack.c.l.b16 %v342
      %v1152 = vunpack.c.h.b16 %v342
      %v1153 = vunpack.c.l.b16 %v343
      %v1154 = vunpack.c.h.b16 %v343
      %v1155 = vunpack.c.l.b16 %v344
      %v1156 = vunpack.c.h.b16 %v344
      %v1157 = vunpack.c.l.b16 %v345
      %v1158 = vunpack.c.h.b16 %v345
      %v1159 = vunpack.c.l.b16 %v346
      %v1160 = vunpack.c.h.b16 %v346
      %v1161 = vunpack.c.l.b16 %v347
      %v1162 = vunpack.c.h.b16 %v347
      %v1163 = vunpack.c.l.b16 %v348
      %v1164 = vunpack.c.h.b16 %v348
      %v1165 = vunpack.c.l.b16 %v349
      %v1166 = vunpack.c.h.b16 %v349
      %v1167 = vunpack.c.l.b16 %v350
      %v1168 = vunpack.c.h.b16 %v350
      %v1169 = vunpack.c.l.b16 %v351
      %v1170 = vunpack.c.h.b16 %v351
      %v1171 = vunpack.c.l.b16 %v352
      %v1172 = vunpack.c.h.b16 %v352
      %v1173 = vunpack.c.l.b16 %v353
      %v1174 = vunpack.c.h.b16 %v353
      %v1175 = vunpack.c.l.b16 %v354
      %v1176 = vunpack.c.h.b16 %v354
      %v1177 = vunpack.c.l.b16 %v355
      %v1178 = vunpack.c.h.b16 %v355
      %v1179 = vunpack.c.l.b16 %v356
      %v1180 = vunpack.c.h.b16 %v356
      %v1181 = vunpack.c.l.b16 %v357
      %v1182 = vunpack.c.h.b16 %v357
      %v1183 = vunpack.c.l.b16 %v358
      %v1184 = vunpack.c.h.b16 %v358
      %v1185 = vunpack.c.l.b16 %v359
      %v1186 = vunpack.c.h.b16 %v359
      %v1187 = vunpack.c.l.b16 %v360
      %v1188 = vunpack.c.h.b16 %v360
      %v1189 = vunpack.c.l.b16 %v361
      %v1190 = vunpack.c.h.b16 %v361
      %v1191 = vunpack.c.l.b16 %v362
      %v1192 = vunpack.c.h.b16 %v362
      %v1193 = vunpack.c.l.b16 %v363
      %v1194 = vunpack.c.h.b16 %v363
      %v1195 = vunpack.c.l.b16 %v364
      %v1196 = vunpack.c.h.b16 %v364
      %v1197 = vunpack.c.l.b16 %v365
      %v1198 = vunpack.c.h.b16 %v365
      %v1199 = vunpack.c.l.b16 %v366
      %v1200 = vunpack.c.h.b16 %v366
      %v1201 = vunpack.c.l.b16 %v367
      %v1202 = vunpack.c.h.b16 %v367
      %v1203 = vunpack.c.l.b16 %v368
      %v1204 = vunpack.c.h.b16 %v368
      %v1205 = vpack.c.b16 %v837, %v821
      %v1206 = vpack.c.b16 %v838, %v822
      %v1207 = vpack.c.b16 %v839, %v823
      %v1208 = vpack.c.b16 %v840, %v824
      %v1209 = vpack.c.b16 %v841, %v825
      %v1210 = vpack.c.b16 %v842, %v826
      %v1211 = vpack.c.b16 %v843, %v827
      %v1212 = vpack.c.b16 %v844, %v828
      %v1213 = vpack.c.b16 %v845, %v829
      %v1214 = vpack.c.b16 %v846, %v830
      %v1215 = vpack.c.b16 %v847, %v831
      %v1216 = vpack.c.b16 %v848, %v832
      %v1217 = vpack.c.b16 %v849, %v833
      %v1218 = vpack.c.b16 %v850, %v834
      %v1219 = vpack.c.b16 %v851, %v835
      %v1220 = vpack.c.b16 %v852, %v836
      %v1221 = vpack.c.b16 %v869, %v853
      %v1222 = vpack.c.b16 %v870, %v854
      %v1223 = vpack.c.b16 %v871, %v855
      %v1224 = vpack.c.b16 %v872, %v856
      %v1225 = vpack.c.b16 %v873, %v857
      %v1226 = vpack.c.b16 %v874, %v858
      %v1227 = vpack.c.b16 %v875, %v859
      %v1228 = vpack.c.b16 %v876, %v860
      %v1229 = vpack.c.b16 %v877, %v861
      %v1230 = vpack.c.b16 %v878, %v862
      %v1231 = vpack.c.b16 %v879, %v863
      %v1232 = vpack.c.b16 %v880, %v864
      %v1233 = vpack.c.b16 %v881, %v865
      %v1234 = vpack.c.b16 %v882, %v866
      %v1235 = vpack.c.b16 %v883, %v867
      %v1236 = vpack.c.b16 %v884, %v868
      %v1237 = vpack.c.b16 %v901, %v885
      %v1238 = vpack.c.b16 %v902, %v886
      %v1239 = vpack.c.b16 %v903, %v887
      %v1240 = vpack.c.b16 %v904, %v888
      %v1241 = vpack.c.b16 %v905, %v889
      %v1242 = vpack.c.b16 %v906, %v890
      %v1243 = vpack.c.b16 %v907, %v891
      %v1244 = vpack.c.b16 %v908, %v892
      %v1245 = vpack.c.b16 %v909, %v893
      %v1246 = vpack.c.b16 %v910, %v894
      %v1247 = vpack.c.b16 %v911, %v895
      %v1248 = vpack.c.b16 %v912, %v896
      %v1249 = vpack.c.b16 %v913, %v897
      %v1250 = vpack.c.b16 %v914, %v898
      %v1251 = vpack.c.b16 %v915, %v899
      %v1252 = vpack.c.b16 %v916, %v900
      %v1253 = vpack.c.b16 %v933, %v917
      %v1254 = vpack.c.b16 %v934, %v918
      %v1255 = vpack.c.b16 %v935, %v919
      %v1256 = vpack.c.b16 %v936, %v920
      %v1257 = vpack.c.b16 %v937, %v921
      %v1258 = vpack.c.b16 %v938, %v922
      %v1259 = vpack.c.b16 %v939, %v923
      %v1260 = vpack.c.b16 %v940, %v924
      %v1261 = vpack.c.b16 %v941, %v925
      %v1262 = vpack.c.b16 %v942, %v926
      %v1263 = vpack.c.b16 %v943, %v927
      %v1264 = vpack.c.b16 %v944, %v928
      %v1265 = vpack.c.b16 %v945, %v929
      %v1266 = vpack.c.b16 %v946, %v930
      %v1267 = vpack.c.b16 %v947, %v931
      %v1268 = vpack.c.b16 %v948, %v932
      %v1269 = vpack.c.b16 %v965, %v949
      %v1270 = vpack.c.b16 %v966, %v950
      %v1271 = vpack.c.b16 %v967, %v951
      %v1272 = vpack.c.b16 %v968, %v952
      %v1273 = vpack.c.b16 %v969, %v953
      %v1274 = vpack.c.b16 %v970, %v954
      %v1275 = vpack.c.b16 %v971, %v955
      %v1276 = vpack.c.b16 %v972, %v956
      %v1277 = vpack.c.b16 %v973, %v957
      %v1278 = vpack.c.b16 %v974, %v958
      %v1279 = vpack.c.b16 %v975, %v959
      %v1280 = vpack.c.b16 %v976, %v960
      %v1281 = vpack.c.b16 %v977, %v961
      %v1282 = vpack.c.b16 %v978, %v962
      %v1283 = vpack.c.b16 %v979, %v963
      %v1284 = vpack.c.b16 %v980, %v964
      %v1285 = vpack.c.b16 %v997, %v981
      %v1286 = vpack.c.b16 %v998, %v982
      %v1287 = vpack.c.b16 %v999, %v983
      %v1288 = vpack.c.b16 %v1000, %v984
      %v1289 = vpack.c.b16 %v1001, %v985
      %v1290 = vpack.c.b16 %v1002, %v986
      %v1291 = vpack.c.b16 %v1003, %v987
      %v1292 = vpack.c.b16 %v1004, %v988
      %v1293 = vpack.c.b16 %v1005, %v989
      %v1294 = vpack.c.b16 %v1006, %v990
      %v1295 = vpack.c.b16 %v1007, %v991
      %v1296 = vpack.c.b16 %v1008, %v992
      %v1297 = vpack.c.b16 %v1009, %v993
      %v1298 = vpack.c.b16 %v1010, %v994
      %v1299 = vpack.c.b16 %v1011, %v995
      %v1300 = vpack.c.b16 %v1012, %v996
      %v1301 = vpack.c.b16 %v1029, %v1013
      %v1302 = vpack.c.b16 %v1030, %v1014
      %v1303 = vpack.c.b16 %v1031, %v1015
      %v1304 = vpack.c.b16 %v1032, %v1016
      %v1305 = vpack.c.b16 %v1033, %v1017
      %v1306 = vpack.c.b16 %v1034, %v1018
      %v1307 = vpack.c.b16 %v1035, %v1019
      %v1308 = vpack.c.b16 %v1036, %v1020
      %v1309 = vpack.c.b16 %v1037, %v1021
      %v1310 = vpack.c.b16 %v1038, %v1022
      %v1311 = vpack.c.b16 %v1039, %v1023
      %v1312 = vpack.c.b16 %v1040, %v1024
      %v1313 = vpack.c.b16 %v1041, %v1025
      %v1314 = vpack.c.b16 %v1042, %v1026
      %v1315 = vpack.c.b16 %v1043, %v1027
      %v1316 = vpack.c.b16 %v1044, %v1028
      %v1317 = vpack.c.b16 %v1061, %v1045
      %v1318 = vpack.c.b16 %v1062, %v1046
      %v1319 = vpack.c.b16 %v1063, %v1047
      %v1320 = vpack.c.b16 %v1064, %v1048
      %v1321 = vpack.c.b16 %v1065, %v1049
      %v1322 = vpack.c.b16 %v1066, %v1050
      %v1323 = vpack.c.b16 %v1067, %v1051
      %v1324 = vpack.c.b16 %v1068, %v1052
      %v1325 = vpack.c.b16 %v1069, %v1053
      %v1326 = vpack.c.b16 %v1070, %v1054
      %v1327 = vpack.c.b16 %v1071, %v1055
      %v1328 = vpack.c.b16 %v1072, %v1056
      %v1329 = vpack.c.b16 %v1073, %v1057
      %v1330 = vpack.c.b16 %v1074, %v1058
      %v1331 = vpack.c.b16 %v1075, %v1059
      %v1332 = vpack.c.b16 %v1076, %v1060
      %v1333 = vpack.c.b16 %v1093, %v1077
      %v1334 = vpack.c.b16 %v1094, %v1078
      %v1335 = vpack.c.b16 %v1095, %v1079
      %v1336 = vpack.c.b16 %v1096, %v1080
      %v1337 = vpack.c.b16 %v1097, %v1081
      %v1338 = vpack.c.b16 %v1098, %v1082
      %v1339 = vpack.c.b16 %v1099, %v1083
      %v1340 = vpack.c.b16 %v1100, %v1084
      %v1341 = vpack.c.b16 %v1101, %v1085
      %v1342 = vpack.c.b16 %v1102, %v1086
      %v1343 = vpack.c.b16 %v1103, %v1087
      %v1344 = vpack.c.b16 %v1104, %v1088
      %v1345 = vpack.c.b16 %v1105, %v1089
      %v1346 = vpack.c.b16 %v1106, %v1090
      %v1347 = vpack.c.b16 %v1107, %v1091
      %v1348 = vpack.c.b16 %v1108, %v1092
      %v1349 = vpack.c.b16 %v1125, %v1109
      %v1350 = vpack.c.b16 %v1126, %v1110
      %v1351 = vpack.c.b16 %v1127, %v1111
      %v1352 = vpack.c.b16 %v1128, %v1112
      %v1353 = vpack.c.b16 %v1129, %v1113
      %v1354 = vpack.c.b16 %v1130, %v1114
      %v1355 = vpack.c.b16 %v1131, %v1115
      %v1356 = vpack.c.b16 %v1132, %v1116
      %v1357 = vpack.c.b16 %v1133, %v1117
      %v1358 = vpack.c.b16 %v1134, %v1118
      %v1359 = vpack.c.b16 %v1135, %v1119
      %v1360 = vpack.c.b16 %v1136, %v1120
      %v1361 = vpack.c.b16 %v1137, %v1121
      %v1362 = vpack.c.b16 %v1138, %v1122
      %v1363 = vpack.c.b16 %v1139, %v1123
      %v1364 = vpack.c.b16 %v1140, %v1124
      %v1365 = vpack.c.b16 %v1157, %v1141
      %v1366 = vpack.c.b16 %v1158, %v1142
      %v1367 = vpack.c.b16 %v1159, %v1143
      %v1368 = vpack.c.b16 %v1160, %v1144
      %v1369 = vpack.c.b16 %v1161, %v1145
      %v1370 = vpack.c.b16 %v1162, %v1146
      %v1371 = vpack.c.b16 %v1163, %v1147
      %v1372 = vpack.c.b16 %v1164, %v1148
      %v1373 = vpack.c.b16 %v1165, %v1149
      %v1374 = vpack.c.b16 %v1166, %v1150
      %v1375 = vpack.c.b16 %v1167, %v1151
      %v1376 = vpack.c.b16 %v1168, %v1152
      %v1377 = vpack.c.b16 %v1169, %v1153
      %v1378 = vpack.c.b16 %v1170, %v1154
      %v1379 = vpack.c.b16 %v1171, %v1155
      %v1380 = vpack.c.b16 %v1172, %v1156
      %v1381 = vpack.c.b16 %v1189, %v1173
      %v1382 = vpack.c.b16 %v1190, %v1174
      %v1383 = vpack.c.b16 %v1191, %v1175
      %v1384 = vpack.c.b16 %v1192, %v1176
      %v1385 = vpack.c.b16 %v1193, %v1177
      %v1386 = vpack.c.b16 %v1194, %v1178
      %v1387 = vpack.c.b16 %v1195, %v1179
      %v1388 = vpack.c.b16 %v1196, %v1180
      %v1389 = vpack.c.b16 %v1197, %v1181
      %v1390 = vpack.c.b16 %v1198, %v1182
      %v1391 = vpack.c.b16 %v1199, %v1183
      %v1392 = vpack.c.b16 %v1200, %v1184
      %v1393 = vpack.c.b16 %v1201, %v1185
      %v1394 = vpack.c.b16 %v1202, %v1186
      %v1395 = vpack.c.b16 %v1203, %v1187
      %v1396 = vpack.c.b16 %v1204, %v1188
      %v1845 = vunpack.c.l.b16 %v369
      %v1846 = vunpack.c.l.b16 %v370
      %v1847 = vunpack.c.l.b16 %v371
      %v1848 = vunpack.c.l.b16 %v372
      %v1849 = vunpack.c.l.b16 %v373
      %v1850 = vunpack.c.l.b16 %v374
      %v1851 = vunpack.c.l.b16 %v375
      %v1852 = vunpack.c.l.b16 %v376
      %v1853 = vunpack.c.l.b16 %v377
      %v1854 = vunpack.c.l.b16 %v378
      %v1855 = vunpack.c.l.b16 %v379
      %v1856 = vunpack.c.l.b16 %v380
      %v1857 = vunpack.c.l.b16 %v381
      %v1858 = vunpack.c.l.b16 %v382
      %v1859 = vunpack.c.l.b16 %v383
      %v1860 = vunpack.c.l.b16 %v384
      %v1861 = vunpack.c.l.b16 %v385
      %v1862 = vunpack.c.l.b16 %v386
      %v1863 = vunpack.c.l.b16 %v387
      %v1864 = vunpack.c.l.b16 %v388
      %v1865 = vunpack.c.l.b16 %v389
      %v1866 = vunpack.c.l.b16 %v390
      %v1867 = vunpack.c.l.b16 %v391
      %v1868 = vunpack.c.l.b16 %v392
      %v1869 = vunpack.c.l.b16 %v393
      %v1870 = vunpack.c.l.b16 %v394
      %v1871 = vunpack.c.l.b16 %v395
      %v1872 = vunpack.c.l.b16 %v396
      %v1873 = vunpack.c.l.b16 %v397
      %v1874 = vunpack.c.l.b16 %v398
      %v1875 = vunpack.c.l.b16 %v399
      %v1876 = vunpack.c.l.b16 %v400
      %v1877 = vunpack.c.l.b16 %v401
      %v1878 = vunpack.c.l.b16 %v402
      %v1879 = vunpack.c.l.b16 %v403
      %v1880 = vunpack.c.l.b16 %v404
      %v1881 = vunpack.c.l.b16 %v405
      %v1882 = vunpack.c.l.b16 %v406
      %v1883 = vunpack.c.l.b16 %v407
      %v1884 = vunpack.c.l.b16 %v408
      %v1885 = vunpack.c.l.b16 %v409
      %v1886 = vunpack.c.l.b16 %v410
      %v1887 = vunpack.c.l.b16 %v411
      %v1888 = vunpack.c.l.b16 %v412
      %v1889 = vunpack.c.l.b16 %v413
      %v1890 = vunpack.c.l.b16 %v414
      %v1891 = vunpack.c.l.b16 %v415
      %v1892 = vunpack.c.l.b16 %v416
      %v1893 = vunpack.c.l.b16 %v417
      %v1894 = vunpack.c.l.b16 %v418
      %v1895 = vunpack.c.l.b16 %v419
      %v1896 = vunpack.c.l.b16 %v420
      %v1897 = vunpack.c.l.b16 %v421
      %v1898 = vunpack.c.l.b16 %v422
      %v1899 = vunpack.c.l.b16 %v423
      %v1900 = vunpack.c.l.b16 %v424
      %v1901 = vunpack.c.l.b16 %v425
      %v1902 = vunpack.c.l.b16 %v426
      %v1903 = vunpack.c.l.b16 %v427
      %v1904 = vunpack.c.l.b16 %v428
      %v1905 = vunpack.c.l.b16 %v429
      %v1906 = vunpack.c.l.b16 %v430
      %v1907 = vunpack.c.l.b16 %v431
      %v1908 = vunpack.c.l.b16 %v432
      %v1909 = vunpack.c.l.b16 %v433
      %v1910 = vunpack.c.l.b16 %v434
      %v1911 = vunpack.c.l.b16 %v435
      %v1912 = vunpack.c.l.b16 %v436
      %v1913 = vunpack.c.l.b16 %v437
      %v1914 = vunpack.c.l.b16 %v438
      %v1915 = vunpack.c.l.b16 %v439
      %v1916 = vunpack.c.l.b16 %v440
      %v1917 = vunpack.c.l.b16 %v441
      %v1918 = vunpack.c.l.b16 %v442
      %v1919 = vunpack.c.l.b16 %v443
      %v1920 = vunpack.c.l.b16 %v444
      %v1921 = vunpack.c.l.b16 %v445
      %v1922 = vunpack.c.l.b16 %v446
      %v1923 = vunpack.c.l.b16 %v447
      %v1924 = vunpack.c.l.b16 %v448
      %v1925 = vunpack.c.l.b16 %v449
      %v1926 = vunpack.c.l.b16 %v450
      %v1927 = vunpack.c.l.b16 %v451
      %v1928 = vunpack.c.l.b16 %v452
      %v1929 = vunpack.c.l.b16 %v453
      %v1930 = vunpack.c.l.b16 %v454
      %v1931 = vunpack.c.l.b16 %v455
      %v1932 = vunpack.c.l.b16 %v456
      %v1933 = vunpack.c.l.b16 %v457
      %v1934 = vunpack.c.l.b16 %v458
      %v1935 = vunpack.c.l.b16 %v459
      %v1936 = vunpack.c.l.b16 %v460
      %v1937 = vunpack.c.l.b16 %v461
      %v1938 = vunpack.c.l.b16 %v462
      %v1939 = vunpack.c.l.b16 %v463
      %v1940 = vunpack.c.l.b16 %v464
      %v1941 = vunpack.c.l.b16 %v465
      %v1942 = vunpack.c.l.b16 %v466
      %v1943 = vunpack.c.l.b16 %v467
      %v1944 = vunpack.c.l.b16 %v468
      %v1945 = vunpack.c.l.b16 %v469
      %v1946 = vunpack.c.l.b16 %v470
      %v1947 = vunpack.c.l.b16 %v471
      %v1948 = vunpack.c.l.b16 %v472
      %v1949 = vunpack.c.l.b16 %v473
      %v1950 = vunpack.c.l.b16 %v474
      %v1951 = vunpack.c.l.b16 %v475
      %v1952 = vunpack.c.l.b16 %v476
      %v1953 = vunpack.c.l.b16 %v477
      %v1954 = vunpack.c.l.b16 %v478
      %v1955 = vunpack.c.l.b16 %v479
      %v1956 = vunpack.c.l.b16 %v480
      %v1957 = vunpack.c.l.b16 %v481
      %v1958 = vunpack.c.l.b16 %v482
      %v1959 = vunpack.c.l.b16 %v483
      %v1960 = vunpack.c.l.b16 %v484
      %v1961 = vunpack.c.l.b16 %v485
      %v1962 = vunpack.c.l.b16 %v486
      %v1963 = vunpack.c.l.b16 %v487
      %v1964 = vunpack.c.l.b16 %v488
      %v1965 = vunpack.c.l.b16 %v489
      %v1966 = vunpack.c.l.b16 %v490
      %v1967 = vunpack.c.l.b16 %v491
      %v1968 = vunpack.c.l.b16 %v492
      %v1969 = vunpack.c.l.b16 %v493
      %v1970 = vunpack.c.l.b16 %v494
      %v1971 = vunpack.c.l.b16 %v495
      %v1972 = vunpack.c.l.b16 %v496
      %v1973 = vunpack.c.l.b16 %v497
      %v1974 = vunpack.c.l.b16 %v498
      %v1975 = vunpack.c.l.b16 %v499
      %v1976 = vunpack.c.l.b16 %v500
      %v1977 = vunpack.c.l.b16 %v501
      %v1978 = vunpack.c.l.b16 %v502
      %v1979 = vunpack.c.l.b16 %v503
      %v1980 = vunpack.c.l.b16 %v504
      %v1981 = vunpack.c.l.b16 %v505
      %v1982 = vunpack.c.l.b16 %v506
      %v1983 = vunpack.c.l.b16 %v507
      %v1984 = vunpack.c.l.b16 %v508
      %v1985 = vunpack.c.l.b16 %v509
      %v1986 = vunpack.c.l.b16 %v510
      %v1987 = vunpack.c.l.b16 %v511
      %v1988 = vunpack.c.l.b16 %v512
      %v1989 = vunpack.c.l.b16 %v513
      %v1990 = vunpack.c.l.b16 %v514
      %v1991 = vunpack.c.l.b16 %v515
      %v1992 = vunpack.c.l.b16 %v516
      %v1993 = vunpack.c.l.b16 %v517
      %v1994 = vunpack.c.l.b16 %v518
      %v1995 = vunpack.c.l.b16 %v519
      %v1996 = vunpack.c.l.b16 %v520
      %v1997 = vunpack.c.l.b16 %v521
      %v1998 = vunpack.c.l.b16 %v522
      %v1999 = vunpack.c.l.b16 %v523
      %v2000 = vunpack.c.l.b16 %v524
      %v2001 = vunpack.c.l.b16 %v525
      %v2002 = vunpack.c.l.b16 %v526
      %v2003 = vunpack.c.l.b16 %v527
      %v2004 = vunpack.c.l.b16 %v528
      %v2005 = vunpack.c.l.b16 %v529
      %v2006 = vunpack.c.l.b16 %v530
      %v2007 = vunpack.c.l.b16 %v531
      %v2008 = vunpack.c.l.b16 %v532
      %v2009 = vunpack.c.l.b16 %v533
      %v2010 = vunpack.c.l.b16 %v534
      %v2011 = vunpack.c.l.b16 %v535
      %v2012 = vunpack.c.l.b16 %v536
      %v2013 = vunpack.c.l.b16 %v537
      %v2014 = vunpack.c.l.b16 %v538
      %v2015 = vunpack.c.l.b16 %v539
      %v2016 = vunpack.c.l.b16 %v540
      %v2017 = vunpack.c.l.b16 %v541
      %v2018 = vunpack.c.l.b16 %v542
      %v2019 = vunpack.c.l.b16 %v543
      %v2020 = vunpack.c.l.b16 %v544
      %v2021 = vunpack.c.l.b16 %v545
      %v2022 = vunpack.c.l.b16 %v546
      %v2023 = vunpack.c.l.b16 %v547
      %v2024 = vunpack.c.l.b16 %v548
      %v2025 = vunpack.c.l.b16 %v549
      %v2026 = vunpack.c.l.b16 %v550
      %v2027 = vunpack.c.l.b16 %v551
      %v2028 = vunpack.c.l.b16 %v552
      %v2029 = vunpack.c.l.b16 %v553
      %v2030 = vunpack.c.l.b16 %v554
      %v2031 = vunpack.c.l.b16 %v555
      %v2032 = vunpack.c.l.b16 %v556
      %v2033 = vunpack.c.l.b16 %v557
      %v2034 = vunpack.c.l.b16 %v558
      %v2035 = vunpack.c.l.b16 %v559
      %v2036 = vunpack.c.l.b16 %v560
      %v2037 = vunpack.c.l.b16 %v561
      %v2038 = vunpack.c.l.b16 %v562
      %v2039 = vunpack.c.l.b16 %v563
      %v2040 = vunpack.c.l.b16 %v564
      %v2041 = vunpack.c.l.b16 %v565
      %v2042 = vunpack.c.l.b16 %v566
      %v2043 = vunpack.c.l.b16 %v567
      %v2044 = vunpack.c.l.b16 %v568
      %v2045 = vunpack.c.l.b16 %v569
      %v2046 = vunpack.c.l.b16 %v570
      %v2047 = vunpack.c.l.b16 %v571
      %v2048 = vunpack.c.l.b16 %v572
      %v2049 = vunpack.c.l.b16 %v573
      %v2050 = vunpack.c.l.b16 %v574
      %v2051 = vunpack.c.l.b16 %v575
      %v2052 = vunpack.c.l.b16 %v576
      %v2053 = vunpack.c.l.b16 %v577
      %v2054 = vunpack.c.l.b16 %v578
      %v2055 = vunpack.c.l.b16 %v579
      %v2056 = vunpack.c.l.b16 %v580
      %v2057 = vunpack.c.l.b16 %v581
      %v2058 = vunpack.c.l.b16 %v582
      %v2059 = vunpack.c.l.b16 %v583
      %v2060 = vunpack.c.l.b16 %v584
      %v2061 = vunpack.c.l.b16 %v585
      %v2062 = vunpack.c.l.b16 %v586
      %v2063 = vunpack.c.l.b16 %v587
      %v2064 = vunpack.c.l.b16 %v588
      %v2065 = vunpack.c.l.b16 %v589
      %v2066 = vunpack.c.l.b16 %v590
      %v2067 = vunpack.c.l.b16 %v591
      %v2068 = vunpack.c.l.b16 %v592
      %v2069 = vunpack.c.l.b16 %v593
      %v2070 = vunpack.c.l.b16 %v594
      %v2071 = vunpack.c.l.b16 %v595
      %v2072 = vunpack.c.l.b16 %v596
      %v2073 = vunpack.c.l.b16 %v597
      %v2074 = vunpack.c.l.b16 %v598
      %v2075 = vunpack.c.l.b16 %v599
      %v2076 = vunpack.c.l.b16 %v600
      %v2077 = vunpack.c.l.b16 %v601
      %v2078 = vunpack.c.l.b16 %v602
      %v2079 = vunpack.c.l.b16 %v603
      %v2080 = vunpack.c.l.b16 %v604
      %v2081 = vunpack.c.l.b16 %v605
      %v2082 = vunpack.c.l.b16 %v606
      %v2083 = vunpack.c.l.b16 %v607
      %v2084 = vunpack.c.l.b16 %v608
      %v2085 = vunpack.c.l.b16 %v609
      %v2086 = vunpack.c.l.b16 %v610
      %v2087 = vunpack.c.l.b16 %v611
      %v2088 = vunpack.c.l.b16 %v612
      %v2089 = vunpack.c.l.b16 %v613
      %v2090 = vunpack.c.l.b16 %v614
      %v2091 = vunpack.c.l.b16 %v615
      %v2092 = vunpack.c.l.b16 %v616
      %v2093 = vunpack.c.l.b16 %v617
      %v2094 = vunpack.c.l.b16 %v618
      %v2095 = vunpack.c.l.b16 %v619
      %v2096 = vunpack.c.l.b16 %v620
      %v2097 = vunpack.c.l.b16 %v621
      %v2098 = vunpack.c.l.b16 %v622
      %v2099 = vunpack.c.l.b16 %v623
      %v2100 = vunpack.c.l.b16 %v624
      %v2101 = vpack.c.b16 %v1846, %v1845
      %v2102 = vpack.c.b16 %v1848, %v1847
      %v2103 = vpack.c.b16 %v1850, %v1849
      %v2104 = vpack.c.b16 %v1852, %v1851
      %v2105 = vpack.c.b16 %v1854, %v1853
      %v2106 = vpack.c.b16 %v1856, %v1855
      %v2107 = vpack.c.b16 %v1858, %v1857
      %v2108 = vpack.c.b16 %v1860, %v1859
      %v2109 = vpack.c.b16 %v1862, %v1861
      %v2110 = vpack.c.b16 %v1864, %v1863
      %v2111 = vpack.c.b16 %v1866, %v1865
      %v2112 = vpack.c.b16 %v1868, %v1867
      %v2113 = vpack.c.b16 %v1870, %v1869
      %v2114 = vpack.c.b16 %v1872, %v1871
      %v2115 = vpack.c.b16 %v1874, %v1873
      %v2116 = vpack.c.b16 %v1876, %v1875
      %v2117 = vpack.c.b16 %v1878, %v1877
      %v2118 = vpack.c.b16 %v1880, %v1879
      %v2119 = vpack.c.b16 %v1882, %v1881
      %v2120 = vpack.c.b16 %v1884, %v1883
      %v2121 = vpack.c.b16 %v1886, %v1885
      %v2122 = vpack.c.b16 %v1888, %v1887
      %v2123 = vpack.c.b16 %v1890, %v1889
      %v2124 = vpack.c.b16 %v1892, %v1891
      %v2125 = vpack.c.b16 %v1894, %v1893
      %v2126 = vpack.c.b16 %v1896, %v1895
      %v2127 = vpack.c.b16 %v1898, %v1897
      %v2128 = vpack.c.b16 %v1900, %v1899
      %v2129 = vpack.c.b16 %v1902, %v1901
      %v2130 = vpack.c.b16 %v1904, %v1903
      %v2131 = vpack.c.b16 %v1906, %v1905
      %v2132 = vpack.c.b16 %v1908, %v1907
      %v2133 = vpack.c.b16 %v1910, %v1909
      %v2134 = vpack.c.b16 %v1912, %v1911
      %v2135 = vpack.c.b16 %v1914, %v1913
      %v2136 = vpack.c.b16 %v1916, %v1915
      %v2137 = vpack.c.b16 %v1918, %v1917
      %v2138 = vpack.c.b16 %v1920, %v1919
      %v2139 = vpack.c.b16 %v1922, %v1921
      %v2140 = vpack.c.b16 %v1924, %v1923
      %v2141 = vpack.c.b16 %v1926, %v1925
      %v2142 = vpack.c.b16 %v1928, %v1927
      %v2143 = vpack.c.b16 %v1930, %v1929
      %v2144 = vpack.c.b16 %v1932, %v1931
      %v2145 = vpack.c.b16 %v1934, %v1933
      %v2146 = vpack.c.b16 %v1936, %v1935
      %v2147 = vpack.c.b16 %v1938, %v1937
      %v2148 = vpack.c.b16 %v1940, %v1939
      %v2149 = vpack.c.b16 %v1942, %v1941
      %v2150 = vpack.c.b16 %v1944, %v1943
      %v2151 = vpack.c.b16 %v1946, %v1945
      %v2152 = vpack.c.b16 %v1948, %v1947
      %v2153 = vpack.c.b16 %v1950, %v1949
      %v2154 = vpack.c.b16 %v1952, %v1951
      %v2155 = vpack.c.b16 %v1954, %v1953
      %v2156 = vpack.c.b16 %v1956, %v1955
      %v2157 = vpack.c.b16 %v1958, %v1957
      %v2158 = vpack.c.b16 %v1960, %v1959
      %v2159 = vpack.c.b16 %v1962, %v1961
      %v2160 = vpack.c.b16 %v1964, %v1963
      %v2161 = vpack.c.b16 %v1966, %v1965
      %v2162 = vpack.c.b16 %v1968, %v1967
      %v2163 = vpack.c.b16 %v1970, %v1969
      %v2164 = vpack.c.b16 %v1972, %v1971
      %v2165 = vpack.c.b16 %v1974, %v1973
      %v2166 = vpack.c.b16 %v1976, %v1975
      %v2167 = vpack.c.b16 %v1978, %v1977
      %v2168 = vpack.c.b16 %v1980, %v1979
      %v2169 = vpack.c.b16 %v1982, %v1981
      %v2170 = vpack.c.b16 %v1984, %v1983
      %v2171 = vpack.c.b16 %v1986, %v1985
      %v2172 = vpack.c.b16 %v1988, %v1987
      %v2173 = vpack.c.b16 %v1990, %v1989
      %v2174 = vpack.c.b16 %v1992, %v1991
      %v2175 = vpack.c.b16 %v1994, %v1993
      %v2176 = vpack.c.b16 %v1996, %v1995
      %v2177 = vpack.c.b16 %v1998, %v1997
      %v2178 = vpack.c.b16 %v2000, %v1999
      %v2179 = vpack.c.b16 %v2002, %v2001
      %v2180 = vpack.c.b16 %v2004, %v2003
      %v2181 = vpack.c.b16 %v2006, %v2005
      %v2182 = vpack.c.b16 %v2008, %v2007
      %v2183 = vpack.c.b16 %v2010, %v2009
      %v2184 = vpack.c.b16 %v2012, %v2011
      %v2185 = vpack.c.b16 %v2014, %v2013
      %v2186 = vpack.c.b16 %v2016, %v2015
      %v2187 = vpack.c.b16 %v2018, %v2017
      %v2188 = vpack.c.b16 %v2020, %v2019
      %v2189 = vpack.c.b16 %v2022, %v2021
      %v2190 = vpack.c.b16 %v2024, %v2023
      %v2191 = vpack.c.b16 %v2026, %v2025
      %v2192 = vpack.c.b16 %v2028, %v2027
      %v2193 = vpack.c.b16 %v2030, %v2029
      %v2194 = vpack.c.b16 %v2032, %v2031
      %v2195 = vpack.c.b16 %v2034, %v2033
      %v2196 = vpack.c.b16 %v2036, %v2035
      %v2197 = vpack.c.b16 %v2038, %v2037
      %v2198 = vpack.c.b16 %v2040, %v2039
      %v2199 = vpack.c.b16 %v2042, %v2041
      %v2200 = vpack.c.b16 %v2044, %v2043
      %v2201 = vpack.c.b16 %v2046, %v2045
      %v2202 = vpack.c.b16 %v2048, %v2047
      %v2203 = vpack.c.b16 %v2050, %v2049
      %v2204 = vpack.c.b16 %v2052, %v2051
      %v2205 = vpack.c.b16 %v2054, %v2053
      %v2206 = vpack.c.b16 %v2056, %v2055
      %v2207 = vpack.c.b16 %v2058, %v2057
      %v2208 = vpack.c.b16 %v2060, %v2059
      %v2209 = vpack.c.b16 %v2062, %v2061
      %v2210 = vpack.c.b16 %v2064, %v2063
      %v2211 = vpack.c.b16 %v2066, %v2065
      %v2212 = vpack.c.b16 %v2068, %v2067
      %v2213 = vpack.c.b16 %v2070, %v2069
      %v2214 = vpack.c.b16 %v2072, %v2071
      %v2215 = vpack.c.b16 %v2074, %v2073
      %v2216 = vpack.c.b16 %v2076, %v2075
      %v2217 = vpack.c.b16 %v2078, %v2077
      %v2218 = vpack.c.b16 %v2080, %v2079
      %v2219 = vpack.c.b16 %v2082, %v2081
      %v2220 = vpack.c.b16 %v2084, %v2083
      %v2221 = vpack.c.b16 %v2086, %v2085
      %v2222 = vpack.c.b16 %v2088, %v2087
      %v2223 = vpack.c.b16 %v2090, %v2089
      %v2224 = vpack.c.b16 %v2092, %v2091
      %v2225 = vpack.c.b16 %v2094, %v2093
      %v2226 = vpack.c.b16 %v2096, %v2095
      %v2227 = vpack.c.b16 %v2098, %v2097
      %v2228 = vpack.c.b16 %v2100, %v2099
      %2357 = vmatpush.bf16.msra.mxu0 %v2108
      %2358 = vmatpush.bf16.msra.mxu0 %v2107
      %2359 = vmatpush.bf16.msra.mxu0 %v2106
      %2360 = vmatpush.bf16.msra.mxu0 %v2105
      %2361 = vmatpush.bf16.msra.mxu0 %v2104
      %2362 = vmatpush.bf16.msra.mxu0 %v2103
      %2363 = vmatpush.bf16.msra.mxu0 %v2102
      %2364 = vmatpush.bf16.msra.mxu0 %v2101
      %2365 = vmatmul.bf16.gmra.mxu0 %v1205
      %v2366 = vpop.f32.mrf.mxu0
      %v2367 = vadd.f32 %v627, %v2366
      %v2368 = vpop.f32.mrf.mxu0
      %v2369 = vadd.f32 %v627, %v2368
      %2370 = vmatmul.bf16.gmra.mxu0 %v1221
      %v2371 = vpop.f32.mrf.mxu0
      %v2372 = vadd.f32 %v627, %v2371
      %v2373 = vpop.f32.mrf.mxu0
      %v2374 = vadd.f32 %v627, %v2373
      %2375 = vmatmul.bf16.gmra.mxu0 %v1237
      %v2376 = vpop.f32.mrf.mxu0
      %v2377 = vadd.f32 %v627, %v2376
      %v2378 = vpop.f32.mrf.mxu0
      %v2379 = vadd.f32 %v627, %v2378
      %2380 = vmatmul.bf16.gmra.mxu0 %v1253
      %v2381 = vpop.f32.mrf.mxu0
      %v2382 = vadd.f32 %v627, %v2381
      %v2383 = vpop.f32.mrf.mxu0
      %v2384 = vadd.f32 %v627, %v2383
      %2385 = vmatmul.bf16.gmra.mxu0 %v1269
      %v2386 = vpop.f32.mrf.mxu0
      %v2387 = vadd.f32 %v627, %v2386
      %v2388 = vpop.f32.mrf.mxu0
      %v2389 = vadd.f32 %v627, %v2388
      %2390 = vmatmul.bf16.gmra.mxu0 %v1285
      %v2391 = vpop.f32.mrf.mxu0
      %v2392 = vadd.f32 %v627, %v2391
      %v2393 = vpop.f32.mrf.mxu0
      %v2394 = vadd.f32 %v627, %v2393
      %2395 = vmatmul.bf16.gmra.mxu0 %v1301
      %v2396 = vpop.f32.mrf.mxu0
      %v2397 = vadd.f32 %v627, %v2396
      %v2398 = vpop.f32.mrf.mxu0
      %v2399 = vadd.f32 %v627, %v2398
      %2400 = vmatmul.bf16.gmra.mxu0 %v1317
      %v2401 = vpop.f32.mrf.mxu0
      %v2402 = vadd.f32 %v627, %v2401
      %v2403 = vpop.f32.mrf.mxu0
      %v2404 = vadd.f32 %v627, %v2403
      %2405 = vmatmul.bf16.gmra.mxu0 %v1333
      %v2406 = vpop.f32.mrf.mxu0
      %v2407 = vadd.f32 %v627, %v2406
      %v2408 = vpop.f32.mrf.mxu0
      %v2409 = vadd.f32 %v627, %v2408
      %2410 = vmatmul.bf16.gmra.mxu0 %v1349
      %v2411 = vpop.f32.mrf.mxu0
      %v2412 = vadd.f32 %v627, %v2411
      %v2413 = vpop.f32.mrf.mxu0
      %v2414 = vadd.f32 %v627, %v2413
      %2415 = vmatmul.bf16.gmra.mxu0 %v1365
      %v2416 = vpop.f32.mrf.mxu0
      %v2417 = vadd.f32 %v627, %v2416
      %v2418 = vpop.f32.mrf.mxu0
      %v2419 = vadd.f32 %v627, %v2418
      %2420 = vmatmul.bf16.gmra.mxu0 %v1381
      %v2421 = vpop.f32.mrf.mxu0
      %v2422 = vadd.f32 %v627, %v2421
      %v2423 = vpop.f32.mrf.mxu0
      %v2424 = vadd.f32 %v627, %v2423
      %2425 = vdwg.mxu0
      %2426 = vmatpush.bf16.msra.mxu0 %v2116
      %2427 = vmatpush.bf16.msra.mxu0 %v2115
      %2428 = vmatpush.bf16.msra.mxu0 %v2114
      %2429 = vmatpush.bf16.msra.mxu0 %v2113
      %2430 = vmatpush.bf16.msra.mxu0 %v2112
      %2431 = vmatpush.bf16.msra.mxu0 %v2111
      %2432 = vmatpush.bf16.msra.mxu0 %v2110
      %2433 = vmatpush.bf16.msra.mxu0 %v2109
      %2434 = vmatmul.bf16.gmra.mxu0 %v1206
      %v2435 = vpop.f32.mrf.mxu0
      %v2436 = vadd.f32 %v2367, %v2435
      %v2437 = vpop.f32.mrf.mxu0
      %v2438 = vadd.f32 %v2369, %v2437
      %2439 = vmatmul.bf16.gmra.mxu0 %v1222
      %v2440 = vpop.f32.mrf.mxu0
      %v2441 = vadd.f32 %v2372, %v2440
      %v2442 = vpop.f32.mrf.mxu0
      %v2443 = vadd.f32 %v2374, %v2442
      %2444 = vmatmul.bf16.gmra.mxu0 %v1238
      %v2445 = vpop.f32.mrf.mxu0
      %v2446 = vadd.f32 %v2377, %v2445
      %v2447 = vpop.f32.mrf.mxu0
      %v2448 = vadd.f32 %v2379, %v2447
      %2449 = vmatmul.bf16.gmra.mxu0 %v1254
      %v2450 = vpop.f32.mrf.mxu0
      %v2451 = vadd.f32 %v2382, %v2450
      %v2452 = vpop.f32.mrf.mxu0
      %v2453 = vadd.f32 %v2384, %v2452
      %2454 = vmatmul.bf16.gmra.mxu0 %v1270
      %v2455 = vpop.f32.mrf.mxu0
      %v2456 = vadd.f32 %v2387, %v2455
      %v2457 = vpop.f32.mrf.mxu0
      %v2458 = vadd.f32 %v2389, %v2457
      %2459 = vmatmul.bf16.gmra.mxu0 %v1286
      %v2460 = vpop.f32.mrf.mxu0
      %v2461 = vadd.f32 %v2392, %v2460
      %v2462 = vpop.f32.mrf.mxu0
      %v2463 = vadd.f32 %v2394, %v2462
      %2464 = vmatmul.bf16.gmra.mxu0 %v1302
      %v2465 = vpop.f32.mrf.mxu0
      %v2466 = vadd.f32 %v2397, %v2465
      %v2467 = vpop.f32.mrf.mxu0
      %v2468 = vadd.f32 %v2399, %v2467
      %2469 = vmatmul.bf16.gmra.mxu0 %v1318
      %v2470 = vpop.f32.mrf.mxu0
      %v2471 = vadd.f32 %v2402, %v2470
      %v2472 = vpop.f32.mrf.mxu0
      %v2473 = vadd.f32 %v2404, %v2472
      %2474 = vmatmul.bf16.gmra.mxu0 %v1334
      %v2475 = vpop.f32.mrf.mxu0
      %v2476 = vadd.f32 %v2407, %v2475
      %v2477 = vpop.f32.mrf.mxu0
      %v2478 = vadd.f32 %v2409, %v2477
      %2479 = vmatmul.bf16.gmra.mxu0 %v1350
      %v2480 = vpop.f32.mrf.mxu0
      %v2481 = vadd.f32 %v2412, %v2480
      %v2482 = vpop.f32.mrf.mxu0
      %v2483 = vadd.f32 %v2414, %v2482
      %2484 = vmatmul.bf16.gmra.mxu0 %v1366
      %v2485 = vpop.f32.mrf.mxu0
      %v2486 = vadd.f32 %v2417, %v2485
      %v2487 = vpop.f32.mrf.mxu0
      %v2488 = vadd.f32 %v2419, %v2487
      %2489 = vmatmul.bf16.gmra.mxu0 %v1382
      %v2490 = vpop.f32.mrf.mxu0
      %v2491 = vadd.f32 %v2422, %v2490
      %v2492 = vpop.f32.mrf.mxu0
      %v2493 = vadd.f32 %v2424, %v2492
      %2494 = vdwg.mxu0
      %2495 = vmatpush.bf16.msra.mxu0 %v2124
      %2496 = vmatpush.bf16.msra.mxu0 %v2123
      %2497 = vmatpush.bf16.msra.mxu0 %v2122
      %2498 = vmatpush.bf16.msra.mxu0 %v2121
      %2499 = vmatpush.bf16.msra.mxu0 %v2120
      %2500 = vmatpush.bf16.msra.mxu0 %v2119
      %2501 = vmatpush.bf16.msra.mxu0 %v2118
      %2502 = vmatpush.bf16.msra.mxu0 %v2117
      %2503 = vmatmul.bf16.gmra.mxu0 %v1207
      %v2504 = vpop.f32.mrf.mxu0
      %v2505 = vadd.f32 %v2436, %v2504
      %v2506 = vpop.f32.mrf.mxu0
      %v2507 = vadd.f32 %v2438, %v2506
      %2508 = vmatmul.bf16.gmra.mxu0 %v1223
      %v2509 = vpop.f32.mrf.mxu0
      %v2510 = vadd.f32 %v2441, %v2509
      %v2511 = vpop.f32.mrf.mxu0
      %v2512 = vadd.f32 %v2443, %v2511
      %2513 = vmatmul.bf16.gmra.mxu0 %v1239
      %v2514 = vpop.f32.mrf.mxu0
      %v2515 = vadd.f32 %v2446, %v2514
      %v2516 = vpop.f32.mrf.mxu0
      %v2517 = vadd.f32 %v2448, %v2516
      %2518 = vmatmul.bf16.gmra.mxu0 %v1255
      %v2519 = vpop.f32.mrf.mxu0
      %v2520 = vadd.f32 %v2451, %v2519
      %v2521 = vpop.f32.mrf.mxu0
      %v2522 = vadd.f32 %v2453, %v2521
      %2523 = vmatmul.bf16.gmra.mxu0 %v1271
      %v2524 = vpop.f32.mrf.mxu0
      %v2525 = vadd.f32 %v2456, %v2524
      %v2526 = vpop.f32.mrf.mxu0
      %v2527 = vadd.f32 %v2458, %v2526
      %2528 = vmatmul.bf16.gmra.mxu0 %v1287
      %v2529 = vpop.f32.mrf.mxu0
      %v2530 = vadd.f32 %v2461, %v2529
      %v2531 = vpop.f32.mrf.mxu0
      %v2532 = vadd.f32 %v2463, %v2531
      %2533 = vmatmul.bf16.gmra.mxu0 %v1303
      %v2534 = vpop.f32.mrf.mxu0
      %v2535 = vadd.f32 %v2466, %v2534
      %v2536 = vpop.f32.mrf.mxu0
      %v2537 = vadd.f32 %v2468, %v2536
      %2538 = vmatmul.bf16.gmra.mxu0 %v1319
      %v2539 = vpop.f32.mrf.mxu0
      %v2540 = vadd.f32 %v2471, %v2539
      %v2541 = vpop.f32.mrf.mxu0
      %v2542 = vadd.f32 %v2473, %v2541
      %2543 = vmatmul.bf16.gmra.mxu0 %v1335
      %v2544 = vpop.f32.mrf.mxu0
      %v2545 = vadd.f32 %v2476, %v2544
      %v2546 = vpop.f32.mrf.mxu0
      %v2547 = vadd.f32 %v2478, %v2546
      %2548 = vmatmul.bf16.gmra.mxu0 %v1351
      %v2549 = vpop.f32.mrf.mxu0
      %v2550 = vadd.f32 %v2481, %v2549
      %v2551 = vpop.f32.mrf.mxu0
      %v2552 = vadd.f32 %v2483, %v2551
      %2553 = vmatmul.bf16.gmra.mxu0 %v1367
      %v2554 = vpop.f32.mrf.mxu0
      %v2555 = vadd.f32 %v2486, %v2554
      %v2556 = vpop.f32.mrf.mxu0
      %v2557 = vadd.f32 %v2488, %v2556
      %2558 = vmatmul.bf16.gmra.mxu0 %v1383
      %v2559 = vpop.f32.mrf.mxu0
      %v2560 = vadd.f32 %v2491, %v2559
      %v2561 = vpop.f32.mrf.mxu0
      %v2562 = vadd.f32 %v2493, %v2561
      %2563 = vdwg.mxu0
      %2564 = vmatpush.bf16.msra.mxu0 %v2132
      %2565 = vmatpush.bf16.msra.mxu0 %v2131
      %2566 = vmatpush.bf16.msra.mxu0 %v2130
      %2567 = vmatpush.bf16.msra.mxu0 %v2129
      %2568 = vmatpush.bf16.msra.mxu0 %v2128
      %2569 = vmatpush.bf16.msra.mxu0 %v2127
      %2570 = vmatpush.bf16.msra.mxu0 %v2126
      %2571 = vmatpush.bf16.msra.mxu0 %v2125
      %2572 = vmatmul.bf16.gmra.mxu0 %v1208
      %v2573 = vpop.f32.mrf.mxu0
      %v2574 = vadd.f32 %v2505, %v2573
      %v2575 = vpop.f32.mrf.mxu0
      %v2576 = vadd.f32 %v2507, %v2575
      %2577 = vmatmul.bf16.gmra.mxu0 %v1224
      %v2578 = vpop.f32.mrf.mxu0
      %v2579 = vadd.f32 %v2510, %v2578
      %v2580 = vpop.f32.mrf.mxu0
      %v2581 = vadd.f32 %v2512, %v2580
      %2582 = vmatmul.bf16.gmra.mxu0 %v1240
      %v2583 = vpop.f32.mrf.mxu0
      %v2584 = vadd.f32 %v2515, %v2583
      %v2585 = vpop.f32.mrf.mxu0
      %v2586 = vadd.f32 %v2517, %v2585
      %2587 = vmatmul.bf16.gmra.mxu0 %v1256
      %v2588 = vpop.f32.mrf.mxu0
      %v2589 = vadd.f32 %v2520, %v2588
      %v2590 = vpop.f32.mrf.mxu0
      %v2591 = vadd.f32 %v2522, %v2590
      %2592 = vmatmul.bf16.gmra.mxu0 %v1272
      %v2593 = vpop.f32.mrf.mxu0
      %v2594 = vadd.f32 %v2525, %v2593
      %v2595 = vpop.f32.mrf.mxu0
      %v2596 = vadd.f32 %v2527, %v2595
      %2597 = vmatmul.bf16.gmra.mxu0 %v1288
      %v2598 = vpop.f32.mrf.mxu0
      %v2599 = vadd.f32 %v2530, %v2598
      %v2600 = vpop.f32.mrf.mxu0
      %v2601 = vadd.f32 %v2532, %v2600
      %2602 = vmatmul.bf16.gmra.mxu0 %v1304
      %v2603 = vpop.f32.mrf.mxu0
      %v2604 = vadd.f32 %v2535, %v2603
      %v2605 = vpop.f32.mrf.mxu0
      %v2606 = vadd.f32 %v2537, %v2605
      %2607 = vmatmul.bf16.gmra.mxu0 %v1320
      %v2608 = vpop.f32.mrf.mxu0
      %v2609 = vadd.f32 %v2540, %v2608
      %v2610 = vpop.f32.mrf.mxu0
      %v2611 = vadd.f32 %v2542, %v2610
      %2612 = vmatmul.bf16.gmra.mxu0 %v1336
      %v2613 = vpop.f32.mrf.mxu0
      %v2614 = vadd.f32 %v2545, %v2613
      %v2615 = vpop.f32.mrf.mxu0
      %v2616 = vadd.f32 %v2547, %v2615
      %2617 = vmatmul.bf16.gmra.mxu0 %v1352
      %v2618 = vpop.f32.mrf.mxu0
      %v2619 = vadd.f32 %v2550, %v2618
      %v2620 = vpop.f32.mrf.mxu0
      %v2621 = vadd.f32 %v2552, %v2620
      %2622 = vmatmul.bf16.gmra.mxu0 %v1368
      %v2623 = vpop.f32.mrf.mxu0
      %v2624 = vadd.f32 %v2555, %v2623
      %v2625 = vpop.f32.mrf.mxu0
      %v2626 = vadd.f32 %v2557, %v2625
      %2627 = vmatmul.bf16.gmra.mxu0 %v1384
      %v2628 = vpop.f32.mrf.mxu0
      %v2629 = vadd.f32 %v2560, %v2628
      %v2630 = vpop.f32.mrf.mxu0
      %v2631 = vadd.f32 %v2562, %v2630
      %2632 = vdwg.mxu0
      %2633 = vmatpush.bf16.msra.mxu0 %v2140
      %2634 = vmatpush.bf16.msra.mxu0 %v2139
      %2635 = vmatpush.bf16.msra.mxu0 %v2138
      %2636 = vmatpush.bf16.msra.mxu0 %v2137
      %2637 = vmatpush.bf16.msra.mxu0 %v2136
      %2638 = vmatpush.bf16.msra.mxu0 %v2135
      %2639 = vmatpush.bf16.msra.mxu0 %v2134
      %2640 = vmatpush.bf16.msra.mxu0 %v2133
      %2641 = vmatmul.bf16.gmra.mxu0 %v1209
      %v2642 = vpop.f32.mrf.mxu0
      %v2643 = vadd.f32 %v2574, %v2642
      %v2644 = vpop.f32.mrf.mxu0
      %v2645 = vadd.f32 %v2576, %v2644
      %2646 = vmatmul.bf16.gmra.mxu0 %v1225
      %v2647 = vpop.f32.mrf.mxu0
      %v2648 = vadd.f32 %v2579, %v2647
      %v2649 = vpop.f32.mrf.mxu0
      %v2650 = vadd.f32 %v2581, %v2649
      %2651 = vmatmul.bf16.gmra.mxu0 %v1241
      %v2652 = vpop.f32.mrf.mxu0
      %v2653 = vadd.f32 %v2584, %v2652
      %v2654 = vpop.f32.mrf.mxu0
      %v2655 = vadd.f32 %v2586, %v2654
      %2656 = vmatmul.bf16.gmra.mxu0 %v1257
      %v2657 = vpop.f32.mrf.mxu0
      %v2658 = vadd.f32 %v2589, %v2657
      %v2659 = vpop.f32.mrf.mxu0
      %v2660 = vadd.f32 %v2591, %v2659
      %2661 = vmatmul.bf16.gmra.mxu0 %v1273
      %v2662 = vpop.f32.mrf.mxu0
      %v2663 = vadd.f32 %v2594, %v2662
      %v2664 = vpop.f32.mrf.mxu0
      %v2665 = vadd.f32 %v2596, %v2664
      %2666 = vmatmul.bf16.gmra.mxu0 %v1289
      %v2667 = vpop.f32.mrf.mxu0
      %v2668 = vadd.f32 %v2599, %v2667
      %v2669 = vpop.f32.mrf.mxu0
      %v2670 = vadd.f32 %v2601, %v2669
      %2671 = vmatmul.bf16.gmra.mxu0 %v1305
      %v2672 = vpop.f32.mrf.mxu0
      %v2673 = vadd.f32 %v2604, %v2672
      %v2674 = vpop.f32.mrf.mxu0
      %v2675 = vadd.f32 %v2606, %v2674
      %2676 = vmatmul.bf16.gmra.mxu0 %v1321
      %v2677 = vpop.f32.mrf.mxu0
      %v2678 = vadd.f32 %v2609, %v2677
      %v2679 = vpop.f32.mrf.mxu0
      %v2680 = vadd.f32 %v2611, %v2679
      %2681 = vmatmul.bf16.gmra.mxu0 %v1337
      %v2682 = vpop.f32.mrf.mxu0
      %v2683 = vadd.f32 %v2614, %v2682
      %v2684 = vpop.f32.mrf.mxu0
      %v2685 = vadd.f32 %v2616, %v2684
      %2686 = vmatmul.bf16.gmra.mxu0 %v1353
      %v2687 = vpop.f32.mrf.mxu0
      %v2688 = vadd.f32 %v2619, %v2687
      %v2689 = vpop.f32.mrf.mxu0
      %v2690 = vadd.f32 %v2621, %v2689
      %2691 = vmatmul.bf16.gmra.mxu0 %v1369
      %v2692 = vpop.f32.mrf.mxu0
      %v2693 = vadd.f32 %v2624, %v2692
      %v2694 = vpop.f32.mrf.mxu0
      %v2695 = vadd.f32 %v2626, %v2694
      %2696 = vmatmul.bf16.gmra.mxu0 %v1385
      %v2697 = vpop.f32.mrf.mxu0
      %v2698 = vadd.f32 %v2629, %v2697
      %v2699 = vpop.f32.mrf.mxu0
      %v2700 = vadd.f32 %v2631, %v2699
      %2701 = vdwg.mxu0
      %2702 = vmatpush.bf16.msra.mxu0 %v2148
      %2703 = vmatpush.bf16.msra.mxu0 %v2147
      %2704 = vmatpush.bf16.msra.mxu0 %v2146
      %2705 = vmatpush.bf16.msra.mxu0 %v2145
      %2706 = vmatpush.bf16.msra.mxu0 %v2144
      %2707 = vmatpush.bf16.msra.mxu0 %v2143
      %2708 = vmatpush.bf16.msra.mxu0 %v2142
      %2709 = vmatpush.bf16.msra.mxu0 %v2141
      %2710 = vmatmul.bf16.gmra.mxu0 %v1210
      %v2711 = vpop.f32.mrf.mxu0
      %v2712 = vadd.f32 %v2643, %v2711
      %v2713 = vpop.f32.mrf.mxu0
      %v2714 = vadd.f32 %v2645, %v2713
      %2715 = vmatmul.bf16.gmra.mxu0 %v1226
      %v2716 = vpop.f32.mrf.mxu0
      %v2717 = vadd.f32 %v2648, %v2716
      %v2718 = vpop.f32.mrf.mxu0
      %v2719 = vadd.f32 %v2650, %v2718
      %2720 = vmatmul.bf16.gmra.mxu0 %v1242
      %v2721 = vpop.f32.mrf.mxu0
      %v2722 = vadd.f32 %v2653, %v2721
      %v2723 = vpop.f32.mrf.mxu0
      %v2724 = vadd.f32 %v2655, %v2723
      %2725 = vmatmul.bf16.gmra.mxu0 %v1258
      %v2726 = vpop.f32.mrf.mxu0
      %v2727 = vadd.f32 %v2658, %v2726
      %v2728 = vpop.f32.mrf.mxu0
      %v2729 = vadd.f32 %v2660, %v2728
      %2730 = vmatmul.bf16.gmra.mxu0 %v1274
      %v2731 = vpop.f32.mrf.mxu0
      %v2732 = vadd.f32 %v2663, %v2731
      %v2733 = vpop.f32.mrf.mxu0
      %v2734 = vadd.f32 %v2665, %v2733
      %2735 = vmatmul.bf16.gmra.mxu0 %v1290
      %v2736 = vpop.f32.mrf.mxu0
      %v2737 = vadd.f32 %v2668, %v2736
      %v2738 = vpop.f32.mrf.mxu0
      %v2739 = vadd.f32 %v2670, %v2738
      %2740 = vmatmul.bf16.gmra.mxu0 %v1306
      %v2741 = vpop.f32.mrf.mxu0
      %v2742 = vadd.f32 %v2673, %v2741
      %v2743 = vpop.f32.mrf.mxu0
      %v2744 = vadd.f32 %v2675, %v2743
      %2745 = vmatmul.bf16.gmra.mxu0 %v1322
      %v2746 = vpop.f32.mrf.mxu0
      %v2747 = vadd.f32 %v2678, %v2746
      %v2748 = vpop.f32.mrf.mxu0
      %v2749 = vadd.f32 %v2680, %v2748
      %2750 = vmatmul.bf16.gmra.mxu0 %v1338
      %v2751 = vpop.f32.mrf.mxu0
      %v2752 = vadd.f32 %v2683, %v2751
      %v2753 = vpop.f32.mrf.mxu0
      %v2754 = vadd.f32 %v2685, %v2753
      %2755 = vmatmul.bf16.gmra.mxu0 %v1354
      %v2756 = vpop.f32.mrf.mxu0
      %v2757 = vadd.f32 %v2688, %v2756
      %v2758 = vpop.f32.mrf.mxu0
      %v2759 = vadd.f32 %v2690, %v2758
      %2760 = vmatmul.bf16.gmra.mxu0 %v1370
      %v2761 = vpop.f32.mrf.mxu0
      %v2762 = vadd.f32 %v2693, %v2761
      %v2763 = vpop.f32.mrf.mxu0
      %v2764 = vadd.f32 %v2695, %v2763
      %2765 = vmatmul.bf16.gmra.mxu0 %v1386
      %v2766 = vpop.f32.mrf.mxu0
      %v2767 = vadd.f32 %v2698, %v2766
      %v2768 = vpop.f32.mrf.mxu0
      %v2769 = vadd.f32 %v2700, %v2768
      %2770 = vdwg.mxu0
      %2771 = vmatpush.bf16.msra.mxu0 %v2156
      %2772 = vmatpush.bf16.msra.mxu0 %v2155
      %2773 = vmatpush.bf16.msra.mxu0 %v2154
      %2774 = vmatpush.bf16.msra.mxu0 %v2153
      %2775 = vmatpush.bf16.msra.mxu0 %v2152
      %2776 = vmatpush.bf16.msra.mxu0 %v2151
      %2777 = vmatpush.bf16.msra.mxu0 %v2150
      %2778 = vmatpush.bf16.msra.mxu0 %v2149
      %2779 = vmatmul.bf16.gmra.mxu0 %v1211
      %v2780 = vpop.f32.mrf.mxu0
      %v2781 = vadd.f32 %v2712, %v2780
      %v2782 = vpop.f32.mrf.mxu0
      %v2783 = vadd.f32 %v2714, %v2782
      %2784 = vmatmul.bf16.gmra.mxu0 %v1227
      %v2785 = vpop.f32.mrf.mxu0
      %v2786 = vadd.f32 %v2717, %v2785
      %v2787 = vpop.f32.mrf.mxu0
      %v2788 = vadd.f32 %v2719, %v2787
      %2789 = vmatmul.bf16.gmra.mxu0 %v1243
      %v2790 = vpop.f32.mrf.mxu0
      %v2791 = vadd.f32 %v2722, %v2790
      %v2792 = vpop.f32.mrf.mxu0
      %v2793 = vadd.f32 %v2724, %v2792
      %2794 = vmatmul.bf16.gmra.mxu0 %v1259
      %v2795 = vpop.f32.mrf.mxu0
      %v2796 = vadd.f32 %v2727, %v2795
      %v2797 = vpop.f32.mrf.mxu0
      %v2798 = vadd.f32 %v2729, %v2797
      %2799 = vmatmul.bf16.gmra.mxu0 %v1275
      %v2800 = vpop.f32.mrf.mxu0
      %v2801 = vadd.f32 %v2732, %v2800
      %v2802 = vpop.f32.mrf.mxu0
      %v2803 = vadd.f32 %v2734, %v2802
      %2804 = vmatmul.bf16.gmra.mxu0 %v1291
      %v2805 = vpop.f32.mrf.mxu0
      %v2806 = vadd.f32 %v2737, %v2805
      %v2807 = vpop.f32.mrf.mxu0
      %v2808 = vadd.f32 %v2739, %v2807
      %2809 = vmatmul.bf16.gmra.mxu0 %v1307
      %v2810 = vpop.f32.mrf.mxu0
      %v2811 = vadd.f32 %v2742, %v2810
      %v2812 = vpop.f32.mrf.mxu0
      %v2813 = vadd.f32 %v2744, %v2812
      %2814 = vmatmul.bf16.gmra.mxu0 %v1323
      %v2815 = vpop.f32.mrf.mxu0
      %v2816 = vadd.f32 %v2747, %v2815
      %v2817 = vpop.f32.mrf.mxu0
      %v2818 = vadd.f32 %v2749, %v2817
      %2819 = vmatmul.bf16.gmra.mxu0 %v1339
      %v2820 = vpop.f32.mrf.mxu0
      %v2821 = vadd.f32 %v2752, %v2820
      %v2822 = vpop.f32.mrf.mxu0
      %v2823 = vadd.f32 %v2754, %v2822
      %2824 = vmatmul.bf16.gmra.mxu0 %v1355
      %v2825 = vpop.f32.mrf.mxu0
      %v2826 = vadd.f32 %v2757, %v2825
      %v2827 = vpop.f32.mrf.mxu0
      %v2828 = vadd.f32 %v2759, %v2827
      %2829 = vmatmul.bf16.gmra.mxu0 %v1371
      %v2830 = vpop.f32.mrf.mxu0
      %v2831 = vadd.f32 %v2762, %v2830
      %v2832 = vpop.f32.mrf.mxu0
      %v2833 = vadd.f32 %v2764, %v2832
      %2834 = vmatmul.bf16.gmra.mxu0 %v1387
      %v2835 = vpop.f32.mrf.mxu0
      %v2836 = vadd.f32 %v2767, %v2835
      %v2837 = vpop.f32.mrf.mxu0
      %v2838 = vadd.f32 %v2769, %v2837
      %2839 = vdwg.mxu0
      %2840 = vmatpush.bf16.msra.mxu0 %v2164
      %2841 = vmatpush.bf16.msra.mxu0 %v2163
      %2842 = vmatpush.bf16.msra.mxu0 %v2162
      %2843 = vmatpush.bf16.msra.mxu0 %v2161
      %2844 = vmatpush.bf16.msra.mxu0 %v2160
      %2845 = vmatpush.bf16.msra.mxu0 %v2159
      %2846 = vmatpush.bf16.msra.mxu0 %v2158
      %2847 = vmatpush.bf16.msra.mxu0 %v2157
      %2848 = vmatmul.bf16.gmra.mxu0 %v1212
      %v2849 = vpop.f32.mrf.mxu0
      %v2850 = vadd.f32 %v2781, %v2849
      %v2851 = vpop.f32.mrf.mxu0
      %v2852 = vadd.f32 %v2783, %v2851
      %2853 = vmatmul.bf16.gmra.mxu0 %v1228
      %v2854 = vpop.f32.mrf.mxu0
      %v2855 = vadd.f32 %v2786, %v2854
      %v2856 = vpop.f32.mrf.mxu0
      %v2857 = vadd.f32 %v2788, %v2856
      %2858 = vmatmul.bf16.gmra.mxu0 %v1244
      %v2859 = vpop.f32.mrf.mxu0
      %v2860 = vadd.f32 %v2791, %v2859
      %v2861 = vpop.f32.mrf.mxu0
      %v2862 = vadd.f32 %v2793, %v2861
      %2863 = vmatmul.bf16.gmra.mxu0 %v1260
      %v2864 = vpop.f32.mrf.mxu0
      %v2865 = vadd.f32 %v2796, %v2864
      %v2866 = vpop.f32.mrf.mxu0
      %v2867 = vadd.f32 %v2798, %v2866
      %2868 = vmatmul.bf16.gmra.mxu0 %v1276
      %v2869 = vpop.f32.mrf.mxu0
      %v2870 = vadd.f32 %v2801, %v2869
      %v2871 = vpop.f32.mrf.mxu0
      %v2872 = vadd.f32 %v2803, %v2871
      %2873 = vmatmul.bf16.gmra.mxu0 %v1292
      %v2874 = vpop.f32.mrf.mxu0
      %v2875 = vadd.f32 %v2806, %v2874
      %v2876 = vpop.f32.mrf.mxu0
      %v2877 = vadd.f32 %v2808, %v2876
      %2878 = vmatmul.bf16.gmra.mxu0 %v1308
      %v2879 = vpop.f32.mrf.mxu0
      %v2880 = vadd.f32 %v2811, %v2879
      %v2881 = vpop.f32.mrf.mxu0
      %v2882 = vadd.f32 %v2813, %v2881
      %2883 = vmatmul.bf16.gmra.mxu0 %v1324
      %v2884 = vpop.f32.mrf.mxu0
      %v2885 = vadd.f32 %v2816, %v2884
      %v2886 = vpop.f32.mrf.mxu0
      %v2887 = vadd.f32 %v2818, %v2886
      %2888 = vmatmul.bf16.gmra.mxu0 %v1340
      %v2889 = vpop.f32.mrf.mxu0
      %v2890 = vadd.f32 %v2821, %v2889
      %v2891 = vpop.f32.mrf.mxu0
      %v2892 = vadd.f32 %v2823, %v2891
      %2893 = vmatmul.bf16.gmra.mxu0 %v1356
      %v2894 = vpop.f32.mrf.mxu0
      %v2895 = vadd.f32 %v2826, %v2894
      %v2896 = vpop.f32.mrf.mxu0
      %v2897 = vadd.f32 %v2828, %v2896
      %2898 = vmatmul.bf16.gmra.mxu0 %v1372
      %v2899 = vpop.f32.mrf.mxu0
      %v2900 = vadd.f32 %v2831, %v2899
      %v2901 = vpop.f32.mrf.mxu0
      %v2902 = vadd.f32 %v2833, %v2901
      %2903 = vmatmul.bf16.gmra.mxu0 %v1388
      %v2904 = vpop.f32.mrf.mxu0
      %v2905 = vadd.f32 %v2836, %v2904
      %v2906 = vpop.f32.mrf.mxu0
      %v2907 = vadd.f32 %v2838, %v2906
      %2908 = vdwg.mxu0
      %2909 = vmatpush.bf16.msra.mxu0 %v2172
      %2910 = vmatpush.bf16.msra.mxu0 %v2171
      %2911 = vmatpush.bf16.msra.mxu0 %v2170
      %2912 = vmatpush.bf16.msra.mxu0 %v2169
      %2913 = vmatpush.bf16.msra.mxu0 %v2168
      %2914 = vmatpush.bf16.msra.mxu0 %v2167
      %2915 = vmatpush.bf16.msra.mxu0 %v2166
      %2916 = vmatpush.bf16.msra.mxu0 %v2165
      %2917 = vmatmul.bf16.gmra.mxu0 %v1213
      %v2918 = vpop.f32.mrf.mxu0
      %v2919 = vadd.f32 %v2850, %v2918
      %v2920 = vpop.f32.mrf.mxu0
      %v2921 = vadd.f32 %v2852, %v2920
      %2922 = vmatmul.bf16.gmra.mxu0 %v1229
      %v2923 = vpop.f32.mrf.mxu0
      %v2924 = vadd.f32 %v2855, %v2923
      %v2925 = vpop.f32.mrf.mxu0
      %v2926 = vadd.f32 %v2857, %v2925
      %2927 = vmatmul.bf16.gmra.mxu0 %v1245
      %v2928 = vpop.f32.mrf.mxu0
      %v2929 = vadd.f32 %v2860, %v2928
      %v2930 = vpop.f32.mrf.mxu0
      %v2931 = vadd.f32 %v2862, %v2930
      %2932 = vmatmul.bf16.gmra.mxu0 %v1261
      %v2933 = vpop.f32.mrf.mxu0
      %v2934 = vadd.f32 %v2865, %v2933
      %v2935 = vpop.f32.mrf.mxu0
      %v2936 = vadd.f32 %v2867, %v2935
      %2937 = vmatmul.bf16.gmra.mxu0 %v1277
      %v2938 = vpop.f32.mrf.mxu0
      %v2939 = vadd.f32 %v2870, %v2938
      %v2940 = vpop.f32.mrf.mxu0
      %v2941 = vadd.f32 %v2872, %v2940
      %2942 = vmatmul.bf16.gmra.mxu0 %v1293
      %v2943 = vpop.f32.mrf.mxu0
      %v2944 = vadd.f32 %v2875, %v2943
      %v2945 = vpop.f32.mrf.mxu0
      %v2946 = vadd.f32 %v2877, %v2945
      %2947 = vmatmul.bf16.gmra.mxu0 %v1309
      %v2948 = vpop.f32.mrf.mxu0
      %v2949 = vadd.f32 %v2880, %v2948
      %v2950 = vpop.f32.mrf.mxu0
      %v2951 = vadd.f32 %v2882, %v2950
      %2952 = vmatmul.bf16.gmra.mxu0 %v1325
      %v2953 = vpop.f32.mrf.mxu0
      %v2954 = vadd.f32 %v2885, %v2953
      %v2955 = vpop.f32.mrf.mxu0
      %v2956 = vadd.f32 %v2887, %v2955
      %2957 = vmatmul.bf16.gmra.mxu0 %v1341
      %v2958 = vpop.f32.mrf.mxu0
      %v2959 = vadd.f32 %v2890, %v2958
      %v2960 = vpop.f32.mrf.mxu0
      %v2961 = vadd.f32 %v2892, %v2960
      %2962 = vmatmul.bf16.gmra.mxu0 %v1357
      %v2963 = vpop.f32.mrf.mxu0
      %v2964 = vadd.f32 %v2895, %v2963
      %v2965 = vpop.f32.mrf.mxu0
      %v2966 = vadd.f32 %v2897, %v2965
      %2967 = vmatmul.bf16.gmra.mxu0 %v1373
      %v2968 = vpop.f32.mrf.mxu0
      %v2969 = vadd.f32 %v2900, %v2968
      %v2970 = vpop.f32.mrf.mxu0
      %v2971 = vadd.f32 %v2902, %v2970
      %2972 = vmatmul.bf16.gmra.mxu0 %v1389
      %v2973 = vpop.f32.mrf.mxu0
      %v2974 = vadd.f32 %v2905, %v2973
      %v2975 = vpop.f32.mrf.mxu0
      %v2976 = vadd.f32 %v2907, %v2975
      %2977 = vdwg.mxu0
      %2978 = vmatpush.bf16.msra.mxu0 %v2180
      %2979 = vmatpush.bf16.msra.mxu0 %v2179
      %2980 = vmatpush.bf16.msra.mxu0 %v2178
      %2981 = vmatpush.bf16.msra.mxu0 %v2177
      %2982 = vmatpush.bf16.msra.mxu0 %v2176
      %2983 = vmatpush.bf16.msra.mxu0 %v2175
      %2984 = vmatpush.bf16.msra.mxu0 %v2174
      %2985 = vmatpush.bf16.msra.mxu0 %v2173
      %2986 = vmatmul.bf16.gmra.mxu0 %v1214
      %v2987 = vpop.f32.mrf.mxu0
      %v2988 = vadd.f32 %v2919, %v2987
      %v2989 = vpop.f32.mrf.mxu0
      %v2990 = vadd.f32 %v2921, %v2989
      %2991 = vmatmul.bf16.gmra.mxu0 %v1230
      %v2992 = vpop.f32.mrf.mxu0
      %v2993 = vadd.f32 %v2924, %v2992
      %v2994 = vpop.f32.mrf.mxu0
      %v2995 = vadd.f32 %v2926, %v2994
      %2996 = vmatmul.bf16.gmra.mxu0 %v1246
      %v2997 = vpop.f32.mrf.mxu0
      %v2998 = vadd.f32 %v2929, %v2997
      %v2999 = vpop.f32.mrf.mxu0
      %v3000 = vadd.f32 %v2931, %v2999
      %3001 = vmatmul.bf16.gmra.mxu0 %v1262
      %v3002 = vpop.f32.mrf.mxu0
      %v3003 = vadd.f32 %v2934, %v3002
      %v3004 = vpop.f32.mrf.mxu0
      %v3005 = vadd.f32 %v2936, %v3004
      %3006 = vmatmul.bf16.gmra.mxu0 %v1278
      %v3007 = vpop.f32.mrf.mxu0
      %v3008 = vadd.f32 %v2939, %v3007
      %v3009 = vpop.f32.mrf.mxu0
      %v3010 = vadd.f32 %v2941, %v3009
      %3011 = vmatmul.bf16.gmra.mxu0 %v1294
      %v3012 = vpop.f32.mrf.mxu0
      %v3013 = vadd.f32 %v2944, %v3012
      %v3014 = vpop.f32.mrf.mxu0
      %v3015 = vadd.f32 %v2946, %v3014
      %3016 = vmatmul.bf16.gmra.mxu0 %v1310
      %v3017 = vpop.f32.mrf.mxu0
      %v3018 = vadd.f32 %v2949, %v3017
      %v3019 = vpop.f32.mrf.mxu0
      %v3020 = vadd.f32 %v2951, %v3019
      %3021 = vmatmul.bf16.gmra.mxu0 %v1326
      %v3022 = vpop.f32.mrf.mxu0
      %v3023 = vadd.f32 %v2954, %v3022
      %v3024 = vpop.f32.mrf.mxu0
      %v3025 = vadd.f32 %v2956, %v3024
      %3026 = vmatmul.bf16.gmra.mxu0 %v1342
      %v3027 = vpop.f32.mrf.mxu0
      %v3028 = vadd.f32 %v2959, %v3027
      %v3029 = vpop.f32.mrf.mxu0
      %v3030 = vadd.f32 %v2961, %v3029
      %3031 = vmatmul.bf16.gmra.mxu0 %v1358
      %v3032 = vpop.f32.mrf.mxu0
      %v3033 = vadd.f32 %v2964, %v3032
      %v3034 = vpop.f32.mrf.mxu0
      %v3035 = vadd.f32 %v2966, %v3034
      %3036 = vmatmul.bf16.gmra.mxu0 %v1374
      %v3037 = vpop.f32.mrf.mxu0
      %v3038 = vadd.f32 %v2969, %v3037
      %v3039 = vpop.f32.mrf.mxu0
      %v3040 = vadd.f32 %v2971, %v3039
      %3041 = vmatmul.bf16.gmra.mxu0 %v1390
      %v3042 = vpop.f32.mrf.mxu0
      %v3043 = vadd.f32 %v2974, %v3042
      %v3044 = vpop.f32.mrf.mxu0
      %v3045 = vadd.f32 %v2976, %v3044
      %3046 = vdwg.mxu0
      %3047 = vmatpush.bf16.msra.mxu0 %v2188
      %3048 = vmatpush.bf16.msra.mxu0 %v2187
      %3049 = vmatpush.bf16.msra.mxu0 %v2186
      %3050 = vmatpush.bf16.msra.mxu0 %v2185
      %3051 = vmatpush.bf16.msra.mxu0 %v2184
      %3052 = vmatpush.bf16.msra.mxu0 %v2183
      %3053 = vmatpush.bf16.msra.mxu0 %v2182
      %3054 = vmatpush.bf16.msra.mxu0 %v2181
      %3055 = vmatmul.bf16.gmra.mxu0 %v1215
      %v3056 = vpop.f32.mrf.mxu0
      %v3057 = vadd.f32 %v2988, %v3056
      %v3058 = vpop.f32.mrf.mxu0
      %v3059 = vadd.f32 %v2990, %v3058
      %3060 = vmatmul.bf16.gmra.mxu0 %v1231
      %v3061 = vpop.f32.mrf.mxu0
      %v3062 = vadd.f32 %v2993, %v3061
      %v3063 = vpop.f32.mrf.mxu0
      %v3064 = vadd.f32 %v2995, %v3063
      %3065 = vmatmul.bf16.gmra.mxu0 %v1247
      %v3066 = vpop.f32.mrf.mxu0
      %v3067 = vadd.f32 %v2998, %v3066
      %v3068 = vpop.f32.mrf.mxu0
      %v3069 = vadd.f32 %v3000, %v3068
      %3070 = vmatmul.bf16.gmra.mxu0 %v1263
      %v3071 = vpop.f32.mrf.mxu0
      %v3072 = vadd.f32 %v3003, %v3071
      %v3073 = vpop.f32.mrf.mxu0
      %v3074 = vadd.f32 %v3005, %v3073
      %3075 = vmatmul.bf16.gmra.mxu0 %v1279
      %v3076 = vpop.f32.mrf.mxu0
      %v3077 = vadd.f32 %v3008, %v3076
      %v3078 = vpop.f32.mrf.mxu0
      %v3079 = vadd.f32 %v3010, %v3078
      %3080 = vmatmul.bf16.gmra.mxu0 %v1295
      %v3081 = vpop.f32.mrf.mxu0
      %v3082 = vadd.f32 %v3013, %v3081
      %v3083 = vpop.f32.mrf.mxu0
      %v3084 = vadd.f32 %v3015, %v3083
      %3085 = vmatmul.bf16.gmra.mxu0 %v1311
      %v3086 = vpop.f32.mrf.mxu0
      %v3087 = vadd.f32 %v3018, %v3086
      %v3088 = vpop.f32.mrf.mxu0
      %v3089 = vadd.f32 %v3020, %v3088
      %3090 = vmatmul.bf16.gmra.mxu0 %v1327
      %v3091 = vpop.f32.mrf.mxu0
      %v3092 = vadd.f32 %v3023, %v3091
      %v3093 = vpop.f32.mrf.mxu0
      %v3094 = vadd.f32 %v3025, %v3093
      %3095 = vmatmul.bf16.gmra.mxu0 %v1343
      %v3096 = vpop.f32.mrf.mxu0
      %v3097 = vadd.f32 %v3028, %v3096
      %v3098 = vpop.f32.mrf.mxu0
      %v3099 = vadd.f32 %v3030, %v3098
      %3100 = vmatmul.bf16.gmra.mxu0 %v1359
      %v3101 = vpop.f32.mrf.mxu0
      %v3102 = vadd.f32 %v3033, %v3101
      %v3103 = vpop.f32.mrf.mxu0
      %v3104 = vadd.f32 %v3035, %v3103
      %3105 = vmatmul.bf16.gmra.mxu0 %v1375
      %v3106 = vpop.f32.mrf.mxu0
      %v3107 = vadd.f32 %v3038, %v3106
      %v3108 = vpop.f32.mrf.mxu0
      %v3109 = vadd.f32 %v3040, %v3108
      %3110 = vmatmul.bf16.gmra.mxu0 %v1391
      %v3111 = vpop.f32.mrf.mxu0
      %v3112 = vadd.f32 %v3043, %v3111
      %v3113 = vpop.f32.mrf.mxu0
      %v3114 = vadd.f32 %v3045, %v3113
      %3115 = vdwg.mxu0
      %3116 = vmatpush.bf16.msra.mxu0 %v2196
      %3117 = vmatpush.bf16.msra.mxu0 %v2195
      %3118 = vmatpush.bf16.msra.mxu0 %v2194
      %3119 = vmatpush.bf16.msra.mxu0 %v2193
      %3120 = vmatpush.bf16.msra.mxu0 %v2192
      %3121 = vmatpush.bf16.msra.mxu0 %v2191
      %3122 = vmatpush.bf16.msra.mxu0 %v2190
      %3123 = vmatpush.bf16.msra.mxu0 %v2189
      %3124 = vmatmul.bf16.gmra.mxu0 %v1216
      %v3125 = vpop.f32.mrf.mxu0
      %v3126 = vadd.f32 %v3057, %v3125
      %v3127 = vpop.f32.mrf.mxu0
      %v3128 = vadd.f32 %v3059, %v3127
      %3129 = vmatmul.bf16.gmra.mxu0 %v1232
      %v3130 = vpop.f32.mrf.mxu0
      %v3131 = vadd.f32 %v3062, %v3130
      %v3132 = vpop.f32.mrf.mxu0
      %v3133 = vadd.f32 %v3064, %v3132
      %3134 = vmatmul.bf16.gmra.mxu0 %v1248
      %v3135 = vpop.f32.mrf.mxu0
      %v3136 = vadd.f32 %v3067, %v3135
      %v3137 = vpop.f32.mrf.mxu0
      %v3138 = vadd.f32 %v3069, %v3137
      %3139 = vmatmul.bf16.gmra.mxu0 %v1264
      %v3140 = vpop.f32.mrf.mxu0
      %v3141 = vadd.f32 %v3072, %v3140
      %v3142 = vpop.f32.mrf.mxu0
      %v3143 = vadd.f32 %v3074, %v3142
      %3144 = vmatmul.bf16.gmra.mxu0 %v1280
      %v3145 = vpop.f32.mrf.mxu0
      %v3146 = vadd.f32 %v3077, %v3145
      %v3147 = vpop.f32.mrf.mxu0
      %v3148 = vadd.f32 %v3079, %v3147
      %3149 = vmatmul.bf16.gmra.mxu0 %v1296
      %v3150 = vpop.f32.mrf.mxu0
      %v3151 = vadd.f32 %v3082, %v3150
      %v3152 = vpop.f32.mrf.mxu0
      %v3153 = vadd.f32 %v3084, %v3152
      %3154 = vmatmul.bf16.gmra.mxu0 %v1312
      %v3155 = vpop.f32.mrf.mxu0
      %v3156 = vadd.f32 %v3087, %v3155
      %v3157 = vpop.f32.mrf.mxu0
      %v3158 = vadd.f32 %v3089, %v3157
      %3159 = vmatmul.bf16.gmra.mxu0 %v1328
      %v3160 = vpop.f32.mrf.mxu0
      %v3161 = vadd.f32 %v3092, %v3160
      %v3162 = vpop.f32.mrf.mxu0
      %v3163 = vadd.f32 %v3094, %v3162
      %3164 = vmatmul.bf16.gmra.mxu0 %v1344
      %v3165 = vpop.f32.mrf.mxu0
      %v3166 = vadd.f32 %v3097, %v3165
      %v3167 = vpop.f32.mrf.mxu0
      %v3168 = vadd.f32 %v3099, %v3167
      %3169 = vmatmul.bf16.gmra.mxu0 %v1360
      %v3170 = vpop.f32.mrf.mxu0
      %v3171 = vadd.f32 %v3102, %v3170
      %v3172 = vpop.f32.mrf.mxu0
      %v3173 = vadd.f32 %v3104, %v3172
      %3174 = vmatmul.bf16.gmra.mxu0 %v1376
      %v3175 = vpop.f32.mrf.mxu0
      %v3176 = vadd.f32 %v3107, %v3175
      %v3177 = vpop.f32.mrf.mxu0
      %v3178 = vadd.f32 %v3109, %v3177
      %3179 = vmatmul.bf16.gmra.mxu0 %v1392
      %v3180 = vpop.f32.mrf.mxu0
      %v3181 = vadd.f32 %v3112, %v3180
      %v3182 = vpop.f32.mrf.mxu0
      %v3183 = vadd.f32 %v3114, %v3182
      %3184 = vdwg.mxu0
      %3185 = vmatpush.bf16.msra.mxu0 %v2204
      %3186 = vmatpush.bf16.msra.mxu0 %v2203
      %3187 = vmatpush.bf16.msra.mxu0 %v2202
      %3188 = vmatpush.bf16.msra.mxu0 %v2201
      %3189 = vmatpush.bf16.msra.mxu0 %v2200
      %3190 = vmatpush.bf16.msra.mxu0 %v2199
      %3191 = vmatpush.bf16.msra.mxu0 %v2198
      %3192 = vmatpush.bf16.msra.mxu0 %v2197
      %3193 = vmatmul.bf16.gmra.mxu0 %v1217
      %v3194 = vpop.f32.mrf.mxu0
      %v3195 = vadd.f32 %v3126, %v3194
      %v3196 = vpop.f32.mrf.mxu0
      %v3197 = vadd.f32 %v3128, %v3196
      %3198 = vmatmul.bf16.gmra.mxu0 %v1233
      %v3199 = vpop.f32.mrf.mxu0
      %v3200 = vadd.f32 %v3131, %v3199
      %v3201 = vpop.f32.mrf.mxu0
      %v3202 = vadd.f32 %v3133, %v3201
      %3203 = vmatmul.bf16.gmra.mxu0 %v1249
      %v3204 = vpop.f32.mrf.mxu0
      %v3205 = vadd.f32 %v3136, %v3204
      %v3206 = vpop.f32.mrf.mxu0
      %v3207 = vadd.f32 %v3138, %v3206
      %3208 = vmatmul.bf16.gmra.mxu0 %v1265
      %v3209 = vpop.f32.mrf.mxu0
      %v3210 = vadd.f32 %v3141, %v3209
      %v3211 = vpop.f32.mrf.mxu0
      %v3212 = vadd.f32 %v3143, %v3211
      %3213 = vmatmul.bf16.gmra.mxu0 %v1281
      %v3214 = vpop.f32.mrf.mxu0
      %v3215 = vadd.f32 %v3146, %v3214
      %v3216 = vpop.f32.mrf.mxu0
      %v3217 = vadd.f32 %v3148, %v3216
      %3218 = vmatmul.bf16.gmra.mxu0 %v1297
      %v3219 = vpop.f32.mrf.mxu0
      %v3220 = vadd.f32 %v3151, %v3219
      %v3221 = vpop.f32.mrf.mxu0
      %v3222 = vadd.f32 %v3153, %v3221
      %3223 = vmatmul.bf16.gmra.mxu0 %v1313
      %v3224 = vpop.f32.mrf.mxu0
      %v3225 = vadd.f32 %v3156, %v3224
      %v3226 = vpop.f32.mrf.mxu0
      %v3227 = vadd.f32 %v3158, %v3226
      %3228 = vmatmul.bf16.gmra.mxu0 %v1329
      %v3229 = vpop.f32.mrf.mxu0
      %v3230 = vadd.f32 %v3161, %v3229
      %v3231 = vpop.f32.mrf.mxu0
      %v3232 = vadd.f32 %v3163, %v3231
      %3233 = vmatmul.bf16.gmra.mxu0 %v1345
      %v3234 = vpop.f32.mrf.mxu0
      %v3235 = vadd.f32 %v3166, %v3234
      %v3236 = vpop.f32.mrf.mxu0
      %v3237 = vadd.f32 %v3168, %v3236
      %3238 = vmatmul.bf16.gmra.mxu0 %v1361
      %v3239 = vpop.f32.mrf.mxu0
      %v3240 = vadd.f32 %v3171, %v3239
      %v3241 = vpop.f32.mrf.mxu0
      %v3242 = vadd.f32 %v3173, %v3241
      %3243 = vmatmul.bf16.gmra.mxu0 %v1377
      %v3244 = vpop.f32.mrf.mxu0
      %v3245 = vadd.f32 %v3176, %v3244
      %v3246 = vpop.f32.mrf.mxu0
      %v3247 = vadd.f32 %v3178, %v3246
      %3248 = vmatmul.bf16.gmra.mxu0 %v1393
      %v3249 = vpop.f32.mrf.mxu0
      %v3250 = vadd.f32 %v3181, %v3249
      %v3251 = vpop.f32.mrf.mxu0
      %v3252 = vadd.f32 %v3183, %v3251
      %3253 = vdwg.mxu0
      %3254 = vmatpush.bf16.msra.mxu0 %v2212
      %3255 = vmatpush.bf16.msra.mxu0 %v2211
      %3256 = vmatpush.bf16.msra.mxu0 %v2210
      %3257 = vmatpush.bf16.msra.mxu0 %v2209
      %3258 = vmatpush.bf16.msra.mxu0 %v2208
      %3259 = vmatpush.bf16.msra.mxu0 %v2207
      %3260 = vmatpush.bf16.msra.mxu0 %v2206
      %3261 = vmatpush.bf16.msra.mxu0 %v2205
      %3262 = vmatmul.bf16.gmra.mxu0 %v1218
      %v3263 = vpop.f32.mrf.mxu0
      %v3264 = vadd.f32 %v3195, %v3263
      %v3265 = vpop.f32.mrf.mxu0
      %v3266 = vadd.f32 %v3197, %v3265
      %3267 = vmatmul.bf16.gmra.mxu0 %v1234
      %v3268 = vpop.f32.mrf.mxu0
      %v3269 = vadd.f32 %v3200, %v3268
      %v3270 = vpop.f32.mrf.mxu0
      %v3271 = vadd.f32 %v3202, %v3270
      %3272 = vmatmul.bf16.gmra.mxu0 %v1250
      %v3273 = vpop.f32.mrf.mxu0
      %v3274 = vadd.f32 %v3205, %v3273
      %v3275 = vpop.f32.mrf.mxu0
      %v3276 = vadd.f32 %v3207, %v3275
      %3277 = vmatmul.bf16.gmra.mxu0 %v1266
      %v3278 = vpop.f32.mrf.mxu0
      %v3279 = vadd.f32 %v3210, %v3278
      %v3280 = vpop.f32.mrf.mxu0
      %v3281 = vadd.f32 %v3212, %v3280
      %3282 = vmatmul.bf16.gmra.mxu0 %v1282
      %v3283 = vpop.f32.mrf.mxu0
      %v3284 = vadd.f32 %v3215, %v3283
      %v3285 = vpop.f32.mrf.mxu0
      %v3286 = vadd.f32 %v3217, %v3285
      %3287 = vmatmul.bf16.gmra.mxu0 %v1298
      %v3288 = vpop.f32.mrf.mxu0
      %v3289 = vadd.f32 %v3220, %v3288
      %v3290 = vpop.f32.mrf.mxu0
      %v3291 = vadd.f32 %v3222, %v3290
      %3292 = vmatmul.bf16.gmra.mxu0 %v1314
      %v3293 = vpop.f32.mrf.mxu0
      %v3294 = vadd.f32 %v3225, %v3293
      %v3295 = vpop.f32.mrf.mxu0
      %v3296 = vadd.f32 %v3227, %v3295
      %3297 = vmatmul.bf16.gmra.mxu0 %v1330
      %v3298 = vpop.f32.mrf.mxu0
      %v3299 = vadd.f32 %v3230, %v3298
      %v3300 = vpop.f32.mrf.mxu0
      %v3301 = vadd.f32 %v3232, %v3300
      %3302 = vmatmul.bf16.gmra.mxu0 %v1346
      %v3303 = vpop.f32.mrf.mxu0
      %v3304 = vadd.f32 %v3235, %v3303
      %v3305 = vpop.f32.mrf.mxu0
      %v3306 = vadd.f32 %v3237, %v3305
      %3307 = vmatmul.bf16.gmra.mxu0 %v1362
      %v3308 = vpop.f32.mrf.mxu0
      %v3309 = vadd.f32 %v3240, %v3308
      %v3310 = vpop.f32.mrf.mxu0
      %v3311 = vadd.f32 %v3242, %v3310
      %3312 = vmatmul.bf16.gmra.mxu0 %v1378
      %v3313 = vpop.f32.mrf.mxu0
      %v3314 = vadd.f32 %v3245, %v3313
      %v3315 = vpop.f32.mrf.mxu0
      %v3316 = vadd.f32 %v3247, %v3315
      %3317 = vmatmul.bf16.gmra.mxu0 %v1394
      %v3318 = vpop.f32.mrf.mxu0
      %v3319 = vadd.f32 %v3250, %v3318
      %v3320 = vpop.f32.mrf.mxu0
      %v3321 = vadd.f32 %v3252, %v3320
      %3322 = vdwg.mxu0
      %3323 = vmatpush.bf16.msra.mxu0 %v2220
      %3324 = vmatpush.bf16.msra.mxu0 %v2219
      %3325 = vmatpush.bf16.msra.mxu0 %v2218
      %3326 = vmatpush.bf16.msra.mxu0 %v2217
      %3327 = vmatpush.bf16.msra.mxu0 %v2216
      %3328 = vmatpush.bf16.msra.mxu0 %v2215
      %3329 = vmatpush.bf16.msra.mxu0 %v2214
      %3330 = vmatpush.bf16.msra.mxu0 %v2213
      %3331 = vmatmul.bf16.gmra.mxu0 %v1219
      %v3332 = vpop.f32.mrf.mxu0
      %v3333 = vadd.f32 %v3264, %v3332
      %v3334 = vpop.f32.mrf.mxu0
      %v3335 = vadd.f32 %v3266, %v3334
      %3336 = vmatmul.bf16.gmra.mxu0 %v1235
      %v3337 = vpop.f32.mrf.mxu0
      %v3338 = vadd.f32 %v3269, %v3337
      %v3339 = vpop.f32.mrf.mxu0
      %v3340 = vadd.f32 %v3271, %v3339
      %3341 = vmatmul.bf16.gmra.mxu0 %v1251
      %v3342 = vpop.f32.mrf.mxu0
      %v3343 = vadd.f32 %v3274, %v3342
      %v3344 = vpop.f32.mrf.mxu0
      %v3345 = vadd.f32 %v3276, %v3344
      %3346 = vmatmul.bf16.gmra.mxu0 %v1267
      %v3347 = vpop.f32.mrf.mxu0
      %v3348 = vadd.f32 %v3279, %v3347
      %v3349 = vpop.f32.mrf.mxu0
      %v3350 = vadd.f32 %v3281, %v3349
      %3351 = vmatmul.bf16.gmra.mxu0 %v1283
      %v3352 = vpop.f32.mrf.mxu0
      %v3353 = vadd.f32 %v3284, %v3352
      %v3354 = vpop.f32.mrf.mxu0
      %v3355 = vadd.f32 %v3286, %v3354
      %3356 = vmatmul.bf16.gmra.mxu0 %v1299
      %v3357 = vpop.f32.mrf.mxu0
      %v3358 = vadd.f32 %v3289, %v3357
      %v3359 = vpop.f32.mrf.mxu0
      %v3360 = vadd.f32 %v3291, %v3359
      %3361 = vmatmul.bf16.gmra.mxu0 %v1315
      %v3362 = vpop.f32.mrf.mxu0
      %v3363 = vadd.f32 %v3294, %v3362
      %v3364 = vpop.f32.mrf.mxu0
      %v3365 = vadd.f32 %v3296, %v3364
      %3366 = vmatmul.bf16.gmra.mxu0 %v1331
      %v3367 = vpop.f32.mrf.mxu0
      %v3368 = vadd.f32 %v3299, %v3367
      %v3369 = vpop.f32.mrf.mxu0
      %v3370 = vadd.f32 %v3301, %v3369
      %3371 = vmatmul.bf16.gmra.mxu0 %v1347
      %v3372 = vpop.f32.mrf.mxu0
      %v3373 = vadd.f32 %v3304, %v3372
      %v3374 = vpop.f32.mrf.mxu0
      %v3375 = vadd.f32 %v3306, %v3374
      %3376 = vmatmul.bf16.gmra.mxu0 %v1363
      %v3377 = vpop.f32.mrf.mxu0
      %v3378 = vadd.f32 %v3309, %v3377
      %v3379 = vpop.f32.mrf.mxu0
      %v3380 = vadd.f32 %v3311, %v3379
      %3381 = vmatmul.bf16.gmra.mxu0 %v1379
      %v3382 = vpop.f32.mrf.mxu0
      %v3383 = vadd.f32 %v3314, %v3382
      %v3384 = vpop.f32.mrf.mxu0
      %v3385 = vadd.f32 %v3316, %v3384
      %3386 = vmatmul.bf16.gmra.mxu0 %v1395
      %v3387 = vpop.f32.mrf.mxu0
      %v3388 = vadd.f32 %v3319, %v3387
      %v3389 = vpop.f32.mrf.mxu0
      %v3390 = vadd.f32 %v3321, %v3389
      %3391 = vdwg.mxu0
      %3392 = vmatpush.bf16.msra.mxu0 %v2228
      %3393 = vmatpush.bf16.msra.mxu0 %v2227
      %3394 = vmatpush.bf16.msra.mxu0 %v2226
      %3395 = vmatpush.bf16.msra.mxu0 %v2225
      %3396 = vmatpush.bf16.msra.mxu0 %v2224
      %3397 = vmatpush.bf16.msra.mxu0 %v2223
      %3398 = vmatpush.bf16.msra.mxu0 %v2222
      %3399 = vmatpush.bf16.msra.mxu0 %v2221
      %3400 = vmatmul.bf16.gmra.mxu0 %v1220
      %v3401 = vpop.f32.mrf.mxu0
      %v3402 = vadd.f32 %v3333, %v3401
      %v3403 = vpop.f32.mrf.mxu0
      %v3404 = vadd.f32 %v3335, %v3403
      %3405 = vmatmul.bf16.gmra.mxu0 %v1236
      %v3406 = vpop.f32.mrf.mxu0
      %v3407 = vadd.f32 %v3338, %v3406
      %v3408 = vpop.f32.mrf.mxu0
      %v3409 = vadd.f32 %v3340, %v3408
      %3410 = vmatmul.bf16.gmra.mxu0 %v1252
      %v3411 = vpop.f32.mrf.mxu0
      %v3412 = vadd.f32 %v3343, %v3411
      %v3413 = vpop.f32.mrf.mxu0
      %v3414 = vadd.f32 %v3345, %v3413
      %3415 = vmatmul.bf16.gmra.mxu0 %v1268
      %v3416 = vpop.f32.mrf.mxu0
      %v3417 = vadd.f32 %v3348, %v3416
      %v3418 = vpop.f32.mrf.mxu0
      %v3419 = vadd.f32 %v3350, %v3418
      %3420 = vmatmul.bf16.gmra.mxu0 %v1284
      %v3421 = vpop.f32.mrf.mxu0
      %v3422 = vadd.f32 %v3353, %v3421
      %v3423 = vpop.f32.mrf.mxu0
      %v3424 = vadd.f32 %v3355, %v3423
      %3425 = vmatmul.bf16.gmra.mxu0 %v1300
      %v3426 = vpop.f32.mrf.mxu0
      %v3427 = vadd.f32 %v3358, %v3426
      %v3428 = vpop.f32.mrf.mxu0
      %v3429 = vadd.f32 %v3360, %v3428
      %3430 = vmatmul.bf16.gmra.mxu0 %v1316
      %v3431 = vpop.f32.mrf.mxu0
      %v3432 = vadd.f32 %v3363, %v3431
      %v3433 = vpop.f32.mrf.mxu0
      %v3434 = vadd.f32 %v3365, %v3433
      %3435 = vmatmul.bf16.gmra.mxu0 %v1332
      %v3436 = vpop.f32.mrf.mxu0
      %v3437 = vadd.f32 %v3368, %v3436
      %v3438 = vpop.f32.mrf.mxu0
      %v3439 = vadd.f32 %v3370, %v3438
      %3440 = vmatmul.bf16.gmra.mxu0 %v1348
      %v3441 = vpop.f32.mrf.mxu0
      %v3442 = vadd.f32 %v3373, %v3441
      %v3443 = vpop.f32.mrf.mxu0
      %v3444 = vadd.f32 %v3375, %v3443
      %3445 = vmatmul.bf16.gmra.mxu0 %v1364
      %v3446 = vpop.f32.mrf.mxu0
      %v3447 = vadd.f32 %v3378, %v3446
      %v3448 = vpop.f32.mrf.mxu0
      %v3449 = vadd.f32 %v3380, %v3448
      %3450 = vmatmul.bf16.gmra.mxu0 %v1380
      %v3451 = vpop.f32.mrf.mxu0
      %v3452 = vadd.f32 %v3383, %v3451
      %v3453 = vpop.f32.mrf.mxu0
      %v3454 = vadd.f32 %v3385, %v3453
      %3455 = vmatmul.bf16.gmra.mxu0 %v1396
      %v3456 = vpop.f32.mrf.mxu0
      %v3457 = vadd.f32 %v3388, %v3456
      %v3458 = vpop.f32.mrf.mxu0
      %v3459 = vadd.f32 %v3390, %v3458
      %3460 = vdwg.mxu0
      %v3461 = vmax.f32 %v3402, 0.0
      %v3462 = vmax.f32 %v3404, 0.0
      %v3463 = vmax.f32 %v3407, 0.0
      %v3464 = vmax.f32 %v3409, 0.0
      %v3465 = vmax.f32 %v3412, 0.0
      %v3466 = vmax.f32 %v3414, 0.0
      %v3467 = vmax.f32 %v3417, 0.0
      %v3468 = vmax.f32 %v3419, 0.0
      %v3469 = vmax.f32 %v3422, 0.0
      %v3470 = vmax.f32 %v3424, 0.0
      %v3471 = vmax.f32 %v3427, 0.0
      %v3472 = vmax.f32 %v3429, 0.0
      %v3473 = vmax.f32 %v3432, 0.0
      %v3474 = vmax.f32 %v3434, 0.0
      %v3475 = vmax.f32 %v3437, 0.0
      %v3476 = vmax.f32 %v3439, 0.0
      %v3477 = vmax.f32 %v3442, 0.0
      %v3478 = vmax.f32 %v3444, 0.0
      %v3479 = vmax.f32 %v3447, 0.0
      %v3480 = vmax.f32 %v3449, 0.0
      %v3481 = vmax.f32 %v3452, 0.0
      %v3482 = vmax.f32 %v3454, 0.0
      %v3483 = vmax.f32 %v3457, 0.0
      %v3484 = vmax.f32 %v3459, 0.0
      %v3485 = vpack.c.bf16 %v3461, %v3461
      %v3486 = vpack.c.bf16 %v3462, %v3462
      %v3487 = vpack.c.bf16 %v3463, %v3463
      %v3488 = vpack.c.bf16 %v3464, %v3464
      %v3489 = vpack.c.bf16 %v3465, %v3465
      %v3490 = vpack.c.bf16 %v3466, %v3466
      %v3491 = vpack.c.bf16 %v3467, %v3467
      %v3492 = vpack.c.bf16 %v3468, %v3468
      %v3493 = vpack.c.bf16 %v3469, %v3469
      %v3494 = vpack.c.bf16 %v3470, %v3470
      %v3495 = vpack.c.bf16 %v3471, %v3471
      %v3496 = vpack.c.bf16 %v3472, %v3472
      %v3497 = vpack.c.bf16 %v3473, %v3473
      %v3498 = vpack.c.bf16 %v3474, %v3474
      %v3499 = vpack.c.bf16 %v3475, %v3475
      %v3500 = vpack.c.bf16 %v3476, %v3476
      %v3501 = vpack.c.bf16 %v3477, %v3477
      %v3502 = vpack.c.bf16 %v3478, %v3478
      %v3503 = vpack.c.bf16 %v3479, %v3479
      %v3504 = vpack.c.bf16 %v3480, %v3480
      %v3505 = vpack.c.bf16 %v3481, %v3481
      %v3506 = vpack.c.bf16 %v3482, %v3482
      %v3507 = vpack.c.bf16 %v3483, %v3483
      %v3508 = vpack.c.bf16 %v3484, %v3484
      %vm3509 = vcmask 125952
      %3510 = vst.msk [vmem:[%s175] sm:$0xf] %vm3509, %v3485
      %3511 = vst.msk [vmem:[%s175 + $0x4] sm:$0xf] %vm3509, %v3486
      %3512 = vst.msk [vmem:[%s175 + $0x8] sm:$0xf] %vm3509, %v3487
      %3513 = vst.msk [vmem:[%s175 + $0xc] sm:$0xf] %vm3509, %v3488
      %3514 = vst.msk [vmem:[%s175 + $0x10] sm:$0xf] %vm3509, %v3489
      %3515 = vst.msk [vmem:[%s175 + $0x14] sm:$0xf] %vm3509, %v3490
      %3516 = vst.msk [vmem:[%s175 + $0x18] sm:$0xf] %vm3509, %v3491
      %3517 = vst.msk [vmem:[%s175 + $0x1c] sm:$0xf] %vm3509, %v3492
      %3518 = vst.msk [vmem:[%s175 + $0x20] sm:$0xf] %vm3509, %v3493
      %3519 = vst.msk [vmem:[%s175 + $0x24] sm:$0xf] %vm3509, %v3494
      %3520 = vst.msk [vmem:[%s175 + $0x28] sm:$0xf] %vm3509, %v3495
      %3521 = vst.msk [vmem:[%s175 + $0x2c] sm:$0xf] %vm3509, %v3496
      %3522 = vst.msk [vmem:[%s175 + $0x30] sm:$0xf] %vm3509, %v3497
      %3523 = vst.msk [vmem:[%s175 + $0x34] sm:$0xf] %vm3509, %v3498
      %3524 = vst.msk [vmem:[%s175 + $0x38] sm:$0xf] %vm3509, %v3499
      %3525 = vst.msk [vmem:[%s175 + $0x3c] sm:$0xf] %vm3509, %v3500
      %3526 = vst.msk [vmem:[%s175 + $0x40] sm:$0xf] %vm3509, %v3501
      %3527 = vst.msk [vmem:[%s175 + $0x44] sm:$0xf] %vm3509, %v3502
      %3528 = vst.msk [vmem:[%s175 + $0x48] sm:$0xf] %vm3509, %v3503
      %3529 = vst.msk [vmem:[%s175 + $0x4c] sm:$0xf] %vm3509, %v3504
      %3530 = vst.msk [vmem:[%s175 + $0x50] sm:$0xf] %vm3509, %v3505
      %3531 = vst.msk [vmem:[%s175 + $0x54] sm:$0xf] %vm3509, %v3506
      %3532 = vst.msk [vmem:[%s175 + $0x58] sm:$0xf] %vm3509, %v3507
      %3533 = vst.msk [vmem:[%s175 + $0x5c] sm:$0xf] %vm3509, %v3508
      %s3534 = smul.u32 24, %s14
      %p3535 = scmp.lt.s32.totalorder %s3534, 47
      %s3536 = scalar_select %p3535, %s3534, 47
      %s3537 = smul.addr %s3536, 4
      %s3538 = scalar_lea.vmem %s3, %s3537
      // Predicated region
      $region33: #{forward.5} parent=31 // pred_check
        %p3539 = pneg %p100
      $region34: #{forward.5} parent=31 // pred_check_branch
        %3541 = sbr.rel (%p3539) target = $region36
      $region35: #{forward.5} parent=31 // pred_region
        %s3542 = smul.u32 24, %s14
      $region36: #{forward.5} parent=31 // pred_fallthru
        _
    $region32: #{forward.5} parent=5 // pred_fallthru
      _
    %p3543 = scmp.le.s32.totalorder 2, %s9
    // Predicated region
    $region37: #{forward.5} parent=5 // pred_check
      %p3544 = pneg %p3543
    $region38: #{forward.5} parent=5 // pred_check_branch
      %3546 = sbr.rel (%p3544) target = $region40
    $region39: #{forward.5} parent=5 // pred_region
      %s3547 = ssub.s32 %s9, 2
      // Predicated region
      $region41: #{forward.5} parent=39 // pred_check
        %p3548 = pneg %p106
      $region42: #{forward.5} parent=39 // pred_check_branch
        %3550 = sbr.rel (%p3548) target = $region44
      $region43: #{forward.5} parent=39 // pred_region
        %s3551 = smul.u32 24, %s15
        %p3552 = scmp.lt.s32.totalorder %s3551, 47
        %s3553 = scalar_select %p3552, %s3551, 47
        %s3554 = smul.addr %s3553, 4
        %s3555 = scalar_lea.vmem %s3, %s3554
      $region44: #{forward.5} parent=39 // pred_fallthru
        _
    $region40: #{forward.5} parent=5 // pred_fallthru
      _
  $region6: #{forward.5} parent=0 // loop_footer
    %s13 = sadd.s32 1, %s9
  $region7: #{forward.5} parent=0 // loop_footer_branch
    %8 = sbr.rel target = $region3
  $region8: #{forward.5} parent=0 // loop_exit
    _

// kernel: forward.6
$region0: #{forward.6}
  #allocation0 [shape = 'u32[]', space=smem, size = 0x4, offset = 0x4, fixed_abs, tag = 'smem constant byte address 0x4 - core index']
  #allocation1 [shape = 'u32[72,128]{1,0:T(1,128)}', space=vmem, size = 0x9000, scoped, tag = 'internal scratch']
  %s0 = inlined_call_operand.vmem [shape: bf16[64,1024], index: 0, kind: input, shape index: {}]
  %s1 = inlined_call_operand.vmem [shape: bf16[1024,32], index: 1, kind: input, shape index: {}]
  %s2 = inlined_call_operand.vmem [shape: f32[1,32], index: 2, kind: input, shape index: {}]
  %s3 = inlined_call_operand.vmem [shape: bf16[64,32], index: 3, kind: output, shape index: {}]
  %s4 = sld [smem:[#allocation0]]
  $region22: #{forward.6} parent=0
    _
  %s6 = ssub.s32 1, %s4
  %s7 = scalar_select 0, %s6, %s4
  // Predicated region
  $region2: #{forward.6} parent=0 // pred_check
    _
  $region3: #{forward.6} parent=0 // pred_check_branch
    %9 = sbr.rel (0) target = $region5
  $region4: #{forward.6} parent=0 // pred_region
    _
  $region5: #{forward.6} parent=0 // pred_fallthru
    _
  // Predicated region
  $region6: #{forward.6} parent=0 // pred_check
    _
  $region7: #{forward.6} parent=0 // pred_check_branch
    %11 = sbr.rel (0) target = $region9
  $region8: #{forward.6} parent=0 // pred_region
    _
  $region9: #{forward.6} parent=0 // pred_fallthru
    _
  // Predicated region
  $region10: #{forward.6} parent=0 // pred_check
    _
  $region11: #{forward.6} parent=0 // pred_check_branch
    %13 = sbr.rel (0) target = $region13
  $region12: #{forward.6} parent=0 // pred_region
    _
  $region13: #{forward.6} parent=0 // pred_fallthru
    _
  %v14 = vld [vmem:[%s0] sm:$0xff]
  %v15 = vld [vmem:[%s0 + $0x8] sm:$0xff]
  %v16 = vld [vmem:[%s0 + $0x10] sm:$0xff]
  %v17 = vld [vmem:[%s0 + $0x18] sm:$0xff]
  %v18 = vld [vmem:[%s0 + $0x20] sm:$0xff]
  %v19 = vld [vmem:[%s0 + $0x28] sm:$0xff]
  %v20 = vld [vmem:[%s0 + $0x30] sm:$0xff]
  %v21 = vld [vmem:[%s0 + $0x38] sm:$0xff]
  %v22 = vld [vmem:[%s0 + $0x40] sm:$0xff]
  %v23 = vld [vmem:[%s0 + $0x48] sm:$0xff]
  %v24 = vld [vmem:[%s0 + $0x50] sm:$0xff]
  %v25 = vld [vmem:[%s0 + $0x58] sm:$0xff]
  %v26 = vld [vmem:[%s0 + $0x60] sm:$0xff]
  %v27 = vld [vmem:[%s0 + $0x68] sm:$0xff]
  %v28 = vld [vmem:[%s0 + $0x70] sm:$0xff]
  %v29 = vld [vmem:[%s0 + $0x78] sm:$0xff]
  %v30 = vld [vmem:[%s0 + $0x80] sm:$0xff]
  %v31 = vld [vmem:[%s0 + $0x88] sm:$0xff]
  %v32 = vld [vmem:[%s0 + $0x90] sm:$0xff]
  %v33 = vld [vmem:[%s0 + $0x98] sm:$0xff]
  %v34 = vld [vmem:[%s0 + $0xa0] sm:$0xff]
  %v35 = vld [vmem:[%s0 + $0xa8] sm:$0xff]
  %v36 = vld [vmem:[%s0 + $0xb0] sm:$0xff]
  %v37 = vld [vmem:[%s0 + $0xb8] sm:$0xff]
  %v38 = vld [vmem:[%s0 + $0xc0] sm:$0xff]
  %v39 = vld [vmem:[%s0 + $0xc8] sm:$0xff]
  %v40 = vld [vmem:[%s0 + $0xd0] sm:$0xff]
  %v41 = vld [vmem:[%s0 + $0xd8] sm:$0xff]
  %v42 = vld [vmem:[%s0 + $0xe0] sm:$0xff]
  %v43 = vld [vmem:[%s0 + $0xe8] sm:$0xff]
  %v44 = vld [vmem:[%s0 + $0xf0] sm:$0xff]
  %v45 = vld [vmem:[%s0 + $0xf8] sm:$0xff]
  %v46 = vld [vmem:[%s1] sm:$0xf]
  %v47 = vld [vmem:[%s1 + $0x4] sm:$0xf]
  %v48 = vld [vmem:[%s1 + $0x8] sm:$0xf]
  %v49 = vld [vmem:[%s1 + $0xc] sm:$0xf]
  %v50 = vld [vmem:[%s1 + $0x10] sm:$0xf]
  %v51 = vld [vmem:[%s1 + $0x14] sm:$0xf]
  %v52 = vld [vmem:[%s1 + $0x18] sm:$0xf]
  %v53 = vld [vmem:[%s1 + $0x1c] sm:$0xf]
  %v54 = vld [vmem:[%s1 + $0x20] sm:$0xf]
  %v55 = vld [vmem:[%s1 + $0x24] sm:$0xf]
  %v56 = vld [vmem:[%s1 + $0x28] sm:$0xf]
  %v57 = vld [vmem:[%s1 + $0x2c] sm:$0xf]
  %v58 = vld [vmem:[%s1 + $0x30] sm:$0xf]
  %v59 = vld [vmem:[%s1 + $0x34] sm:$0xf]
  %v60 = vld [vmem:[%s1 + $0x38] sm:$0xf]
  %v61 = vld [vmem:[%s1 + $0x3c] sm:$0xf]
  %v62 = vld [vmem:[%s1 + $0x40] sm:$0xf]
  %v63 = vld [vmem:[%s1 + $0x44] sm:$0xf]
  %v64 = vld [vmem:[%s1 + $0x48] sm:$0xf]
  %v65 = vld [vmem:[%s1 + $0x4c] sm:$0xf]
  %v66 = vld [vmem:[%s1 + $0x50] sm:$0xf]
  %v67 = vld [vmem:[%s1 + $0x54] sm:$0xf]
  %v68 = vld [vmem:[%s1 + $0x58] sm:$0xf]
  %v69 = vld [vmem:[%s1 + $0x5c] sm:$0xf]
  %v70 = vld [vmem:[%s1 + $0x60] sm:$0xf]
  %v71 = vld [vmem:[%s1 + $0x64] sm:$0xf]
  %v72 = vld [vmem:[%s1 + $0x68] sm:$0xf]
  %v73 = vld [vmem:[%s1 + $0x6c] sm:$0xf]
  %v74 = vld [vmem:[%s1 + $0x70] sm:$0xf]
  %v75 = vld [vmem:[%s1 + $0x74] sm:$0xf]
  %v76 = vld [vmem:[%s1 + $0x78] sm:$0xf]
  %v77 = vld [vmem:[%s1 + $0x7c] sm:$0xf]
  %v78 = vld [vmem:[%s1 + $0x80] sm:$0xf]
  %v79 = vld [vmem:[%s1 + $0x84] sm:$0xf]
  %v80 = vld [vmem:[%s1 + $0x88] sm:$0xf]
  %v81 = vld [vmem:[%s1 + $0x8c] sm:$0xf]
  %v82 = vld [vmem:[%s1 + $0x90] sm:$0xf]
  %v83 = vld [vmem:[%s1 + $0x94] sm:$0xf]
  %v84 = vld [vmem:[%s1 + $0x98] sm:$0xf]
  %v85 = vld [vmem:[%s1 + $0x9c] sm:$0xf]
  %v86 = vld [vmem:[%s1 + $0xa0] sm:$0xf]
  %v87 = vld [vmem:[%s1 + $0xa4] sm:$0xf]
  %v88 = vld [vmem:[%s1 + $0xa8] sm:$0xf]
  %v89 = vld [vmem:[%s1 + $0xac] sm:$0xf]
  %v90 = vld [vmem:[%s1 + $0xb0] sm:$0xf]
  %v91 = vld [vmem:[%s1 + $0xb4] sm:$0xf]
  %v92 = vld [vmem:[%s1 + $0xb8] sm:$0xf]
  %v93 = vld [vmem:[%s1 + $0xbc] sm:$0xf]
  %v94 = vld [vmem:[%s1 + $0xc0] sm:$0xf]
  %v95 = vld [vmem:[%s1 + $0xc4] sm:$0xf]
  %v96 = vld [vmem:[%s1 + $0xc8] sm:$0xf]
  %v97 = vld [vmem:[%s1 + $0xcc] sm:$0xf]
  %v98 = vld [vmem:[%s1 + $0xd0] sm:$0xf]
  %v99 = vld [vmem:[%s1 + $0xd4] sm:$0xf]
  %v100 = vld [vmem:[%s1 + $0xd8] sm:$0xf]
  %v101 = vld [vmem:[%s1 + $0xdc] sm:$0xf]
  %v102 = vld [vmem:[%s1 + $0xe0] sm:$0xf]
  %v103 = vld [vmem:[%s1 + $0xe4] sm:$0xf]
  %v104 = vld [vmem:[%s1 + $0xe8] sm:$0xf]
  %v105 = vld [vmem:[%s1 + $0xec] sm:$0xf]
  %v106 = vld [vmem:[%s1 + $0xf0] sm:$0xf]
  %v107 = vld [vmem:[%s1 + $0xf4] sm:$0xf]
  %v108 = vld [vmem:[%s1 + $0xf8] sm:$0xf]
  %v109 = vld [vmem:[%s1 + $0xfc] sm:$0xf]
  %v110 = vld [vmem:[%s1 + $0x100] sm:$0xf]
  %v111 = vld [vmem:[%s1 + $0x104] sm:$0xf]
  %v112 = vld [vmem:[%s1 + $0x108] sm:$0xf]
  %v113 = vld [vmem:[%s1 + $0x10c] sm:$0xf]
  %v114 = vld [vmem:[%s1 + $0x110] sm:$0xf]
  %v115 = vld [vmem:[%s1 + $0x114] sm:$0xf]
  %v116 = vld [vmem:[%s1 + $0x118] sm:$0xf]
  %v117 = vld [vmem:[%s1 + $0x11c] sm:$0xf]
  %v118 = vld [vmem:[%s1 + $0x120] sm:$0xf]
  %v119 = vld [vmem:[%s1 + $0x124] sm:$0xf]
  %v120 = vld [vmem:[%s1 + $0x128] sm:$0xf]
  %v121 = vld [vmem:[%s1 + $0x12c] sm:$0xf]
  %v122 = vld [vmem:[%s1 + $0x130] sm:$0xf]
  %v123 = vld [vmem:[%s1 + $0x134] sm:$0xf]
  %v124 = vld [vmem:[%s1 + $0x138] sm:$0xf]
  %v125 = vld [vmem:[%s1 + $0x13c] sm:$0xf]
  %v126 = vld [vmem:[%s1 + $0x140] sm:$0xf]
  %v127 = vld [vmem:[%s1 + $0x144] sm:$0xf]
  %v128 = vld [vmem:[%s1 + $0x148] sm:$0xf]
  %v129 = vld [vmem:[%s1 + $0x14c] sm:$0xf]
  %v130 = vld [vmem:[%s1 + $0x150] sm:$0xf]
  %v131 = vld [vmem:[%s1 + $0x154] sm:$0xf]
  %v132 = vld [vmem:[%s1 + $0x158] sm:$0xf]
  %v133 = vld [vmem:[%s1 + $0x15c] sm:$0xf]
  %v134 = vld [vmem:[%s1 + $0x160] sm:$0xf]
  %v135 = vld [vmem:[%s1 + $0x164] sm:$0xf]
  %v136 = vld [vmem:[%s1 + $0x168] sm:$0xf]
  %v137 = vld [vmem:[%s1 + $0x16c] sm:$0xf]
  %v138 = vld [vmem:[%s1 + $0x170] sm:$0xf]
  %v139 = vld [vmem:[%s1 + $0x174] sm:$0xf]
  %v140 = vld [vmem:[%s1 + $0x178] sm:$0xf]
  %v141 = vld [vmem:[%s1 + $0x17c] sm:$0xf]
  %v142 = vld [vmem:[%s1 + $0x180] sm:$0xf]
  %v143 = vld [vmem:[%s1 + $0x184] sm:$0xf]
  %v144 = vld [vmem:[%s1 + $0x188] sm:$0xf]
  %v145 = vld [vmem:[%s1 + $0x18c] sm:$0xf]
  %v146 = vld [vmem:[%s1 + $0x190] sm:$0xf]
  %v147 = vld [vmem:[%s1 + $0x194] sm:$0xf]
  %v148 = vld [vmem:[%s1 + $0x198] sm:$0xf]
  %v149 = vld [vmem:[%s1 + $0x19c] sm:$0xf]
  %v150 = vld [vmem:[%s1 + $0x1a0] sm:$0xf]
  %v151 = vld [vmem:[%s1 + $0x1a4] sm:$0xf]
  %v152 = vld [vmem:[%s1 + $0x1a8] sm:$0xf]
  %v153 = vld [vmem:[%s1 + $0x1ac] sm:$0xf]
  %v154 = vld [vmem:[%s1 + $0x1b0] sm:$0xf]
  %v155 = vld [vmem:[%s1 + $0x1b4] sm:$0xf]
  %v156 = vld [vmem:[%s1 + $0x1b8] sm:$0xf]
  %v157 = vld [vmem:[%s1 + $0x1bc] sm:$0xf]
  %v158 = vld [vmem:[%s1 + $0x1c0] sm:$0xf]
  %v159 = vld [vmem:[%s1 + $0x1c4] sm:$0xf]
  %v160 = vld [vmem:[%s1 + $0x1c8] sm:$0xf]
  %v161 = vld [vmem:[%s1 + $0x1cc] sm:$0xf]
  %v162 = vld [vmem:[%s1 + $0x1d0] sm:$0xf]
  %v163 = vld [vmem:[%s1 + $0x1d4] sm:$0xf]
  %v164 = vld [vmem:[%s1 + $0x1d8] sm:$0xf]
  %v165 = vld [vmem:[%s1 + $0x1dc] sm:$0xf]
  %v166 = vld [vmem:[%s1 + $0x1e0] sm:$0xf]
  %v167 = vld [vmem:[%s1 + $0x1e4] sm:$0xf]
  %v168 = vld [vmem:[%s1 + $0x1e8] sm:$0xf]
  %v169 = vld [vmem:[%s1 + $0x1ec] sm:$0xf]
  %v170 = vld [vmem:[%s1 + $0x1f0] sm:$0xf]
  %v171 = vld [vmem:[%s1 + $0x1f4] sm:$0xf]
  %v172 = vld [vmem:[%s1 + $0x1f8] sm:$0xf]
  %v173 = vld [vmem:[%s1 + $0x1fc] sm:$0xf]
  %v174 = vld [vmem:[%s2] sm:$0x1]
  %v176 = vperm.slane %v174, 0
  %v210 = vunpack.c.l.b16 %v14
  %v211 = vunpack.c.h.b16 %v14
  %v212 = vunpack.c.l.b16 %v15
  %v213 = vunpack.c.h.b16 %v15
  %v214 = vunpack.c.l.b16 %v16
  %v215 = vunpack.c.h.b16 %v16
  %v216 = vunpack.c.l.b16 %v17
  %v217 = vunpack.c.h.b16 %v17
  %v218 = vunpack.c.l.b16 %v18
  %v219 = vunpack.c.h.b16 %v18
  %v220 = vunpack.c.l.b16 %v19
  %v221 = vunpack.c.h.b16 %v19
  %v222 = vunpack.c.l.b16 %v20
  %v223 = vunpack.c.h.b16 %v20
  %v224 = vunpack.c.l.b16 %v21
  %v225 = vunpack.c.h.b16 %v21
  %v226 = vunpack.c.l.b16 %v22
  %v227 = vunpack.c.h.b16 %v22
  %v228 = vunpack.c.l.b16 %v23
  %v229 = vunpack.c.h.b16 %v23
  %v230 = vunpack.c.l.b16 %v24
  %v231 = vunpack.c.h.b16 %v24
  %v232 = vunpack.c.l.b16 %v25
  %v233 = vunpack.c.h.b16 %v25
  %v234 = vunpack.c.l.b16 %v26
  %v235 = vunpack.c.h.b16 %v26
  %v236 = vunpack.c.l.b16 %v27
  %v237 = vunpack.c.h.b16 %v27
  %v238 = vunpack.c.l.b16 %v28
  %v239 = vunpack.c.h.b16 %v28
  %v240 = vunpack.c.l.b16 %v29
  %v241 = vunpack.c.h.b16 %v29
  %v242 = vunpack.c.l.b16 %v30
  %v243 = vunpack.c.h.b16 %v30
  %v244 = vunpack.c.l.b16 %v31
  %v245 = vunpack.c.h.b16 %v31
  %v246 = vunpack.c.l.b16 %v32
  %v247 = vunpack.c.h.b16 %v32
  %v248 = vunpack.c.l.b16 %v33
  %v249 = vunpack.c.h.b16 %v33
  %v250 = vunpack.c.l.b16 %v34
  %v251 = vunpack.c.h.b16 %v34
  %v252 = vunpack.c.l.b16 %v35
  %v253 = vunpack.c.h.b16 %v35
  %v254 = vunpack.c.l.b16 %v36
  %v255 = vunpack.c.h.b16 %v36
  %v256 = vunpack.c.l.b16 %v37
  %v257 = vunpack.c.h.b16 %v37
  %v258 = vunpack.c.l.b16 %v38
  %v259 = vunpack.c.h.b16 %v38
  %v260 = vunpack.c.l.b16 %v39
  %v261 = vunpack.c.h.b16 %v39
  %v262 = vunpack.c.l.b16 %v40
  %v263 = vunpack.c.h.b16 %v40
  %v264 = vunpack.c.l.b16 %v41
  %v265 = vunpack.c.h.b16 %v41
  %v266 = vunpack.c.l.b16 %v42
  %v267 = vunpack.c.h.b16 %v42
  %v268 = vunpack.c.l.b16 %v43
  %v269 = vunpack.c.h.b16 %v43
  %v270 = vunpack.c.l.b16 %v44
  %v271 = vunpack.c.h.b16 %v44
  %v272 = vunpack.c.l.b16 %v45
  %v273 = vunpack.c.h.b16 %v45
  %v274 = vpack.c.b16 %v218, %v210
  %v275 = vpack.c.b16 %v219, %v211
  %v276 = vpack.c.b16 %v220, %v212
  %v277 = vpack.c.b16 %v221, %v213
  %v278 = vpack.c.b16 %v222, %v214
  %v279 = vpack.c.b16 %v223, %v215
  %v280 = vpack.c.b16 %v224, %v216
  %v281 = vpack.c.b16 %v225, %v217
  %v282 = vpack.c.b16 %v234, %v226
  %v283 = vpack.c.b16 %v235, %v227
  %v284 = vpack.c.b16 %v236, %v228
  %v285 = vpack.c.b16 %v237, %v229
  %v286 = vpack.c.b16 %v238, %v230
  %v287 = vpack.c.b16 %v239, %v231
  %v288 = vpack.c.b16 %v240, %v232
  %v289 = vpack.c.b16 %v241, %v233
  %v290 = vpack.c.b16 %v250, %v242
  %v291 = vpack.c.b16 %v251, %v243
  %v292 = vpack.c.b16 %v252, %v244
  %v293 = vpack.c.b16 %v253, %v245
  %v294 = vpack.c.b16 %v254, %v246
  %v295 = vpack.c.b16 %v255, %v247
  %v296 = vpack.c.b16 %v256, %v248
  %v297 = vpack.c.b16 %v257, %v249
  %v298 = vpack.c.b16 %v266, %v258
  %v299 = vpack.c.b16 %v267, %v259
  %v300 = vpack.c.b16 %v268, %v260
  %v301 = vpack.c.b16 %v269, %v261
  %v302 = vpack.c.b16 %v270, %v262
  %v303 = vpack.c.b16 %v271, %v263
  %v304 = vpack.c.b16 %v272, %v264
  %v305 = vpack.c.b16 %v273, %v265
  %v466 = vunpack.c.l.b16 %v46
  %v467 = vunpack.c.l.b16 %v47
  %v468 = vunpack.c.l.b16 %v48
  %v469 = vunpack.c.l.b16 %v49
  %v470 = vunpack.c.l.b16 %v50
  %v471 = vunpack.c.l.b16 %v51
  %v472 = vunpack.c.l.b16 %v52
  %v473 = vunpack.c.l.b16 %v53
  %v474 = vunpack.c.l.b16 %v54
  %v475 = vunpack.c.l.b16 %v55
  %v476 = vunpack.c.l.b16 %v56
  %v477 = vunpack.c.l.b16 %v57
  %v478 = vunpack.c.l.b16 %v58
  %v479 = vunpack.c.l.b16 %v59
  %v480 = vunpack.c.l.b16 %v60
  %v481 = vunpack.c.l.b16 %v61
  %v482 = vunpack.c.l.b16 %v62
  %v483 = vunpack.c.l.b16 %v63
  %v484 = vunpack.c.l.b16 %v64
  %v485 = vunpack.c.l.b16 %v65
  %v486 = vunpack.c.l.b16 %v66
  %v487 = vunpack.c.l.b16 %v67
  %v488 = vunpack.c.l.b16 %v68
  %v489 = vunpack.c.l.b16 %v69
  %v490 = vunpack.c.l.b16 %v70
  %v491 = vunpack.c.l.b16 %v71
  %v492 = vunpack.c.l.b16 %v72
  %v493 = vunpack.c.l.b16 %v73
  %v494 = vunpack.c.l.b16 %v74
  %v495 = vunpack.c.l.b16 %v75
  %v496 = vunpack.c.l.b16 %v76
  %v497 = vunpack.c.l.b16 %v77
  %v498 = vunpack.c.l.b16 %v78
  %v499 = vunpack.c.l.b16 %v79
  %v500 = vunpack.c.l.b16 %v80
  %v501 = vunpack.c.l.b16 %v81
  %v502 = vunpack.c.l.b16 %v82
  %v503 = vunpack.c.l.b16 %v83
  %v504 = vunpack.c.l.b16 %v84
  %v505 = vunpack.c.l.b16 %v85
  %v506 = vunpack.c.l.b16 %v86
  %v507 = vunpack.c.l.b16 %v87
  %v508 = vunpack.c.l.b16 %v88
  %v509 = vunpack.c.l.b16 %v89
  %v510 = vunpack.c.l.b16 %v90
  %v511 = vunpack.c.l.b16 %v91
  %v512 = vunpack.c.l.b16 %v92
  %v513 = vunpack.c.l.b16 %v93
  %v514 = vunpack.c.l.b16 %v94
  %v515 = vunpack.c.l.b16 %v95
  %v516 = vunpack.c.l.b16 %v96
  %v517 = vunpack.c.l.b16 %v97
  %v518 = vunpack.c.l.b16 %v98
  %v519 = vunpack.c.l.b16 %v99
  %v520 = vunpack.c.l.b16 %v100
  %v521 = vunpack.c.l.b16 %v101
  %v522 = vunpack.c.l.b16 %v102
  %v523 = vunpack.c.l.b16 %v103
  %v524 = vunpack.c.l.b16 %v104
  %v525 = vunpack.c.l.b16 %v105
  %v526 = vunpack.c.l.b16 %v106
  %v527 = vunpack.c.l.b16 %v107
  %v528 = vunpack.c.l.b16 %v108
  %v529 = vunpack.c.l.b16 %v109
  %v530 = vunpack.c.l.b16 %v110
  %v531 = vunpack.c.l.b16 %v111
  %v532 = vunpack.c.l.b16 %v112
  %v533 = vunpack.c.l.b16 %v113
  %v534 = vunpack.c.l.b16 %v114
  %v535 = vunpack.c.l.b16 %v115
  %v536 = vunpack.c.l.b16 %v116
  %v537 = vunpack.c.l.b16 %v117
  %v538 = vunpack.c.l.b16 %v118
  %v539 = vunpack.c.l.b16 %v119
  %v540 = vunpack.c.l.b16 %v120
  %v541 = vunpack.c.l.b16 %v121
  %v542 = vunpack.c.l.b16 %v122
  %v543 = vunpack.c.l.b16 %v123
  %v544 = vunpack.c.l.b16 %v124
  %v545 = vunpack.c.l.b16 %v125
  %v546 = vunpack.c.l.b16 %v126
  %v547 = vunpack.c.l.b16 %v127
  %v548 = vunpack.c.l.b16 %v128
  %v549 = vunpack.c.l.b16 %v129
  %v550 = vunpack.c.l.b16 %v130
  %v551 = vunpack.c.l.b16 %v131
  %v552 = vunpack.c.l.b16 %v132
  %v553 = vunpack.c.l.b16 %v133
  %v554 = vunpack.c.l.b16 %v134
  %v555 = vunpack.c.l.b16 %v135
  %v556 = vunpack.c.l.b16 %v136
  %v557 = vunpack.c.l.b16 %v137
  %v558 = vunpack.c.l.b16 %v138
  %v559 = vunpack.c.l.b16 %v139
  %v560 = vunpack.c.l.b16 %v140
  %v561 = vunpack.c.l.b16 %v141
  %v562 = vunpack.c.l.b16 %v142
  %v563 = vunpack.c.l.b16 %v143
  %v564 = vunpack.c.l.b16 %v144
  %v565 = vunpack.c.l.b16 %v145
  %v566 = vunpack.c.l.b16 %v146
  %v567 = vunpack.c.l.b16 %v147
  %v568 = vunpack.c.l.b16 %v148
  %v569 = vunpack.c.l.b16 %v149
  %v570 = vunpack.c.l.b16 %v150
  %v571 = vunpack.c.l.b16 %v151
  %v572 = vunpack.c.l.b16 %v152
  %v573 = vunpack.c.l.b16 %v153
  %v574 = vunpack.c.l.b16 %v154
  %v575 = vunpack.c.l.b16 %v155
  %v576 = vunpack.c.l.b16 %v156
  %v577 = vunpack.c.l.b16 %v157
  %v578 = vunpack.c.l.b16 %v158
  %v579 = vunpack.c.l.b16 %v159
  %v580 = vunpack.c.l.b16 %v160
  %v581 = vunpack.c.l.b16 %v161
  %v582 = vunpack.c.l.b16 %v162
  %v583 = vunpack.c.l.b16 %v163
  %v584 = vunpack.c.l.b16 %v164
  %v585 = vunpack.c.l.b16 %v165
  %v586 = vunpack.c.l.b16 %v166
  %v587 = vunpack.c.l.b16 %v167
  %v588 = vunpack.c.l.b16 %v168
  %v589 = vunpack.c.l.b16 %v169
  %v590 = vunpack.c.l.b16 %v170
  %v591 = vunpack.c.l.b16 %v171
  %v592 = vunpack.c.l.b16 %v172
  %v593 = vunpack.c.l.b16 %v173
  %v594 = vpack.c.b16 %v467, %v466
  %v595 = vpack.c.b16 %v469, %v468
  %v596 = vpack.c.b16 %v471, %v470
  %v597 = vpack.c.b16 %v473, %v472
  %v598 = vpack.c.b16 %v475, %v474
  %v599 = vpack.c.b16 %v477, %v476
  %v600 = vpack.c.b16 %v479, %v478
  %v601 = vpack.c.b16 %v481, %v480
  %v602 = vpack.c.b16 %v483, %v482
  %v603 = vpack.c.b16 %v485, %v484
  %v604 = vpack.c.b16 %v487, %v486
  %v605 = vpack.c.b16 %v489, %v488
  %v606 = vpack.c.b16 %v491, %v490
  %v607 = vpack.c.b16 %v493, %v492
  %v608 = vpack.c.b16 %v495, %v494
  %v609 = vpack.c.b16 %v497, %v496
  %v610 = vpack.c.b16 %v499, %v498
  %v611 = vpack.c.b16 %v501, %v500
  %v612 = vpack.c.b16 %v503, %v502
  %v613 = vpack.c.b16 %v505, %v504
  %v614 = vpack.c.b16 %v507, %v506
  %v615 = vpack.c.b16 %v509, %v508
  %v616 = vpack.c.b16 %v511, %v510
  %v617 = vpack.c.b16 %v513, %v512
  %v618 = vpack.c.b16 %v515, %v514
  %v619 = vpack.c.b16 %v517, %v516
  %v620 = vpack.c.b16 %v519, %v518
  %v621 = vpack.c.b16 %v521, %v520
  %v622 = vpack.c.b16 %v523, %v522
  %v623 = vpack.c.b16 %v525, %v524
  %v624 = vpack.c.b16 %v527, %v526
  %v625 = vpack.c.b16 %v529, %v528
  %v626 = vpack.c.b16 %v531, %v530
  %v627 = vpack.c.b16 %v533, %v532
  %v628 = vpack.c.b16 %v535, %v534
  %v629 = vpack.c.b16 %v537, %v536
  %v630 = vpack.c.b16 %v539, %v538
  %v631 = vpack.c.b16 %v541, %v540
  %v632 = vpack.c.b16 %v543, %v542
  %v633 = vpack.c.b16 %v545, %v544
  %v634 = vpack.c.b16 %v547, %v546
  %v635 = vpack.c.b16 %v549, %v548
  %v636 = vpack.c.b16 %v551, %v550
  %v637 = vpack.c.b16 %v553, %v552
  %v638 = vpack.c.b16 %v555, %v554
  %v639 = vpack.c.b16 %v557, %v556
  %v640 = vpack.c.b16 %v559, %v558
  %v641 = vpack.c.b16 %v561, %v560
  %v642 = vpack.c.b16 %v563, %v562
  %v643 = vpack.c.b16 %v565, %v564
  %v644 = vpack.c.b16 %v567, %v566
  %v645 = vpack.c.b16 %v569, %v568
  %v646 = vpack.c.b16 %v571, %v570
  %v647 = vpack.c.b16 %v573, %v572
  %v648 = vpack.c.b16 %v575, %v574
  %v649 = vpack.c.b16 %v577, %v576
  %v650 = vpack.c.b16 %v579, %v578
  %v651 = vpack.c.b16 %v581, %v580
  %v652 = vpack.c.b16 %v583, %v582
  %v653 = vpack.c.b16 %v585, %v584
  %v654 = vpack.c.b16 %v587, %v586
  %v655 = vpack.c.b16 %v589, %v588
  %v656 = vpack.c.b16 %v591, %v590
  %v657 = vpack.c.b16 %v593, %v592
  %722 = vmatpush.bf16.msra.mxu0 %v601
  %723 = vmatpush.bf16.msra.mxu0 %v600
  %724 = vmatpush.bf16.msra.mxu0 %v599
  %725 = vmatpush.bf16.msra.mxu0 %v598
  %726 = vmatpush.bf16.msra.mxu0 %v597
  %727 = vmatpush.bf16.msra.mxu0 %v596
  %728 = vmatpush.bf16.msra.mxu0 %v595
  %729 = vmatpush.bf16.msra.mxu0 %v594
  %730 = vmatmul.bf16.gmra.mxu0 %v274
  %v731 = vpop.f32.mrf.mxu0
  %v732 = vadd.f32 %v176, %v731
  %v733 = vpop.f32.mrf.mxu0
  %v734 = vadd.f32 %v176, %v733
  %735 = vmatmul.bf16.gmra.mxu0 %v282
  %v736 = vpop.f32.mrf.mxu0
  %v737 = vadd.f32 %v176, %v736
  %v738 = vpop.f32.mrf.mxu0
  %v739 = vadd.f32 %v176, %v738
  %740 = vmatmul.bf16.gmra.mxu0 %v290
  %v741 = vpop.f32.mrf.mxu0
  %v742 = vadd.f32 %v176, %v741
  %v743 = vpop.f32.mrf.mxu0
  %v744 = vadd.f32 %v176, %v743
  %745 = vmatmul.bf16.gmra.mxu0 %v298
  %v746 = vpop.f32.mrf.mxu0
  %v747 = vadd.f32 %v176, %v746
  %v748 = vpop.f32.mrf.mxu0
  %v749 = vadd.f32 %v176, %v748
  %750 = vdwg.mxu0
  %751 = vmatpush.bf16.msra.mxu0 %v609
  %752 = vmatpush.bf16.msra.mxu0 %v608
  %753 = vmatpush.bf16.msra.mxu0 %v607
  %754 = vmatpush.bf16.msra.mxu0 %v606
  %755 = vmatpush.bf16.msra.mxu0 %v605
  %756 = vmatpush.bf16.msra.mxu0 %v604
  %757 = vmatpush.bf16.msra.mxu0 %v603
  %758 = vmatpush.bf16.msra.mxu0 %v602
  %759 = vmatmul.bf16.gmra.mxu0 %v275
  %v760 = vpop.f32.mrf.mxu0
  %v761 = vadd.f32 %v732, %v760
  %v762 = vpop.f32.mrf.mxu0
  %v763 = vadd.f32 %v734, %v762
  %764 = vmatmul.bf16.gmra.mxu0 %v283
  %v765 = vpop.f32.mrf.mxu0
  %v766 = vadd.f32 %v737, %v765
  %v767 = vpop.f32.mrf.mxu0
  %v768 = vadd.f32 %v739, %v767
  %769 = vmatmul.bf16.gmra.mxu0 %v291
  %v770 = vpop.f32.mrf.mxu0
  %v771 = vadd.f32 %v742, %v770
  %v772 = vpop.f32.mrf.mxu0
  %v773 = vadd.f32 %v744, %v772
  %774 = vmatmul.bf16.gmra.mxu0 %v299
  %v775 = vpop.f32.mrf.mxu0
  %v776 = vadd.f32 %v747, %v775
  %v777 = vpop.f32.mrf.mxu0
  %v778 = vadd.f32 %v749, %v777
  %779 = vdwg.mxu0
  %780 = vmatpush.bf16.msra.mxu0 %v617
  %781 = vmatpush.bf16.msra.mxu0 %v616
  %782 = vmatpush.bf16.msra.mxu0 %v615
  %783 = vmatpush.bf16.msra.mxu0 %v614
  %784 = vmatpush.bf16.msra.mxu0 %v613
  %785 = vmatpush.bf16.msra.mxu0 %v612
  %786 = vmatpush.bf16.msra.mxu0 %v611
  %787 = vmatpush.bf16.msra.mxu0 %v610
  %788 = vmatmul.bf16.gmra.mxu0 %v276
  %v789 = vpop.f32.mrf.mxu0
  %v790 = vadd.f32 %v761, %v789
  %v791 = vpop.f32.mrf.mxu0
  %v792 = vadd.f32 %v763, %v791
  %793 = vmatmul.bf16.gmra.mxu0 %v284
  %v794 = vpop.f32.mrf.mxu0
  %v795 = vadd.f32 %v766, %v794
  %v796 = vpop.f32.mrf.mxu0
  %v797 = vadd.f32 %v768, %v796
  %798 = vmatmul.bf16.gmra.mxu0 %v292
  %v799 = vpop.f32.mrf.mxu0
  %v800 = vadd.f32 %v771, %v799
  %v801 = vpop.f32.mrf.mxu0
  %v802 = vadd.f32 %v773, %v801
  %803 = vmatmul.bf16.gmra.mxu0 %v300
  %v804 = vpop.f32.mrf.mxu0
  %v805 = vadd.f32 %v776, %v804
  %v806 = vpop.f32.mrf.mxu0
  %v807 = vadd.f32 %v778, %v806
  %808 = vdwg.mxu0
  %809 = vmatpush.bf16.msra.mxu0 %v625
  %810 = vmatpush.bf16.msra.mxu0 %v624
  %811 = vmatpush.bf16.msra.mxu0 %v623
  %812 = vmatpush.bf16.msra.mxu0 %v622
  %813 = vmatpush.bf16.msra.mxu0 %v621
  %814 = vmatpush.bf16.msra.mxu0 %v620
  %815 = vmatpush.bf16.msra.mxu0 %v619
  %816 = vmatpush.bf16.msra.mxu0 %v618
  %817 = vmatmul.bf16.gmra.mxu0 %v277
  %v818 = vpop.f32.mrf.mxu0
  %v819 = vadd.f32 %v790, %v818
  %v820 = vpop.f32.mrf.mxu0
  %v821 = vadd.f32 %v792, %v820
  %822 = vmatmul.bf16.gmra.mxu0 %v285
  %v823 = vpop.f32.mrf.mxu0
  %v824 = vadd.f32 %v795, %v823
  %v825 = vpop.f32.mrf.mxu0
  %v826 = vadd.f32 %v797, %v825
  %827 = vmatmul.bf16.gmra.mxu0 %v293
  %v828 = vpop.f32.mrf.mxu0
  %v829 = vadd.f32 %v800, %v828
  %v830 = vpop.f32.mrf.mxu0
  %v831 = vadd.f32 %v802, %v830
  %832 = vmatmul.bf16.gmra.mxu0 %v301
  %v833 = vpop.f32.mrf.mxu0
  %v834 = vadd.f32 %v805, %v833
  %v835 = vpop.f32.mrf.mxu0
  %v836 = vadd.f32 %v807, %v835
  %837 = vdwg.mxu0
  %838 = vmatpush.bf16.msra.mxu0 %v633
  %839 = vmatpush.bf16.msra.mxu0 %v632
  %840 = vmatpush.bf16.msra.mxu0 %v631
  %841 = vmatpush.bf16.msra.mxu0 %v630
  %842 = vmatpush.bf16.msra.mxu0 %v629
  %843 = vmatpush.bf16.msra.mxu0 %v628
  %844 = vmatpush.bf16.msra.mxu0 %v627
  %845 = vmatpush.bf16.msra.mxu0 %v626
  %846 = vmatmul.bf16.gmra.mxu0 %v278
  %v847 = vpop.f32.mrf.mxu0
  %v848 = vadd.f32 %v819, %v847
  %v849 = vpop.f32.mrf.mxu0
  %v850 = vadd.f32 %v821, %v849
  %851 = vmatmul.bf16.gmra.mxu0 %v286
  %v852 = vpop.f32.mrf.mxu0
  %v853 = vadd.f32 %v824, %v852
  %v854 = vpop.f32.mrf.mxu0
  %v855 = vadd.f32 %v826, %v854
  %856 = vmatmul.bf16.gmra.mxu0 %v294
  %v857 = vpop.f32.mrf.mxu0
  %v858 = vadd.f32 %v829, %v857
  %v859 = vpop.f32.mrf.mxu0
  %v860 = vadd.f32 %v831, %v859
  %861 = vmatmul.bf16.gmra.mxu0 %v302
  %v862 = vpop.f32.mrf.mxu0
  %v863 = vadd.f32 %v834, %v862
  %v864 = vpop.f32.mrf.mxu0
  %v865 = vadd.f32 %v836, %v864
  %866 = vdwg.mxu0
  %867 = vmatpush.bf16.msra.mxu0 %v641
  %868 = vmatpush.bf16.msra.mxu0 %v640
  %869 = vmatpush.bf16.msra.mxu0 %v639
  %870 = vmatpush.bf16.msra.mxu0 %v638
  %871 = vmatpush.bf16.msra.mxu0 %v637
  %872 = vmatpush.bf16.msra.mxu0 %v636
  %873 = vmatpush.bf16.msra.mxu0 %v635
  %874 = vmatpush.bf16.msra.mxu0 %v634
  %875 = vmatmul.bf16.gmra.mxu0 %v279
  %v876 = vpop.f32.mrf.mxu0
  %v877 = vadd.f32 %v848, %v876
  %v878 = vpop.f32.mrf.mxu0
  %v879 = vadd.f32 %v850, %v878
  %880 = vmatmul.bf16.gmra.mxu0 %v287
  %v881 = vpop.f32.mrf.mxu0
  %v882 = vadd.f32 %v853, %v881
  %v883 = vpop.f32.mrf.mxu0
  %v884 = vadd.f32 %v855, %v883
  %885 = vmatmul.bf16.gmra.mxu0 %v295
  %v886 = vpop.f32.mrf.mxu0
  %v887 = vadd.f32 %v858, %v886
  %v888 = vpop.f32.mrf.mxu0
  %v889 = vadd.f32 %v860, %v888
  %890 = vmatmul.bf16.gmra.mxu0 %v303
  %v891 = vpop.f32.mrf.mxu0
  %v892 = vadd.f32 %v863, %v891
  %v893 = vpop.f32.mrf.mxu0
  %v894 = vadd.f32 %v865, %v893
  %895 = vdwg.mxu0
  %896 = vmatpush.bf16.msra.mxu0 %v649
  %897 = vmatpush.bf16.msra.mxu0 %v648
  %898 = vmatpush.bf16.msra.mxu0 %v647
  %899 = vmatpush.bf16.msra.mxu0 %v646
  %900 = vmatpush.bf16.msra.mxu0 %v645
  %901 = vmatpush.bf16.msra.mxu0 %v644
  %902 = vmatpush.bf16.msra.mxu0 %v643
  %903 = vmatpush.bf16.msra.mxu0 %v642
  %904 = vmatmul.bf16.gmra.mxu0 %v280
  %v905 = vpop.f32.mrf.mxu0
  %v906 = vadd.f32 %v877, %v905
  %v907 = vpop.f32.mrf.mxu0
  %v908 = vadd.f32 %v879, %v907
  %909 = vmatmul.bf16.gmra.mxu0 %v288
  %v910 = vpop.f32.mrf.mxu0
  %v911 = vadd.f32 %v882, %v910
  %v912 = vpop.f32.mrf.mxu0
  %v913 = vadd.f32 %v884, %v912
  %914 = vmatmul.bf16.gmra.mxu0 %v296
  %v915 = vpop.f32.mrf.mxu0
  %v916 = vadd.f32 %v887, %v915
  %v917 = vpop.f32.mrf.mxu0
  %v918 = vadd.f32 %v889, %v917
  %919 = vmatmul.bf16.gmra.mxu0 %v304
  %v920 = vpop.f32.mrf.mxu0
  %v921 = vadd.f32 %v892, %v920
  %v922 = vpop.f32.mrf.mxu0
  %v923 = vadd.f32 %v894, %v922
  %924 = vdwg.mxu0
  %925 = vmatpush.bf16.msra.mxu0 %v657
  %926 = vmatpush.bf16.msra.mxu0 %v656
  %927 = vmatpush.bf16.msra.mxu0 %v655
  %928 = vmatpush.bf16.msra.mxu0 %v654
  %929 = vmatpush.bf16.msra.mxu0 %v653
  %930 = vmatpush.bf16.msra.mxu0 %v652
  %931 = vmatpush.bf16.msra.mxu0 %v651
  %932 = vmatpush.bf16.msra.mxu0 %v650
  %933 = vmatmul.bf16.gmra.mxu0 %v281
  %v934 = vpop.f32.mrf.mxu0
  %v935 = vadd.f32 %v906, %v934
  %v936 = vpop.f32.mrf.mxu0
  %v937 = vadd.f32 %v908, %v936
  %938 = vmatmul.bf16.gmra.mxu0 %v289
  %v939 = vpop.f32.mrf.mxu0
  %v940 = vadd.f32 %v911, %v939
  %v941 = vpop.f32.mrf.mxu0
  %v942 = vadd.f32 %v913, %v941
  %943 = vmatmul.bf16.gmra.mxu0 %v297
  %v944 = vpop.f32.mrf.mxu0
  %v945 = vadd.f32 %v916, %v944
  %v946 = vpop.f32.mrf.mxu0
  %v947 = vadd.f32 %v918, %v946
  %948 = vmatmul.bf16.gmra.mxu0 %v305
  %v949 = vpop.f32.mrf.mxu0
  %v950 = vadd.f32 %v921, %v949
  %v951 = vpop.f32.mrf.mxu0
  %v952 = vadd.f32 %v923, %v951
  %953 = vdwg.mxu0
  %v954 = vmax.f32 %v935, 0.0
  %v955 = vmax.f32 %v937, 0.0
  %v956 = vmax.f32 %v940, 0.0
  %v957 = vmax.f32 %v942, 0.0
  %v958 = vmax.f32 %v945, 0.0
  %v959 = vmax.f32 %v947, 0.0
  %v960 = vmax.f32 %v950, 0.0
  %v961 = vmax.f32 %v952, 0.0
  %v962 = vpack.c.bf16 %v954, %v954
  %v963 = vpack.c.bf16 %v955, %v955
  %v964 = vpack.c.bf16 %v956, %v956
  %v965 = vpack.c.bf16 %v957, %v957
  %v966 = vpack.c.bf16 %v958, %v958
  %v967 = vpack.c.bf16 %v959, %v959
  %v968 = vpack.c.bf16 %v960, %v960
  %v969 = vpack.c.bf16 %v961, %v961
  %vm970 = vcmask 257024
  %971 = vst.msk [vmem:[%s3] sm:$0xf] %vm970, %v962
  %972 = vst.msk [vmem:[%s3 + $0x4] sm:$0xf] %vm970, %v963
  %973 = vst.msk [vmem:[%s3 + $0x8] sm:$0xf] %vm970, %v964
  %974 = vst.msk [vmem:[%s3 + $0xc] sm:$0xf] %vm970, %v965
  %975 = vst.msk [vmem:[%s3 + $0x10] sm:$0xf] %vm970, %v966
  %976 = vst.msk [vmem:[%s3 + $0x14] sm:$0xf] %vm970, %v967
  %977 = vst.msk [vmem:[%s3 + $0x18] sm:$0xf] %vm970, %v968
  %978 = vst.msk [vmem:[%s3 + $0x1c] sm:$0xf] %vm970, %v969
  // Predicated region
  $region14: #{forward.6} parent=0 // pred_check
    _
  $region15: #{forward.6} parent=0 // pred_check_branch
    %980 = sbr.rel (0) target = $region17
  $region16: #{forward.6} parent=0 // pred_region
    _
  $region17: #{forward.6} parent=0 // pred_fallthru
    _
  // Predicated region
  $region18: #{forward.6} parent=0 // pred_check
    _
  $region19: #{forward.6} parent=0 // pred_check_branch
    %982 = sbr.rel (0) target = $region21
  $region20: #{forward.6} parent=0 // pred_region
    _
  $region21: #{forward.6} parent=0 // pred_fallthru
    _

// kernel: forward.7
$region0: #{forward.7}
  #allocation0 [shape = 'u32[]', space=smem, size = 0x4, offset = 0x4, fixed_abs, tag = 'smem constant byte address 0x4 - core index']
  #allocation1 [shape = 'u32[72,128]{1,0:T(1,128)}', space=vmem, size = 0x9000, scoped, tag = 'internal scratch']
  %s0 = inlined_call_operand.vmem [shape: bf16[24,864], index: 0, kind: input, shape index: {}]
  %s1 = inlined_call_operand.vmem [shape: bf16[864,64], index: 1, kind: input, shape index: {}]
  %s2 = inlined_call_operand.vmem [shape: f32[1,64], index: 2, kind: input, shape index: {}]
  %s3 = inlined_call_operand.vmem [shape: bf16[24,64], index: 3, kind: output, shape index: {}]
  %s4 = sld [smem:[#allocation0]]
  $region22: #{forward.7} parent=0
    _
  %s6 = ssub.s32 1, %s4
  %s7 = scalar_select 0, %s6, %s4
  // Predicated region
  $region2: #{forward.7} parent=0 // pred_check
    _
  $region3: #{forward.7} parent=0 // pred_check_branch
    %9 = sbr.rel (0) target = $region5
  $region4: #{forward.7} parent=0 // pred_region
    _
  $region5: #{forward.7} parent=0 // pred_fallthru
    _
  // Predicated region
  $region6: #{forward.7} parent=0 // pred_check
    _
  $region7: #{forward.7} parent=0 // pred_check_branch
    %11 = sbr.rel (0) target = $region9
  $region8: #{forward.7} parent=0 // pred_region
    _
  $region9: #{forward.7} parent=0 // pred_fallthru
    _
  // Predicated region
  $region10: #{forward.7} parent=0 // pred_check
    _
  $region11: #{forward.7} parent=0 // pred_check_branch
    %13 = sbr.rel (0) target = $region13
  $region12: #{forward.7} parent=0 // pred_region
    _
  $region13: #{forward.7} parent=0 // pred_fallthru
    _
  %v15 = vld [vmem:[%s0] sm:$0xff]
  %v16 = vld [vmem:[%s0 + $0x8] sm:$0xff]
  %v17 = vld [vmem:[%s0 + $0x10] sm:$0xff]
  %v18 = vld [vmem:[%s0 + $0x18] sm:$0xf]
  %v19 = vld [vmem:[%s0 + $0x1c] sm:$0xff]
  %v20 = vld [vmem:[%s0 + $0x24] sm:$0xff]
  %v21 = vld [vmem:[%s0 + $0x2c] sm:$0xff]
  %v22 = vld [vmem:[%s0 + $0x34] sm:$0xf]
  %v23 = vld [vmem:[%s0 + $0x38] sm:$0xff]
  %v24 = vld [vmem:[%s0 + $0x40] sm:$0xff]
  %v25 = vld [vmem:[%s0 + $0x48] sm:$0xff]
  %v26 = vld [vmem:[%s0 + $0x50] sm:$0xf]
  %v27 = vld [vmem:[%s1] sm:$0xf]
  %v28 = vld [vmem:[%s1 + $0x4] sm:$0xf]
  %v29 = vld [vmem:[%s1 + $0x8] sm:$0xf]
  %v30 = vld [vmem:[%s1 + $0xc] sm:$0xf]
  %v31 = vld [vmem:[%s1 + $0x10] sm:$0xf]
  %v32 = vld [vmem:[%s1 + $0x14] sm:$0xf]
  %v33 = vld [vmem:[%s1 + $0x18] sm:$0xf]
  %v34 = vld [vmem:[%s1 + $0x1c] sm:$0xf]
  %v35 = vld [vmem:[%s1 + $0x20] sm:$0xf]
  %v36 = vld [vmem:[%s1 + $0x24] sm:$0xf]
  %v37 = vld [vmem:[%s1 + $0x28] sm:$0xf]
  %v38 = vld [vmem:[%s1 + $0x2c] sm:$0xf]
  %v39 = vld [vmem:[%s1 + $0x30] sm:$0xf]
  %v40 = vld [vmem:[%s1 + $0x34] sm:$0xf]
  %v41 = vld [vmem:[%s1 + $0x38] sm:$0xf]
  %v42 = vld [vmem:[%s1 + $0x3c] sm:$0xf]
  %v43 = vld [vmem:[%s1 + $0x40] sm:$0xf]
  %v44 = vld [vmem:[%s1 + $0x44] sm:$0xf]
  %v45 = vld [vmem:[%s1 + $0x48] sm:$0xf]
  %v46 = vld [vmem:[%s1 + $0x4c] sm:$0xf]
  %v47 = vld [vmem:[%s1 + $0x50] sm:$0xf]
  %v48 = vld [vmem:[%s1 + $0x54] sm:$0xf]
  %v49 = vld [vmem:[%s1 + $0x58] sm:$0xf]
  %v50 = vld [vmem:[%s1 + $0x5c] sm:$0xf]
  %v51 = vld [vmem:[%s1 + $0x60] sm:$0xf]
  %v52 = vld [vmem:[%s1 + $0x64] sm:$0xf]
  %v53 = vld [vmem:[%s1 + $0x68] sm:$0xf]
  %v54 = vld [vmem:[%s1 + $0x6c] sm:$0xf]
  %v55 = vld [vmem:[%s1 + $0x70] sm:$0xf]
  %v56 = vld [vmem:[%s1 + $0x74] sm:$0xf]
  %v57 = vld [vmem:[%s1 + $0x78] sm:$0xf]
  %v58 = vld [vmem:[%s1 + $0x7c] sm:$0xf]
  %v59 = vld [vmem:[%s1 + $0x80] sm:$0xf]
  %v60 = vld [vmem:[%s1 + $0x84] sm:$0xf]
  %v61 = vld [vmem:[%s1 + $0x88] sm:$0xf]
  %v62 = vld [vmem:[%s1 + $0x8c] sm:$0xf]
  %v63 = vld [vmem:[%s1 + $0x90] sm:$0xf]
  %v64 = vld [vmem:[%s1 + $0x94] sm:$0xf]
  %v65 = vld [vmem:[%s1 + $0x98] sm:$0xf]
  %v66 = vld [vmem:[%s1 + $0x9c] sm:$0xf]
  %v67 = vld [vmem:[%s1 + $0xa0] sm:$0xf]
  %v68 = vld [vmem:[%s1 + $0xa4] sm:$0xf]
  %v69 = vld [vmem:[%s1 + $0xa8] sm:$0xf]
  %v70 = vld [vmem:[%s1 + $0xac] sm:$0xf]
  %v71 = vld [vmem:[%s1 + $0xb0] sm:$0xf]
  %v72 = vld [vmem:[%s1 + $0xb4] sm:$0xf]
  %v73 = vld [vmem:[%s1 + $0xb8] sm:$0xf]
  %v74 = vld [vmem:[%s1 + $0xbc] sm:$0xf]
  %v75 = vld [vmem:[%s1 + $0xc0] sm:$0xf]
  %v76 = vld [vmem:[%s1 + $0xc4] sm:$0xf]
  %v77 = vld [vmem:[%s1 + $0xc8] sm:$0xf]
  %v78 = vld [vmem:[%s1 + $0xcc] sm:$0xf]
  %v79 = vld [vmem:[%s1 + $0xd0] sm:$0xf]
  %v80 = vld [vmem:[%s1 + $0xd4] sm:$0xf]
  %v81 = vld [vmem:[%s1 + $0xd8] sm:$0xf]
  %v82 = vld [vmem:[%s1 + $0xdc] sm:$0xf]
  %v83 = vld [vmem:[%s1 + $0xe0] sm:$0xf]
  %v84 = vld [vmem:[%s1 + $0xe4] sm:$0xf]
  %v85 = vld [vmem:[%s1 + $0xe8] sm:$0xf]
  %v86 = vld [vmem:[%s1 + $0xec] sm:$0xf]
  %v87 = vld [vmem:[%s1 + $0xf0] sm:$0xf]
  %v88 = vld [vmem:[%s1 + $0xf4] sm:$0xf]
  %v89 = vld [vmem:[%s1 + $0xf8] sm:$0xf]
  %v90 = vld [vmem:[%s1 + $0xfc] sm:$0xf]
  %v91 = vld [vmem:[%s1 + $0x100] sm:$0xf]
  %v92 = vld [vmem:[%s1 + $0x104] sm:$0xf]
  %v93 = vld [vmem:[%s1 + $0x108] sm:$0xf]
  %v94 = vld [vmem:[%s1 + $0x10c] sm:$0xf]
  %v95 = vld [vmem:[%s1 + $0x110] sm:$0xf]
  %v96 = vld [vmem:[%s1 + $0x114] sm:$0xf]
  %v97 = vld [vmem:[%s1 + $0x118] sm:$0xf]
  %v98 = vld [vmem:[%s1 + $0x11c] sm:$0xf]
  %v99 = vld [vmem:[%s1 + $0x120] sm:$0xf]
  %v100 = vld [vmem:[%s1 + $0x124] sm:$0xf]
  %v101 = vld [vmem:[%s1 + $0x128] sm:$0xf]
  %v102 = vld [vmem:[%s1 + $0x12c] sm:$0xf]
  %v103 = vld [vmem:[%s1 + $0x130] sm:$0xf]
  %v104 = vld [vmem:[%s1 + $0x134] sm:$0xf]
  %v105 = vld [vmem:[%s1 + $0x138] sm:$0xf]
  %v106 = vld [vmem:[%s1 + $0x13c] sm:$0xf]
  %v107 = vld [vmem:[%s1 + $0x140] sm:$0xf]
  %v108 = vld [vmem:[%s1 + $0x144] sm:$0xf]
  %v109 = vld [vmem:[%s1 + $0x148] sm:$0xf]
  %v110 = vld [vmem:[%s1 + $0x14c] sm:$0xf]
  %v111 = vld [vmem:[%s1 + $0x150] sm:$0xf]
  %v112 = vld [vmem:[%s1 + $0x154] sm:$0xf]
  %v113 = vld [vmem:[%s1 + $0x158] sm:$0xf]
  %v114 = vld [vmem:[%s1 + $0x15c] sm:$0xf]
  %v115 = vld [vmem:[%s1 + $0x160] sm:$0xf]
  %v116 = vld [vmem:[%s1 + $0x164] sm:$0xf]
  %v117 = vld [vmem:[%s1 + $0x168] sm:$0xf]
  %v118 = vld [vmem:[%s1 + $0x16c] sm:$0xf]
  %v119 = vld [vmem:[%s1 + $0x170] sm:$0xf]
  %v120 = vld [vmem:[%s1 + $0x174] sm:$0xf]
  %v121 = vld [vmem:[%s1 + $0x178] sm:$0xf]
  %v122 = vld [vmem:[%s1 + $0x17c] sm:$0xf]
  %v123 = vld [vmem:[%s1 + $0x180] sm:$0xf]
  %v124 = vld [vmem:[%s1 + $0x184] sm:$0xf]
  %v125 = vld [vmem:[%s1 + $0x188] sm:$0xf]
  %v126 = vld [vmem:[%s1 + $0x18c] sm:$0xf]
  %v127 = vld [vmem:[%s1 + $0x190] sm:$0xf]
  %v128 = vld [vmem:[%s1 + $0x194] sm:$0xf]
  %v129 = vld [vmem:[%s1 + $0x198] sm:$0xf]
  %v130 = vld [vmem:[%s1 + $0x19c] sm:$0xf]
  %v131 = vld [vmem:[%s1 + $0x1a0] sm:$0xf]
  %v132 = vld [vmem:[%s1 + $0x1a4] sm:$0xf]
  %v133 = vld [vmem:[%s1 + $0x1a8] sm:$0xf]
  %v134 = vld [vmem:[%s1 + $0x1ac] sm:$0xf]
  %v135 = vld [vmem:[%s2] sm:$0x1]
  %v137 = vperm.slane %v135, 0
  %v151 = vunpack.c.l.b16 %v15
  %v152 = vunpack.c.h.b16 %v15
  %v153 = vunpack.c.l.b16 %v16
  %v154 = vunpack.c.h.b16 %v16
  %v155 = vunpack.c.l.b16 %v17
  %v156 = vunpack.c.h.b16 %v17
  %v157 = vunpack.c.l.b16 %v18
  %v158 = vunpack.c.l.b16 %v19
  %v159 = vunpack.c.h.b16 %v19
  %v160 = vunpack.c.l.b16 %v20
  %v161 = vunpack.c.h.b16 %v20
  %v162 = vunpack.c.l.b16 %v21
  %v163 = vunpack.c.h.b16 %v21
  %v164 = vunpack.c.l.b16 %v22
  %v165 = vunpack.c.l.b16 %v23
  %v166 = vunpack.c.h.b16 %v23
  %v167 = vunpack.c.l.b16 %v24
  %v168 = vunpack.c.h.b16 %v24
  %v169 = vunpack.c.l.b16 %v25
  %v170 = vunpack.c.h.b16 %v25
  %v171 = vunpack.c.l.b16 %v26
  %v172 = vpack.c.b16 %v158, %v151
  %v173 = vpack.c.b16 %v159, %v152
  %v174 = vpack.c.b16 %v160, %v153
  %v175 = vpack.c.b16 %v161, %v154
  %v176 = vpack.c.b16 %v162, %v155
  %v177 = vpack.c.b16 %v163, %v156
  %v178 = vpack.c.b16 %v164, %v157
  %v179 = vpack.c.b16 %v165, %v165
  %v180 = vpack.c.b16 %v166, %v166
  %v181 = vpack.c.b16 %v167, %v167
  %v182 = vpack.c.b16 %v168, %v168
  %v183 = vpack.c.b16 %v169, %v169
  %v184 = vpack.c.b16 %v170, %v170
  %v185 = vpack.c.b16 %v171, %v171
  %v306 = vunpack.c.l.b16 %v27
  %v307 = vunpack.c.l.b16 %v28
  %v308 = vunpack.c.l.b16 %v29
  %v309 = vunpack.c.l.b16 %v30
  %v310 = vunpack.c.l.b16 %v31
  %v311 = vunpack.c.l.b16 %v32
  %v312 = vunpack.c.l.b16 %v33
  %v313 = vunpack.c.l.b16 %v34
  %v314 = vunpack.c.l.b16 %v35
  %v315 = vunpack.c.l.b16 %v36
  %v316 = vunpack.c.l.b16 %v37
  %v317 = vunpack.c.l.b16 %v38
  %v318 = vunpack.c.l.b16 %v39
  %v319 = vunpack.c.l.b16 %v40
  %v320 = vunpack.c.l.b16 %v41
  %v321 = vunpack.c.l.b16 %v42
  %v322 = vunpack.c.l.b16 %v43
  %v323 = vunpack.c.l.b16 %v44
  %v324 = vunpack.c.l.b16 %v45
  %v325 = vunpack.c.l.b16 %v46
  %v326 = vunpack.c.l.b16 %v47
  %v327 = vunpack.c.l.b16 %v48
  %v328 = vunpack.c.l.b16 %v49
  %v329 = vunpack.c.l.b16 %v50
  %v330 = vunpack.c.l.b16 %v51
  %v331 = vunpack.c.l.b16 %v52
  %v332 = vunpack.c.l.b16 %v53
  %v333 = vunpack.c.l.b16 %v54
  %v334 = vunpack.c.l.b16 %v55
  %v335 = vunpack.c.l.b16 %v56
  %v336 = vunpack.c.l.b16 %v57
  %v337 = vunpack.c.l.b16 %v58
  %v338 = vunpack.c.l.b16 %v59
  %v339 = vunpack.c.l.b16 %v60
  %v340 = vunpack.c.l.b16 %v61
  %v341 = vunpack.c.l.b16 %v62
  %v342 = vunpack.c.l.b16 %v63
  %v343 = vunpack.c.l.b16 %v64
  %v344 = vunpack.c.l.b16 %v65
  %v345 = vunpack.c.l.b16 %v66
  %v346 = vunpack.c.l.b16 %v67
  %v347 = vunpack.c.l.b16 %v68
  %v348 = vunpack.c.l.b16 %v69
  %v349 = vunpack.c.l.b16 %v70
  %v350 = vunpack.c.l.b16 %v71
  %v351 = vunpack.c.l.b16 %v72
  %v352 = vunpack.c.l.b16 %v73
  %v353 = vunpack.c.l.b16 %v74
  %v354 = vunpack.c.l.b16 %v75
  %v355 = vunpack.c.l.b16 %v76
  %v356 = vunpack.c.l.b16 %v77
  %v357 = vunpack.c.l.b16 %v78
  %v358 = vunpack.c.l.b16 %v79
  %v359 = vunpack.c.l.b16 %v80
  %v360 = vunpack.c.l.b16 %v81
  %v361 = vunpack.c.l.b16 %v82
  %v362 = vunpack.c.l.b16 %v83
  %v363 = vunpack.c.l.b16 %v84
  %v364 = vunpack.c.l.b16 %v85
  %v365 = vunpack.c.l.b16 %v86
  %v366 = vunpack.c.l.b16 %v87
  %v367 = vunpack.c.l.b16 %v88
  %v368 = vunpack.c.l.b16 %v89
  %v369 = vunpack.c.l.b16 %v90
  %v370 = vunpack.c.l.b16 %v91
  %v371 = vunpack.c.l.b16 %v92
  %v372 = vunpack.c.l.b16 %v93
  %v373 = vunpack.c.l.b16 %v94
  %v374 = vunpack.c.l.b16 %v95
  %v375 = vunpack.c.l.b16 %v96
  %v376 = vunpack.c.l.b16 %v97
  %v377 = vunpack.c.l.b16 %v98
  %v378 = vunpack.c.l.b16 %v99
  %v379 = vunpack.c.l.b16 %v100
  %v380 = vunpack.c.l.b16 %v101
  %v381 = vunpack.c.l.b16 %v102
  %v382 = vunpack.c.l.b16 %v103
  %v383 = vunpack.c.l.b16 %v104
  %v384 = vunpack.c.l.b16 %v105
  %v385 = vunpack.c.l.b16 %v106
  %v386 = vunpack.c.l.b16 %v107
  %v387 = vunpack.c.l.b16 %v108
  %v388 = vunpack.c.l.b16 %v109
  %v389 = vunpack.c.l.b16 %v110
  %v390 = vunpack.c.l.b16 %v111
  %v391 = vunpack.c.l.b16 %v112
  %v392 = vunpack.c.l.b16 %v113
  %v393 = vunpack.c.l.b16 %v114
  %v394 = vunpack.c.l.b16 %v115
  %v395 = vunpack.c.l.b16 %v116
  %v396 = vunpack.c.l.b16 %v117
  %v397 = vunpack.c.l.b16 %v118
  %v398 = vunpack.c.l.b16 %v119
  %v399 = vunpack.c.l.b16 %v120
  %v400 = vunpack.c.l.b16 %v121
  %v401 = vunpack.c.l.b16 %v122
  %v402 = vunpack.c.l.b16 %v123
  %v403 = vunpack.c.l.b16 %v124
  %v404 = vunpack.c.l.b16 %v125
  %v405 = vunpack.c.l.b16 %v126
  %v406 = vunpack.c.l.b16 %v127
  %v407 = vunpack.c.l.b16 %v128
  %v408 = vunpack.c.l.b16 %v129
  %v409 = vunpack.c.l.b16 %v130
  %v410 = vunpack.c.l.b16 %v131
  %v411 = vunpack.c.l.b16 %v132
  %v412 = vunpack.c.l.b16 %v133
  %v413 = vunpack.c.l.b16 %v134
  %v414 = vpack.c.b16 %v307, %v306
  %v415 = vpack.c.b16 %v309, %v308
  %v416 = vpack.c.b16 %v311, %v310
  %v417 = vpack.c.b16 %v313, %v312
  %v418 = vpack.c.b16 %v315, %v314
  %v419 = vpack.c.b16 %v317, %v316
  %v420 = vpack.c.b16 %v319, %v318
  %v421 = vpack.c.b16 %v321, %v320
  %v422 = vpack.c.b16 %v323, %v322
  %v423 = vpack.c.b16 %v325, %v324
  %v424 = vpack.c.b16 %v327, %v326
  %v425 = vpack.c.b16 %v329, %v328
  %v426 = vpack.c.b16 %v331, %v330
  %v427 = vpack.c.b16 %v333, %v332
  %v428 = vpack.c.b16 %v335, %v334
  %v429 = vpack.c.b16 %v337, %v336
  %v430 = vpack.c.b16 %v339, %v338
  %v431 = vpack.c.b16 %v341, %v340
  %v432 = vpack.c.b16 %v343, %v342
  %v433 = vpack.c.b16 %v345, %v344
  %v434 = vpack.c.b16 %v347, %v346
  %v435 = vpack.c.b16 %v349, %v348
  %v436 = vpack.c.b16 %v351, %v350
  %v437 = vpack.c.b16 %v353, %v352
  %v438 = vpack.c.b16 %v355, %v354
  %v439 = vpack.c.b16 %v357, %v356
  %v440 = vpack.c.b16 %v359, %v358
  %v441 = vpack.c.b16 %v361, %v360
  %v442 = vpack.c.b16 %v363, %v362
  %v443 = vpack.c.b16 %v365, %v364
  %v444 = vpack.c.b16 %v367, %v366
  %v445 = vpack.c.b16 %v369, %v368
  %v446 = vpack.c.b16 %v371, %v370
  %v447 = vpack.c.b16 %v373, %v372
  %v448 = vpack.c.b16 %v375, %v374
  %v449 = vpack.c.b16 %v377, %v376
  %v450 = vpack.c.b16 %v379, %v378
  %v451 = vpack.c.b16 %v381, %v380
  %v452 = vpack.c.b16 %v383, %v382
  %v453 = vpack.c.b16 %v385, %v384
  %v454 = vpack.c.b16 %v387, %v386
  %v455 = vpack.c.b16 %v389, %v388
  %v456 = vpack.c.b16 %v391, %v390
  %v457 = vpack.c.b16 %v393, %v392
  %v458 = vpack.c.b16 %v395, %v394
  %v459 = vpack.c.b16 %v397, %v396
  %v460 = vpack.c.b16 %v399, %v398
  %v461 = vpack.c.b16 %v401, %v400
  %v462 = vpack.c.b16 %v403, %v402
  %v463 = vpack.c.b16 %v405, %v404
  %v464 = vpack.c.b16 %v407, %v406
  %v465 = vpack.c.b16 %v409, %v408
  %v466 = vpack.c.b16 %v411, %v410
  %v467 = vpack.c.b16 %v413, %v412
  %vm522 = vcmask 785408
  %v524 = vsel %vm522, %v178, 0
  %v527 = vsel %vm522, %v185, 0
  %529 = vmatpush.bf16.msra.mxu0 %v421
  %530 = vmatpush.bf16.msra.mxu0 %v420
  %531 = vmatpush.bf16.msra.mxu0 %v419
  %532 = vmatpush.bf16.msra.mxu0 %v418
  %533 = vmatpush.bf16.msra.mxu0 %v417
  %534 = vmatpush.bf16.msra.mxu0 %v416
  %535 = vmatpush.bf16.msra.mxu0 %v415
  %536 = vmatpush.bf16.msra.mxu0 %v414
  %537 = vmatmul.bf16.gmra.mxu0 %v172
  %v538 = vpop.f32.mrf.mxu0
  %v539 = vadd.f32 %v137, %v538
  %v540 = vpop.f32.mrf.mxu0
  %v541 = vadd.f32 %v137, %v540
  %542 = vmatmul.bf16.gmra.mxu0 %v179
  %v543 = vpop.f32.mrf.mxu0
  %v544 = vadd.f32 %v137, %v543
  %v545 = vpop.f32.mrf.mxu0
  %546 = vdwg.mxu0
  %547 = vmatpush.bf16.msra.mxu0 %v429
  %548 = vmatpush.bf16.msra.mxu0 %v428
  %549 = vmatpush.bf16.msra.mxu0 %v427
  %550 = vmatpush.bf16.msra.mxu0 %v426
  %551 = vmatpush.bf16.msra.mxu0 %v425
  %552 = vmatpush.bf16.msra.mxu0 %v424
  %553 = vmatpush.bf16.msra.mxu0 %v423
  %554 = vmatpush.bf16.msra.mxu0 %v422
  %555 = vmatmul.bf16.gmra.mxu0 %v173
  %v556 = vpop.f32.mrf.mxu0
  %v557 = vadd.f32 %v539, %v556
  %v558 = vpop.f32.mrf.mxu0
  %v559 = vadd.f32 %v541, %v558
  %560 = vmatmul.bf16.gmra.mxu0 %v180
  %v561 = vpop.f32.mrf.mxu0
  %v562 = vadd.f32 %v544, %v561
  %v563 = vpop.f32.mrf.mxu0
  %564 = vdwg.mxu0
  %565 = vmatpush.bf16.msra.mxu0 %v437
  %566 = vmatpush.bf16.msra.mxu0 %v436
  %567 = vmatpush.bf16.msra.mxu0 %v435
  %568 = vmatpush.bf16.msra.mxu0 %v434
  %569 = vmatpush.bf16.msra.mxu0 %v433
  %570 = vmatpush.bf16.msra.mxu0 %v432
  %571 = vmatpush.bf16.msra.mxu0 %v431
  %572 = vmatpush.bf16.msra.mxu0 %v430
  %573 = vmatmul.bf16.gmra.mxu0 %v174
  %v574 = vpop.f32.mrf.mxu0
  %v575 = vadd.f32 %v557, %v574
  %v576 = vpop.f32.mrf.mxu0
  %v577 = vadd.f32 %v559, %v576
  %578 = vmatmul.bf16.gmra.mxu0 %v181
  %v579 = vpop.f32.mrf.mxu0
  %v580 = vadd.f32 %v562, %v579
  %v581 = vpop.f32.mrf.mxu0
  %582 = vdwg.mxu0
  %583 = vmatpush.bf16.msra.mxu0 %v445
  %584 = vmatpush.bf16.msra.mxu0 %v444
  %585 = vmatpush.bf16.msra.mxu0 %v443
  %586 = vmatpush.bf16.msra.mxu0 %v442
  %587 = vmatpush.bf16.msra.mxu0 %v441
  %588 = vmatpush.bf16.msra.mxu0 %v440
  %589 = vmatpush.bf16.msra.mxu0 %v439
  %590 = vmatpush.bf16.msra.mxu0 %v438
  %591 = vmatmul.bf16.gmra.mxu0 %v175
  %v592 = vpop.f32.mrf.mxu0
  %v593 = vadd.f32 %v575, %v592
  %v594 = vpop.f32.mrf.mxu0
  %v595 = vadd.f32 %v577, %v594
  %596 = vmatmul.bf16.gmra.mxu0 %v182
  %v597 = vpop.f32.mrf.mxu0
  %v598 = vadd.f32 %v580, %v597
  %v599 = vpop.f32.mrf.mxu0
  %600 = vdwg.mxu0
  %601 = vmatpush.bf16.msra.mxu0 %v453
  %602 = vmatpush.bf16.msra.mxu0 %v452
  %603 = vmatpush.bf16.msra.mxu0 %v451
  %604 = vmatpush.bf16.msra.mxu0 %v450
  %605 = vmatpush.bf16.msra.mxu0 %v449
  %606 = vmatpush.bf16.msra.mxu0 %v448
  %607 = vmatpush.bf16.msra.mxu0 %v447
  %608 = vmatpush.bf16.msra.mxu0 %v446
  %609 = vmatmul.bf16.gmra.mxu0 %v176
  %v610 = vpop.f32.mrf.mxu0
  %v611 = vadd.f32 %v593, %v610
  %v612 = vpop.f32.mrf.mxu0
  %v613 = vadd.f32 %v595, %v612
  %614 = vmatmul.bf16.gmra.mxu0 %v183
  %v615 = vpop.f32.mrf.mxu0
  %v616 = vadd.f32 %v598, %v615
  %v617 = vpop.f32.mrf.mxu0
  %618 = vdwg.mxu0
  %619 = vmatpush.bf16.msra.mxu0 %v461
  %620 = vmatpush.bf16.msra.mxu0 %v460
  %621 = vmatpush.bf16.msra.mxu0 %v459
  %622 = vmatpush.bf16.msra.mxu0 %v458
  %623 = vmatpush.bf16.msra.mxu0 %v457
  %624 = vmatpush.bf16.msra.mxu0 %v456
  %625 = vmatpush.bf16.msra.mxu0 %v455
  %626 = vmatpush.bf16.msra.mxu0 %v454
  %627 = vmatmul.bf16.gmra.mxu0 %v177
  %v628 = vpop.f32.mrf.mxu0
  %v629 = vadd.f32 %v611, %v628
  %v630 = vpop.f32.mrf.mxu0
  %v631 = vadd.f32 %v613, %v630
  %632 = vmatmul.bf16.gmra.mxu0 %v184
  %v633 = vpop.f32.mrf.mxu0
  %v634 = vadd.f32 %v616, %v633
  %v635 = vpop.f32.mrf.mxu0
  %636 = vdwg.mxu0
  %637 = vmatpush.bf16.msra.mxu0 0
  %638 = vmatpush.bf16.msra.mxu0 0
  %639 = vmatpush.bf16.msra.mxu0 %v467
  %640 = vmatpush.bf16.msra.mxu0 %v466
  %641 = vmatpush.bf16.msra.mxu0 %v465
  %642 = vmatpush.bf16.msra.mxu0 %v464
  %643 = vmatpush.bf16.msra.mxu0 %v463
  %644 = vmatpush.bf16.msra.mxu0 %v462
  %645 = vmatmul.bf16.gmra.mxu0 %v524
  %v646 = vpop.f32.mrf.mxu0
  %v647 = vadd.f32 %v629, %v646
  %v648 = vpop.f32.mrf.mxu0
  %v649 = vadd.f32 %v631, %v648
  %650 = vmatmul.bf16.gmra.mxu0 %v527
  %v651 = vpop.f32.mrf.mxu0
  %v652 = vadd.f32 %v634, %v651
  %v653 = vpop.f32.mrf.mxu0
  %654 = vdwg.mxu0
  %v655 = vmax.f32 %v647, 0.0
  %v656 = vmax.f32 %v649, 0.0
  %v657 = vmax.f32 %v652, 0.0
  %v658 = vpack.c.bf16 %v655, %v655
  %v659 = vpack.c.bf16 %v656, %v656
  %v660 = vpack.c.bf16 %v657, %v657
  %vm661 = vcmask 519168
  %662 = vst.msk [vmem:[%s3] sm:$0xf] %vm661, %v658
  %663 = vst.msk [vmem:[%s3 + $0x4] sm:$0xf] %vm661, %v659
  %664 = vst.msk [vmem:[%s3 + $0x8] sm:$0xf] %vm661, %v660
  // Predicated region
  $region14: #{forward.7} parent=0 // pred_check
    _
  $region15: #{forward.7} parent=0 // pred_check_branch
    %666 = sbr.rel (0) target = $region17
  $region16: #{forward.7} parent=0 // pred_region
    _
  $region17: #{forward.7} parent=0 // pred_fallthru
    _
  // Predicated region
  $region18: #{forward.7} parent=0 // pred_check
    _
  $region19: #{forward.7} parent=0 // pred_check_branch
    %668 = sbr.rel (0) target = $region21
  $region20: #{forward.7} parent=0 // pred_region
    _
  $region21: #{forward.7} parent=0 // pred_fallthru
    _

// kernel: forward.8
$region0: #{forward.8}
  #allocation0 [shape = 'u32[]', space=smem, size = 0x4, offset = 0x4, fixed_abs, tag = 'smem constant byte address 0x4 - core index']
  #allocation1 [shape = 'u32[72,128]{1,0:T(1,128)}', space=vmem, size = 0x9000, scoped, tag = 'internal scratch']
  %s0 = inlined_call_operand.vmem [shape: bf16[16,1728], index: 0, kind: input, shape index: {}]
  %s1 = inlined_call_operand.vmem [shape: bf16[1728,128], index: 1, kind: input, shape index: {}]
  %s2 = inlined_call_operand.vmem [shape: f32[1,128], index: 2, kind: input, shape index: {}]
  %s3 = inlined_call_operand.vmem [shape: bf16[16,128], index: 3, kind: output, shape index: {}]
  %s4 = sld [smem:[#allocation0]]
  $region22: #{forward.8} parent=0
    _
  %s6 = ssub.s32 1, %s4
  %s7 = scalar_select 0, %s6, %s4
  // Predicated region
  $region2: #{forward.8} parent=0 // pred_check
    _
  $region3: #{forward.8} parent=0 // pred_check_branch
    %9 = sbr.rel (0) target = $region5
  $region4: #{forward.8} parent=0 // pred_region
    _
  $region5: #{forward.8} parent=0 // pred_fallthru
    _
  // Predicated region
  $region6: #{forward.8} parent=0 // pred_check
    _
  $region7: #{forward.8} parent=0 // pred_check_branch
    %11 = sbr.rel (0) target = $region9
  $region8: #{forward.8} parent=0 // pred_region
    _
  $region9: #{forward.8} parent=0 // pred_fallthru
    _
  // Predicated region
  $region10: #{forward.8} parent=0 // pred_check
    _
  $region11: #{forward.8} parent=0 // pred_check_branch
    %13 = sbr.rel (0) target = $region13
  $region12: #{forward.8} parent=0 // pred_region
    _
  $region13: #{forward.8} parent=0 // pred_fallthru
    _
  %v15 = vld [vmem:[%s0] sm:$0xff]
  %v16 = vld [vmem:[%s0 + $0x8] sm:$0xff]
  %v17 = vld [vmem:[%s0 + $0x10] sm:$0xff]
  %v18 = vld [vmem:[%s0 + $0x18] sm:$0xff]
  %v19 = vld [vmem:[%s0 + $0x20] sm:$0xff]
  %v20 = vld [vmem:[%s0 + $0x28] sm:$0xff]
  %v21 = vld [vmem:[%s0 + $0x30] sm:$0xff]
  %v22 = vld [vmem:[%s0 + $0x38] sm:$0xff]
  %v23 = vld [vmem:[%s0 + $0x40] sm:$0xff]
  %v24 = vld [vmem:[%s0 + $0x48] sm:$0xff]
  %v25 = vld [vmem:[%s0 + $0x50] sm:$0xff]
  %v26 = vld [vmem:[%s0 + $0x58] sm:$0xff]
  %v27 = vld [vmem:[%s0 + $0x60] sm:$0xff]
  %v28 = vld [vmem:[%s0 + $0x68] sm:$0xff]
  %v29 = vld [vmem:[%s1] sm:$0xf]
  %v30 = vld [vmem:[%s1 + $0x4] sm:$0xf]
  %v31 = vld [vmem:[%s1 + $0x8] sm:$0xf]
  %v32 = vld [vmem:[%s1 + $0xc] sm:$0xf]
  %v33 = vld [vmem:[%s1 + $0x10] sm:$0xf]
  %v34 = vld [vmem:[%s1 + $0x14] sm:$0xf]
  %v35 = vld [vmem:[%s1 + $0x18] sm:$0xf]
  %v36 = vld [vmem:[%s1 + $0x1c] sm:$0xf]
  %v37 = vld [vmem:[%s1 + $0x20] sm:$0xf]
  %v38 = vld [vmem:[%s1 + $0x24] sm:$0xf]
  %v39 = vld [vmem:[%s1 + $0x28] sm:$0xf]
  %v40 = vld [vmem:[%s1 + $0x2c] sm:$0xf]
  %v41 = vld [vmem:[%s1 + $0x30] sm:$0xf]
  %v42 = vld [vmem:[%s1 + $0x34] sm:$0xf]
  %v43 = vld [vmem:[%s1 + $0x38] sm:$0xf]
  %v44 = vld [vmem:[%s1 + $0x3c] sm:$0xf]
  %v45 = vld [vmem:[%s1 + $0x40] sm:$0xf]
  %v46 = vld [vmem:[%s1 + $0x44] sm:$0xf]
  %v47 = vld [vmem:[%s1 + $0x48] sm:$0xf]
  %v48 = vld [vmem:[%s1 + $0x4c] sm:$0xf]
  %v49 = vld [vmem:[%s1 + $0x50] sm:$0xf]
  %v50 = vld [vmem:[%s1 + $0x54] sm:$0xf]
  %v51 = vld [vmem:[%s1 + $0x58] sm:$0xf]
  %v52 = vld [vmem:[%s1 + $0x5c] sm:$0xf]
  %v53 = vld [vmem:[%s1 + $0x60] sm:$0xf]
  %v54 = vld [vmem:[%s1 + $0x64] sm:$0xf]
  %v55 = vld [vmem:[%s1 + $0x68] sm:$0xf]
  %v56 = vld [vmem:[%s1 + $0x6c] sm:$0xf]
  %v57 = vld [vmem:[%s1 + $0x70] sm:$0xf]
  %v58 = vld [vmem:[%s1 + $0x74] sm:$0xf]
  %v59 = vld [vmem:[%s1 + $0x78] sm:$0xf]
  %v60 = vld [vmem:[%s1 + $0x7c] sm:$0xf]
  %v61 = vld [vmem:[%s1 + $0x80] sm:$0xf]
  %v62 = vld [vmem:[%s1 + $0x84] sm:$0xf]
  %v63 = vld [vmem:[%s1 + $0x88] sm:$0xf]
  %v64 = vld [vmem:[%s1 + $0x8c] sm:$0xf]
  %v65 = vld [vmem:[%s1 + $0x90] sm:$0xf]
  %v66 = vld [vmem:[%s1 + $0x94] sm:$0xf]
  %v67 = vld [vmem:[%s1 + $0x98] sm:$0xf]
  %v68 = vld [vmem:[%s1 + $0x9c] sm:$0xf]
  %v69 = vld [vmem:[%s1 + $0xa0] sm:$0xf]
  %v70 = vld [vmem:[%s1 + $0xa4] sm:$0xf]
  %v71 = vld [vmem:[%s1 + $0xa8] sm:$0xf]
  %v72 = vld [vmem:[%s1 + $0xac] sm:$0xf]
  %v73 = vld [vmem:[%s1 + $0xb0] sm:$0xf]
  %v74 = vld [vmem:[%s1 + $0xb4] sm:$0xf]
  %v75 = vld [vmem:[%s1 + $0xb8] sm:$0xf]
  %v76 = vld [vmem:[%s1 + $0xbc] sm:$0xf]
  %v77 = vld [vmem:[%s1 + $0xc0] sm:$0xf]
  %v78 = vld [vmem:[%s1 + $0xc4] sm:$0xf]
  %v79 = vld [vmem:[%s1 + $0xc8] sm:$0xf]
  %v80 = vld [vmem:[%s1 + $0xcc] sm:$0xf]
  %v81 = vld [vmem:[%s1 + $0xd0] sm:$0xf]
  %v82 = vld [vmem:[%s1 + $0xd4] sm:$0xf]
  %v83 = vld [vmem:[%s1 + $0xd8] sm:$0xf]
  %v84 = vld [vmem:[%s1 + $0xdc] sm:$0xf]
  %v85 = vld [vmem:[%s1 + $0xe0] sm:$0xf]
  %v86 = vld [vmem:[%s1 + $0xe4] sm:$0xf]
  %v87 = vld [vmem:[%s1 + $0xe8] sm:$0xf]
  %v88 = vld [vmem:[%s1 + $0xec] sm:$0xf]
  %v89 = vld [vmem:[%s1 + $0xf0] sm:$0xf]
  %v90 = vld [vmem:[%s1 + $0xf4] sm:$0xf]
  %v91 = vld [vmem:[%s1 + $0xf8] sm:$0xf]
  %v92 = vld [vmem:[%s1 + $0xfc] sm:$0xf]
  %v93 = vld [vmem:[%s1 + $0x100] sm:$0xf]
  %v94 = vld [vmem:[%s1 + $0x104] sm:$0xf]
  %v95 = vld [vmem:[%s1 + $0x108] sm:$0xf]
  %v96 = vld [vmem:[%s1 + $0x10c] sm:$0xf]
  %v97 = vld [vmem:[%s1 + $0x110] sm:$0xf]
  %v98 = vld [vmem:[%s1 + $0x114] sm:$0xf]
  %v99 = vld [vmem:[%s1 + $0x118] sm:$0xf]
  %v100 = vld [vmem:[%s1 + $0x11c] sm:$0xf]
  %v101 = vld [vmem:[%s1 + $0x120] sm:$0xf]
  %v102 = vld [vmem:[%s1 + $0x124] sm:$0xf]
  %v103 = vld [vmem:[%s1 + $0x128] sm:$0xf]
  %v104 = vld [vmem:[%s1 + $0x12c] sm:$0xf]
  %v105 = vld [vmem:[%s1 + $0x130] sm:$0xf]
  %v106 = vld [vmem:[%s1 + $0x134] sm:$0xf]
  %v107 = vld [vmem:[%s1 + $0x138] sm:$0xf]
  %v108 = vld [vmem:[%s1 + $0x13c] sm:$0xf]
  %v109 = vld [vmem:[%s1 + $0x140] sm:$0xf]
  %v110 = vld [vmem:[%s1 + $0x144] sm:$0xf]
  %v111 = vld [vmem:[%s1 + $0x148] sm:$0xf]
  %v112 = vld [vmem:[%s1 + $0x14c] sm:$0xf]
  %v113 = vld [vmem:[%s1 + $0x150] sm:$0xf]
  %v114 = vld [vmem:[%s1 + $0x154] sm:$0xf]
  %v115 = vld [vmem:[%s1 + $0x158] sm:$0xf]
  %v116 = vld [vmem:[%s1 + $0x15c] sm:$0xf]
  %v117 = vld [vmem:[%s1 + $0x160] sm:$0xf]
  %v118 = vld [vmem:[%s1 + $0x164] sm:$0xf]
  %v119 = vld [vmem:[%s1 + $0x168] sm:$0xf]
  %v120 = vld [vmem:[%s1 + $0x16c] sm:$0xf]
  %v121 = vld [vmem:[%s1 + $0x170] sm:$0xf]
  %v122 = vld [vmem:[%s1 + $0x174] sm:$0xf]
  %v123 = vld [vmem:[%s1 + $0x178] sm:$0xf]
  %v124 = vld [vmem:[%s1 + $0x17c] sm:$0xf]
  %v125 = vld [vmem:[%s1 + $0x180] sm:$0xf]
  %v126 = vld [vmem:[%s1 + $0x184] sm:$0xf]
  %v127 = vld [vmem:[%s1 + $0x188] sm:$0xf]
  %v128 = vld [vmem:[%s1 + $0x18c] sm:$0xf]
  %v129 = vld [vmem:[%s1 + $0x190] sm:$0xf]
  %v130 = vld [vmem:[%s1 + $0x194] sm:$0xf]
  %v131 = vld [vmem:[%s1 + $0x198] sm:$0xf]
  %v132 = vld [vmem:[%s1 + $0x19c] sm:$0xf]
  %v133 = vld [vmem:[%s1 + $0x1a0] sm:$0xf]
  %v134 = vld [vmem:[%s1 + $0x1a4] sm:$0xf]
  %v135 = vld [vmem:[%s1 + $0x1a8] sm:$0xf]
  %v136 = vld [vmem:[%s1 + $0x1ac] sm:$0xf]
  %v137 = vld [vmem:[%s1 + $0x1b0] sm:$0xf]
  %v138 = vld [vmem:[%s1 + $0x1b4] sm:$0xf]
  %v139 = vld [vmem:[%s1 + $0x1b8] sm:$0xf]
  %v140 = vld [vmem:[%s1 + $0x1bc] sm:$0xf]
  %v141 = vld [vmem:[%s1 + $0x1c0] sm:$0xf]
  %v142 = vld [vmem:[%s1 + $0x1c4] sm:$0xf]
  %v143 = vld [vmem:[%s1 + $0x1c8] sm:$0xf]
  %v144 = vld [vmem:[%s1 + $0x1cc] sm:$0xf]
  %v145 = vld [vmem:[%s1 + $0x1d0] sm:$0xf]
  %v146 = vld [vmem:[%s1 + $0x1d4] sm:$0xf]
  %v147 = vld [vmem:[%s1 + $0x1d8] sm:$0xf]
  %v148 = vld [vmem:[%s1 + $0x1dc] sm:$0xf]
  %v149 = vld [vmem:[%s1 + $0x1e0] sm:$0xf]
  %v150 = vld [vmem:[%s1 + $0x1e4] sm:$0xf]
  %v151 = vld [vmem:[%s1 + $0x1e8] sm:$0xf]
  %v152 = vld [vmem:[%s1 + $0x1ec] sm:$0xf]
  %v153 = vld [vmem:[%s1 + $0x1f0] sm:$0xf]
  %v154 = vld [vmem:[%s1 + $0x1f4] sm:$0xf]
  %v155 = vld [vmem:[%s1 + $0x1f8] sm:$0xf]
  %v156 = vld [vmem:[%s1 + $0x1fc] sm:$0xf]
  %v157 = vld [vmem:[%s1 + $0x200] sm:$0xf]
  %v158 = vld [vmem:[%s1 + $0x204] sm:$0xf]
  %v159 = vld [vmem:[%s1 + $0x208] sm:$0xf]
  %v160 = vld [vmem:[%s1 + $0x20c] sm:$0xf]
  %v161 = vld [vmem:[%s1 + $0x210] sm:$0xf]
  %v162 = vld [vmem:[%s1 + $0x214] sm:$0xf]
  %v163 = vld [vmem:[%s1 + $0x218] sm:$0xf]
  %v164 = vld [vmem:[%s1 + $0x21c] sm:$0xf]
  %v165 = vld [vmem:[%s1 + $0x220] sm:$0xf]
  %v166 = vld [vmem:[%s1 + $0x224] sm:$0xf]
  %v167 = vld [vmem:[%s1 + $0x228] sm:$0xf]
  %v168 = vld [vmem:[%s1 + $0x22c] sm:$0xf]
  %v169 = vld [vmem:[%s1 + $0x230] sm:$0xf]
  %v170 = vld [vmem:[%s1 + $0x234] sm:$0xf]
  %v171 = vld [vmem:[%s1 + $0x238] sm:$0xf]
  %v172 = vld [vmem:[%s1 + $0x23c] sm:$0xf]
  %v173 = vld [vmem:[%s1 + $0x240] sm:$0xf]
  %v174 = vld [vmem:[%s1 + $0x244] sm:$0xf]
  %v175 = vld [vmem:[%s1 + $0x248] sm:$0xf]
  %v176 = vld [vmem:[%s1 + $0x24c] sm:$0xf]
  %v177 = vld [vmem:[%s1 + $0x250] sm:$0xf]
  %v178 = vld [vmem:[%s1 + $0x254] sm:$0xf]
  %v179 = vld [vmem:[%s1 + $0x258] sm:$0xf]
  %v180 = vld [vmem:[%s1 + $0x25c] sm:$0xf]
  %v181 = vld [vmem:[%s1 + $0x260] sm:$0xf]
  %v182 = vld [vmem:[%s1 + $0x264] sm:$0xf]
  %v183 = vld [vmem:[%s1 + $0x268] sm:$0xf]
  %v184 = vld [vmem:[%s1 + $0x26c] sm:$0xf]
  %v185 = vld [vmem:[%s1 + $0x270] sm:$0xf]
  %v186 = vld [vmem:[%s1 + $0x274] sm:$0xf]
  %v187 = vld [vmem:[%s1 + $0x278] sm:$0xf]
  %v188 = vld [vmem:[%s1 + $0x27c] sm:$0xf]
  %v189 = vld [vmem:[%s1 + $0x280] sm:$0xf]
  %v190 = vld [vmem:[%s1 + $0x284] sm:$0xf]
  %v191 = vld [vmem:[%s1 + $0x288] sm:$0xf]
  %v192 = vld [vmem:[%s1 + $0x28c] sm:$0xf]
  %v193 = vld [vmem:[%s1 + $0x290] sm:$0xf]
  %v194 = vld [vmem:[%s1 + $0x294] sm:$0xf]
  %v195 = vld [vmem:[%s1 + $0x298] sm:$0xf]
  %v196 = vld [vmem:[%s1 + $0x29c] sm:$0xf]
  %v197 = vld [vmem:[%s1 + $0x2a0] sm:$0xf]
  %v198 = vld [vmem:[%s1 + $0x2a4] sm:$0xf]
  %v199 = vld [vmem:[%s1 + $0x2a8] sm:$0xf]
  %v200 = vld [vmem:[%s1 + $0x2ac] sm:$0xf]
  %v201 = vld [vmem:[%s1 + $0x2b0] sm:$0xf]
  %v202 = vld [vmem:[%s1 + $0x2b4] sm:$0xf]
  %v203 = vld [vmem:[%s1 + $0x2b8] sm:$0xf]
  %v204 = vld [vmem:[%s1 + $0x2bc] sm:$0xf]
  %v205 = vld [vmem:[%s1 + $0x2c0] sm:$0xf]
  %v206 = vld [vmem:[%s1 + $0x2c4] sm:$0xf]
  %v207 = vld [vmem:[%s1 + $0x2c8] sm:$0xf]
  %v208 = vld [vmem:[%s1 + $0x2cc] sm:$0xf]
  %v209 = vld [vmem:[%s1 + $0x2d0] sm:$0xf]
  %v210 = vld [vmem:[%s1 + $0x2d4] sm:$0xf]
  %v211 = vld [vmem:[%s1 + $0x2d8] sm:$0xf]
  %v212 = vld [vmem:[%s1 + $0x2dc] sm:$0xf]
  %v213 = vld [vmem:[%s1 + $0x2e0] sm:$0xf]
  %v214 = vld [vmem:[%s1 + $0x2e4] sm:$0xf]
  %v215 = vld [vmem:[%s1 + $0x2e8] sm:$0xf]
  %v216 = vld [vmem:[%s1 + $0x2ec] sm:$0xf]
  %v217 = vld [vmem:[%s1 + $0x2f0] sm:$0xf]
  %v218 = vld [vmem:[%s1 + $0x2f4] sm:$0xf]
  %v219 = vld [vmem:[%s1 + $0x2f8] sm:$0xf]
  %v220 = vld [vmem:[%s1 + $0x2fc] sm:$0xf]
  %v221 = vld [vmem:[%s1 + $0x300] sm:$0xf]
  %v222 = vld [vmem:[%s1 + $0x304] sm:$0xf]
  %v223 = vld [vmem:[%s1 + $0x308] sm:$0xf]
  %v224 = vld [vmem:[%s1 + $0x30c] sm:$0xf]
  %v225 = vld [vmem:[%s1 + $0x310] sm:$0xf]
  %v226 = vld [vmem:[%s1 + $0x314] sm:$0xf]
  %v227 = vld [vmem:[%s1 + $0x318] sm:$0xf]
  %v228 = vld [vmem:[%s1 + $0x31c] sm:$0xf]
  %v229 = vld [vmem:[%s1 + $0x320] sm:$0xf]
  %v230 = vld [vmem:[%s1 + $0x324] sm:$0xf]
  %v231 = vld [vmem:[%s1 + $0x328] sm:$0xf]
  %v232 = vld [vmem:[%s1 + $0x32c] sm:$0xf]
  %v233 = vld [vmem:[%s1 + $0x330] sm:$0xf]
  %v234 = vld [vmem:[%s1 + $0x334] sm:$0xf]
  %v235 = vld [vmem:[%s1 + $0x338] sm:$0xf]
  %v236 = vld [vmem:[%s1 + $0x33c] sm:$0xf]
  %v237 = vld [vmem:[%s1 + $0x340] sm:$0xf]
  %v238 = vld [vmem:[%s1 + $0x344] sm:$0xf]
  %v239 = vld [vmem:[%s1 + $0x348] sm:$0xf]
  %v240 = vld [vmem:[%s1 + $0x34c] sm:$0xf]
  %v241 = vld [vmem:[%s1 + $0x350] sm:$0xf]
  %v242 = vld [vmem:[%s1 + $0x354] sm:$0xf]
  %v243 = vld [vmem:[%s1 + $0x358] sm:$0xf]
  %v244 = vld [vmem:[%s1 + $0x35c] sm:$0xf]
  %v245 = vld [vmem:[%s2] sm:$0x1]
  %v247 = vperm.slane %v245, 0
  %v263 = vunpack.c.l.b16 %v15
  %v264 = vunpack.c.h.b16 %v15
  %v265 = vunpack.c.l.b16 %v16
  %v266 = vunpack.c.h.b16 %v16
  %v267 = vunpack.c.l.b16 %v17
  %v268 = vunpack.c.h.b16 %v17
  %v269 = vunpack.c.l.b16 %v18
  %v270 = vunpack.c.h.b16 %v18
  %v271 = vunpack.c.l.b16 %v19
  %v272 = vunpack.c.h.b16 %v19
  %v273 = vunpack.c.l.b16 %v20
  %v274 = vunpack.c.h.b16 %v20
  %v275 = vunpack.c.l.b16 %v21
  %v276 = vunpack.c.h.b16 %v21
  %v277 = vunpack.c.l.b16 %v22
  %v278 = vunpack.c.h.b16 %v22
  %v279 = vunpack.c.l.b16 %v23
  %v280 = vunpack.c.h.b16 %v23
  %v281 = vunpack.c.l.b16 %v24
  %v282 = vunpack.c.h.b16 %v24
  %v283 = vunpack.c.l.b16 %v25
  %v284 = vunpack.c.h.b16 %v25
  %v285 = vunpack.c.l.b16 %v26
  %v286 = vunpack.c.h.b16 %v26
  %v287 = vunpack.c.l.b16 %v27
  %v288 = vunpack.c.h.b16 %v27
  %v289 = vunpack.c.l.b16 %v28
  %v290 = vunpack.c.h.b16 %v28
  %v291 = vpack.c.b16 %v277, %v263
  %v292 = vpack.c.b16 %v278, %v264
  %v293 = vpack.c.b16 %v279, %v265
  %v294 = vpack.c.b16 %v280, %v266
  %v295 = vpack.c.b16 %v281, %v267
  %v296 = vpack.c.b16 %v282, %v268
  %v297 = vpack.c.b16 %v283, %v269
  %v298 = vpack.c.b16 %v284, %v270
  %v299 = vpack.c.b16 %v285, %v271
  %v300 = vpack.c.b16 %v286, %v272
  %v301 = vpack.c.b16 %v287, %v273
  %v302 = vpack.c.b16 %v288, %v274
  %v303 = vpack.c.b16 %v289, %v275
  %v304 = vpack.c.b16 %v290, %v276
  %v534 = vunpack.c.l.b16 %v29
  %v535 = vunpack.c.l.b16 %v30
  %v536 = vunpack.c.l.b16 %v31
  %v537 = vunpack.c.l.b16 %v32
  %v538 = vunpack.c.l.b16 %v33
  %v539 = vunpack.c.l.b16 %v34
  %v540 = vunpack.c.l.b16 %v35
  %v541 = vunpack.c.l.b16 %v36
  %v542 = vunpack.c.l.b16 %v37
  %v543 = vunpack.c.l.b16 %v38
  %v544 = vunpack.c.l.b16 %v39
  %v545 = vunpack.c.l.b16 %v40
  %v546 = vunpack.c.l.b16 %v41
  %v547 = vunpack.c.l.b16 %v42
  %v548 = vunpack.c.l.b16 %v43
  %v549 = vunpack.c.l.b16 %v44
  %v550 = vunpack.c.l.b16 %v45
  %v551 = vunpack.c.l.b16 %v46
  %v552 = vunpack.c.l.b16 %v47
  %v553 = vunpack.c.l.b16 %v48
  %v554 = vunpack.c.l.b16 %v49
  %v555 = vunpack.c.l.b16 %v50
  %v556 = vunpack.c.l.b16 %v51
  %v557 = vunpack.c.l.b16 %v52
  %v558 = vunpack.c.l.b16 %v53
  %v559 = vunpack.c.l.b16 %v54
  %v560 = vunpack.c.l.b16 %v55
  %v561 = vunpack.c.l.b16 %v56
  %v562 = vunpack.c.l.b16 %v57
  %v563 = vunpack.c.l.b16 %v58
  %v564 = vunpack.c.l.b16 %v59
  %v565 = vunpack.c.l.b16 %v60
  %v566 = vunpack.c.l.b16 %v61
  %v567 = vunpack.c.l.b16 %v62
  %v568 = vunpack.c.l.b16 %v63
  %v569 = vunpack.c.l.b16 %v64
  %v570 = vunpack.c.l.b16 %v65
  %v571 = vunpack.c.l.b16 %v66
  %v572 = vunpack.c.l.b16 %v67
  %v573 = vunpack.c.l.b16 %v68
  %v574 = vunpack.c.l.b16 %v69
  %v575 = vunpack.c.l.b16 %v70
  %v576 = vunpack.c.l.b16 %v71
  %v577 = vunpack.c.l.b16 %v72
  %v578 = vunpack.c.l.b16 %v73
  %v579 = vunpack.c.l.b16 %v74
  %v580 = vunpack.c.l.b16 %v75
  %v581 = vunpack.c.l.b16 %v76
  %v582 = vunpack.c.l.b16 %v77
  %v583 = vunpack.c.l.b16 %v78
  %v584 = vunpack.c.l.b16 %v79
  %v585 = vunpack.c.l.b16 %v80
  %v586 = vunpack.c.l.b16 %v81
  %v587 = vunpack.c.l.b16 %v82
  %v588 = vunpack.c.l.b16 %v83
  %v589 = vunpack.c.l.b16 %v84
  %v590 = vunpack.c.l.b16 %v85
  %v591 = vunpack.c.l.b16 %v86
  %v592 = vunpack.c.l.b16 %v87
  %v593 = vunpack.c.l.b16 %v88
  %v594 = vunpack.c.l.b16 %v89
  %v595 = vunpack.c.l.b16 %v90
  %v596 = vunpack.c.l.b16 %v91
  %v597 = vunpack.c.l.b16 %v92
  %v598 = vunpack.c.l.b16 %v93
  %v599 = vunpack.c.l.b16 %v94
  %v600 = vunpack.c.l.b16 %v95
  %v601 = vunpack.c.l.b16 %v96
  %v602 = vunpack.c.l.b16 %v97
  %v603 = vunpack.c.l.b16 %v98
  %v604 = vunpack.c.l.b16 %v99
  %v605 = vunpack.c.l.b16 %v100
  %v606 = vunpack.c.l.b16 %v101
  %v607 = vunpack.c.l.b16 %v102
  %v608 = vunpack.c.l.b16 %v103
  %v609 = vunpack.c.l.b16 %v104
  %v610 = vunpack.c.l.b16 %v105
  %v611 = vunpack.c.l.b16 %v106
  %v612 = vunpack.c.l.b16 %v107
  %v613 = vunpack.c.l.b16 %v108
  %v614 = vunpack.c.l.b16 %v109
  %v615 = vunpack.c.l.b16 %v110
  %v616 = vunpack.c.l.b16 %v111
  %v617 = vunpack.c.l.b16 %v112
  %v618 = vunpack.c.l.b16 %v113
  %v619 = vunpack.c.l.b16 %v114
  %v620 = vunpack.c.l.b16 %v115
  %v621 = vunpack.c.l.b16 %v116
  %v622 = vunpack.c.l.b16 %v117
  %v623 = vunpack.c.l.b16 %v118
  %v624 = vunpack.c.l.b16 %v119
  %v625 = vunpack.c.l.b16 %v120
  %v626 = vunpack.c.l.b16 %v121
  %v627 = vunpack.c.l.b16 %v122
  %v628 = vunpack.c.l.b16 %v123
  %v629 = vunpack.c.l.b16 %v124
  %v630 = vunpack.c.l.b16 %v125
  %v631 = vunpack.c.l.b16 %v126
  %v632 = vunpack.c.l.b16 %v127
  %v633 = vunpack.c.l.b16 %v128
  %v634 = vunpack.c.l.b16 %v129
  %v635 = vunpack.c.l.b16 %v130
  %v636 = vunpack.c.l.b16 %v131
  %v637 = vunpack.c.l.b16 %v132
  %v638 = vunpack.c.l.b16 %v133
  %v639 = vunpack.c.l.b16 %v134
  %v640 = vunpack.c.l.b16 %v135
  %v641 = vunpack.c.l.b16 %v136
  %v642 = vunpack.c.l.b16 %v137
  %v643 = vunpack.c.l.b16 %v138
  %v644 = vunpack.c.l.b16 %v139
  %v645 = vunpack.c.l.b16 %v140
  %v646 = vunpack.c.l.b16 %v141
  %v647 = vunpack.c.l.b16 %v142
  %v648 = vunpack.c.l.b16 %v143
  %v649 = vunpack.c.l.b16 %v144
  %v650 = vunpack.c.l.b16 %v145
  %v651 = vunpack.c.l.b16 %v146
  %v652 = vunpack.c.l.b16 %v147
  %v653 = vunpack.c.l.b16 %v148
  %v654 = vunpack.c.l.b16 %v149
  %v655 = vunpack.c.l.b16 %v150
  %v656 = vunpack.c.l.b16 %v151
  %v657 = vunpack.c.l.b16 %v152
  %v658 = vunpack.c.l.b16 %v153
  %v659 = vunpack.c.l.b16 %v154
  %v660 = vunpack.c.l.b16 %v155
  %v661 = vunpack.c.l.b16 %v156
  %v662 = vunpack.c.l.b16 %v157
  %v663 = vunpack.c.l.b16 %v158
  %v664 = vunpack.c.l.b16 %v159
  %v665 = vunpack.c.l.b16 %v160
  %v666 = vunpack.c.l.b16 %v161
  %v667 = vunpack.c.l.b16 %v162
  %v668 = vunpack.c.l.b16 %v163
  %v669 = vunpack.c.l.b16 %v164
  %v670 = vunpack.c.l.b16 %v165
  %v671 = vunpack.c.l.b16 %v166
  %v672 = vunpack.c.l.b16 %v167
  %v673 = vunpack.c.l.b16 %v168
  %v674 = vunpack.c.l.b16 %v169
  %v675 = vunpack.c.l.b16 %v170
  %v676 = vunpack.c.l.b16 %v171
  %v677 = vunpack.c.l.b16 %v172
  %v678 = vunpack.c.l.b16 %v173
  %v679 = vunpack.c.l.b16 %v174
  %v680 = vunpack.c.l.b16 %v175
  %v681 = vunpack.c.l.b16 %v176
  %v682 = vunpack.c.l.b16 %v177
  %v683 = vunpack.c.l.b16 %v178
  %v684 = vunpack.c.l.b16 %v179
  %v685 = vunpack.c.l.b16 %v180
  %v686 = vunpack.c.l.b16 %v181
  %v687 = vunpack.c.l.b16 %v182
  %v688 = vunpack.c.l.b16 %v183
  %v689 = vunpack.c.l.b16 %v184
  %v690 = vunpack.c.l.b16 %v185
  %v691 = vunpack.c.l.b16 %v186
  %v692 = vunpack.c.l.b16 %v187
  %v693 = vunpack.c.l.b16 %v188
  %v694 = vunpack.c.l.b16 %v189
  %v695 = vunpack.c.l.b16 %v190
  %v696 = vunpack.c.l.b16 %v191
  %v697 = vunpack.c.l.b16 %v192
  %v698 = vunpack.c.l.b16 %v193
  %v699 = vunpack.c.l.b16 %v194
  %v700 = vunpack.c.l.b16 %v195
  %v701 = vunpack.c.l.b16 %v196
  %v702 = vunpack.c.l.b16 %v197
  %v703 = vunpack.c.l.b16 %v198
  %v704 = vunpack.c.l.b16 %v199
  %v705 = vunpack.c.l.b16 %v200
  %v706 = vunpack.c.l.b16 %v201
  %v707 = vunpack.c.l.b16 %v202
  %v708 = vunpack.c.l.b16 %v203
  %v709 = vunpack.c.l.b16 %v204
  %v710 = vunpack.c.l.b16 %v205
  %v711 = vunpack.c.l.b16 %v206
  %v712 = vunpack.c.l.b16 %v207
  %v713 = vunpack.c.l.b16 %v208
  %v714 = vunpack.c.l.b16 %v209
  %v715 = vunpack.c.l.b16 %v210
  %v716 = vunpack.c.l.b16 %v211
  %v717 = vunpack.c.l.b16 %v212
  %v718 = vunpack.c.l.b16 %v213
  %v719 = vunpack.c.l.b16 %v214
  %v720 = vunpack.c.l.b16 %v215
  %v721 = vunpack.c.l.b16 %v216
  %v722 = vunpack.c.l.b16 %v217
  %v723 = vunpack.c.l.b16 %v218
  %v724 = vunpack.c.l.b16 %v219
  %v725 = vunpack.c.l.b16 %v220
  %v726 = vunpack.c.l.b16 %v221
  %v727 = vunpack.c.l.b16 %v222
  %v728 = vunpack.c.l.b16 %v223
  %v729 = vunpack.c.l.b16 %v224
  %v730 = vunpack.c.l.b16 %v225
  %v731 = vunpack.c.l.b16 %v226
  %v732 = vunpack.c.l.b16 %v227
  %v733 = vunpack.c.l.b16 %v228
  %v734 = vunpack.c.l.b16 %v229
  %v735 = vunpack.c.l.b16 %v230
  %v736 = vunpack.c.l.b16 %v231
  %v737 = vunpack.c.l.b16 %v232
  %v738 = vunpack.c.l.b16 %v233
  %v739 = vunpack.c.l.b16 %v234
  %v740 = vunpack.c.l.b16 %v235
  %v741 = vunpack.c.l.b16 %v236
  %v742 = vunpack.c.l.b16 %v237
  %v743 = vunpack.c.l.b16 %v238
  %v744 = vunpack.c.l.b16 %v239
  %v745 = vunpack.c.l.b16 %v240
  %v746 = vunpack.c.l.b16 %v241
  %v747 = vunpack.c.l.b16 %v242
  %v748 = vunpack.c.l.b16 %v243
  %v749 = vunpack.c.l.b16 %v244
  %v750 = vpack.c.b16 %v535, %v534
  %v751 = vpack.c.b16 %v537, %v536
  %v752 = vpack.c.b16 %v539, %v538
  %v753 = vpack.c.b16 %v541, %v540
  %v754 = vpack.c.b16 %v543, %v542
  %v755 = vpack.c.b16 %v545, %v544
  %v756 = vpack.c.b16 %v547, %v546
  %v757 = vpack.c.b16 %v549, %v548
  %v758 = vpack.c.b16 %v551, %v550
  %v759 = vpack.c.b16 %v553, %v552
  %v760 = vpack.c.b16 %v555, %v554
  %v761 = vpack.c.b16 %v557, %v556
  %v762 = vpack.c.b16 %v559, %v558
  %v763 = vpack.c.b16 %v561, %v560
  %v764 = vpack.c.b16 %v563, %v562
  %v765 = vpack.c.b16 %v565, %v564
  %v766 = vpack.c.b16 %v567, %v566
  %v767 = vpack.c.b16 %v569, %v568
  %v768 = vpack.c.b16 %v571, %v570
  %v769 = vpack.c.b16 %v573, %v572
  %v770 = vpack.c.b16 %v575, %v574
  %v771 = vpack.c.b16 %v577, %v576
  %v772 = vpack.c.b16 %v579, %v578
  %v773 = vpack.c.b16 %v581, %v580
  %v774 = vpack.c.b16 %v583, %v582
  %v775 = vpack.c.b16 %v585, %v584
  %v776 = vpack.c.b16 %v587, %v586
  %v777 = vpack.c.b16 %v589, %v588
  %v778 = vpack.c.b16 %v591, %v590
  %v779 = vpack.c.b16 %v593, %v592
  %v780 = vpack.c.b16 %v595, %v594
  %v781 = vpack.c.b16 %v597, %v596
  %v782 = vpack.c.b16 %v599, %v598
  %v783 = vpack.c.b16 %v601, %v600
  %v784 = vpack.c.b16 %v603, %v602
  %v785 = vpack.c.b16 %v605, %v604
  %v786 = vpack.c.b16 %v607, %v606
  %v787 = vpack.c.b16 %v609, %v608
  %v788 = vpack.c.b16 %v611, %v610
  %v789 = vpack.c.b16 %v613, %v612
  %v790 = vpack.c.b16 %v615, %v614
  %v791 = vpack.c.b16 %v617, %v616
  %v792 = vpack.c.b16 %v619, %v618
  %v793 = vpack.c.b16 %v621, %v620
  %v794 = vpack.c.b16 %v623, %v622
  %v795 = vpack.c.b16 %v625, %v624
  %v796 = vpack.c.b16 %v627, %v626
  %v797 = vpack.c.b16 %v629, %v628
  %v798 = vpack.c.b16 %v631, %v630
  %v799 = vpack.c.b16 %v633, %v632
  %v800 = vpack.c.b16 %v635, %v634
  %v801 = vpack.c.b16 %v637, %v636
  %v802 = vpack.c.b16 %v639, %v638
  %v803 = vpack.c.b16 %v641, %v640
  %v804 = vpack.c.b16 %v643, %v642
  %v805 = vpack.c.b16 %v645, %v644
  %v806 = vpack.c.b16 %v647, %v646
  %v807 = vpack.c.b16 %v649, %v648
  %v808 = vpack.c.b16 %v651, %v650
  %v809 = vpack.c.b16 %v653, %v652
  %v810 = vpack.c.b16 %v655, %v654
  %v811 = vpack.c.b16 %v657, %v656
  %v812 = vpack.c.b16 %v659, %v658
  %v813 = vpack.c.b16 %v661, %v660
  %v814 = vpack.c.b16 %v663, %v662
  %v815 = vpack.c.b16 %v665, %v664
  %v816 = vpack.c.b16 %v667, %v666
  %v817 = vpack.c.b16 %v669, %v668
  %v818 = vpack.c.b16 %v671, %v670
  %v819 = vpack.c.b16 %v673, %v672
  %v820 = vpack.c.b16 %v675, %v674
  %v821 = vpack.c.b16 %v677, %v676
  %v822 = vpack.c.b16 %v679, %v678
  %v823 = vpack.c.b16 %v681, %v680
  %v824 = vpack.c.b16 %v683, %v682
  %v825 = vpack.c.b16 %v685, %v684
  %v826 = vpack.c.b16 %v687, %v686
  %v827 = vpack.c.b16 %v689, %v688
  %v828 = vpack.c.b16 %v691, %v690
  %v829 = vpack.c.b16 %v693, %v692
  %v830 = vpack.c.b16 %v695, %v694
  %v831 = vpack.c.b16 %v697, %v696
  %v832 = vpack.c.b16 %v699, %v698
  %v833 = vpack.c.b16 %v701, %v700
  %v834 = vpack.c.b16 %v703, %v702
  %v835 = vpack.c.b16 %v705, %v704
  %v836 = vpack.c.b16 %v707, %v706
  %v837 = vpack.c.b16 %v709, %v708
  %v838 = vpack.c.b16 %v711, %v710
  %v839 = vpack.c.b16 %v713, %v712
  %v840 = vpack.c.b16 %v715, %v714
  %v841 = vpack.c.b16 %v717, %v716
  %v842 = vpack.c.b16 %v719, %v718
  %v843 = vpack.c.b16 %v721, %v720
  %v844 = vpack.c.b16 %v723, %v722
  %v845 = vpack.c.b16 %v725, %v724
  %v846 = vpack.c.b16 %v727, %v726
  %v847 = vpack.c.b16 %v729, %v728
  %v848 = vpack.c.b16 %v731, %v730
  %v849 = vpack.c.b16 %v733, %v732
  %v850 = vpack.c.b16 %v735, %v734
  %v851 = vpack.c.b16 %v737, %v736
  %v852 = vpack.c.b16 %v739, %v738
  %v853 = vpack.c.b16 %v741, %v740
  %v854 = vpack.c.b16 %v743, %v742
  %v855 = vpack.c.b16 %v745, %v744
  %v856 = vpack.c.b16 %v747, %v746
  %v857 = vpack.c.b16 %v749, %v748
  %vm966 = vcmask 523264
  %v968 = vsel %vm966, %v304, 0
  %970 = vmatpush.bf16.msra.mxu0 %v757
  %971 = vmatpush.bf16.msra.mxu0 %v756
  %972 = vmatpush.bf16.msra.mxu0 %v755
  %973 = vmatpush.bf16.msra.mxu0 %v754
  %974 = vmatpush.bf16.msra.mxu0 %v753
  %975 = vmatpush.bf16.msra.mxu0 %v752
  %976 = vmatpush.bf16.msra.mxu0 %v751
  %977 = vmatpush.bf16.msra.mxu0 %v750
  %978 = vmatmul.bf16.gmra.mxu0 %v291
  %v979 = vpop.f32.mrf.mxu0
  %v980 = vadd.f32 %v247, %v979
  %v981 = vpop.f32.mrf.mxu0
  %v982 = vadd.f32 %v247, %v981
  %983 = vdwg.mxu0
  %984 = vmatpush.bf16.msra.mxu0 %v765
  %985 = vmatpush.bf16.msra.mxu0 %v764
  %986 = vmatpush.bf16.msra.mxu0 %v763
  %987 = vmatpush.bf16.msra.mxu0 %v762
  %988 = vmatpush.bf16.msra.mxu0 %v761
  %989 = vmatpush.bf16.msra.mxu0 %v760
  %990 = vmatpush.bf16.msra.mxu0 %v759
  %991 = vmatpush.bf16.msra.mxu0 %v758
  %992 = vmatmul.bf16.gmra.mxu0 %v292
  %v993 = vpop.f32.mrf.mxu0
  %v994 = vadd.f32 %v980, %v993
  %v995 = vpop.f32.mrf.mxu0
  %v996 = vadd.f32 %v982, %v995
  %997 = vdwg.mxu0
  %998 = vmatpush.bf16.msra.mxu0 %v773
  %999 = vmatpush.bf16.msra.mxu0 %v772
  %1000 = vmatpush.bf16.msra.mxu0 %v771
  %1001 = vmatpush.bf16.msra.mxu0 %v770
  %1002 = vmatpush.bf16.msra.mxu0 %v769
  %1003 = vmatpush.bf16.msra.mxu0 %v768
  %1004 = vmatpush.bf16.msra.mxu0 %v767
  %1005 = vmatpush.bf16.msra.mxu0 %v766
  %1006 = vmatmul.bf16.gmra.mxu0 %v293
  %v1007 = vpop.f32.mrf.mxu0
  %v1008 = vadd.f32 %v994, %v1007
  %v1009 = vpop.f32.mrf.mxu0
  %v1010 = vadd.f32 %v996, %v1009
  %1011 = vdwg.mxu0
  %1012 = vmatpush.bf16.msra.mxu0 %v781
  %1013 = vmatpush.bf16.msra.mxu0 %v780
  %1014 = vmatpush.bf16.msra.mxu0 %v779
  %1015 = vmatpush.bf16.msra.mxu0 %v778
  %1016 = vmatpush.bf16.msra.mxu0 %v777
  %1017 = vmatpush.bf16.msra.mxu0 %v776
  %1018 = vmatpush.bf16.msra.mxu0 %v775
  %1019 = vmatpush.bf16.msra.mxu0 %v774
  %1020 = vmatmul.bf16.gmra.mxu0 %v294
  %v1021 = vpop.f32.mrf.mxu0
  %v1022 = vadd.f32 %v1008, %v1021
  %v1023 = vpop.f32.mrf.mxu0
  %v1024 = vadd.f32 %v1010, %v1023
  %1025 = vdwg.mxu0
  %1026 = vmatpush.bf16.msra.mxu0 %v789
  %1027 = vmatpush.bf16.msra.mxu0 %v788
  %1028 = vmatpush.bf16.msra.mxu0 %v787
  %1029 = vmatpush.bf16.msra.mxu0 %v786
  %1030 = vmatpush.bf16.msra.mxu0 %v785
  %1031 = vmatpush.bf16.msra.mxu0 %v784
  %1032 = vmatpush.bf16.msra.mxu0 %v783
  %1033 = vmatpush.bf16.msra.mxu0 %v782
  %1034 = vmatmul.bf16.gmra.mxu0 %v295
  %v1035 = vpop.f32.mrf.mxu0
  %v1036 = vadd.f32 %v1022, %v1035
  %v1037 = vpop.f32.mrf.mxu0
  %v1038 = vadd.f32 %v1024, %v1037
  %1039 = vdwg.mxu0
  %1040 = vmatpush.bf16.msra.mxu0 %v797
  %1041 = vmatpush.bf16.msra.mxu0 %v796
  %1042 = vmatpush.bf16.msra.mxu0 %v795
  %1043 = vmatpush.bf16.msra.mxu0 %v794
  %1044 = vmatpush.bf16.msra.mxu0 %v793
  %1045 = vmatpush.bf16.msra.mxu0 %v792
  %1046 = vmatpush.bf16.msra.mxu0 %v791
  %1047 = vmatpush.bf16.msra.mxu0 %v790
  %1048 = vmatmul.bf16.gmra.mxu0 %v296
  %v1049 = vpop.f32.mrf.mxu0
  %v1050 = vadd.f32 %v1036, %v1049
  %v1051 = vpop.f32.mrf.mxu0
  %v1052 = vadd.f32 %v1038, %v1051
  %1053 = vdwg.mxu0
  %1054 = vmatpush.bf16.msra.mxu0 %v805
  %1055 = vmatpush.bf16.msra.mxu0 %v804
  %1056 = vmatpush.bf16.msra.mxu0 %v803
  %1057 = vmatpush.bf16.msra.mxu0 %v802
  %1058 = vmatpush.bf16.msra.mxu0 %v801
  %1059 = vmatpush.bf16.msra.mxu0 %v800
  %1060 = vmatpush.bf16.msra.mxu0 %v799
  %1061 = vmatpush.bf16.msra.mxu0 %v798
  %1062 = vmatmul.bf16.gmra.mxu0 %v297
  %v1063 = vpop.f32.mrf.mxu0
  %v1064 = vadd.f32 %v1050, %v1063
  %v1065 = vpop.f32.mrf.mxu0
  %v1066 = vadd.f32 %v1052, %v1065
  %1067 = vdwg.mxu0
  %1068 = vmatpush.bf16.msra.mxu0 %v813
  %1069 = vmatpush.bf16.msra.mxu0 %v812
  %1070 = vmatpush.bf16.msra.mxu0 %v811
  %1071 = vmatpush.bf16.msra.mxu0 %v810
  %1072 = vmatpush.bf16.msra.mxu0 %v809
  %1073 = vmatpush.bf16.msra.mxu0 %v808
  %1074 = vmatpush.bf16.msra.mxu0 %v807
  %1075 = vmatpush.bf16.msra.mxu0 %v806
  %1076 = vmatmul.bf16.gmra.mxu0 %v298
  %v1077 = vpop.f32.mrf.mxu0
  %v1078 = vadd.f32 %v1064, %v1077
  %v1079 = vpop.f32.mrf.mxu0
  %v1080 = vadd.f32 %v1066, %v1079
  %1081 = vdwg.mxu0
  %1082 = vmatpush.bf16.msra.mxu0 %v821
  %1083 = vmatpush.bf16.msra.mxu0 %v820
  %1084 = vmatpush.bf16.msra.mxu0 %v819
  %1085 = vmatpush.bf16.msra.mxu0 %v818
  %1086 = vmatpush.bf16.msra.mxu0 %v817
  %1087 = vmatpush.bf16.msra.mxu0 %v816
  %1088 = vmatpush.bf16.msra.mxu0 %v815
  %1089 = vmatpush.bf16.msra.mxu0 %v814
  %1090 = vmatmul.bf16.gmra.mxu0 %v299
  %v1091 = vpop.f32.mrf.mxu0
  %v1092 = vadd.f32 %v1078, %v1091
  %v1093 = vpop.f32.mrf.mxu0
  %v1094 = vadd.f32 %v1080, %v1093
  %1095 = vdwg.mxu0
  %1096 = vmatpush.bf16.msra.mxu0 %v829
  %1097 = vmatpush.bf16.msra.mxu0 %v828
  %1098 = vmatpush.bf16.msra.mxu0 %v827
  %1099 = vmatpush.bf16.msra.mxu0 %v826
  %1100 = vmatpush.bf16.msra.mxu0 %v825
  %1101 = vmatpush.bf16.msra.mxu0 %v824
  %1102 = vmatpush.bf16.msra.mxu0 %v823
  %1103 = vmatpush.bf16.msra.mxu0 %v822
  %1104 = vmatmul.bf16.gmra.mxu0 %v300
  %v1105 = vpop.f32.mrf.mxu0
  %v1106 = vadd.f32 %v1092, %v1105
  %v1107 = vpop.f32.mrf.mxu0
  %v1108 = vadd.f32 %v1094, %v1107
  %1109 = vdwg.mxu0
  %1110 = vmatpush.bf16.msra.mxu0 %v837
  %1111 = vmatpush.bf16.msra.mxu0 %v836
  %1112 = vmatpush.bf16.msra.mxu0 %v835
  %1113 = vmatpush.bf16.msra.mxu0 %v834
  %1114 = vmatpush.bf16.msra.mxu0 %v833
  %1115 = vmatpush.bf16.msra.mxu0 %v832
  %1116 = vmatpush.bf16.msra.mxu0 %v831
  %1117 = vmatpush.bf16.msra.mxu0 %v830
  %1118 = vmatmul.bf16.gmra.mxu0 %v301
  %v1119 = vpop.f32.mrf.mxu0
  %v1120 = vadd.f32 %v1106, %v1119
  %v1121 = vpop.f32.mrf.mxu0
  %v1122 = vadd.f32 %v1108, %v1121
  %1123 = vdwg.mxu0
  %1124 = vmatpush.bf16.msra.mxu0 %v845
  %1125 = vmatpush.bf16.msra.mxu0 %v844
  %1126 = vmatpush.bf16.msra.mxu0 %v843
  %1127 = vmatpush.bf16.msra.mxu0 %v842
  %1128 = vmatpush.bf16.msra.mxu0 %v841
  %1129 = vmatpush.bf16.msra.mxu0 %v840
  %1130 = vmatpush.bf16.msra.mxu0 %v839
  %1131 = vmatpush.bf16.msra.mxu0 %v838
  %1132 = vmatmul.bf16.gmra.mxu0 %v302
  %v1133 = vpop.f32.mrf.mxu0
  %v1134 = vadd.f32 %v1120, %v1133
  %v1135 = vpop.f32.mrf.mxu0
  %v1136 = vadd.f32 %v1122, %v1135
  %1137 = vdwg.mxu0
  %1138 = vmatpush.bf16.msra.mxu0 %v853
  %1139 = vmatpush.bf16.msra.mxu0 %v852
  %1140 = vmatpush.bf16.msra.mxu0 %v851
  %1141 = vmatpush.bf16.msra.mxu0 %v850
  %1142 = vmatpush.bf16.msra.mxu0 %v849
  %1143 = vmatpush.bf16.msra.mxu0 %v848
  %1144 = vmatpush.bf16.msra.mxu0 %v847
  %1145 = vmatpush.bf16.msra.mxu0 %v846
  %1146 = vmatmul.bf16.gmra.mxu0 %v303
  %v1147 = vpop.f32.mrf.mxu0
  %v1148 = vadd.f32 %v1134, %v1147
  %v1149 = vpop.f32.mrf.mxu0
  %v1150 = vadd.f32 %v1136, %v1149
  %1151 = vdwg.mxu0
  %1152 = vmatpush.bf16.msra.mxu0 0
  %1153 = vmatpush.bf16.msra.mxu0 0
  %1154 = vmatpush.bf16.msra.mxu0 0
  %1155 = vmatpush.bf16.msra.mxu0 0
  %1156 = vmatpush.bf16.msra.mxu0 %v857
  %1157 = vmatpush.bf16.msra.mxu0 %v856
  %1158 = vmatpush.bf16.msra.mxu0 %v855
  %1159 = vmatpush.bf16.msra.mxu0 %v854
  %1160 = vmatmul.bf16.gmra.mxu0 %v968
  %v1161 = vpop.f32.mrf.mxu0
  %v1162 = vadd.f32 %v1148, %v1161
  %v1163 = vpop.f32.mrf.mxu0
  %v1164 = vadd.f32 %v1150, %v1163
  %1165 = vdwg.mxu0
  %v1166 = vmax.f32 %v1162, 0.0
  %v1167 = vmax.f32 %v1164, 0.0
  %v1168 = vpack.c.bf16 %v1166, %v1166
  %v1169 = vpack.c.bf16 %v1167, %v1167
  %1170 = vst [vmem:[%s3] sm:$0xf] %v1168
  %1171 = vst [vmem:[%s3 + $0x4] sm:$0xf] %v1169
  // Predicated region
  $region14: #{forward.8} parent=0 // pred_check
    _
  $region15: #{forward.8} parent=0 // pred_check_branch
    %1173 = sbr.rel (0) target = $region17
  $region16: #{forward.8} parent=0 // pred_region
    _
  $region17: #{forward.8} parent=0 // pred_fallthru
    _
  // Predicated region
  $region18: #{forward.8} parent=0 // pred_check
    _
  $region19: #{forward.8} parent=0 // pred_check_branch
    %1175 = sbr.rel (0) target = $region21
  $region20: #{forward.8} parent=0 // pred_region
    _
  $region21: #{forward.8} parent=0 // pred_fallthru
    _

// kernel: forward.9
$region0: #{forward.9}
  #allocation0 [shape = 'u32[]', space=smem, size = 0x4, offset = 0x4, fixed_abs, tag = 'smem constant byte address 0x4 - core index']
  #allocation1 [shape = 'u32[72,128]{1,0:T(1,128)}', space=vmem, size = 0x9000, scoped, tag = 'internal scratch']
  %s0 = inlined_call_operand.vmem [shape: bf16[2,1024], index: 0, kind: input, shape index: {}]
  %s1 = inlined_call_operand.vmem [shape: bf16[1024,256], index: 1, kind: input, shape index: {}]
  %s2 = inlined_call_operand.vmem [shape: f32[1,256], index: 2, kind: input, shape index: {}]
  %s3 = inlined_call_operand.vmem [shape: bf16[256,128], index: 3, kind: input, shape index: {}]
  %s4 = inlined_call_operand.vmem [shape: f32[1,128], index: 4, kind: input, shape index: {}]
  %s5 = inlined_call_operand.vmem [shape: bf16[128,128], index: 5, kind: input, shape index: {}]
  %s6 = inlined_call_operand.vmem [shape: f32[1,128], index: 6, kind: input, shape index: {}]
  %s7 = inlined_call_operand.hbm [shape: f32[2,30], index: 7, kind: output, shape index: {}]
  %s8 = sld [smem:[#allocation0]]
  $region38: #{forward.9} parent=0
    _
  %s10 = ssub.s32 1, %s8
  %s11 = scalar_select 0, %s10, %s8
  $region1: #{forward.9} parent=0
    #allocation2 [shape = 'u8[1024]{0}', space=vmem, size = 0x400, scoped, tag = 'output window, operand 0, single buffered']
    #allocation3 [shape = 's32[1]{0}', space=sflag, size = 0x4, scoped, tag = 'scoped memory for forward.9']
    %12 = vsyncpa [#allocation3], 0
    // Predicated region
    $region2: #{forward.9} parent=1 // pred_check
      _
    $region3: #{forward.9} parent=1 // pred_check_branch
      %14 = sbr.rel (0) target = $region5
    $region4: #{forward.9} parent=1 // pred_region
      _
    $region5: #{forward.9} parent=1 // pred_fallthru
      _
    // Predicated region
    $region6: #{forward.9} parent=1 // pred_check
      _
    $region7: #{forward.9} parent=1 // pred_check_branch
      %16 = sbr.rel (0) target = $region9
    $region8: #{forward.9} parent=1 // pred_region
      _
    $region9: #{forward.9} parent=1 // pred_fallthru
      _
    // Predicated region
    $region10: #{forward.9} parent=1 // pred_check
      _
    $region11: #{forward.9} parent=1 // pred_check_branch
      %18 = sbr.rel (0) target = $region13
    $region12: #{forward.9} parent=1 // pred_region
      _
    $region13: #{forward.9} parent=1 // pred_fallthru
      _
    // Predicated region
    $region14: #{forward.9} parent=1 // pred_check
      _
    $region15: #{forward.9} parent=1 // pred_check_branch
      %20 = sbr.rel (0) target = $region17
    $region16: #{forward.9} parent=1 // pred_region
      _
    $region17: #{forward.9} parent=1 // pred_fallthru
      _
    // Predicated region
    $region18: #{forward.9} parent=1 // pred_check
      _
    $region19: #{forward.9} parent=1 // pred_check_branch
      %22 = sbr.rel (0) target = $region21
    $region20: #{forward.9} parent=1 // pred_region
      _
    $region21: #{forward.9} parent=1 // pred_fallthru
      _
    // Predicated region
    $region22: #{forward.9} parent=1 // pred_check
      _
    $region23: #{forward.9} parent=1 // pred_check_branch
      %24 = sbr.rel (0) target = $region25
    $region24: #{forward.9} parent=1 // pred_region
      _
    $region25: #{forward.9} parent=1 // pred_fallthru
      _
    // Predicated region
    $region26: #{forward.9} parent=1 // pred_check
      _
    $region27: #{forward.9} parent=1 // pred_check_branch
      %26 = sbr.rel (0) target = $region29
    $region28: #{forward.9} parent=1 // pred_region
      _
    $region29: #{forward.9} parent=1 // pred_fallthru
      _
    %v27 = vld [vmem:[%s0] sm:$0xff]
    %v28 = vld [vmem:[%s1] sm:$0xff]
    %v29 = vld [vmem:[%s1 + $0x8] sm:$0xff]
    %v30 = vld [vmem:[%s1 + $0x10] sm:$0xff]
    %v31 = vld [vmem:[%s1 + $0x18] sm:$0xff]
    %v32 = vld [vmem:[%s1 + $0x20] sm:$0xff]
    %v33 = vld [vmem:[%s1 + $0x28] sm:$0xff]
    %v34 = vld [vmem:[%s1 + $0x30] sm:$0xff]
    %v35 = vld [vmem:[%s1 + $0x38] sm:$0xff]
    %v36 = vld [vmem:[%s1 + $0x40] sm:$0xff]
    %v37 = vld [vmem:[%s1 + $0x48] sm:$0xff]
    %v38 = vld [vmem:[%s1 + $0x50] sm:$0xff]
    %v39 = vld [vmem:[%s1 + $0x58] sm:$0xff]
    %v40 = vld [vmem:[%s1 + $0x60] sm:$0xff]
    %v41 = vld [vmem:[%s1 + $0x68] sm:$0xff]
    %v42 = vld [vmem:[%s1 + $0x70] sm:$0xff]
    %v43 = vld [vmem:[%s1 + $0x78] sm:$0xff]
    %v44 = vld [vmem:[%s1 + $0x80] sm:$0xff]
    %v45 = vld [vmem:[%s1 + $0x88] sm:$0xff]
    %v46 = vld [vmem:[%s1 + $0x90] sm:$0xff]
    %v47 = vld [vmem:[%s1 + $0x98] sm:$0xff]
    %v48 = vld [vmem:[%s1 + $0xa0] sm:$0xff]
    %v49 = vld [vmem:[%s1 + $0xa8] sm:$0xff]
    %v50 = vld [vmem:[%s1 + $0xb0] sm:$0xff]
    %v51 = vld [vmem:[%s1 + $0xb8] sm:$0xff]
    %v52 = vld [vmem:[%s1 + $0xc0] sm:$0xff]
    %v53 = vld [vmem:[%s1 + $0xc8] sm:$0xff]
    %v54 = vld [vmem:[%s1 + $0xd0] sm:$0xff]
    %v55 = vld [vmem:[%s1 + $0xd8] sm:$0xff]
    %v56 = vld [vmem:[%s1 + $0xe0] sm:$0xff]
    %v57 = vld [vmem:[%s1 + $0xe8] sm:$0xff]
    %v58 = vld [vmem:[%s1 + $0xf0] sm:$0xff]
    %v59 = vld [vmem:[%s1 + $0xf8] sm:$0xff]
    %v60 = vld [vmem:[%s1 + $0x100] sm:$0xff]
    %v61 = vld [vmem:[%s1 + $0x108] sm:$0xff]
    %v62 = vld [vmem:[%s1 + $0x110] sm:$0xff]
    %v63 = vld [vmem:[%s1 + $0x118] sm:$0xff]
    %v64 = vld [vmem:[%s1 + $0x120] sm:$0xff]
    %v65 = vld [vmem:[%s1 + $0x128] sm:$0xff]
    %v66 = vld [vmem:[%s1 + $0x130] sm:$0xff]
    %v67 = vld [vmem:[%s1 + $0x138] sm:$0xff]
    %v68 = vld [vmem:[%s1 + $0x140] sm:$0xff]
    %v69 = vld [vmem:[%s1 + $0x148] sm:$0xff]
    %v70 = vld [vmem:[%s1 + $0x150] sm:$0xff]
    %v71 = vld [vmem:[%s1 + $0x158] sm:$0xff]
    %v72 = vld [vmem:[%s1 + $0x160] sm:$0xff]
    %v73 = vld [vmem:[%s1 + $0x168] sm:$0xff]
    %v74 = vld [vmem:[%s1 + $0x170] sm:$0xff]
    %v75 = vld [vmem:[%s1 + $0x178] sm:$0xff]
    %v76 = vld [vmem:[%s1 + $0x180] sm:$0xff]
    %v77 = vld [vmem:[%s1 + $0x188] sm:$0xff]
    %v78 = vld [vmem:[%s1 + $0x190] sm:$0xff]
    %v79 = vld [vmem:[%s1 + $0x198] sm:$0xff]
    %v80 = vld [vmem:[%s1 + $0x1a0] sm:$0xff]
    %v81 = vld [vmem:[%s1 + $0x1a8] sm:$0xff]
    %v82 = vld [vmem:[%s1 + $0x1b0] sm:$0xff]
    %v83 = vld [vmem:[%s1 + $0x1b8] sm:$0xff]
    %v84 = vld [vmem:[%s1 + $0x1c0] sm:$0xff]
    %v85 = vld [vmem:[%s1 + $0x1c8] sm:$0xff]
    %v86 = vld [vmem:[%s1 + $0x1d0] sm:$0xff]
    %v87 = vld [vmem:[%s1 + $0x1d8] sm:$0xff]
    %v88 = vld [vmem:[%s1 + $0x1e0] sm:$0xff]
    %v89 = vld [vmem:[%s1 + $0x1e8] sm:$0xff]
    %v90 = vld [vmem:[%s1 + $0x1f0] sm:$0xff]
    %v91 = vld [vmem:[%s1 + $0x1f8] sm:$0xff]
    %v92 = vld [vmem:[%s1 + $0x200] sm:$0xff]
    %v93 = vld [vmem:[%s1 + $0x208] sm:$0xff]
    %v94 = vld [vmem:[%s1 + $0x210] sm:$0xff]
    %v95 = vld [vmem:[%s1 + $0x218] sm:$0xff]
    %v96 = vld [vmem:[%s1 + $0x220] sm:$0xff]
    %v97 = vld [vmem:[%s1 + $0x228] sm:$0xff]
    %v98 = vld [vmem:[%s1 + $0x230] sm:$0xff]
    %v99 = vld [vmem:[%s1 + $0x238] sm:$0xff]
    %v100 = vld [vmem:[%s1 + $0x240] sm:$0xff]
    %v101 = vld [vmem:[%s1 + $0x248] sm:$0xff]
    %v102 = vld [vmem:[%s1 + $0x250] sm:$0xff]
    %v103 = vld [vmem:[%s1 + $0x258] sm:$0xff]
    %v104 = vld [vmem:[%s1 + $0x260] sm:$0xff]
    %v105 = vld [vmem:[%s1 + $0x268] sm:$0xff]
    %v106 = vld [vmem:[%s1 + $0x270] sm:$0xff]
    %v107 = vld [vmem:[%s1 + $0x278] sm:$0xff]
    %v108 = vld [vmem:[%s1 + $0x280] sm:$0xff]
    %v109 = vld [vmem:[%s1 + $0x288] sm:$0xff]
    %v110 = vld [vmem:[%s1 + $0x290] sm:$0xff]
    %v111 = vld [vmem:[%s1 + $0x298] sm:$0xff]
    %v112 = vld [vmem:[%s1 + $0x2a0] sm:$0xff]
    %v113 = vld [vmem:[%s1 + $0x2a8] sm:$0xff]
    %v114 = vld [vmem:[%s1 + $0x2b0] sm:$0xff]
    %v115 = vld [vmem:[%s1 + $0x2b8] sm:$0xff]
    %v116 = vld [vmem:[%s1 + $0x2c0] sm:$0xff]
    %v117 = vld [vmem:[%s1 + $0x2c8] sm:$0xff]
    %v118 = vld [vmem:[%s1 + $0x2d0] sm:$0xff]
    %v119 = vld [vmem:[%s1 + $0x2d8] sm:$0xff]
    %v120 = vld [vmem:[%s1 + $0x2e0] sm:$0xff]
    %v121 = vld [vmem:[%s1 + $0x2e8] sm:$0xff]
    %v122 = vld [vmem:[%s1 + $0x2f0] sm:$0xff]
    %v123 = vld [vmem:[%s1 + $0x2f8] sm:$0xff]
    %v124 = vld [vmem:[%s1 + $0x300] sm:$0xff]
    %v125 = vld [vmem:[%s1 + $0x308] sm:$0xff]
    %v126 = vld [vmem:[%s1 + $0x310] sm:$0xff]
    %v127 = vld [vmem:[%s1 + $0x318] sm:$0xff]
    %v128 = vld [vmem:[%s1 + $0x320] sm:$0xff]
    %v129 = vld [vmem:[%s1 + $0x328] sm:$0xff]
    %v130 = vld [vmem:[%s1 + $0x330] sm:$0xff]
    %v131 = vld [vmem:[%s1 + $0x338] sm:$0xff]
    %v132 = vld [vmem:[%s1 + $0x340] sm:$0xff]
    %v133 = vld [vmem:[%s1 + $0x348] sm:$0xff]
    %v134 = vld [vmem:[%s1 + $0x350] sm:$0xff]
    %v135 = vld [vmem:[%s1 + $0x358] sm:$0xff]
    %v136 = vld [vmem:[%s1 + $0x360] sm:$0xff]
    %v137 = vld [vmem:[%s1 + $0x368] sm:$0xff]
    %v138 = vld [vmem:[%s1 + $0x370] sm:$0xff]
    %v139 = vld [vmem:[%s1 + $0x378] sm:$0xff]
    %v140 = vld [vmem:[%s1 + $0x380] sm:$0xff]
    %v141 = vld [vmem:[%s1 + $0x388] sm:$0xff]
    %v142 = vld [vmem:[%s1 + $0x390] sm:$0xff]
    %v143 = vld [vmem:[%s1 + $0x398] sm:$0xff]
    %v144 = vld [vmem:[%s1 + $0x3a0] sm:$0xff]
    %v145 = vld [vmem:[%s1 + $0x3a8] sm:$0xff]
    %v146 = vld [vmem:[%s1 + $0x3b0] sm:$0xff]
    %v147 = vld [vmem:[%s1 + $0x3b8] sm:$0xff]
    %v148 = vld [vmem:[%s1 + $0x3c0] sm:$0xff]
    %v149 = vld [vmem:[%s1 + $0x3c8] sm:$0xff]
    %v150 = vld [vmem:[%s1 + $0x3d0] sm:$0xff]
    %v151 = vld [vmem:[%s1 + $0x3d8] sm:$0xff]
    %v152 = vld [vmem:[%s1 + $0x3e0] sm:$0xff]
    %v153 = vld [vmem:[%s1 + $0x3e8] sm:$0xff]
    %v154 = vld [vmem:[%s1 + $0x3f0] sm:$0xff]
    %v155 = vld [vmem:[%s1 + $0x3f8] sm:$0xff]
    %v156 = vld [vmem:[%s2] sm:$0x3]
    %v158 = vperm.slane %v156, 0
    %v159 = vperm.slane %v156, 1
    %163 = vst [vmem:[#allocation1] ss:$9 sm:$0xff] %v27
    %v164 = vld [vmem:[#allocation1] sm:$0xff]
    %v165 = vld [vmem:[#allocation1 + $0x9] sm:$0xff]
    %v166 = vld [vmem:[#allocation1 + $0x12] sm:$0xff]
    %v167 = vld [vmem:[#allocation1 + $0x1b] sm:$0xff]
    %v168 = vld [vmem:[#allocation1 + $0x24] sm:$0xff]
    %v169 = vld [vmem:[#allocation1 + $0x2d] sm:$0xff]
    %v170 = vld [vmem:[#allocation1 + $0x36] sm:$0xff]
    %v171 = vld [vmem:[#allocation1 + $0x3f] sm:$0xff]
    %v308 = vunpack.c.l.b16 %v28
    %v309 = vunpack.c.h.b16 %v28
    %v310 = vunpack.c.l.b16 %v29
    %v311 = vunpack.c.h.b16 %v29
    %v312 = vunpack.c.l.b16 %v30
    %v313 = vunpack.c.h.b16 %v30
    %v314 = vunpack.c.l.b16 %v31
    %v315 = vunpack.c.h.b16 %v31
    %v316 = vunpack.c.l.b16 %v32
    %v317 = vunpack.c.h.b16 %v32
    %v318 = vunpack.c.l.b16 %v33
    %v319 = vunpack.c.h.b16 %v33
    %v320 = vunpack.c.l.b16 %v34
    %v321 = vunpack.c.h.b16 %v34
    %v322 = vunpack.c.l.b16 %v35
    %v323 = vunpack.c.h.b16 %v35
    %v324 = vunpack.c.l.b16 %v36
    %v325 = vunpack.c.h.b16 %v36
    %v326 = vunpack.c.l.b16 %v37
    %v327 = vunpack.c.h.b16 %v37
    %v328 = vunpack.c.l.b16 %v38
    %v329 = vunpack.c.h.b16 %v38
    %v330 = vunpack.c.l.b16 %v39
    %v331 = vunpack.c.h.b16 %v39
    %v332 = vunpack.c.l.b16 %v40
    %v333 = vunpack.c.h.b16 %v40
    %v334 = vunpack.c.l.b16 %v41
    %v335 = vunpack.c.h.b16 %v41
    %v336 = vunpack.c.l.b16 %v42
    %v337 = vunpack.c.h.b16 %v42
    %v338 = vunpack.c.l.b16 %v43
    %v339 = vunpack.c.h.b16 %v43
    %v340 = vunpack.c.l.b16 %v44
    %v341 = vunpack.c.h.b16 %v44
    %v342 = vunpack.c.l.b16 %v45
    %v343 = vunpack.c.h.b16 %v45
    %v344 = vunpack.c.l.b16 %v46
    %v345 = vunpack.c.h.b16 %v46
    %v346 = vunpack.c.l.b16 %v47
    %v347 = vunpack.c.h.b16 %v47
    %v348 = vunpack.c.l.b16 %v48
    %v349 = vunpack.c.h.b16 %v48
    %v350 = vunpack.c.l.b16 %v49
    %v351 = vunpack.c.h.b16 %v49
    %v352 = vunpack.c.l.b16 %v50
    %v353 = vunpack.c.h.b16 %v50
    %v354 = vunpack.c.l.b16 %v51
    %v355 = vunpack.c.h.b16 %v51
    %v356 = vunpack.c.l.b16 %v52
    %v357 = vunpack.c.h.b16 %v52
    %v358 = vunpack.c.l.b16 %v53
    %v359 = vunpack.c.h.b16 %v53
    %v360 = vunpack.c.l.b16 %v54
    %v361 = vunpack.c.h.b16 %v54
    %v362 = vunpack.c.l.b16 %v55
    %v363 = vunpack.c.h.b16 %v55
    %v364 = vunpack.c.l.b16 %v56
    %v365 = vunpack.c.h.b16 %v56
    %v366 = vunpack.c.l.b16 %v57
    %v367 = vunpack.c.h.b16 %v57
    %v368 = vunpack.c.l.b16 %v58
    %v369 = vunpack.c.h.b16 %v58
    %v370 = vunpack.c.l.b16 %v59
    %v371 = vunpack.c.h.b16 %v59
    %v372 = vunpack.c.l.b16 %v60
    %v373 = vunpack.c.h.b16 %v60
    %v374 = vunpack.c.l.b16 %v61
    %v375 = vunpack.c.h.b16 %v61
    %v376 = vunpack.c.l.b16 %v62
    %v377 = vunpack.c.h.b16 %v62
    %v378 = vunpack.c.l.b16 %v63
    %v379 = vunpack.c.h.b16 %v63
    %v380 = vunpack.c.l.b16 %v64
    %v381 = vunpack.c.h.b16 %v64
    %v382 = vunpack.c.l.b16 %v65
    %v383 = vunpack.c.h.b16 %v65
    %v384 = vunpack.c.l.b16 %v66
    %v385 = vunpack.c.h.b16 %v66
    %v386 = vunpack.c.l.b16 %v67
    %v387 = vunpack.c.h.b16 %v67
    %v388 = vunpack.c.l.b16 %v68
    %v389 = vunpack.c.h.b16 %v68
    %v390 = vunpack.c.l.b16 %v69
    %v391 = vunpack.c.h.b16 %v69
    %v392 = vunpack.c.l.b16 %v70
    %v393 = vunpack.c.h.b16 %v70
    %v394 = vunpack.c.l.b16 %v71
    %v395 = vunpack.c.h.b16 %v71
    %v396 = vunpack.c.l.b16 %v72
    %v397 = vunpack.c.h.b16 %v72
    %v398 = vunpack.c.l.b16 %v73
    %v399 = vunpack.c.h.b16 %v73
    %v400 = vunpack.c.l.b16 %v74
    %v401 = vunpack.c.h.b16 %v74
    %v402 = vunpack.c.l.b16 %v75
    %v403 = vunpack.c.h.b16 %v75
    %v404 = vunpack.c.l.b16 %v76
    %v405 = vunpack.c.h.b16 %v76
    %v406 = vunpack.c.l.b16 %v77
    %v407 = vunpack.c.h.b16 %v77
    %v408 = vunpack.c.l.b16 %v78
    %v409 = vunpack.c.h.b16 %v78
    %v410 = vunpack.c.l.b16 %v79
    %v411 = vunpack.c.h.b16 %v79
    %v412 = vunpack.c.l.b16 %v80
    %v413 = vunpack.c.h.b16 %v80
    %v414 = vunpack.c.l.b16 %v81
    %v415 = vunpack.c.h.b16 %v81
    %v416 = vunpack.c.l.b16 %v82
    %v417 = vunpack.c.h.b16 %v82
    %v418 = vunpack.c.l.b16 %v83
    %v419 = vunpack.c.h.b16 %v83
    %v420 = vunpack.c.l.b16 %v84
    %v421 = vunpack.c.h.b16 %v84
    %v422 = vunpack.c.l.b16 %v85
    %v423 = vunpack.c.h.b16 %v85
    %v424 = vunpack.c.l.b16 %v86
    %v425 = vunpack.c.h.b16 %v86
    %v426 = vunpack.c.l.b16 %v87
    %v427 = vunpack.c.h.b16 %v87
    %v428 = vunpack.c.l.b16 %v88
    %v429 = vunpack.c.h.b16 %v88
    %v430 = vunpack.c.l.b16 %v89
    %v431 = vunpack.c.h.b16 %v89
    %v432 = vunpack.c.l.b16 %v90
    %v433 = vunpack.c.h.b16 %v90
    %v434 = vunpack.c.l.b16 %v91
    %v435 = vunpack.c.h.b16 %v91
    %v436 = vunpack.c.l.b16 %v92
    %v437 = vunpack.c.h.b16 %v92
    %v438 = vunpack.c.l.b16 %v93
    %v439 = vunpack.c.h.b16 %v93
    %v440 = vunpack.c.l.b16 %v94
    %v441 = vunpack.c.h.b16 %v94
    %v442 = vunpack.c.l.b16 %v95
    %v443 = vunpack.c.h.b16 %v95
    %v444 = vunpack.c.l.b16 %v96
    %v445 = vunpack.c.h.b16 %v96
    %v446 = vunpack.c.l.b16 %v97
    %v447 = vunpack.c.h.b16 %v97
    %v448 = vunpack.c.l.b16 %v98
    %v449 = vunpack.c.h.b16 %v98
    %v450 = vunpack.c.l.b16 %v99
    %v451 = vunpack.c.h.b16 %v99
    %v452 = vunpack.c.l.b16 %v100
    %v453 = vunpack.c.h.b16 %v100
    %v454 = vunpack.c.l.b16 %v101
    %v455 = vunpack.c.h.b16 %v101
    %v456 = vunpack.c.l.b16 %v102
    %v457 = vunpack.c.h.b16 %v102
    %v458 = vunpack.c.l.b16 %v103
    %v459 = vunpack.c.h.b16 %v103
    %v460 = vunpack.c.l.b16 %v104
    %v461 = vunpack.c.h.b16 %v104
    %v462 = vunpack.c.l.b16 %v105
    %v463 = vunpack.c.h.b16 %v105
    %v464 = vunpack.c.l.b16 %v106
    %v465 = vunpack.c.h.b16 %v106
    %v466 = vunpack.c.l.b16 %v107
    %v467 = vunpack.c.h.b16 %v107
    %v468 = vunpack.c.l.b16 %v108
    %v469 = vunpack.c.h.b16 %v108
    %v470 = vunpack.c.l.b16 %v109
    %v471 = vunpack.c.h.b16 %v109
    %v472 = vunpack.c.l.b16 %v110
    %v473 = vunpack.c.h.b16 %v110
    %v474 = vunpack.c.l.b16 %v111
    %v475 = vunpack.c.h.b16 %v111
    %v476 = vunpack.c.l.b16 %v112
    %v477 = vunpack.c.h.b16 %v112
    %v478 = vunpack.c.l.b16 %v113
    %v479 = vunpack.c.h.b16 %v113
    %v480 = vunpack.c.l.b16 %v114
    %v481 = vunpack.c.h.b16 %v114
    %v482 = vunpack.c.l.b16 %v115
    %v483 = vunpack.c.h.b16 %v115
    %v484 = vunpack.c.l.b16 %v116
    %v485 = vunpack.c.h.b16 %v116
    %v486 = vunpack.c.l.b16 %v117
    %v487 = vunpack.c.h.b16 %v117
    %v488 = vunpack.c.l.b16 %v118
    %v489 = vunpack.c.h.b16 %v118
    %v490 = vunpack.c.l.b16 %v119
    %v491 = vunpack.c.h.b16 %v119
    %v492 = vunpack.c.l.b16 %v120
    %v493 = vunpack.c.h.b16 %v120
    %v494 = vunpack.c.l.b16 %v121
    %v495 = vunpack.c.h.b16 %v121
    %v496 = vunpack.c.l.b16 %v122
    %v497 = vunpack.c.h.b16 %v122
    %v498 = vunpack.c.l.b16 %v123
    %v499 = vunpack.c.h.b16 %v123
    %v500 = vunpack.c.l.b16 %v124
    %v501 = vunpack.c.h.b16 %v124
    %v502 = vunpack.c.l.b16 %v125
    %v503 = vunpack.c.h.b16 %v125
    %v504 = vunpack.c.l.b16 %v126
    %v505 = vunpack.c.h.b16 %v126
    %v506 = vunpack.c.l.b16 %v127
    %v507 = vunpack.c.h.b16 %v127
    %v508 = vunpack.c.l.b16 %v128
    %v509 = vunpack.c.h.b16 %v128
    %v510 = vunpack.c.l.b16 %v129
    %v511 = vunpack.c.h.b16 %v129
    %v512 = vunpack.c.l.b16 %v130
    %v513 = vunpack.c.h.b16 %v130
    %v514 = vunpack.c.l.b16 %v131
    %v515 = vunpack.c.h.b16 %v131
    %v516 = vunpack.c.l.b16 %v132
    %v517 = vunpack.c.h.b16 %v132
    %v518 = vunpack.c.l.b16 %v133
    %v519 = vunpack.c.h.b16 %v133
    %v520 = vunpack.c.l.b16 %v134
    %v521 = vunpack.c.h.b16 %v134
    %v522 = vunpack.c.l.b16 %v135
    %v523 = vunpack.c.h.b16 %v135
    %v524 = vunpack.c.l.b16 %v136
    %v525 = vunpack.c.h.b16 %v136
    %v526 = vunpack.c.l.b16 %v137
    %v527 = vunpack.c.h.b16 %v137
    %v528 = vunpack.c.l.b16 %v138
    %v529 = vunpack.c.h.b16 %v138
    %v530 = vunpack.c.l.b16 %v139
    %v531 = vunpack.c.h.b16 %v139
    %v532 = vunpack.c.l.b16 %v140
    %v533 = vunpack.c.h.b16 %v140
    %v534 = vunpack.c.l.b16 %v141
    %v535 = vunpack.c.h.b16 %v141
    %v536 = vunpack.c.l.b16 %v142
    %v537 = vunpack.c.h.b16 %v142
    %v538 = vunpack.c.l.b16 %v143
    %v539 = vunpack.c.h.b16 %v143
    %v540 = vunpack.c.l.b16 %v144
    %v541 = vunpack.c.h.b16 %v144
    %v542 = vunpack.c.l.b16 %v145
    %v543 = vunpack.c.h.b16 %v145
    %v544 = vunpack.c.l.b16 %v146
    %v545 = vunpack.c.h.b16 %v146
    %v546 = vunpack.c.l.b16 %v147
    %v547 = vunpack.c.h.b16 %v147
    %v548 = vunpack.c.l.b16 %v148
    %v549 = vunpack.c.h.b16 %v148
    %v550 = vunpack.c.l.b16 %v149
    %v551 = vunpack.c.h.b16 %v149
    %v552 = vunpack.c.l.b16 %v150
    %v553 = vunpack.c.h.b16 %v150
    %v554 = vunpack.c.l.b16 %v151
    %v555 = vunpack.c.h.b16 %v151
    %v556 = vunpack.c.l.b16 %v152
    %v557 = vunpack.c.h.b16 %v152
    %v558 = vunpack.c.l.b16 %v153
    %v559 = vunpack.c.h.b16 %v153
    %v560 = vunpack.c.l.b16 %v154
    %v561 = vunpack.c.h.b16 %v154
    %v562 = vunpack.c.l.b16 %v155
    %v563 = vunpack.c.h.b16 %v155
    %v564 = vpack.c.b16 %v310, %v308
    %v565 = vpack.c.b16 %v311, %v309
    %v566 = vpack.c.b16 %v314, %v312
    %v567 = vpack.c.b16 %v315, %v313
    %v568 = vpack.c.b16 %v318, %v316
    %v569 = vpack.c.b16 %v319, %v317
    %v570 = vpack.c.b16 %v322, %v320
    %v571 = vpack.c.b16 %v323, %v321
    %v572 = vpack.c.b16 %v326, %v324
    %v573 = vpack.c.b16 %v327, %v325
    %v574 = vpack.c.b16 %v330, %v328
    %v575 = vpack.c.b16 %v331, %v329
    %v576 = vpack.c.b16 %v334, %v332
    %v577 = vpack.c.b16 %v335, %v333
    %v578 = vpack.c.b16 %v338, %v336
    %v579 = vpack.c.b16 %v339, %v337
    %v580 = vpack.c.b16 %v342, %v340
    %v581 = vpack.c.b16 %v343, %v341
    %v582 = vpack.c.b16 %v346, %v344
    %v583 = vpack.c.b16 %v347, %v345
    %v584 = vpack.c.b16 %v350, %v348
    %v585 = vpack.c.b16 %v351, %v349
    %v586 = vpack.c.b16 %v354, %v352
    %v587 = vpack.c.b16 %v355, %v353
    %v588 = vpack.c.b16 %v358, %v356
    %v589 = vpack.c.b16 %v359, %v357
    %v590 = vpack.c.b16 %v362, %v360
    %v591 = vpack.c.b16 %v363, %v361
    %v592 = vpack.c.b16 %v366, %v364
    %v593 = vpack.c.b16 %v367, %v365
    %v594 = vpack.c.b16 %v370, %v368
    %v595 = vpack.c.b16 %v371, %v369
    %v596 = vpack.c.b16 %v374, %v372
    %v597 = vpack.c.b16 %v375, %v373
    %v598 = vpack.c.b16 %v378, %v376
    %v599 = vpack.c.b16 %v379, %v377
    %v600 = vpack.c.b16 %v382, %v380
    %v601 = vpack.c.b16 %v383, %v381
    %v602 = vpack.c.b16 %v386, %v384
    %v603 = vpack.c.b16 %v387, %v385
    %v604 = vpack.c.b16 %v390, %v388
    %v605 = vpack.c.b16 %v391, %v389
    %v606 = vpack.c.b16 %v394, %v392
    %v607 = vpack.c.b16 %v395, %v393
    %v608 = vpack.c.b16 %v398, %v396
    %v609 = vpack.c.b16 %v399, %v397
    %v610 = vpack.c.b16 %v402, %v400
    %v611 = vpack.c.b16 %v403, %v401
    %v612 = vpack.c.b16 %v406, %v404
    %v613 = vpack.c.b16 %v407, %v405
    %v614 = vpack.c.b16 %v410, %v408
    %v615 = vpack.c.b16 %v411, %v409
    %v616 = vpack.c.b16 %v414, %v412
    %v617 = vpack.c.b16 %v415, %v413
    %v618 = vpack.c.b16 %v418, %v416
    %v619 = vpack.c.b16 %v419, %v417
    %v620 = vpack.c.b16 %v422, %v420
    %v621 = vpack.c.b16 %v423, %v421
    %v622 = vpack.c.b16 %v426, %v424
    %v623 = vpack.c.b16 %v427, %v425
    %v624 = vpack.c.b16 %v430, %v428
    %v625 = vpack.c.b16 %v431, %v429
    %v626 = vpack.c.b16 %v434, %v432
    %v627 = vpack.c.b16 %v435, %v433
    %v628 = vpack.c.b16 %v438, %v436
    %v629 = vpack.c.b16 %v439, %v437
    %v630 = vpack.c.b16 %v442, %v440
    %v631 = vpack.c.b16 %v443, %v441
    %v632 = vpack.c.b16 %v446, %v444
    %v633 = vpack.c.b16 %v447, %v445
    %v634 = vpack.c.b16 %v450, %v448
    %v635 = vpack.c.b16 %v451, %v449
    %v636 = vpack.c.b16 %v454, %v452
    %v637 = vpack.c.b16 %v455, %v453
    %v638 = vpack.c.b16 %v458, %v456
    %v639 = vpack.c.b16 %v459, %v457
    %v640 = vpack.c.b16 %v462, %v460
    %v641 = vpack.c.b16 %v463, %v461
    %v642 = vpack.c.b16 %v466, %v464
    %v643 = vpack.c.b16 %v467, %v465
    %v644 = vpack.c.b16 %v470, %v468
    %v645 = vpack.c.b16 %v471, %v469
    %v646 = vpack.c.b16 %v474, %v472
    %v647 = vpack.c.b16 %v475, %v473
    %v648 = vpack.c.b16 %v478, %v476
    %v649 = vpack.c.b16 %v479, %v477
    %v650 = vpack.c.b16 %v482, %v480
    %v651 = vpack.c.b16 %v483, %v481
    %v652 = vpack.c.b16 %v486, %v484
    %v653 = vpack.c.b16 %v487, %v485
    %v654 = vpack.c.b16 %v490, %v488
    %v655 = vpack.c.b16 %v491, %v489
    %v656 = vpack.c.b16 %v494, %v492
    %v657 = vpack.c.b16 %v495, %v493
    %v658 = vpack.c.b16 %v498, %v496
    %v659 = vpack.c.b16 %v499, %v497
    %v660 = vpack.c.b16 %v502, %v500
    %v661 = vpack.c.b16 %v503, %v501
    %v662 = vpack.c.b16 %v506, %v504
    %v663 = vpack.c.b16 %v507, %v505
    %v664 = vpack.c.b16 %v510, %v508
    %v665 = vpack.c.b16 %v511, %v509
    %v666 = vpack.c.b16 %v514, %v512
    %v667 = vpack.c.b16 %v515, %v513
    %v668 = vpack.c.b16 %v518, %v516
    %v669 = vpack.c.b16 %v519, %v517
    %v670 = vpack.c.b16 %v522, %v520
    %v671 = vpack.c.b16 %v523, %v521
    %v672 = vpack.c.b16 %v526, %v524
    %v673 = vpack.c.b16 %v527, %v525
    %v674 = vpack.c.b16 %v530, %v528
    %v675 = vpack.c.b16 %v531, %v529
    %v676 = vpack.c.b16 %v534, %v532
    %v677 = vpack.c.b16 %v535, %v533
    %v678 = vpack.c.b16 %v538, %v536
    %v679 = vpack.c.b16 %v539, %v537
    %v680 = vpack.c.b16 %v542, %v540
    %v681 = vpack.c.b16 %v543, %v541
    %v682 = vpack.c.b16 %v546, %v544
    %v683 = vpack.c.b16 %v547, %v545
    %v684 = vpack.c.b16 %v550, %v548
    %v685 = vpack.c.b16 %v551, %v549
    %v686 = vpack.c.b16 %v554, %v552
    %v687 = vpack.c.b16 %v555, %v553
    %v688 = vpack.c.b16 %v558, %v556
    %v689 = vpack.c.b16 %v559, %v557
    %v690 = vpack.c.b16 %v562, %v560
    %v691 = vpack.c.b16 %v563, %v561
    %820 = vmatpush.bf16.msra.mxu0 %v578
    %821 = vmatpush.bf16.msra.mxu0 %v576
    %822 = vmatpush.bf16.msra.mxu0 %v574
    %823 = vmatpush.bf16.msra.mxu0 %v572
    %824 = vmatpush.bf16.msra.mxu0 %v570
    %825 = vmatpush.bf16.msra.mxu0 %v568
    %826 = vmatpush.bf16.msra.mxu0 %v566
    %827 = vmatpush.bf16.msra.mxu0 %v564
    %828 = vmatmul.bf16.gmra.mxu0 %v164
    %v829 = vpop.f32.mrf.mxu0
    %v830 = vadd.f32 %v158, %v829
    %v831 = vpop.f32.mrf.mxu0
    %832 = vdwg.mxu0
    %833 = vmatpush.bf16.msra.mxu0 %v594
    %834 = vmatpush.bf16.msra.mxu0 %v592
    %835 = vmatpush.bf16.msra.mxu0 %v590
    %836 = vmatpush.bf16.msra.mxu0 %v588
    %837 = vmatpush.bf16.msra.mxu0 %v586
    %838 = vmatpush.bf16.msra.mxu0 %v584
    %839 = vmatpush.bf16.msra.mxu0 %v582
    %840 = vmatpush.bf16.msra.mxu0 %v580
    %841 = vmatmul.bf16.gmra.mxu0 %v165
    %v842 = vpop.f32.mrf.mxu0
    %v843 = vadd.f32 %v830, %v842
    %v844 = vpop.f32.mrf.mxu0
    %845 = vdwg.mxu0
    %846 = vmatpush.bf16.msra.mxu0 %v610
    %847 = vmatpush.bf16.msra.mxu0 %v608
    %848 = vmatpush.bf16.msra.mxu0 %v606
    %849 = vmatpush.bf16.msra.mxu0 %v604
    %850 = vmatpush.bf16.msra.mxu0 %v602
    %851 = vmatpush.bf16.msra.mxu0 %v600
    %852 = vmatpush.bf16.msra.mxu0 %v598
    %853 = vmatpush.bf16.msra.mxu0 %v596
    %854 = vmatmul.bf16.gmra.mxu0 %v166
    %v855 = vpop.f32.mrf.mxu0
    %v856 = vadd.f32 %v843, %v855
    %v857 = vpop.f32.mrf.mxu0
    %858 = vdwg.mxu0
    %859 = vmatpush.bf16.msra.mxu0 %v626
    %860 = vmatpush.bf16.msra.mxu0 %v624
    %861 = vmatpush.bf16.msra.mxu0 %v622
    %862 = vmatpush.bf16.msra.mxu0 %v620
    %863 = vmatpush.bf16.msra.mxu0 %v618
    %864 = vmatpush.bf16.msra.mxu0 %v616
    %865 = vmatpush.bf16.msra.mxu0 %v614
    %866 = vmatpush.bf16.msra.mxu0 %v612
    %867 = vmatmul.bf16.gmra.mxu0 %v167
    %v868 = vpop.f32.mrf.mxu0
    %v869 = vadd.f32 %v856, %v868
    %v870 = vpop.f32.mrf.mxu0
    %871 = vdwg.mxu0
    %872 = vmatpush.bf16.msra.mxu0 %v642
    %873 = vmatpush.bf16.msra.mxu0 %v640
    %874 = vmatpush.bf16.msra.mxu0 %v638
    %875 = vmatpush.bf16.msra.mxu0 %v636
    %876 = vmatpush.bf16.msra.mxu0 %v634
    %877 = vmatpush.bf16.msra.mxu0 %v632
    %878 = vmatpush.bf16.msra.mxu0 %v630
    %879 = vmatpush.bf16.msra.mxu0 %v628
    %880 = vmatmul.bf16.gmra.mxu0 %v168
    %v881 = vpop.f32.mrf.mxu0
    %v882 = vadd.f32 %v869, %v881
    %v883 = vpop.f32.mrf.mxu0
    %884 = vdwg.mxu0
    %885 = vmatpush.bf16.msra.mxu0 %v658
    %886 = vmatpush.bf16.msra.mxu0 %v656
    %887 = vmatpush.bf16.msra.mxu0 %v654
    %888 = vmatpush.bf16.msra.mxu0 %v652
    %889 = vmatpush.bf16.msra.mxu0 %v650
    %890 = vmatpush.bf16.msra.mxu0 %v648
    %891 = vmatpush.bf16.msra.mxu0 %v646
    %892 = vmatpush.bf16.msra.mxu0 %v644
    %893 = vmatmul.bf16.gmra.mxu0 %v169
    %v894 = vpop.f32.mrf.mxu0
    %v895 = vadd.f32 %v882, %v894
    %v896 = vpop.f32.mrf.mxu0
    %897 = vdwg.mxu0
    %898 = vmatpush.bf16.msra.mxu0 %v674
    %899 = vmatpush.bf16.msra.mxu0 %v672
    %900 = vmatpush.bf16.msra.mxu0 %v670
    %901 = vmatpush.bf16.msra.mxu0 %v668
    %902 = vmatpush.bf16.msra.mxu0 %v666
    %903 = vmatpush.bf16.msra.mxu0 %v664
    %904 = vmatpush.bf16.msra.mxu0 %v662
    %905 = vmatpush.bf16.msra.mxu0 %v660
    %906 = vmatmul.bf16.gmra.mxu0 %v170
    %v907 = vpop.f32.mrf.mxu0
    %v908 = vadd.f32 %v895, %v907
    %v909 = vpop.f32.mrf.mxu0
    %910 = vdwg.mxu0
    %911 = vmatpush.bf16.msra.mxu0 %v690
    %912 = vmatpush.bf16.msra.mxu0 %v688
    %913 = vmatpush.bf16.msra.mxu0 %v686
    %914 = vmatpush.bf16.msra.mxu0 %v684
    %915 = vmatpush.bf16.msra.mxu0 %v682
    %916 = vmatpush.bf16.msra.mxu0 %v680
    %917 = vmatpush.bf16.msra.mxu0 %v678
    %918 = vmatpush.bf16.msra.mxu0 %v676
    %919 = vmatmul.bf16.gmra.mxu0 %v171
    %v920 = vpop.f32.mrf.mxu0
    %v921 = vadd.f32 %v908, %v920
    %v922 = vpop.f32.mrf.mxu0
    %923 = vdwg.mxu0
    %924 = vmatpush.bf16.msra.mxu0 %v579
    %925 = vmatpush.bf16.msra.mxu0 %v577
    %926 = vmatpush.bf16.msra.mxu0 %v575
    %927 = vmatpush.bf16.msra.mxu0 %v573
    %928 = vmatpush.bf16.msra.mxu0 %v571
    %929 = vmatpush.bf16.msra.mxu0 %v569
    %930 = vmatpush.bf16.msra.mxu0 %v567
    %931 = vmatpush.bf16.msra.mxu0 %v565
    %932 = vmatmul.bf16.gmra.mxu0 %v164
    %v933 = vpop.f32.mrf.mxu0
    %v934 = vadd.f32 %v159, %v933
    %v935 = vpop.f32.mrf.mxu0
    %936 = vdwg.mxu0
    %937 = vmatpush.bf16.msra.mxu0 %v595
    %938 = vmatpush.bf16.msra.mxu0 %v593
    %939 = vmatpush.bf16.msra.mxu0 %v591
    %940 = vmatpush.bf16.msra.mxu0 %v589
    %941 = vmatpush.bf16.msra.mxu0 %v587
    %942 = vmatpush.bf16.msra.mxu0 %v585
    %943 = vmatpush.bf16.msra.mxu0 %v583
    %944 = vmatpush.bf16.msra.mxu0 %v581
    %945 = vmatmul.bf16.gmra.mxu0 %v165
    %v946 = vpop.f32.mrf.mxu0
    %v947 = vadd.f32 %v934, %v946
    %v948 = vpop.f32.mrf.mxu0
    %949 = vdwg.mxu0
    %950 = vmatpush.bf16.msra.mxu0 %v611
    %951 = vmatpush.bf16.msra.mxu0 %v609
    %952 = vmatpush.bf16.msra.mxu0 %v607
    %953 = vmatpush.bf16.msra.mxu0 %v605
    %954 = vmatpush.bf16.msra.mxu0 %v603
    %955 = vmatpush.bf16.msra.mxu0 %v601
    %956 = vmatpush.bf16.msra.mxu0 %v599
    %957 = vmatpush.bf16.msra.mxu0 %v597
    %958 = vmatmul.bf16.gmra.mxu0 %v166
    %v959 = vpop.f32.mrf.mxu0
    %v960 = vadd.f32 %v947, %v959
    %v961 = vpop.f32.mrf.mxu0
    %962 = vdwg.mxu0
    %963 = vmatpush.bf16.msra.mxu0 %v627
    %964 = vmatpush.bf16.msra.mxu0 %v625
    %965 = vmatpush.bf16.msra.mxu0 %v623
    %966 = vmatpush.bf16.msra.mxu0 %v621
    %967 = vmatpush.bf16.msra.mxu0 %v619
    %968 = vmatpush.bf16.msra.mxu0 %v617
    %969 = vmatpush.bf16.msra.mxu0 %v615
    %970 = vmatpush.bf16.msra.mxu0 %v613
    %971 = vmatmul.bf16.gmra.mxu0 %v167
    %v972 = vpop.f32.mrf.mxu0
    %v973 = vadd.f32 %v960, %v972
    %v974 = vpop.f32.mrf.mxu0
    %975 = vdwg.mxu0
    %976 = vmatpush.bf16.msra.mxu0 %v643
    %977 = vmatpush.bf16.msra.mxu0 %v641
    %978 = vmatpush.bf16.msra.mxu0 %v639
    %979 = vmatpush.bf16.msra.mxu0 %v637
    %980 = vmatpush.bf16.msra.mxu0 %v635
    %981 = vmatpush.bf16.msra.mxu0 %v633
    %982 = vmatpush.bf16.msra.mxu0 %v631
    %983 = vmatpush.bf16.msra.mxu0 %v629
    %984 = vmatmul.bf16.gmra.mxu0 %v168
    %v985 = vpop.f32.mrf.mxu0
    %v986 = vadd.f32 %v973, %v985
    %v987 = vpop.f32.mrf.mxu0
    %988 = vdwg.mxu0
    %989 = vmatpush.bf16.msra.mxu0 %v659
    %990 = vmatpush.bf16.msra.mxu0 %v657
    %991 = vmatpush.bf16.msra.mxu0 %v655
    %992 = vmatpush.bf16.msra.mxu0 %v653
    %993 = vmatpush.bf16.msra.mxu0 %v651
    %994 = vmatpush.bf16.msra.mxu0 %v649
    %995 = vmatpush.bf16.msra.mxu0 %v647
    %996 = vmatpush.bf16.msra.mxu0 %v645
    %997 = vmatmul.bf16.gmra.mxu0 %v169
    %v998 = vpop.f32.mrf.mxu0
    %v999 = vadd.f32 %v986, %v998
    %v1000 = vpop.f32.mrf.mxu0
    %1001 = vdwg.mxu0
    %1002 = vmatpush.bf16.msra.mxu0 %v675
    %1003 = vmatpush.bf16.msra.mxu0 %v673
    %1004 = vmatpush.bf16.msra.mxu0 %v671
    %1005 = vmatpush.bf16.msra.mxu0 %v669
    %1006 = vmatpush.bf16.msra.mxu0 %v667
    %1007 = vmatpush.bf16.msra.mxu0 %v665
    %1008 = vmatpush.bf16.msra.mxu0 %v663
    %1009 = vmatpush.bf16.msra.mxu0 %v661
    %1010 = vmatmul.bf16.gmra.mxu0 %v170
    %v1011 = vpop.f32.mrf.mxu0
    %v1012 = vadd.f32 %v999, %v1011
    %v1013 = vpop.f32.mrf.mxu0
    %1014 = vdwg.mxu0
    %1015 = vmatpush.bf16.msra.mxu0 %v691
    %1016 = vmatpush.bf16.msra.mxu0 %v689
    %1017 = vmatpush.bf16.msra.mxu0 %v687
    %1018 = vmatpush.bf16.msra.mxu0 %v685
    %1019 = vmatpush.bf16.msra.mxu0 %v683
    %1020 = vmatpush.bf16.msra.mxu0 %v681
    %1021 = vmatpush.bf16.msra.mxu0 %v679
    %1022 = vmatpush.bf16.msra.mxu0 %v677
    %1023 = vmatmul.bf16.gmra.mxu0 %v171
    %v1024 = vpop.f32.mrf.mxu0
    %v1025 = vadd.f32 %v1012, %v1024
    %v1026 = vpop.f32.mrf.mxu0
    %1027 = vdwg.mxu0
    %v1028 = vmax.f32 %v921, 0.0
    %v1029 = vmax.f32 %v1025, 0.0
    %v1030 = vpack.c.bf16 %v1028, %v1028
    %v1031 = vpack.c.bf16 %v1029, %v1029
    %v1032 = vld [vmem:[%s3] sm:$0xf]
    %v1033 = vld [vmem:[%s3 + $0x4] sm:$0xf]
    %v1034 = vld [vmem:[%s3 + $0x8] sm:$0xf]
    %v1035 = vld [vmem:[%s3 + $0xc] sm:$0xf]
    %v1036 = vld [vmem:[%s3 + $0x10] sm:$0xf]
    %v1037 = vld [vmem:[%s3 + $0x14] sm:$0xf]
    %v1038 = vld [vmem:[%s3 + $0x18] sm:$0xf]
    %v1039 = vld [vmem:[%s3 + $0x1c] sm:$0xf]
    %v1040 = vld [vmem:[%s3 + $0x20] sm:$0xf]
    %v1041 = vld [vmem:[%s3 + $0x24] sm:$0xf]
    %v1042 = vld [vmem:[%s3 + $0x28] sm:$0xf]
    %v1043 = vld [vmem:[%s3 + $0x2c] sm:$0xf]
    %v1044 = vld [vmem:[%s3 + $0x30] sm:$0xf]
    %v1045 = vld [vmem:[%s3 + $0x34] sm:$0xf]
    %v1046 = vld [vmem:[%s3 + $0x38] sm:$0xf]
    %v1047 = vld [vmem:[%s3 + $0x3c] sm:$0xf]
    %v1048 = vld [vmem:[%s3 + $0x40] sm:$0xf]
    %v1049 = vld [vmem:[%s3 + $0x44] sm:$0xf]
    %v1050 = vld [vmem:[%s3 + $0x48] sm:$0xf]
    %v1051 = vld [vmem:[%s3 + $0x4c] sm:$0xf]
    %v1052 = vld [vmem:[%s3 + $0x50] sm:$0xf]
    %v1053 = vld [vmem:[%s3 + $0x54] sm:$0xf]
    %v1054 = vld [vmem:[%s3 + $0x58] sm:$0xf]
    %v1055 = vld [vmem:[%s3 + $0x5c] sm:$0xf]
    %v1056 = vld [vmem:[%s3 + $0x60] sm:$0xf]
    %v1057 = vld [vmem:[%s3 + $0x64] sm:$0xf]
    %v1058 = vld [vmem:[%s3 + $0x68] sm:$0xf]
    %v1059 = vld [vmem:[%s3 + $0x6c] sm:$0xf]
    %v1060 = vld [vmem:[%s3 + $0x70] sm:$0xf]
    %v1061 = vld [vmem:[%s3 + $0x74] sm:$0xf]
    %v1062 = vld [vmem:[%s3 + $0x78] sm:$0xf]
    %v1063 = vld [vmem:[%s3 + $0x7c] sm:$0xf]
    %v1064 = vld [vmem:[%s4] sm:$0x1]
    %v1066 = vperm.slane %v1064, 0
    %v1100 = vunpack.c.l.b16 %v1032
    %v1101 = vunpack.c.l.b16 %v1033
    %v1102 = vunpack.c.l.b16 %v1034
    %v1103 = vunpack.c.l.b16 %v1035
    %v1104 = vunpack.c.l.b16 %v1036
    %v1105 = vunpack.c.l.b16 %v1037
    %v1106 = vunpack.c.l.b16 %v1038
    %v1107 = vunpack.c.l.b16 %v1039
    %v1108 = vunpack.c.l.b16 %v1040
    %v1109 = vunpack.c.l.b16 %v1041
    %v1110 = vunpack.c.l.b16 %v1042
    %v1111 = vunpack.c.l.b16 %v1043
    %v1112 = vunpack.c.l.b16 %v1044
    %v1113 = vunpack.c.l.b16 %v1045
    %v1114 = vunpack.c.l.b16 %v1046
    %v1115 = vunpack.c.l.b16 %v1047
    %v1116 = vunpack.c.l.b16 %v1048
    %v1117 = vunpack.c.l.b16 %v1049
    %v1118 = vunpack.c.l.b16 %v1050
    %v1119 = vunpack.c.l.b16 %v1051
    %v1120 = vunpack.c.l.b16 %v1052
    %v1121 = vunpack.c.l.b16 %v1053
    %v1122 = vunpack.c.l.b16 %v1054
    %v1123 = vunpack.c.l.b16 %v1055
    %v1124 = vunpack.c.l.b16 %v1056
    %v1125 = vunpack.c.l.b16 %v1057
    %v1126 = vunpack.c.l.b16 %v1058
    %v1127 = vunpack.c.l.b16 %v1059
    %v1128 = vunpack.c.l.b16 %v1060
    %v1129 = vunpack.c.l.b16 %v1061
    %v1130 = vunpack.c.l.b16 %v1062
    %v1131 = vunpack.c.l.b16 %v1063
    %v1132 = vpack.c.b16 %v1101, %v1100
    %v1133 = vpack.c.b16 %v1103, %v1102
    %v1134 = vpack.c.b16 %v1105, %v1104
    %v1135 = vpack.c.b16 %v1107, %v1106
    %v1136 = vpack.c.b16 %v1109, %v1108
    %v1137 = vpack.c.b16 %v1111, %v1110
    %v1138 = vpack.c.b16 %v1113, %v1112
    %v1139 = vpack.c.b16 %v1115, %v1114
    %v1140 = vpack.c.b16 %v1117, %v1116
    %v1141 = vpack.c.b16 %v1119, %v1118
    %v1142 = vpack.c.b16 %v1121, %v1120
    %v1143 = vpack.c.b16 %v1123, %v1122
    %v1144 = vpack.c.b16 %v1125, %v1124
    %v1145 = vpack.c.b16 %v1127, %v1126
    %v1146 = vpack.c.b16 %v1129, %v1128
    %v1147 = vpack.c.b16 %v1131, %v1130
    %1164 = vmatpush.bf16.msra.mxu0 %v1139
    %1165 = vmatpush.bf16.msra.mxu0 %v1138
    %1166 = vmatpush.bf16.msra.mxu0 %v1137
    %1167 = vmatpush.bf16.msra.mxu0 %v1136
    %1168 = vmatpush.bf16.msra.mxu0 %v1135
    %1169 = vmatpush.bf16.msra.mxu0 %v1134
    %1170 = vmatpush.bf16.msra.mxu0 %v1133
    %1171 = vmatpush.bf16.msra.mxu0 %v1132
    %1172 = vmatmul.bf16.gmra.mxu0 %v1030
    %v1173 = vpop.f32.mrf.mxu0
    %v1174 = vadd.f32 %v1066, %v1173
    %v1175 = vpop.f32.mrf.mxu0
    %1176 = vdwg.mxu0
    %1177 = vmatpush.bf16.msra.mxu0 %v1147
    %1178 = vmatpush.bf16.msra.mxu0 %v1146
    %1179 = vmatpush.bf16.msra.mxu0 %v1145
    %1180 = vmatpush.bf16.msra.mxu0 %v1144
    %1181 = vmatpush.bf16.msra.mxu0 %v1143
    %1182 = vmatpush.bf16.msra.mxu0 %v1142
    %1183 = vmatpush.bf16.msra.mxu0 %v1141
    %1184 = vmatpush.bf16.msra.mxu0 %v1140
    %1185 = vmatmul.bf16.gmra.mxu0 %v1031
    %v1186 = vpop.f32.mrf.mxu0
    %v1187 = vadd.f32 %v1174, %v1186
    %v1188 = vpop.f32.mrf.mxu0
    %1189 = vdwg.mxu0
    %v1190 = vmax.f32 %v1187, 0.0
    %v1191 = vpack.c.bf16 %v1190, %v1190
    %v1192 = vld [vmem:[%s5] sm:$0xf]
    %v1193 = vld [vmem:[%s5 + $0x4] sm:$0xf]
    %v1194 = vld [vmem:[%s5 + $0x8] sm:$0xf]
    %v1195 = vld [vmem:[%s5 + $0xc] sm:$0xf]
    %v1196 = vld [vmem:[%s5 + $0x10] sm:$0xf]
    %v1197 = vld [vmem:[%s5 + $0x14] sm:$0xf]
    %v1198 = vld [vmem:[%s5 + $0x18] sm:$0xf]
    %v1199 = vld [vmem:[%s5 + $0x1c] sm:$0xf]
    %v1200 = vld [vmem:[%s5 + $0x20] sm:$0xf]
    %v1201 = vld [vmem:[%s5 + $0x24] sm:$0xf]
    %v1202 = vld [vmem:[%s5 + $0x28] sm:$0xf]
    %v1203 = vld [vmem:[%s5 + $0x2c] sm:$0xf]
    %v1204 = vld [vmem:[%s5 + $0x30] sm:$0xf]
    %v1205 = vld [vmem:[%s5 + $0x34] sm:$0xf]
    %v1206 = vld [vmem:[%s5 + $0x38] sm:$0xf]
    %v1207 = vld [vmem:[%s5 + $0x3c] sm:$0xf]
    %v1208 = vld [vmem:[%s6] sm:$0x1]
    %v1210 = vperm.slane %v1208, 0
    %v1228 = vunpack.c.l.b16 %v1192
    %v1229 = vunpack.c.l.b16 %v1193
    %v1230 = vunpack.c.l.b16 %v1194
    %v1231 = vunpack.c.l.b16 %v1195
    %v1232 = vunpack.c.l.b16 %v1196
    %v1233 = vunpack.c.l.b16 %v1197
    %v1234 = vunpack.c.l.b16 %v1198
    %v1235 = vunpack.c.l.b16 %v1199
    %v1236 = vunpack.c.l.b16 %v1200
    %v1237 = vunpack.c.l.b16 %v1201
    %v1238 = vunpack.c.l.b16 %v1202
    %v1239 = vunpack.c.l.b16 %v1203
    %v1240 = vunpack.c.l.b16 %v1204
    %v1241 = vunpack.c.l.b16 %v1205
    %v1242 = vunpack.c.l.b16 %v1206
    %v1243 = vunpack.c.l.b16 %v1207
    %v1244 = vpack.c.b16 %v1229, %v1228
    %v1245 = vpack.c.b16 %v1231, %v1230
    %v1246 = vpack.c.b16 %v1233, %v1232
    %v1247 = vpack.c.b16 %v1235, %v1234
    %v1248 = vpack.c.b16 %v1237, %v1236
    %v1249 = vpack.c.b16 %v1239, %v1238
    %v1250 = vpack.c.b16 %v1241, %v1240
    %v1251 = vpack.c.b16 %v1243, %v1242
    %1260 = vmatpush.bf16.msra.mxu0 %v1251
    %1261 = vmatpush.bf16.msra.mxu0 %v1250
    %1262 = vmatpush.bf16.msra.mxu0 %v1249
    %1263 = vmatpush.bf16.msra.mxu0 %v1248
    %1264 = vmatpush.bf16.msra.mxu0 %v1247
    %1265 = vmatpush.bf16.msra.mxu0 %v1246
    %1266 = vmatpush.bf16.msra.mxu0 %v1245
    %1267 = vmatpush.bf16.msra.mxu0 %v1244
    %1268 = vmatmul.bf16.gmra.mxu0 %v1191
    %v1269 = vpop.f32.mrf.mxu0
    %v1270 = vadd.f32 %v1210, %v1269
    %v1271 = vpop.f32.mrf.mxu0
    %1272 = vdwg.mxu0
    %vm1273 = vcmask 238592
    %v1274 = vsel %vm1273, %v1270, 0.0
    %1275 = vadd.xlane.f32.xlu0 %v1274
    %v1276 = vpop.xlane.xlu0 %1275
    %v1277 = vrcp.pop 30.0
    %v1278 = vmul.f32 30.0, %v1277
    %v1279 = vsub.f32 1.0, %v1278
    %v1280 = vmul.f32 %v1277, %v1279
    %v1281 = vadd.f32 %v1277, %v1280
    %vm1282 = vweird.f32 %v1277
    %v1283 = vsel %vm1282, %v1277, %v1281
    %v1284 = vmul.f32 %v1276, %v1283
    %v1285 = vsub.f32 %v1270, %v1284
    %1287 = vset.pattern.permute.xlu0 30
    %1288 = vperm.xlu0 %1287, %v1270
    %v1289 = vpop.permute.xlu0 %1288
    %v1291 = vadd.f32 %v1285, %v1289
    %1292 = vst.msk [vmem:[#allocation2] sm:$0x3] %vm1273, %v1291
    // Predicated region
    $region30: #{forward.9} parent=1 // pred_check
      _
    $region31: #{forward.9} parent=1 // pred_check_branch
      %1294 = sbr.rel (0) target = $region33
    $region32: #{forward.9} parent=1 // pred_region
      %1296 = vsyncadd [#allocation3], 0
      %s1298 = sshll.u32 [#allocation2], 4
      %s1299 = int_to_ptr.vmem [resolvable:$true] %s1298
      %s1300 = sshll.u32 %s7, 4
      %s1301 = int_to_ptr.hbm [resolvable:$true] %s1300
      %1303 = dma.vmem_to_hbm [thread:$0]  %s1299, 32, %s1301, [#allocation3]
    $region33: #{forward.9} parent=1 // pred_fallthru
      _
    // Predicated region
    $region34: #{forward.9} parent=1 // pred_check
      _
    $region35: #{forward.9} parent=1 // pred_check_branch
      %1305 = sbr.rel (0) target = $region37
    $region36: #{forward.9} parent=1 // pred_region
      %1307 = dma.done [#allocation3], 32
    $region37: #{forward.9} parent=1 // pred_fallthru
      _
    %1308 = vsyncpa [#allocation3], 1

</llo_original>
